<compile_context>
chip_gen: v6e
topology: v6e:2x2x1
jax: 0.10.0
libtpu: 0.0.40
codegen_flags: <defaults>
</compile_context>

<pallas_src>
import jax
import jax.numpy as jnp
import numpy as np
from jax.experimental import pallas as pl
from jax.experimental.pallas import tpu as pltpu

BN_EPS = 1e-5

GENOTYPE_NORMAL = [
    ("sep_conv_3x3", 0), ("sep_conv_3x3", 1),
    ("sep_conv_3x3", 0), ("sep_conv_3x3", 1),
    ("sep_conv_3x3", 1), ("skip_connect", 0),
    ("skip_connect", 0), ("dil_conv_3x3", 2),
]
NORMAL_CONCAT = [2, 3, 4, 5]


# --------------------------- fused whole-cell Pallas kernel ------------------

def _op_slots(genotype):
    """Indices of each op's depthwise / pointwise params in the packed arrays."""
    dw_slots, pw_slots = [], []
    dwi = pwi = 0
    for name, _ in genotype:
        if name == "sep_conv_3x3":
            dw_slots.append((dwi, dwi + 1)); dwi += 2
            pw_slots.append((pwi, pwi + 1)); pwi += 2
        elif name == "dil_conv_3x3":
            dw_slots.append((dwi,)); dwi += 1
            pw_slots.append((pwi,)); pwi += 1
        elif name == "skip_connect":
            dw_slots.append(None); pw_slots.append(None)
        else:
            raise ValueError(name)
    return dw_slots, pw_slots, dwi, pwi


def _build_cell_kernel(genotype, concat, C, H, W, B):
    HW = H * W
    L = B * HW
    dw_slots, pw_slots, _, _ = _op_slots(genotype)
    dils = set()
    for name, _ in genotype:
        if name == "sep_conv_3x3":
            dils.add(1)
        elif name == "dil_conv_3x3":
            dils.add(2)

    def kernel(s01_ref, coords_ref, prew_ref, preb_ref, dw_ref, pw_ref, pwb_ref,
               out_ref):
        # Per-lane (h, w) coordinates inside each image (one tiny const DMA, hoisted).
        h_idx = coords_ref[0:1, :]                     # (1, L) int32
        w_idx = coords_ref[1:2, :]                     # (1, L) int32

        # Tap validity masks computed ONCE per program (<= 8 per dilation).  The
        # h-mask also prevents vertical taps from bleeding across images in the
        # batched lane axis; the center tap needs no mask at all.
        def make_masks(d):
            masks = {}
            for kh in range(3):
                dh = (kh - 1) * d
                for kw in range(3):
                    dwc = (kw - 1) * d
                    cond = None
                    if dh != 0:
                        cond = (h_idx + dh >= 0) & (h_idx + dh < H)
                    if dwc != 0:
                        cw = (w_idx + dwc >= 0) & (w_idx + dwc < W)
                        cond = cw if cond is None else (cond & cw)
                    masks[(kh, kw)] = cond
            return masks

        masks_by_dil = {d: make_masks(d) for d in sorted(dils)}

        def pw_bn(x, ci, relu_in):
            # (ReLU ->) 1x1 conv over channels; eval-mode BN scale is pre-folded into
            # the weight, so only the bias add remains.  (C,C)@(C,B*HW): the big lane
            # dim keeps output stores dense/unmasked.
            if relu_in:
                x = jnp.maximum(x, 0.0)
            y = jnp.dot(pw_ref[ci], x, preferred_element_type=jnp.float32)
            return y + pwb_ref[ci]

        def dw3x3(x, ci, dil):
            # ReLU -> depthwise 3x3, stride 1, padding == dilation (same-size output).
            # Taps are pltpu.roll's of the in-register (C, B*HW) tile (XLU slot,
            # co-issues with the VPU FMAs) plus a precomputed row/col validity mask:
            # no halo scratch, no zero-fill, no VMEM store/reload round trips.
            x = jnp.maximum(x, 0.0)        # ReLU(0)=0 -> relu-then-pad == pad-then-relu
            masks = masks_by_dil[dil]
            acc = jnp.zeros(x.shape, jnp.float32)
            for kh in range(3):
                dh = (kh - 1) * dil
                for kw in range(3):
                    dwc = (kw - 1) * dil
                    shift = dh * W + dwc
                    tap = x if shift == 0 else pltpu.roll(x, (-shift) % L, axis=1)
                    m = masks[(kh, kw)]
                    if m is not None:
                        tap = jnp.where(m, tap, 0.0)
                    col = ci * 9 + kh * 3 + kw
                    acc = acc + tap * dw_ref[:, col:col + 1]   # (C,1) per-channel tap w
            return acc

        def apply_op(op_idx, x):
            name = genotype[op_idx][0]
            if name == "skip_connect":
                return x
            if name == "sep_conv_3x3":
                d0, d1 = dw_slots[op_idx]
                p0, p1 = pw_slots[op_idx]
                y = dw3x3(x, d0, 1)
                y = pw_bn(y, p0, False)
                y = dw3x3(y, d1, 1)
                return pw_bn(y, p1, False)
            if name == "dil_conv_3x3":
                (d0,) = dw_slots[op_idx]
                (p0,) = pw_slots[op_idx]
                y = dw3x3(x, d0, 2)
                return pw_bn(y, p0, False)
            raise ValueError(name)

        # Fused preprocess0/1: one block-diagonal (2C, C_pp+C_p) matmul on the
        # channel-stacked input, then a static sublane split back into s0 / s1.
        x01 = jnp.maximum(s01_ref[0], 0.0)
        pre = jnp.dot(prew_ref[...], x01, preferred_element_type=jnp.float32)
        pre = pre + preb_ref[...]
        states = [pre[:C, :], pre[C:2 * C, :]]

        for i in range(len(genotype) // 2):
            _, i1 = genotype[2 * i]
            _, i2 = genotype[2 * i + 1]
            h1 = apply_op(2 * i, states[i1])
            h2 = apply_op(2 * i + 1, states[i2])
            states.append(h1 + h2)                   # branch add fused in-kernel

        for j, ci in enumerate(concat):              # channel concat fused: direct stores
            out_ref[0, j * C:(j + 1) * C, :] = states[ci].astype(out_ref.dtype)

    return kernel


def cell_forward_pallas(params, s0_nchw, s1_nchw, drop_prob=0.0, images_per_step=None):
    # TODO(synk): drop_path is training-only (module run in eval mode); drop_prob ignored.
    del drop_prob
    N, C_pp, H, W = s0_nchw.shape
    N1, C_p, H1, W1 = s1_nchw.shape
    assert (N1, H1, W1) == (N, H, W)
    assert s0_nchw.dtype == jnp.float32 and s1_nchw.dtype == jnp.float32
    C = params["pre0"]["w"].shape[1]
    assert C % 8 == 0, "C must be a multiple of 8 sublanes for aligned concat stores"
    HW = H * W

    # Images per grid step: amortize the ~0.35us fixed per-step cost, but keep >= 2
    # parallel grid steps when N >= 2 so v7x's two TensorCores both get work.
    if images_per_step is None:
        images_per_step = max(1, N // 2)
    B = max(1, min(int(images_per_step), N))
    while N % B != 0:
        B -= 1
    G = N // B
    L = B * HW

    # Lane-dense batched layout: (G, C, B*HW); channels on sublanes, B*HW on lanes.
    def to_blocks(x, c):
        return x.reshape(G, B, c, HW).transpose(0, 2, 1, 3).reshape(G, c, L)

    s0b = to_blocks(s0_nchw.reshape(N, C_pp, HW), C_pp)
    s1b = to_blocks(s1_nchw.reshape(N, C_p, HW), C_p)
    s01 = jnp.concatenate([s0b, s1b], axis=1)          # (G, C_pp+C_p, L): one DMA/step

    # Per-lane (h, w) coordinates (identical for every image in the block).
    hh = jnp.arange(HW, dtype=jnp.int32) // W
    ww = jnp.arange(HW, dtype=jnp.int32) % W
    coords = jnp.stack([jnp.tile(hh, B), jnp.tile(ww, B)], axis=0)   # (2, L)

    # ---- packed parameters: a handful of const DMAs instead of ~40 tiny ones ----
    def fold_pw(w, scale):     # (Cin,Cout) + (Cout,) -> (Cout,Cin) with BN scale folded
        return jnp.transpose(w) * scale[:, None]

    w0 = fold_pw(params["pre0"]["w"], params["pre0"]["scale"])       # (C, C_pp)
    w1 = fold_pw(params["pre1"]["w"], params["pre1"]["scale"])       # (C, C_p)
    pre_w = jnp.zeros((2 * C, C_pp + C_p), jnp.float32)
    pre_w = pre_w.at[:C, :C_pp].set(w0).at[C:, C_pp:].set(w1)        # block-diagonal
    pre_b = jnp.concatenate([params["pre0"]["bias"], params["pre1"]["bias"]])[:, None]

    dw_cols, pw_list, pwb_list = [], [], []
    for (name, _), p in zip(GENOTYPE_NORMAL, params["ops"]):
        if name == "sep_conv_3x3":
            for dwk, pwk, sck, bk in (("dw1", "pw1", "bn1_scale", "bn1_bias"),
                                      ("dw2", "pw2", "bn2_scale", "bn2_bias")):
                dw_cols.append(jnp.reshape(p[dwk], (9, -1)).T)       # (C, 9), col=kh*3+kw
                pw_list.append(fold_pw(p[pwk], p[sck]))
                pwb_list.append(p[bk][:, None])
        elif name == "dil_conv_3x3":
            dw_cols.append(jnp.reshape(p["dw"], (9, -1)).T)
            pw_list.append(fold_pw(p["pw"], p["bn_scale"]))
            pwb_list.append(p["bn_bias"][:, None])
        # skip_connect: no parameters
    dw_all = jnp.concatenate(dw_cols, axis=1)          # (C, 9*n_dw)
    pw_all = jnp.stack(pw_list)                        # (n_pw, C, C), scale folded
    pwb_all = jnp.stack(pwb_list)                      # (n_pw, C, 1)

    n_out_c = len(NORMAL_CONCAT) * C
    kernel = _build_cell_kernel(GENOTYPE_NORMAL, NORMAL_CONCAT, C, H, W, B)

    const2 = lambda g: (0, 0)       # whole array resident; never re-fetched across grid
    const3 = lambda g: (0, 0, 0)
    out = pl.pallas_call(
        kernel,
        out_shape=jax.ShapeDtypeStruct((G, n_out_c, L), s0_nchw.dtype),
        grid=(G,),
        in_specs=[
            pl.BlockSpec((1, C_pp + C_p, L), lambda g: (g, 0, 0)),
            pl.BlockSpec(coords.shape, const2),
            pl.BlockSpec(pre_w.shape, const2),
            pl.BlockSpec(pre_b.shape, const2),
            pl.BlockSpec(dw_all.shape, const2),
            pl.BlockSpec(pw_all.shape, const3),
            pl.BlockSpec(pwb_all.shape, const3),
        ],
        out_specs=pl.BlockSpec((1, n_out_c, L), lambda g: (g, 0, 0)),
        compiler_params=pltpu.CompilerParams(dimension_semantics=("parallel",)),
    )(s01, coords, pre_w, pre_b, dw_all, pw_all, pwb_all)

    # (G, 4C, B*HW) -> (N, 4C, H, W)  == torch.cat(dim=1) in NCHW
    out = out.reshape(G, n_out_c, B, HW).transpose(0, 2, 1, 3)
    return out.reshape(N, n_out_c, H, W)


# --------------------------- pure-JAX reference (same math, NHWC path) -------

def conv1x1_bn_ref(x, w, scale, bias, relu_in):
    if relu_in:
        x = jnp.maximum(x, 0.0)
    return jnp.einsum("nhwc,cd->nhwd", x, w) * scale + bias


def dwconv3x3_ref(x, w, dil, relu_in):
    if relu_in:
        x = jnp.maximum(x, 0.0)
    N, H, W, C = x.shape
    xp = jnp.pad(x, ((0, 0), (dil, dil), (dil, dil), (0, 0)))
    acc = jnp.zeros((N, H, W, C), jnp.float32)
    for kh in range(3):
        for kw in range(3):
            acc = acc + xp[:, kh * dil:kh * dil + H, kw * dil:kw * dil + W, :] * w[kh, kw, :]
    return acc


def cell_forward_ref(params, s0_nchw, s1_nchw):
    s0 = jnp.transpose(s0_nchw, (0, 2, 3, 1))
    s1 = jnp.transpose(s1_nchw, (0, 2, 3, 1))
    s0 = conv1x1_bn_ref(s0, params["pre0"]["w"], params["pre0"]["scale"],
                        params["pre0"]["bias"], True)
    s1 = conv1x1_bn_ref(s1, params["pre1"]["w"], params["pre1"]["scale"],
                        params["pre1"]["bias"], True)

    def apply_op(name, p, x):
        if name == "skip_connect":
            return x
        if name == "sep_conv_3x3":
            y = dwconv3x3_ref(x, p["dw1"], 1, True)
            y = conv1x1_bn_ref(y, p["pw1"], p["bn1_scale"], p["bn1_bias"], False)
            y = dwconv3x3_ref(y, p["dw2"], 1, True)
            return conv1x1_bn_ref(y, p["pw2"], p["bn2_scale"], p["bn2_bias"], False)
        if name == "dil_conv_3x3":
            y = dwconv3x3_ref(x, p["dw"], 2, True)
            return conv1x1_bn_ref(y, p["pw"], p["bn_scale"], p["bn_bias"], False)
        raise ValueError(name)

    states = [s0, s1]
    for i in range(len(GENOTYPE_NORMAL) // 2):
        n1, i1 = GENOTYPE_NORMAL[2 * i]
        n2, i2 = GENOTYPE_NORMAL[2 * i + 1]
        states.append(apply_op(n1, params["ops"][2 * i], states[i1]) +
                      apply_op(n2, params["ops"][2 * i + 1], states[i2]))
    out = jnp.concatenate([states[i] for i in NORMAL_CONCAT], axis=-1)
    return jnp.transpose(out, (0, 3, 1, 2))


# --------------------------- parameter init (deterministic) ------------------

def _fold_bn(gamma, beta, mean, var):
    scale = gamma / jnp.sqrt(var + BN_EPS)
    return scale, beta - mean * scale


def _init_bn(kg, kb, c):
    gamma = 1.0 + 0.1 * jax.random.normal(kg, (c,), jnp.float32)
    beta = 0.1 * jax.random.normal(kb, (c,), jnp.float32)
    # eval-mode BN with running_mean=0, running_var=1, folded to scale/bias
    return _fold_bn(gamma, beta, jnp.zeros((c,), jnp.float32), jnp.ones((c,), jnp.float32))


def init_relu_conv_bn(key, cin, cout):
    kw, kg, kb = jax.random.split(key, 3)
    w = 0.1 * jax.random.normal(kw, (cin, cout), jnp.float32)  # == torch conv1x1 W[co,ci].T
    scale, bias = _init_bn(kg, kb, cout)
    return {"w": w, "scale": scale, "bias": bias}


def init_sep_conv(key, c):
    ks = jax.random.split(key, 8)
    s1, b1 = _init_bn(ks[2], ks[3], c)
    s2, b2 = _init_bn(ks[6], ks[7], c)
    return {
        "dw1": 0.1 * jax.random.normal(ks[0], (3, 3, c), jnp.float32),
        "pw1": 0.1 * jax.random.normal(ks[1], (c, c), jnp.float32),
        "bn1_scale": s1, "bn1_bias": b1,
        "dw2": 0.1 * jax.random.normal(ks[4], (3, 3, c), jnp.float32),
        "pw2": 0.1 * jax.random.normal(ks[5], (c, c), jnp.float32),
        "bn2_scale": s2, "bn2_bias": b2,
    }


def init_dil_conv(key, c):
    ks = jax.random.split(key, 4)
    s, b = _init_bn(ks[2], ks[3], c)
    return {
        "dw": 0.1 * jax.random.normal(ks[0], (3, 3, c), jnp.float32),
        "pw": 0.1 * jax.random.normal(ks[1], (c, c), jnp.float32),
        "bn_scale": s, "bn_bias": b,
    }


def init_cell_params(key, c_pp, c_p, c):
    keys = jax.random.split(key, 2 + len(GENOTYPE_NORMAL))
    params = {
        "pre0": init_relu_conv_bn(keys[0], c_pp, c),  # reduction_prev=False -> ReLUConvBN 1x1
        "pre1": init_relu_conv_bn(keys[1], c_p, c),
        "ops": [],
    }
    for j, (name, _) in enumerate(GENOTYPE_NORMAL):
        k = keys[2 + j]
        if name == "sep_conv_3x3":
            params["ops"].append(init_sep_conv(k, c))
        elif name == "dil_conv_3x3":
            params["ops"].append(init_dil_conv(k, c))
        else:  # skip_connect (Identity at stride 1)
            params["ops"].append(None)
    return params


# --------------------------- main ---------------------------------------------

if __name__ == "__main__":
    key = jax.random.PRNGKey(0)
    N, C_pp, C_p, C, H, W = 4, 8, 8, 8, 16, 16   # N=4 -> 2 images/grid-step, 2 steps

    k0, k1, kp = jax.random.split(key, 3)
    s0 = jax.random.normal(k0, (N, C_pp, H, W), jnp.float32)  # NCHW, as in PyTorch
    s1 = jax.random.normal(k1, (N, C_p, H, W), jnp.float32)
    params = init_cell_params(kp, C_pp, C_p, C)

    out = jax.block_until_ready(cell_forward_pallas(params, s0, s1, drop_prob=0.2))
    ref = jax.block_until_ready(cell_forward_ref(params, s0, s1))

    assert out.shape == (N, len(NORMAL_CONCAT) * C, H, W), out.shape
    np.testing.assert_allclose(np.asarray(out), np.asarray(ref), rtol=2e-3, atol=2e-3)
    print("KERNEL_OK")
</pallas_src>

<mosaic_0001>
module attributes {stable_mosaic.version = 11 : i64} {
  func.func @kernel(%arg0: i32, %arg1: memref<1x16x512xf32, #tpu.memory_space<vmem>>, %arg2: memref<2x512xi32, #tpu.memory_space<vmem>>, %arg3: memref<16x16xf32, #tpu.memory_space<vmem>>, %arg4: memref<16x1xf32, #tpu.memory_space<vmem>>, %arg5: memref<8x99xf32, #tpu.memory_space<vmem>>, %arg6: memref<11x8x8xf32, #tpu.memory_space<vmem>>, %arg7: memref<11x8x1xf32, #tpu.memory_space<vmem>>, %arg8: memref<1x32x512xf32, #tpu.memory_space<vmem>>) attributes {dimension_semantics = [#tpu.dimension_semantics<parallel>], iteration_bounds = array<i64: 2>, scalar_prefetch = 0 : i64, scratch_operands = 0 : i64, tpu.core_type = #tpu.core_type<tc>, window_params = [{transform_indices = @transform_0, window_bounds = array<i64: 1, 16, 512>}, {pipeline_mode = #tpu.pipeline_mode<synchronous>, transform_indices = @transform_1, window_bounds = array<i64: 2, 512>}, {pipeline_mode = #tpu.pipeline_mode<synchronous>, transform_indices = @transform_2, window_bounds = array<i64: 16, 16>}, {pipeline_mode = #tpu.pipeline_mode<synchronous>, transform_indices = @transform_3, window_bounds = array<i64: 16, 1>}, {pipeline_mode = #tpu.pipeline_mode<synchronous>, transform_indices = @transform_4, window_bounds = array<i64: 8, 99>}, {pipeline_mode = #tpu.pipeline_mode<synchronous>, transform_indices = @transform_5, window_bounds = array<i64: 11, 8, 8>}, {pipeline_mode = #tpu.pipeline_mode<synchronous>, transform_indices = @transform_6, window_bounds = array<i64: 11, 8, 1>}, {transform_indices = @transform_7, window_bounds = array<i64: 1, 32, 512>}]} {
    %c0 = arith.constant 0 : index
    %c0_0 = arith.constant 0 : index
    %0 = vector.load %arg2[%c0, %c0_0] : memref<2x512xi32, #tpu.memory_space<vmem>>, vector<1x512xi32>
    %c1 = arith.constant 1 : index
    %c0_1 = arith.constant 0 : index
    %1 = vector.load %arg2[%c1, %c0_1] : memref<2x512xi32, #tpu.memory_space<vmem>>, vector<1x512xi32>
    %c-1_i32 = arith.constant -1 : i32
    %2 = vector.broadcast %c-1_i32 : i32 to vector<1x512xi32>
    %3 = arith.addi %0, %2 : vector<1x512xi32>
    %c0_i32 = arith.constant 0 : i32
    %4 = vector.broadcast %c0_i32 : i32 to vector<1x512xi32>
    %5 = arith.cmpi sge, %3, %4 : vector<1x512xi32>
    %c-1_i32_2 = arith.constant -1 : i32
    %6 = vector.broadcast %c-1_i32_2 : i32 to vector<1x512xi32>
    %7 = arith.addi %0, %6 : vector<1x512xi32>
    %c16_i32 = arith.constant 16 : i32
    %8 = vector.broadcast %c16_i32 : i32 to vector<1x512xi32>
    %9 = arith.cmpi slt, %7, %8 : vector<1x512xi32>
    %10 = arith.andi %5, %9 : vector<1x512xi1>
    %c-1_i32_3 = arith.constant -1 : i32
    %11 = vector.broadcast %c-1_i32_3 : i32 to vector<1x512xi32>
    %12 = arith.addi %1, %11 : vector<1x512xi32>
    %c0_i32_4 = arith.constant 0 : i32
    %13 = vector.broadcast %c0_i32_4 : i32 to vector<1x512xi32>
    %14 = arith.cmpi sge, %12, %13 : vector<1x512xi32>
    %c-1_i32_5 = arith.constant -1 : i32
    %15 = vector.broadcast %c-1_i32_5 : i32 to vector<1x512xi32>
    %16 = arith.addi %1, %15 : vector<1x512xi32>
    %c16_i32_6 = arith.constant 16 : i32
    %17 = vector.broadcast %c16_i32_6 : i32 to vector<1x512xi32>
    %18 = arith.cmpi slt, %16, %17 : vector<1x512xi32>
    %19 = arith.andi %14, %18 : vector<1x512xi1>
    %20 = arith.andi %10, %19 : vector<1x512xi1>
    %c-1_i32_7 = arith.constant -1 : i32
    %21 = vector.broadcast %c-1_i32_7 : i32 to vector<1x512xi32>
    %22 = arith.addi %0, %21 : vector<1x512xi32>
    %c0_i32_8 = arith.constant 0 : i32
    %23 = vector.broadcast %c0_i32_8 : i32 to vector<1x512xi32>
    %24 = arith.cmpi sge, %22, %23 : vector<1x512xi32>
    %c-1_i32_9 = arith.constant -1 : i32
    %25 = vector.broadcast %c-1_i32_9 : i32 to vector<1x512xi32>
    %26 = arith.addi %0, %25 : vector<1x512xi32>
    %c16_i32_10 = arith.constant 16 : i32
    %27 = vector.broadcast %c16_i32_10 : i32 to vector<1x512xi32>
    %28 = arith.cmpi slt, %26, %27 : vector<1x512xi32>
    %29 = arith.andi %24, %28 : vector<1x512xi1>
    %c-1_i32_11 = arith.constant -1 : i32
    %30 = vector.broadcast %c-1_i32_11 : i32 to vector<1x512xi32>
    %31 = arith.addi %0, %30 : vector<1x512xi32>
    %c0_i32_12 = arith.constant 0 : i32
    %32 = vector.broadcast %c0_i32_12 : i32 to vector<1x512xi32>
    %33 = arith.cmpi sge, %31, %32 : vector<1x512xi32>
    %c-1_i32_13 = arith.constant -1 : i32
    %34 = vector.broadcast %c-1_i32_13 : i32 to vector<1x512xi32>
    %35 = arith.addi %0, %34 : vector<1x512xi32>
    %c16_i32_14 = arith.constant 16 : i32
    %36 = vector.broadcast %c16_i32_14 : i32 to vector<1x512xi32>
    %37 = arith.cmpi slt, %35, %36 : vector<1x512xi32>
    %38 = arith.andi %33, %37 : vector<1x512xi1>
    %c1_i32 = arith.constant 1 : i32
    %39 = vector.broadcast %c1_i32 : i32 to vector<1x512xi32>
    %40 = arith.addi %1, %39 : vector<1x512xi32>
    %c0_i32_15 = arith.constant 0 : i32
    %41 = vector.broadcast %c0_i32_15 : i32 to vector<1x512xi32>
    %42 = arith.cmpi sge, %40, %41 : vector<1x512xi32>
    %c1_i32_16 = arith.constant 1 : i32
    %43 = vector.broadcast %c1_i32_16 : i32 to vector<1x512xi32>
    %44 = arith.addi %1, %43 : vector<1x512xi32>
    %c16_i32_17 = arith.constant 16 : i32
    %45 = vector.broadcast %c16_i32_17 : i32 to vector<1x512xi32>
    %46 = arith.cmpi slt, %44, %45 : vector<1x512xi32>
    %47 = arith.andi %42, %46 : vector<1x512xi1>
    %48 = arith.andi %38, %47 : vector<1x512xi1>
    %c-1_i32_18 = arith.constant -1 : i32
    %49 = vector.broadcast %c-1_i32_18 : i32 to vector<1x512xi32>
    %50 = arith.addi %1, %49 : vector<1x512xi32>
    %c0_i32_19 = arith.constant 0 : i32
    %51 = vector.broadcast %c0_i32_19 : i32 to vector<1x512xi32>
    %52 = arith.cmpi sge, %50, %51 : vector<1x512xi32>
    %c-1_i32_20 = arith.constant -1 : i32
    %53 = vector.broadcast %c-1_i32_20 : i32 to vector<1x512xi32>
    %54 = arith.addi %1, %53 : vector<1x512xi32>
    %c16_i32_21 = arith.constant 16 : i32
    %55 = vector.broadcast %c16_i32_21 : i32 to vector<1x512xi32>
    %56 = arith.cmpi slt, %54, %55 : vector<1x512xi32>
    %57 = arith.andi %52, %56 : vector<1x512xi1>
    %c1_i32_22 = arith.constant 1 : i32
    %58 = vector.broadcast %c1_i32_22 : i32 to vector<1x512xi32>
    %59 = arith.addi %1, %58 : vector<1x512xi32>
    %c0_i32_23 = arith.constant 0 : i32
    %60 = vector.broadcast %c0_i32_23 : i32 to vector<1x512xi32>
    %61 = arith.cmpi sge, %59, %60 : vector<1x512xi32>
    %c1_i32_24 = arith.constant 1 : i32
    %62 = vector.broadcast %c1_i32_24 : i32 to vector<1x512xi32>
    %63 = arith.addi %1, %62 : vector<1x512xi32>
    %c16_i32_25 = arith.constant 16 : i32
    %64 = vector.broadcast %c16_i32_25 : i32 to vector<1x512xi32>
    %65 = arith.cmpi slt, %63, %64 : vector<1x512xi32>
    %66 = arith.andi %61, %65 : vector<1x512xi1>
    %c1_i32_26 = arith.constant 1 : i32
    %67 = vector.broadcast %c1_i32_26 : i32 to vector<1x512xi32>
    %68 = arith.addi %0, %67 : vector<1x512xi32>
    %c0_i32_27 = arith.constant 0 : i32
    %69 = vector.broadcast %c0_i32_27 : i32 to vector<1x512xi32>
    %70 = arith.cmpi sge, %68, %69 : vector<1x512xi32>
    %c1_i32_28 = arith.constant 1 : i32
    %71 = vector.broadcast %c1_i32_28 : i32 to vector<1x512xi32>
    %72 = arith.addi %0, %71 : vector<1x512xi32>
    %c16_i32_29 = arith.constant 16 : i32
    %73 = vector.broadcast %c16_i32_29 : i32 to vector<1x512xi32>
    %74 = arith.cmpi slt, %72, %73 : vector<1x512xi32>
    %75 = arith.andi %70, %74 : vector<1x512xi1>
    %c-1_i32_30 = arith.constant -1 : i32
    %76 = vector.broadcast %c-1_i32_30 : i32 to vector<1x512xi32>
    %77 = arith.addi %1, %76 : vector<1x512xi32>
    %c0_i32_31 = arith.constant 0 : i32
    %78 = vector.broadcast %c0_i32_31 : i32 to vector<1x512xi32>
    %79 = arith.cmpi sge, %77, %78 : vector<1x512xi32>
    %c-1_i32_32 = arith.constant -1 : i32
    %80 = vector.broadcast %c-1_i32_32 : i32 to vector<1x512xi32>
    %81 = arith.addi %1, %80 : vector<1x512xi32>
    %c16_i32_33 = arith.constant 16 : i32
    %82 = vector.broadcast %c16_i32_33 : i32 to vector<1x512xi32>
    %83 = arith.cmpi slt, %81, %82 : vector<1x512xi32>
    %84 = arith.andi %79, %83 : vector<1x512xi1>
    %85 = arith.andi %75, %84 : vector<1x512xi1>
    %c1_i32_34 = arith.constant 1 : i32
    %86 = vector.broadcast %c1_i32_34 : i32 to vector<1x512xi32>
    %87 = arith.addi %0, %86 : vector<1x512xi32>
    %c0_i32_35 = arith.constant 0 : i32
    %88 = vector.broadcast %c0_i32_35 : i32 to vector<1x512xi32>
    %89 = arith.cmpi sge, %87, %88 : vector<1x512xi32>
    %c1_i32_36 = arith.constant 1 : i32
    %90 = vector.broadcast %c1_i32_36 : i32 to vector<1x512xi32>
    %91 = arith.addi %0, %90 : vector<1x512xi32>
    %c16_i32_37 = arith.constant 16 : i32
    %92 = vector.broadcast %c16_i32_37 : i32 to vector<1x512xi32>
    %93 = arith.cmpi slt, %91, %92 : vector<1x512xi32>
    %94 = arith.andi %89, %93 : vector<1x512xi1>
    %c1_i32_38 = arith.constant 1 : i32
    %95 = vector.broadcast %c1_i32_38 : i32 to vector<1x512xi32>
    %96 = arith.addi %0, %95 : vector<1x512xi32>
    %c0_i32_39 = arith.constant 0 : i32
    %97 = vector.broadcast %c0_i32_39 : i32 to vector<1x512xi32>
    %98 = arith.cmpi sge, %96, %97 : vector<1x512xi32>
    %c1_i32_40 = arith.constant 1 : i32
    %99 = vector.broadcast %c1_i32_40 : i32 to vector<1x512xi32>
    %100 = arith.addi %0, %99 : vector<1x512xi32>
    %c16_i32_41 = arith.constant 16 : i32
    %101 = vector.broadcast %c16_i32_41 : i32 to vector<1x512xi32>
    %102 = arith.cmpi slt, %100, %101 : vector<1x512xi32>
    %103 = arith.andi %98, %102 : vector<1x512xi1>
    %c1_i32_42 = arith.constant 1 : i32
    %104 = vector.broadcast %c1_i32_42 : i32 to vector<1x512xi32>
    %105 = arith.addi %1, %104 : vector<1x512xi32>
    %c0_i32_43 = arith.constant 0 : i32
    %106 = vector.broadcast %c0_i32_43 : i32 to vector<1x512xi32>
    %107 = arith.cmpi sge, %105, %106 : vector<1x512xi32>
    %c1_i32_44 = arith.constant 1 : i32
    %108 = vector.broadcast %c1_i32_44 : i32 to vector<1x512xi32>
    %109 = arith.addi %1, %108 : vector<1x512xi32>
    %c16_i32_45 = arith.constant 16 : i32
    %110 = vector.broadcast %c16_i32_45 : i32 to vector<1x512xi32>
    %111 = arith.cmpi slt, %109, %110 : vector<1x512xi32>
    %112 = arith.andi %107, %111 : vector<1x512xi1>
    %113 = arith.andi %103, %112 : vector<1x512xi1>
    %c-2_i32 = arith.constant -2 : i32
    %114 = vector.broadcast %c-2_i32 : i32 to vector<1x512xi32>
    %115 = arith.addi %0, %114 : vector<1x512xi32>
    %c0_i32_46 = arith.constant 0 : i32
    %116 = vector.broadcast %c0_i32_46 : i32 to vector<1x512xi32>
    %117 = arith.cmpi sge, %115, %116 : vector<1x512xi32>
    %c-2_i32_47 = arith.constant -2 : i32
    %118 = vector.broadcast %c-2_i32_47 : i32 to vector<1x512xi32>
    %119 = arith.addi %0, %118 : vector<1x512xi32>
    %c16_i32_48 = arith.constant 16 : i32
    %120 = vector.broadcast %c16_i32_48 : i32 to vector<1x512xi32>
    %121 = arith.cmpi slt, %119, %120 : vector<1x512xi32>
    %122 = arith.andi %117, %121 : vector<1x512xi1>
    %c-2_i32_49 = arith.constant -2 : i32
    %123 = vector.broadcast %c-2_i32_49 : i32 to vector<1x512xi32>
    %124 = arith.addi %1, %123 : vector<1x512xi32>
    %c0_i32_50 = arith.constant 0 : i32
    %125 = vector.broadcast %c0_i32_50 : i32 to vector<1x512xi32>
    %126 = arith.cmpi sge, %124, %125 : vector<1x512xi32>
    %c-2_i32_51 = arith.constant -2 : i32
    %127 = vector.broadcast %c-2_i32_51 : i32 to vector<1x512xi32>
    %128 = arith.addi %1, %127 : vector<1x512xi32>
    %c16_i32_52 = arith.constant 16 : i32
    %129 = vector.broadcast %c16_i32_52 : i32 to vector<1x512xi32>
    %130 = arith.cmpi slt, %128, %129 : vector<1x512xi32>
    %131 = arith.andi %126, %130 : vector<1x512xi1>
    %132 = arith.andi %122, %131 : vector<1x512xi1>
    %c-2_i32_53 = arith.constant -2 : i32
    %133 = vector.broadcast %c-2_i32_53 : i32 to vector<1x512xi32>
    %134 = arith.addi %0, %133 : vector<1x512xi32>
    %c0_i32_54 = arith.constant 0 : i32
    %135 = vector.broadcast %c0_i32_54 : i32 to vector<1x512xi32>
    %136 = arith.cmpi sge, %134, %135 : vector<1x512xi32>
    %c-2_i32_55 = arith.constant -2 : i32
    %137 = vector.broadcast %c-2_i32_55 : i32 to vector<1x512xi32>
    %138 = arith.addi %0, %137 : vector<1x512xi32>
    %c16_i32_56 = arith.constant 16 : i32
    %139 = vector.broadcast %c16_i32_56 : i32 to vector<1x512xi32>
    %140 = arith.cmpi slt, %138, %139 : vector<1x512xi32>
    %141 = arith.andi %136, %140 : vector<1x512xi1>
    %c-2_i32_57 = arith.constant -2 : i32
    %142 = vector.broadcast %c-2_i32_57 : i32 to vector<1x512xi32>
    %143 = arith.addi %0, %142 : vector<1x512xi32>
    %c0_i32_58 = arith.constant 0 : i32
    %144 = vector.broadcast %c0_i32_58 : i32 to vector<1x512xi32>
    %145 = arith.cmpi sge, %143, %144 : vector<1x512xi32>
    %c-2_i32_59 = arith.constant -2 : i32
    %146 = vector.broadcast %c-2_i32_59 : i32 to vector<1x512xi32>
    %147 = arith.addi %0, %146 : vector<1x512xi32>
    %c16_i32_60 = arith.constant 16 : i32
    %148 = vector.broadcast %c16_i32_60 : i32 to vector<1x512xi32>
    %149 = arith.cmpi slt, %147, %148 : vector<1x512xi32>
    %150 = arith.andi %145, %149 : vector<1x512xi1>
    %c2_i32 = arith.constant 2 : i32
    %151 = vector.broadcast %c2_i32 : i32 to vector<1x512xi32>
    %152 = arith.addi %1, %151 : vector<1x512xi32>
    %c0_i32_61 = arith.constant 0 : i32
    %153 = vector.broadcast %c0_i32_61 : i32 to vector<1x512xi32>
    %154 = arith.cmpi sge, %152, %153 : vector<1x512xi32>
    %c2_i32_62 = arith.constant 2 : i32
    %155 = vector.broadcast %c2_i32_62 : i32 to vector<1x512xi32>
    %156 = arith.addi %1, %155 : vector<1x512xi32>
    %c16_i32_63 = arith.constant 16 : i32
    %157 = vector.broadcast %c16_i32_63 : i32 to vector<1x512xi32>
    %158 = arith.cmpi slt, %156, %157 : vector<1x512xi32>
    %159 = arith.andi %154, %158 : vector<1x512xi1>
    %160 = arith.andi %150, %159 : vector<1x512xi1>
    %c-2_i32_64 = arith.constant -2 : i32
    %161 = vector.broadcast %c-2_i32_64 : i32 to vector<1x512xi32>
    %162 = arith.addi %1, %161 : vector<1x512xi32>
    %c0_i32_65 = arith.constant 0 : i32
    %163 = vector.broadcast %c0_i32_65 : i32 to vector<1x512xi32>
    %164 = arith.cmpi sge, %162, %163 : vector<1x512xi32>
    %c-2_i32_66 = arith.constant -2 : i32
    %165 = vector.broadcast %c-2_i32_66 : i32 to vector<1x512xi32>
    %166 = arith.addi %1, %165 : vector<1x512xi32>
    %c16_i32_67 = arith.constant 16 : i32
    %167 = vector.broadcast %c16_i32_67 : i32 to vector<1x512xi32>
    %168 = arith.cmpi slt, %166, %167 : vector<1x512xi32>
    %169 = arith.andi %164, %168 : vector<1x512xi1>
    %c2_i32_68 = arith.constant 2 : i32
    %170 = vector.broadcast %c2_i32_68 : i32 to vector<1x512xi32>
    %171 = arith.addi %1, %170 : vector<1x512xi32>
    %c0_i32_69 = arith.constant 0 : i32
    %172 = vector.broadcast %c0_i32_69 : i32 to vector<1x512xi32>
    %173 = arith.cmpi sge, %171, %172 : vector<1x512xi32>
    %c2_i32_70 = arith.constant 2 : i32
    %174 = vector.broadcast %c2_i32_70 : i32 to vector<1x512xi32>
    %175 = arith.addi %1, %174 : vector<1x512xi32>
    %c16_i32_71 = arith.constant 16 : i32
    %176 = vector.broadcast %c16_i32_71 : i32 to vector<1x512xi32>
    %177 = arith.cmpi slt, %175, %176 : vector<1x512xi32>
    %178 = arith.andi %173, %177 : vector<1x512xi1>
    %c2_i32_72 = arith.constant 2 : i32
    %179 = vector.broadcast %c2_i32_72 : i32 to vector<1x512xi32>
    %180 = arith.addi %0, %179 : vector<1x512xi32>
    %c0_i32_73 = arith.constant 0 : i32
    %181 = vector.broadcast %c0_i32_73 : i32 to vector<1x512xi32>
    %182 = arith.cmpi sge, %180, %181 : vector<1x512xi32>
    %c2_i32_74 = arith.constant 2 : i32
    %183 = vector.broadcast %c2_i32_74 : i32 to vector<1x512xi32>
    %184 = arith.addi %0, %183 : vector<1x512xi32>
    %c16_i32_75 = arith.constant 16 : i32
    %185 = vector.broadcast %c16_i32_75 : i32 to vector<1x512xi32>
    %186 = arith.cmpi slt, %184, %185 : vector<1x512xi32>
    %187 = arith.andi %182, %186 : vector<1x512xi1>
    %c-2_i32_76 = arith.constant -2 : i32
    %188 = vector.broadcast %c-2_i32_76 : i32 to vector<1x512xi32>
    %189 = arith.addi %1, %188 : vector<1x512xi32>
    %c0_i32_77 = arith.constant 0 : i32
    %190 = vector.broadcast %c0_i32_77 : i32 to vector<1x512xi32>
    %191 = arith.cmpi sge, %189, %190 : vector<1x512xi32>
    %c-2_i32_78 = arith.constant -2 : i32
    %192 = vector.broadcast %c-2_i32_78 : i32 to vector<1x512xi32>
    %193 = arith.addi %1, %192 : vector<1x512xi32>
    %c16_i32_79 = arith.constant 16 : i32
    %194 = vector.broadcast %c16_i32_79 : i32 to vector<1x512xi32>
    %195 = arith.cmpi slt, %193, %194 : vector<1x512xi32>
    %196 = arith.andi %191, %195 : vector<1x512xi1>
    %197 = arith.andi %187, %196 : vector<1x512xi1>
    %c2_i32_80 = arith.constant 2 : i32
    %198 = vector.broadcast %c2_i32_80 : i32 to vector<1x512xi32>
    %199 = arith.addi %0, %198 : vector<1x512xi32>
    %c0_i32_81 = arith.constant 0 : i32
    %200 = vector.broadcast %c0_i32_81 : i32 to vector<1x512xi32>
    %201 = arith.cmpi sge, %199, %200 : vector<1x512xi32>
    %c2_i32_82 = arith.constant 2 : i32
    %202 = vector.broadcast %c2_i32_82 : i32 to vector<1x512xi32>
    %203 = arith.addi %0, %202 : vector<1x512xi32>
    %c16_i32_83 = arith.constant 16 : i32
    %204 = vector.broadcast %c16_i32_83 : i32 to vector<1x512xi32>
    %205 = arith.cmpi slt, %203, %204 : vector<1x512xi32>
    %206 = arith.andi %201, %205 : vector<1x512xi1>
    %c2_i32_84 = arith.constant 2 : i32
    %207 = vector.broadcast %c2_i32_84 : i32 to vector<1x512xi32>
    %208 = arith.addi %0, %207 : vector<1x512xi32>
    %c0_i32_85 = arith.constant 0 : i32
    %209 = vector.broadcast %c0_i32_85 : i32 to vector<1x512xi32>
    %210 = arith.cmpi sge, %208, %209 : vector<1x512xi32>
    %c2_i32_86 = arith.constant 2 : i32
    %211 = vector.broadcast %c2_i32_86 : i32 to vector<1x512xi32>
    %212 = arith.addi %0, %211 : vector<1x512xi32>
    %c16_i32_87 = arith.constant 16 : i32
    %213 = vector.broadcast %c16_i32_87 : i32 to vector<1x512xi32>
    %214 = arith.cmpi slt, %212, %213 : vector<1x512xi32>
    %215 = arith.andi %210, %214 : vector<1x512xi1>
    %c2_i32_88 = arith.constant 2 : i32
    %216 = vector.broadcast %c2_i32_88 : i32 to vector<1x512xi32>
    %217 = arith.addi %1, %216 : vector<1x512xi32>
    %c0_i32_89 = arith.constant 0 : i32
    %218 = vector.broadcast %c0_i32_89 : i32 to vector<1x512xi32>
    %219 = arith.cmpi sge, %217, %218 : vector<1x512xi32>
    %c2_i32_90 = arith.constant 2 : i32
    %220 = vector.broadcast %c2_i32_90 : i32 to vector<1x512xi32>
    %221 = arith.addi %1, %220 : vector<1x512xi32>
    %c16_i32_91 = arith.constant 16 : i32
    %222 = vector.broadcast %c16_i32_91 : i32 to vector<1x512xi32>
    %223 = arith.cmpi slt, %221, %222 : vector<1x512xi32>
    %224 = arith.andi %219, %223 : vector<1x512xi1>
    %225 = arith.andi %215, %224 : vector<1x512xi1>
    %c0_92 = arith.constant 0 : index
    %c0_93 = arith.constant 0 : index
    %c0_94 = arith.constant 0 : index
    %226 = vector.load %arg1[%c0_92, %c0_93, %c0_94] : memref<1x16x512xf32, #tpu.memory_space<vmem>>, vector<1x16x512xf32>
    %227 = vector.shape_cast %226 : vector<1x16x512xf32> to vector<16x512xf32>
    %cst = arith.constant 0.000000e+00 : f32
    %228 = vector.broadcast %cst : f32 to vector<16x512xf32>
    %229 = arith.maximumf %227, %228 : vector<16x512xf32>
    %c0_95 = arith.constant 0 : index
    %c0_96 = arith.constant 0 : index
    %230 = vector.load %arg3[%c0_95, %c0_96] : memref<16x16xf32, #tpu.memory_space<vmem>>, vector<16x16xf32>
    %cst_97 = arith.constant dense<0.000000e+00> : vector<16x512xf32>
    %231 = tpu.matmul %230, %229, %cst_97 {dimension_numbers = #tpu.dot_dimension_numbers<[1], [0], [0], [1], [0, 0, 1, 1], [], []>} : vector<16x16xf32>, vector<16x512xf32>, vector<16x512xf32> -> vector<16x512xf32>
    %c0_98 = arith.constant 0 : index
    %c0_99 = arith.constant 0 : index
    %232 = vector.load %arg4[%c0_98, %c0_99] : memref<16x1xf32, #tpu.memory_space<vmem>>, vector<16x1xf32>
    %233 = vector.broadcast %232 : vector<16x1xf32> to vector<16x512xf32>
    %234 = arith.addf %231, %233 : vector<16x512xf32>
    %235 = vector.extract_strided_slice %234 {offsets = [0, 0], sizes = [8, 512], strides = [1, 1]} : vector<16x512xf32> to vector<8x512xf32>
    %236 = vector.extract_strided_slice %234 {offsets = [8, 0], sizes = [8, 512], strides = [1, 1]} : vector<16x512xf32> to vector<8x512xf32>
    %cst_100 = arith.constant 0.000000e+00 : f32
    %237 = vector.broadcast %cst_100 : f32 to vector<8x512xf32>
    %238 = arith.maximumf %235, %237 : vector<8x512xf32>
    %cst_101 = arith.constant 0.000000e+00 : f32
    %239 = vector.broadcast %cst_101 : f32 to vector<8x512xf32>
    %c17_i32 = arith.constant 17 : i32
    %240 = tpu.dynamic_rotate %238 by %c17_i32 dim 1 : vector<8x512xf32>, i32 -> vector<8x512xf32>
    %cst_102 = arith.constant 0.000000e+00 : f32
    %241 = vector.shape_cast %20 : vector<1x512xi1> to vector<1x512xi1>
    %242 = vector.broadcast %241 : vector<1x512xi1> to vector<8x512xi1>
    %243 = vector.broadcast %cst_102 : f32 to vector<8x512xf32>
    %244 = arith.select %242, %240, %243 : vector<8x512xi1>, vector<8x512xf32>
    %c0_103 = arith.constant 0 : index
    %c0_104 = arith.constant 0 : index
    %245 = vector.load %arg5[%c0_103, %c0_104] : memref<8x99xf32, #tpu.memory_space<vmem>>, vector<8x1xf32>
    %246 = vector.broadcast %245 : vector<8x1xf32> to vector<8x512xf32>
    %247 = arith.mulf %244, %246 : vector<8x512xf32>
    %248 = arith.addf %239, %247 : vector<8x512xf32>
    %c16_i32_105 = arith.constant 16 : i32
    %249 = tpu.dynamic_rotate %238 by %c16_i32_105 dim 1 : vector<8x512xf32>, i32 -> vector<8x512xf32>
    %cst_106 = arith.constant 0.000000e+00 : f32
    %250 = vector.shape_cast %29 : vector<1x512xi1> to vector<1x512xi1>
    %251 = vector.broadcast %250 : vector<1x512xi1> to vector<8x512xi1>
    %252 = vector.broadcast %cst_106 : f32 to vector<8x512xf32>
    %253 = arith.select %251, %249, %252 : vector<8x512xi1>, vector<8x512xf32>
    %c0_107 = arith.constant 0 : index
    %c1_108 = arith.constant 1 : index
    %254 = vector.load %arg5[%c0_107, %c1_108] : memref<8x99xf32, #tpu.memory_space<vmem>>, vector<8x1xf32>
    %255 = vector.broadcast %254 : vector<8x1xf32> to vector<8x512xf32>
    %256 = arith.mulf %253, %255 : vector<8x512xf32>
    %257 = arith.addf %248, %256 : vector<8x512xf32>
    %c15_i32 = arith.constant 15 : i32
    %258 = tpu.dynamic_rotate %238 by %c15_i32 dim 1 : vector<8x512xf32>, i32 -> vector<8x512xf32>
    %cst_109 = arith.constant 0.000000e+00 : f32
    %259 = vector.shape_cast %48 : vector<1x512xi1> to vector<1x512xi1>
    %260 = vector.broadcast %259 : vector<1x512xi1> to vector<8x512xi1>
    %261 = vector.broadcast %cst_109 : f32 to vector<8x512xf32>
    %262 = arith.select %260, %258, %261 : vector<8x512xi1>, vector<8x512xf32>
    %c0_110 = arith.constant 0 : index
    %c2 = arith.constant 2 : index
    %263 = vector.load %arg5[%c0_110, %c2] : memref<8x99xf32, #tpu.memory_space<vmem>>, vector<8x1xf32>
    %264 = vector.broadcast %263 : vector<8x1xf32> to vector<8x512xf32>
    %265 = arith.mulf %262, %264 : vector<8x512xf32>
    %266 = arith.addf %257, %265 : vector<8x512xf32>
    %c1_i32_111 = arith.constant 1 : i32
    %267 = tpu.dynamic_rotate %238 by %c1_i32_111 dim 1 : vector<8x512xf32>, i32 -> vector<8x512xf32>
    %cst_112 = arith.constant 0.000000e+00 : f32
    %268 = vector.shape_cast %57 : vector<1x512xi1> to vector<1x512xi1>
    %269 = vector.broadcast %268 : vector<1x512xi1> to vector<8x512xi1>
    %270 = vector.broadcast %cst_112 : f32 to vector<8x512xf32>
    %271 = arith.select %269, %267, %270 : vector<8x512xi1>, vector<8x512xf32>
    %c0_113 = arith.constant 0 : index
    %c3 = arith.constant 3 : index
    %272 = vector.load %arg5[%c0_113, %c3] : memref<8x99xf32, #tpu.memory_space<vmem>>, vector<8x1xf32>
    %273 = vector.broadcast %272 : vector<8x1xf32> to vector<8x512xf32>
    %274 = arith.mulf %271, %273 : vector<8x512xf32>
    %275 = arith.addf %266, %274 : vector<8x512xf32>
    %c0_114 = arith.constant 0 : index
    %c4 = arith.constant 4 : index
    %276 = vector.load %arg5[%c0_114, %c4] : memref<8x99xf32, #tpu.memory_space<vmem>>, vector<8x1xf32>
    %277 = vector.broadcast %276 : vector<8x1xf32> to vector<8x512xf32>
    %278 = arith.mulf %238, %277 : vector<8x512xf32>
    %279 = arith.addf %275, %278 : vector<8x512xf32>
    %c511_i32 = arith.constant 511 : i32
    %280 = tpu.dynamic_rotate %238 by %c511_i32 dim 1 : vector<8x512xf32>, i32 -> vector<8x512xf32>
    %cst_115 = arith.constant 0.000000e+00 : f32
    %281 = vector.shape_cast %66 : vector<1x512xi1> to vector<1x512xi1>
    %282 = vector.broadcast %281 : vector<1x512xi1> to vector<8x512xi1>
    %283 = vector.broadcast %cst_115 : f32 to vector<8x512xf32>
    %284 = arith.select %282, %280, %283 : vector<8x512xi1>, vector<8x512xf32>
    %c0_116 = arith.constant 0 : index
    %c5 = arith.constant 5 : index
    %285 = vector.load %arg5[%c0_116, %c5] : memref<8x99xf32, #tpu.memory_space<vmem>>, vector<8x1xf32>
    %286 = vector.broadcast %285 : vector<8x1xf32> to vector<8x512xf32>
    %287 = arith.mulf %284, %286 : vector<8x512xf32>
    %288 = arith.addf %279, %287 : vector<8x512xf32>
    %c497_i32 = arith.constant 497 : i32
    %289 = tpu.dynamic_rotate %238 by %c497_i32 dim 1 : vector<8x512xf32>, i32 -> vector<8x512xf32>
    %cst_117 = arith.constant 0.000000e+00 : f32
    %290 = vector.shape_cast %85 : vector<1x512xi1> to vector<1x512xi1>
    %291 = vector.broadcast %290 : vector<1x512xi1> to vector<8x512xi1>
    %292 = vector.broadcast %cst_117 : f32 to vector<8x512xf32>
    %293 = arith.select %291, %289, %292 : vector<8x512xi1>, vector<8x512xf32>
    %c0_118 = arith.constant 0 : index
    %c6 = arith.constant 6 : index
    %294 = vector.load %arg5[%c0_118, %c6] : memref<8x99xf32, #tpu.memory_space<vmem>>, vector<8x1xf32>
    %295 = vector.broadcast %294 : vector<8x1xf32> to vector<8x512xf32>
    %296 = arith.mulf %293, %295 : vector<8x512xf32>
    %297 = arith.addf %288, %296 : vector<8x512xf32>
    %c496_i32 = arith.constant 496 : i32
    %298 = tpu.dynamic_rotate %238 by %c496_i32 dim 1 : vector<8x512xf32>, i32 -> vector<8x512xf32>
    %cst_119 = arith.constant 0.000000e+00 : f32
    %299 = vector.shape_cast %94 : vector<1x512xi1> to vector<1x512xi1>
    %300 = vector.broadcast %299 : vector<1x512xi1> to vector<8x512xi1>
    %301 = vector.broadcast %cst_119 : f32 to vector<8x512xf32>
    %302 = arith.select %300, %298, %301 : vector<8x512xi1>, vector<8x512xf32>
    %c0_120 = arith.constant 0 : index
    %c7 = arith.constant 7 : index
    %303 = vector.load %arg5[%c0_120, %c7] : memref<8x99xf32, #tpu.memory_space<vmem>>, vector<8x1xf32>
    %304 = vector.broadcast %303 : vector<8x1xf32> to vector<8x512xf32>
    %305 = arith.mulf %302, %304 : vector<8x512xf32>
    %306 = arith.addf %297, %305 : vector<8x512xf32>
    %c495_i32 = arith.constant 495 : i32
    %307 = tpu.dynamic_rotate %238 by %c495_i32 dim 1 : vector<8x512xf32>, i32 -> vector<8x512xf32>
    %cst_121 = arith.constant 0.000000e+00 : f32
    %308 = vector.shape_cast %113 : vector<1x512xi1> to vector<1x512xi1>
    %309 = vector.broadcast %308 : vector<1x512xi1> to vector<8x512xi1>
    %310 = vector.broadcast %cst_121 : f32 to vector<8x512xf32>
    %311 = arith.select %309, %307, %310 : vector<8x512xi1>, vector<8x512xf32>
    %c0_122 = arith.constant 0 : index
    %c8 = arith.constant 8 : index
    %312 = vector.load %arg5[%c0_122, %c8] : memref<8x99xf32, #tpu.memory_space<vmem>>, vector<8x1xf32>
    %313 = vector.broadcast %312 : vector<8x1xf32> to vector<8x512xf32>
    %314 = arith.mulf %311, %313 : vector<8x512xf32>
    %315 = arith.addf %306, %314 : vector<8x512xf32>
    %c0_123 = arith.constant 0 : index
    %c0_124 = arith.constant 0 : index
    %c0_125 = arith.constant 0 : index
    %316 = vector.load %arg6[%c0_123, %c0_124, %c0_125] : memref<11x8x8xf32, #tpu.memory_space<vmem>>, vector<1x8x8xf32>
    %317 = vector.shape_cast %316 : vector<1x8x8xf32> to vector<8x8xf32>
    %cst_126 = arith.constant dense<0.000000e+00> : vector<8x512xf32>
    %318 = tpu.matmul %317, %315, %cst_126 {dimension_numbers = #tpu.dot_dimension_numbers<[1], [0], [0], [1], [0, 0, 1, 1], [], []>} : vector<8x8xf32>, vector<8x512xf32>, vector<8x512xf32> -> vector<8x512xf32>
    %c0_127 = arith.constant 0 : index
    %c0_128 = arith.constant 0 : index
    %c0_129 = arith.constant 0 : index
    %319 = vector.load %arg7[%c0_127, %c0_128, %c0_129] : memref<11x8x1xf32, #tpu.memory_space<vmem>>, vector<1x8x1xf32>
    %320 = vector.shape_cast %319 : vector<1x8x1xf32> to vector<8x1xf32>
    %321 = vector.broadcast %320 : vector<8x1xf32> to vector<8x512xf32>
    %322 = arith.addf %318, %321 : vector<8x512xf32>
    %cst_130 = arith.constant 0.000000e+00 : f32
    %323 = vector.broadcast %cst_130 : f32 to vector<8x512xf32>
    %324 = arith.maximumf %322, %323 : vector<8x512xf32>
    %cst_131 = arith.constant 0.000000e+00 : f32
    %325 = vector.broadcast %cst_131 : f32 to vector<8x512xf32>
    %c17_i32_132 = arith.constant 17 : i32
    %326 = tpu.dynamic_rotate %324 by %c17_i32_132 dim 1 : vector<8x512xf32>, i32 -> vector<8x512xf32>
    %cst_133 = arith.constant 0.000000e+00 : f32
    %327 = vector.shape_cast %20 : vector<1x512xi1> to vector<1x512xi1>
    %328 = vector.broadcast %327 : vector<1x512xi1> to vector<8x512xi1>
    %329 = vector.broadcast %cst_133 : f32 to vector<8x512xf32>
    %330 = arith.select %328, %326, %329 : vector<8x512xi1>, vector<8x512xf32>
    %c0_134 = arith.constant 0 : index
    %c9 = arith.constant 9 : index
    %331 = vector.load %arg5[%c0_134, %c9] : memref<8x99xf32, #tpu.memory_space<vmem>>, vector<8x1xf32>
    %332 = vector.broadcast %331 : vector<8x1xf32> to vector<8x512xf32>
    %333 = arith.mulf %330, %332 : vector<8x512xf32>
    %334 = arith.addf %325, %333 : vector<8x512xf32>
    %c16_i32_135 = arith.constant 16 : i32
    %335 = tpu.dynamic_rotate %324 by %c16_i32_135 dim 1 : vector<8x512xf32>, i32 -> vector<8x512xf32>
    %cst_136 = arith.constant 0.000000e+00 : f32
    %336 = vector.shape_cast %29 : vector<1x512xi1> to vector<1x512xi1>
    %337 = vector.broadcast %336 : vector<1x512xi1> to vector<8x512xi1>
    %338 = vector.broadcast %cst_136 : f32 to vector<8x512xf32>
    %339 = arith.select %337, %335, %338 : vector<8x512xi1>, vector<8x512xf32>
    %c0_137 = arith.constant 0 : index
    %c10 = arith.constant 10 : index
    %340 = vector.load %arg5[%c0_137, %c10] : memref<8x99xf32, #tpu.memory_space<vmem>>, vector<8x1xf32>
    %341 = vector.broadcast %340 : vector<8x1xf32> to vector<8x512xf32>
    %342 = arith.mulf %339, %341 : vector<8x512xf32>
    %343 = arith.addf %334, %342 : vector<8x512xf32>
    %c15_i32_138 = arith.constant 15 : i32
    %344 = tpu.dynamic_rotate %324 by %c15_i32_138 dim 1 : vector<8x512xf32>, i32 -> vector<8x512xf32>
    %cst_139 = arith.constant 0.000000e+00 : f32
    %345 = vector.shape_cast %48 : vector<1x512xi1> to vector<1x512xi1>
    %346 = vector.broadcast %345 : vector<1x512xi1> to vector<8x512xi1>
    %347 = vector.broadcast %cst_139 : f32 to vector<8x512xf32>
    %348 = arith.select %346, %344, %347 : vector<8x512xi1>, vector<8x512xf32>
    %c0_140 = arith.constant 0 : index
    %c11 = arith.constant 11 : index
    %349 = vector.load %arg5[%c0_140, %c11] : memref<8x99xf32, #tpu.memory_space<vmem>>, vector<8x1xf32>
    %350 = vector.broadcast %349 : vector<8x1xf32> to vector<8x512xf32>
    %351 = arith.mulf %348, %350 : vector<8x512xf32>
    %352 = arith.addf %343, %351 : vector<8x512xf32>
    %c1_i32_141 = arith.constant 1 : i32
    %353 = tpu.dynamic_rotate %324 by %c1_i32_141 dim 1 : vector<8x512xf32>, i32 -> vector<8x512xf32>
    %cst_142 = arith.constant 0.000000e+00 : f32
    %354 = vector.shape_cast %57 : vector<1x512xi1> to vector<1x512xi1>
    %355 = vector.broadcast %354 : vector<1x512xi1> to vector<8x512xi1>
    %356 = vector.broadcast %cst_142 : f32 to vector<8x512xf32>
    %357 = arith.select %355, %353, %356 : vector<8x512xi1>, vector<8x512xf32>
    %c0_143 = arith.constant 0 : index
    %c12 = arith.constant 12 : index
    %358 = vector.load %arg5[%c0_143, %c12] : memref<8x99xf32, #tpu.memory_space<vmem>>, vector<8x1xf32>
    %359 = vector.broadcast %358 : vector<8x1xf32> to vector<8x512xf32>
    %360 = arith.mulf %357, %359 : vector<8x512xf32>
    %361 = arith.addf %352, %360 : vector<8x512xf32>
    %c0_144 = arith.constant 0 : index
    %c13 = arith.constant 13 : index
    %362 = vector.load %arg5[%c0_144, %c13] : memref<8x99xf32, #tpu.memory_space<vmem>>, vector<8x1xf32>
    %363 = vector.broadcast %362 : vector<8x1xf32> to vector<8x512xf32>
    %364 = arith.mulf %324, %363 : vector<8x512xf32>
    %365 = arith.addf %361, %364 : vector<8x512xf32>
    %c511_i32_145 = arith.constant 511 : i32
    %366 = tpu.dynamic_rotate %324 by %c511_i32_145 dim 1 : vector<8x512xf32>, i32 -> vector<8x512xf32>
    %cst_146 = arith.constant 0.000000e+00 : f32
    %367 = vector.shape_cast %66 : vector<1x512xi1> to vector<1x512xi1>
    %368 = vector.broadcast %367 : vector<1x512xi1> to vector<8x512xi1>
    %369 = vector.broadcast %cst_146 : f32 to vector<8x512xf32>
    %370 = arith.select %368, %366, %369 : vector<8x512xi1>, vector<8x512xf32>
    %c0_147 = arith.constant 0 : index
    %c14 = arith.constant 14 : index
    %371 = vector.load %arg5[%c0_147, %c14] : memref<8x99xf32, #tpu.memory_space<vmem>>, vector<8x1xf32>
    %372 = vector.broadcast %371 : vector<8x1xf32> to vector<8x512xf32>
    %373 = arith.mulf %370, %372 : vector<8x512xf32>
    %374 = arith.addf %365, %373 : vector<8x512xf32>
    %c497_i32_148 = arith.constant 497 : i32
    %375 = tpu.dynamic_rotate %324 by %c497_i32_148 dim 1 : vector<8x512xf32>, i32 -> vector<8x512xf32>
    %cst_149 = arith.constant 0.000000e+00 : f32
    %376 = vector.shape_cast %85 : vector<1x512xi1> to vector<1x512xi1>
    %377 = vector.broadcast %376 : vector<1x512xi1> to vector<8x512xi1>
    %378 = vector.broadcast %cst_149 : f32 to vector<8x512xf32>
    %379 = arith.select %377, %375, %378 : vector<8x512xi1>, vector<8x512xf32>
    %c0_150 = arith.constant 0 : index
    %c15 = arith.constant 15 : index
    %380 = vector.load %arg5[%c0_150, %c15] : memref<8x99xf32, #tpu.memory_space<vmem>>, vector<8x1xf32>
    %381 = vector.broadcast %380 : vector<8x1xf32> to vector<8x512xf32>
    %382 = arith.mulf %379, %381 : vector<8x512xf32>
    %383 = arith.addf %374, %382 : vector<8x512xf32>
    %c496_i32_151 = arith.constant 496 : i32
    %384 = tpu.dynamic_rotate %324 by %c496_i32_151 dim 1 : vector<8x512xf32>, i32 -> vector<8x512xf32>
    %cst_152 = arith.constant 0.000000e+00 : f32
    %385 = vector.shape_cast %94 : vector<1x512xi1> to vector<1x512xi1>
    %386 = vector.broadcast %385 : vector<1x512xi1> to vector<8x512xi1>
    %387 = vector.broadcast %cst_152 : f32 to vector<8x512xf32>
    %388 = arith.select %386, %384, %387 : vector<8x512xi1>, vector<8x512xf32>
    %c0_153 = arith.constant 0 : index
    %c16 = arith.constant 16 : index
    %389 = vector.load %arg5[%c0_153, %c16] : memref<8x99xf32, #tpu.memory_space<vmem>>, vector<8x1xf32>
    %390 = vector.broadcast %389 : vector<8x1xf32> to vector<8x512xf32>
    %391 = arith.mulf %388, %390 : vector<8x512xf32>
    %392 = arith.addf %383, %391 : vector<8x512xf32>
    %c495_i32_154 = arith.constant 495 : i32
    %393 = tpu.dynamic_rotate %324 by %c495_i32_154 dim 1 : vector<8x512xf32>, i32 -> vector<8x512xf32>
    %cst_155 = arith.constant 0.000000e+00 : f32
    %394 = vector.shape_cast %113 : vector<1x512xi1> to vector<1x512xi1>
    %395 = vector.broadcast %394 : vector<1x512xi1> to vector<8x512xi1>
    %396 = vector.broadcast %cst_155 : f32 to vector<8x512xf32>
    %397 = arith.select %395, %393, %396 : vector<8x512xi1>, vector<8x512xf32>
    %c0_156 = arith.constant 0 : index
    %c17 = arith.constant 17 : index
    %398 = vector.load %arg5[%c0_156, %c17] : memref<8x99xf32, #tpu.memory_space<vmem>>, vector<8x1xf32>
    %399 = vector.broadcast %398 : vector<8x1xf32> to vector<8x512xf32>
    %400 = arith.mulf %397, %399 : vector<8x512xf32>
    %401 = arith.addf %392, %400 : vector<8x512xf32>
    %c1_157 = arith.constant 1 : index
    %c0_158 = arith.constant 0 : index
    %c0_159 = arith.constant 0 : index
    %402 = vector.load %arg6[%c1_157, %c0_158, %c0_159] : memref<11x8x8xf32, #tpu.memory_space<vmem>>, vector<1x8x8xf32>
    %403 = vector.shape_cast %402 : vector<1x8x8xf32> to vector<8x8xf32>
    %cst_160 = arith.constant dense<0.000000e+00> : vector<8x512xf32>
    %404 = tpu.matmul %403, %401, %cst_160 {dimension_numbers = #tpu.dot_dimension_numbers<[1], [0], [0], [1], [0, 0, 1, 1], [], []>} : vector<8x8xf32>, vector<8x512xf32>, vector<8x512xf32> -> vector<8x512xf32>
    %c1_161 = arith.constant 1 : index
    %c0_162 = arith.constant 0 : index
    %c0_163 = arith.constant 0 : index
    %405 = vector.load %arg7[%c1_161, %c0_162, %c0_163] : memref<11x8x1xf32, #tpu.memory_space<vmem>>, vector<1x8x1xf32>
    %406 = vector.shape_cast %405 : vector<1x8x1xf32> to vector<8x1xf32>
    %407 = vector.broadcast %406 : vector<8x1xf32> to vector<8x512xf32>
    %408 = arith.addf %404, %407 : vector<8x512xf32>
    %cst_164 = arith.constant 0.000000e+00 : f32
    %409 = vector.broadcast %cst_164 : f32 to vector<8x512xf32>
    %410 = arith.maximumf %236, %409 : vector<8x512xf32>
    %cst_165 = arith.constant 0.000000e+00 : f32
    %411 = vector.broadcast %cst_165 : f32 to vector<8x512xf32>
    %c17_i32_166 = arith.constant 17 : i32
    %412 = tpu.dynamic_rotate %410 by %c17_i32_166 dim 1 : vector<8x512xf32>, i32 -> vector<8x512xf32>
    %cst_167 = arith.constant 0.000000e+00 : f32
    %413 = vector.shape_cast %20 : vector<1x512xi1> to vector<1x512xi1>
    %414 = vector.broadcast %413 : vector<1x512xi1> to vector<8x512xi1>
    %415 = vector.broadcast %cst_167 : f32 to vector<8x512xf32>
    %416 = arith.select %414, %412, %415 : vector<8x512xi1>, vector<8x512xf32>
    %c0_168 = arith.constant 0 : index
    %c18 = arith.constant 18 : index
    %417 = vector.load %arg5[%c0_168, %c18] : memref<8x99xf32, #tpu.memory_space<vmem>>, vector<8x1xf32>
    %418 = vector.broadcast %417 : vector<8x1xf32> to vector<8x512xf32>
    %419 = arith.mulf %416, %418 : vector<8x512xf32>
    %420 = arith.addf %411, %419 : vector<8x512xf32>
    %c16_i32_169 = arith.constant 16 : i32
    %421 = tpu.dynamic_rotate %410 by %c16_i32_169 dim 1 : vector<8x512xf32>, i32 -> vector<8x512xf32>
    %cst_170 = arith.constant 0.000000e+00 : f32
    %422 = vector.shape_cast %29 : vector<1x512xi1> to vector<1x512xi1>
    %423 = vector.broadcast %422 : vector<1x512xi1> to vector<8x512xi1>
    %424 = vector.broadcast %cst_170 : f32 to vector<8x512xf32>
    %425 = arith.select %423, %421, %424 : vector<8x512xi1>, vector<8x512xf32>
    %c0_171 = arith.constant 0 : index
    %c19 = arith.constant 19 : index
    %426 = vector.load %arg5[%c0_171, %c19] : memref<8x99xf32, #tpu.memory_space<vmem>>, vector<8x1xf32>
    %427 = vector.broadcast %426 : vector<8x1xf32> to vector<8x512xf32>
    %428 = arith.mulf %425, %427 : vector<8x512xf32>
    %429 = arith.addf %420, %428 : vector<8x512xf32>
    %c15_i32_172 = arith.constant 15 : i32
    %430 = tpu.dynamic_rotate %410 by %c15_i32_172 dim 1 : vector<8x512xf32>, i32 -> vector<8x512xf32>
    %cst_173 = arith.constant 0.000000e+00 : f32
    %431 = vector.shape_cast %48 : vector<1x512xi1> to vector<1x512xi1>
    %432 = vector.broadcast %431 : vector<1x512xi1> to vector<8x512xi1>
    %433 = vector.broadcast %cst_173 : f32 to vector<8x512xf32>
    %434 = arith.select %432, %430, %433 : vector<8x512xi1>, vector<8x512xf32>
    %c0_174 = arith.constant 0 : index
    %c20 = arith.constant 20 : index
    %435 = vector.load %arg5[%c0_174, %c20] : memref<8x99xf32, #tpu.memory_space<vmem>>, vector<8x1xf32>
    %436 = vector.broadcast %435 : vector<8x1xf32> to vector<8x512xf32>
    %437 = arith.mulf %434, %436 : vector<8x512xf32>
    %438 = arith.addf %429, %437 : vector<8x512xf32>
    %c1_i32_175 = arith.constant 1 : i32
    %439 = tpu.dynamic_rotate %410 by %c1_i32_175 dim 1 : vector<8x512xf32>, i32 -> vector<8x512xf32>
    %cst_176 = arith.constant 0.000000e+00 : f32
    %440 = vector.shape_cast %57 : vector<1x512xi1> to vector<1x512xi1>
    %441 = vector.broadcast %440 : vector<1x512xi1> to vector<8x512xi1>
    %442 = vector.broadcast %cst_176 : f32 to vector<8x512xf32>
    %443 = arith.select %441, %439, %442 : vector<8x512xi1>, vector<8x512xf32>
    %c0_177 = arith.constant 0 : index
    %c21 = arith.constant 21 : index
    %444 = vector.load %arg5[%c0_177, %c21] : memref<8x99xf32, #tpu.memory_space<vmem>>, vector<8x1xf32>
    %445 = vector.broadcast %444 : vector<8x1xf32> to vector<8x512xf32>
    %446 = arith.mulf %443, %445 : vector<8x512xf32>
    %447 = arith.addf %438, %446 : vector<8x512xf32>
    %c0_178 = arith.constant 0 : index
    %c22 = arith.constant 22 : index
    %448 = vector.load %arg5[%c0_178, %c22] : memref<8x99xf32, #tpu.memory_space<vmem>>, vector<8x1xf32>
    %449 = vector.broadcast %448 : vector<8x1xf32> to vector<8x512xf32>
    %450 = arith.mulf %410, %449 : vector<8x512xf32>
    %451 = arith.addf %447, %450 : vector<8x512xf32>
    %c511_i32_179 = arith.constant 511 : i32
    %452 = tpu.dynamic_rotate %410 by %c511_i32_179 dim 1 : vector<8x512xf32>, i32 -> vector<8x512xf32>
    %cst_180 = arith.constant 0.000000e+00 : f32
    %453 = vector.shape_cast %66 : vector<1x512xi1> to vector<1x512xi1>
    %454 = vector.broadcast %453 : vector<1x512xi1> to vector<8x512xi1>
    %455 = vector.broadcast %cst_180 : f32 to vector<8x512xf32>
    %456 = arith.select %454, %452, %455 : vector<8x512xi1>, vector<8x512xf32>
    %c0_181 = arith.constant 0 : index
    %c23 = arith.constant 23 : index
    %457 = vector.load %arg5[%c0_181, %c23] : memref<8x99xf32, #tpu.memory_space<vmem>>, vector<8x1xf32>
    %458 = vector.broadcast %457 : vector<8x1xf32> to vector<8x512xf32>
    %459 = arith.mulf %456, %458 : vector<8x512xf32>
    %460 = arith.addf %451, %459 : vector<8x512xf32>
    %c497_i32_182 = arith.constant 497 : i32
    %461 = tpu.dynamic_rotate %410 by %c497_i32_182 dim 1 : vector<8x512xf32>, i32 -> vector<8x512xf32>
    %cst_183 = arith.constant 0.000000e+00 : f32
    %462 = vector.shape_cast %85 : vector<1x512xi1> to vector<1x512xi1>
    %463 = vector.broadcast %462 : vector<1x512xi1> to vector<8x512xi1>
    %464 = vector.broadcast %cst_183 : f32 to vector<8x512xf32>
    %465 = arith.select %463, %461, %464 : vector<8x512xi1>, vector<8x512xf32>
    %c0_184 = arith.constant 0 : index
    %c24 = arith.constant 24 : index
    %466 = vector.load %arg5[%c0_184, %c24] : memref<8x99xf32, #tpu.memory_space<vmem>>, vector<8x1xf32>
    %467 = vector.broadcast %466 : vector<8x1xf32> to vector<8x512xf32>
    %468 = arith.mulf %465, %467 : vector<8x512xf32>
    %469 = arith.addf %460, %468 : vector<8x512xf32>
    %c496_i32_185 = arith.constant 496 : i32
    %470 = tpu.dynamic_rotate %410 by %c496_i32_185 dim 1 : vector<8x512xf32>, i32 -> vector<8x512xf32>
    %cst_186 = arith.constant 0.000000e+00 : f32
    %471 = vector.shape_cast %94 : vector<1x512xi1> to vector<1x512xi1>
    %472 = vector.broadcast %471 : vector<1x512xi1> to vector<8x512xi1>
    %473 = vector.broadcast %cst_186 : f32 to vector<8x512xf32>
    %474 = arith.select %472, %470, %473 : vector<8x512xi1>, vector<8x512xf32>
    %c0_187 = arith.constant 0 : index
    %c25 = arith.constant 25 : index
    %475 = vector.load %arg5[%c0_187, %c25] : memref<8x99xf32, #tpu.memory_space<vmem>>, vector<8x1xf32>
    %476 = vector.broadcast %475 : vector<8x1xf32> to vector<8x512xf32>
    %477 = arith.mulf %474, %476 : vector<8x512xf32>
    %478 = arith.addf %469, %477 : vector<8x512xf32>
    %c495_i32_188 = arith.constant 495 : i32
    %479 = tpu.dynamic_rotate %410 by %c495_i32_188 dim 1 : vector<8x512xf32>, i32 -> vector<8x512xf32>
    %cst_189 = arith.constant 0.000000e+00 : f32
    %480 = vector.shape_cast %113 : vector<1x512xi1> to vector<1x512xi1>
    %481 = vector.broadcast %480 : vector<1x512xi1> to vector<8x512xi1>
    %482 = vector.broadcast %cst_189 : f32 to vector<8x512xf32>
    %483 = arith.select %481, %479, %482 : vector<8x512xi1>, vector<8x512xf32>
    %c0_190 = arith.constant 0 : index
    %c26 = arith.constant 26 : index
    %484 = vector.load %arg5[%c0_190, %c26] : memref<8x99xf32, #tpu.memory_space<vmem>>, vector<8x1xf32>
    %485 = vector.broadcast %484 : vector<8x1xf32> to vector<8x512xf32>
    %486 = arith.mulf %483, %485 : vector<8x512xf32>
    %487 = arith.addf %478, %486 : vector<8x512xf32>
    %c2_191 = arith.constant 2 : index
    %c0_192 = arith.constant 0 : index
    %c0_193 = arith.constant 0 : index
    %488 = vector.load %arg6[%c2_191, %c0_192, %c0_193] : memref<11x8x8xf32, #tpu.memory_space<vmem>>, vector<1x8x8xf32>
    %489 = vector.shape_cast %488 : vector<1x8x8xf32> to vector<8x8xf32>
    %cst_194 = arith.constant dense<0.000000e+00> : vector<8x512xf32>
    %490 = tpu.matmul %489, %487, %cst_194 {dimension_numbers = #tpu.dot_dimension_numbers<[1], [0], [0], [1], [0, 0, 1, 1], [], []>} : vector<8x8xf32>, vector<8x512xf32>, vector<8x512xf32> -> vector<8x512xf32>
    %c2_195 = arith.constant 2 : index
    %c0_196 = arith.constant 0 : index
    %c0_197 = arith.constant 0 : index
    %491 = vector.load %arg7[%c2_195, %c0_196, %c0_197] : memref<11x8x1xf32, #tpu.memory_space<vmem>>, vector<1x8x1xf32>
    %492 = vector.shape_cast %491 : vector<1x8x1xf32> to vector<8x1xf32>
    %493 = vector.broadcast %492 : vector<8x1xf32> to vector<8x512xf32>
    %494 = arith.addf %490, %493 : vector<8x512xf32>
    %cst_198 = arith.constant 0.000000e+00 : f32
    %495 = vector.broadcast %cst_198 : f32 to vector<8x512xf32>
    %496 = arith.maximumf %494, %495 : vector<8x512xf32>
    %cst_199 = arith.constant 0.000000e+00 : f32
    %497 = vector.broadcast %cst_199 : f32 to vector<8x512xf32>
    %c17_i32_200 = arith.constant 17 : i32
    %498 = tpu.dynamic_rotate %496 by %c17_i32_200 dim 1 : vector<8x512xf32>, i32 -> vector<8x512xf32>
    %cst_201 = arith.constant 0.000000e+00 : f32
    %499 = vector.shape_cast %20 : vector<1x512xi1> to vector<1x512xi1>
    %500 = vector.broadcast %499 : vector<1x512xi1> to vector<8x512xi1>
    %501 = vector.broadcast %cst_201 : f32 to vector<8x512xf32>
    %502 = arith.select %500, %498, %501 : vector<8x512xi1>, vector<8x512xf32>
    %c0_202 = arith.constant 0 : index
    %c27 = arith.constant 27 : index
    %503 = vector.load %arg5[%c0_202, %c27] : memref<8x99xf32, #tpu.memory_space<vmem>>, vector<8x1xf32>
    %504 = vector.broadcast %503 : vector<8x1xf32> to vector<8x512xf32>
    %505 = arith.mulf %502, %504 : vector<8x512xf32>
    %506 = arith.addf %497, %505 : vector<8x512xf32>
    %c16_i32_203 = arith.constant 16 : i32
    %507 = tpu.dynamic_rotate %496 by %c16_i32_203 dim 1 : vector<8x512xf32>, i32 -> vector<8x512xf32>
    %cst_204 = arith.constant 0.000000e+00 : f32
    %508 = vector.shape_cast %29 : vector<1x512xi1> to vector<1x512xi1>
    %509 = vector.broadcast %508 : vector<1x512xi1> to vector<8x512xi1>
    %510 = vector.broadcast %cst_204 : f32 to vector<8x512xf32>
    %511 = arith.select %509, %507, %510 : vector<8x512xi1>, vector<8x512xf32>
    %c0_205 = arith.constant 0 : index
    %c28 = arith.constant 28 : index
    %512 = vector.load %arg5[%c0_205, %c28] : memref<8x99xf32, #tpu.memory_space<vmem>>, vector<8x1xf32>
    %513 = vector.broadcast %512 : vector<8x1xf32> to vector<8x512xf32>
    %514 = arith.mulf %511, %513 : vector<8x512xf32>
    %515 = arith.addf %506, %514 : vector<8x512xf32>
    %c15_i32_206 = arith.constant 15 : i32
    %516 = tpu.dynamic_rotate %496 by %c15_i32_206 dim 1 : vector<8x512xf32>, i32 -> vector<8x512xf32>
    %cst_207 = arith.constant 0.000000e+00 : f32
    %517 = vector.shape_cast %48 : vector<1x512xi1> to vector<1x512xi1>
    %518 = vector.broadcast %517 : vector<1x512xi1> to vector<8x512xi1>
    %519 = vector.broadcast %cst_207 : f32 to vector<8x512xf32>
    %520 = arith.select %518, %516, %519 : vector<8x512xi1>, vector<8x512xf32>
    %c0_208 = arith.constant 0 : index
    %c29 = arith.constant 29 : index
    %521 = vector.load %arg5[%c0_208, %c29] : memref<8x99xf32, #tpu.memory_space<vmem>>, vector<8x1xf32>
    %522 = vector.broadcast %521 : vector<8x1xf32> to vector<8x512xf32>
    %523 = arith.mulf %520, %522 : vector<8x512xf32>
    %524 = arith.addf %515, %523 : vector<8x512xf32>
    %c1_i32_209 = arith.constant 1 : i32
    %525 = tpu.dynamic_rotate %496 by %c1_i32_209 dim 1 : vector<8x512xf32>, i32 -> vector<8x512xf32>
    %cst_210 = arith.constant 0.000000e+00 : f32
    %526 = vector.shape_cast %57 : vector<1x512xi1> to vector<1x512xi1>
    %527 = vector.broadcast %526 : vector<1x512xi1> to vector<8x512xi1>
    %528 = vector.broadcast %cst_210 : f32 to vector<8x512xf32>
    %529 = arith.select %527, %525, %528 : vector<8x512xi1>, vector<8x512xf32>
    %c0_211 = arith.constant 0 : index
    %c30 = arith.constant 30 : index
    %530 = vector.load %arg5[%c0_211, %c30] : memref<8x99xf32, #tpu.memory_space<vmem>>, vector<8x1xf32>
    %531 = vector.broadcast %530 : vector<8x1xf32> to vector<8x512xf32>
    %532 = arith.mulf %529, %531 : vector<8x512xf32>
    %533 = arith.addf %524, %532 : vector<8x512xf32>
    %c0_212 = arith.constant 0 : index
    %c31 = arith.constant 31 : index
    %534 = vector.load %arg5[%c0_212, %c31] : memref<8x99xf32, #tpu.memory_space<vmem>>, vector<8x1xf32>
    %535 = vector.broadcast %534 : vector<8x1xf32> to vector<8x512xf32>
    %536 = arith.mulf %496, %535 : vector<8x512xf32>
    %537 = arith.addf %533, %536 : vector<8x512xf32>
    %c511_i32_213 = arith.constant 511 : i32
    %538 = tpu.dynamic_rotate %496 by %c511_i32_213 dim 1 : vector<8x512xf32>, i32 -> vector<8x512xf32>
    %cst_214 = arith.constant 0.000000e+00 : f32
    %539 = vector.shape_cast %66 : vector<1x512xi1> to vector<1x512xi1>
    %540 = vector.broadcast %539 : vector<1x512xi1> to vector<8x512xi1>
    %541 = vector.broadcast %cst_214 : f32 to vector<8x512xf32>
    %542 = arith.select %540, %538, %541 : vector<8x512xi1>, vector<8x512xf32>
    %c0_215 = arith.constant 0 : index
    %c32 = arith.constant 32 : index
    %543 = vector.load %arg5[%c0_215, %c32] : memref<8x99xf32, #tpu.memory_space<vmem>>, vector<8x1xf32>
    %544 = vector.broadcast %543 : vector<8x1xf32> to vector<8x512xf32>
    %545 = arith.mulf %542, %544 : vector<8x512xf32>
    %546 = arith.addf %537, %545 : vector<8x512xf32>
    %c497_i32_216 = arith.constant 497 : i32
    %547 = tpu.dynamic_rotate %496 by %c497_i32_216 dim 1 : vector<8x512xf32>, i32 -> vector<8x512xf32>
    %cst_217 = arith.constant 0.000000e+00 : f32
    %548 = vector.shape_cast %85 : vector<1x512xi1> to vector<1x512xi1>
    %549 = vector.broadcast %548 : vector<1x512xi1> to vector<8x512xi1>
    %550 = vector.broadcast %cst_217 : f32 to vector<8x512xf32>
    %551 = arith.select %549, %547, %550 : vector<8x512xi1>, vector<8x512xf32>
    %c0_218 = arith.constant 0 : index
    %c33 = arith.constant 33 : index
    %552 = vector.load %arg5[%c0_218, %c33] : memref<8x99xf32, #tpu.memory_space<vmem>>, vector<8x1xf32>
    %553 = vector.broadcast %552 : vector<8x1xf32> to vector<8x512xf32>
    %554 = arith.mulf %551, %553 : vector<8x512xf32>
    %555 = arith.addf %546, %554 : vector<8x512xf32>
    %c496_i32_219 = arith.constant 496 : i32
    %556 = tpu.dynamic_rotate %496 by %c496_i32_219 dim 1 : vector<8x512xf32>, i32 -> vector<8x512xf32>
    %cst_220 = arith.constant 0.000000e+00 : f32
    %557 = vector.shape_cast %94 : vector<1x512xi1> to vector<1x512xi1>
    %558 = vector.broadcast %557 : vector<1x512xi1> to vector<8x512xi1>
    %559 = vector.broadcast %cst_220 : f32 to vector<8x512xf32>
    %560 = arith.select %558, %556, %559 : vector<8x512xi1>, vector<8x512xf32>
    %c0_221 = arith.constant 0 : index
    %c34 = arith.constant 34 : index
    %561 = vector.load %arg5[%c0_221, %c34] : memref<8x99xf32, #tpu.memory_space<vmem>>, vector<8x1xf32>
    %562 = vector.broadcast %561 : vector<8x1xf32> to vector<8x512xf32>
    %563 = arith.mulf %560, %562 : vector<8x512xf32>
    %564 = arith.addf %555, %563 : vector<8x512xf32>
    %c495_i32_222 = arith.constant 495 : i32
    %565 = tpu.dynamic_rotate %496 by %c495_i32_222 dim 1 : vector<8x512xf32>, i32 -> vector<8x512xf32>
    %cst_223 = arith.constant 0.000000e+00 : f32
    %566 = vector.shape_cast %113 : vector<1x512xi1> to vector<1x512xi1>
    %567 = vector.broadcast %566 : vector<1x512xi1> to vector<8x512xi1>
    %568 = vector.broadcast %cst_223 : f32 to vector<8x512xf32>
    %569 = arith.select %567, %565, %568 : vector<8x512xi1>, vector<8x512xf32>
    %c0_224 = arith.constant 0 : index
    %c35 = arith.constant 35 : index
    %570 = vector.load %arg5[%c0_224, %c35] : memref<8x99xf32, #tpu.memory_space<vmem>>, vector<8x1xf32>
    %571 = vector.broadcast %570 : vector<8x1xf32> to vector<8x512xf32>
    %572 = arith.mulf %569, %571 : vector<8x512xf32>
    %573 = arith.addf %564, %572 : vector<8x512xf32>
    %c3_225 = arith.constant 3 : index
    %c0_226 = arith.constant 0 : index
    %c0_227 = arith.constant 0 : index
    %574 = vector.load %arg6[%c3_225, %c0_226, %c0_227] : memref<11x8x8xf32, #tpu.memory_space<vmem>>, vector<1x8x8xf32>
    %575 = vector.shape_cast %574 : vector<1x8x8xf32> to vector<8x8xf32>
    %cst_228 = arith.constant dense<0.000000e+00> : vector<8x512xf32>
    %576 = tpu.matmul %575, %573, %cst_228 {dimension_numbers = #tpu.dot_dimension_numbers<[1], [0], [0], [1], [0, 0, 1, 1], [], []>} : vector<8x8xf32>, vector<8x512xf32>, vector<8x512xf32> -> vector<8x512xf32>
    %c3_229 = arith.constant 3 : index
    %c0_230 = arith.constant 0 : index
    %c0_231 = arith.constant 0 : index
    %577 = vector.load %arg7[%c3_229, %c0_230, %c0_231] : memref<11x8x1xf32, #tpu.memory_space<vmem>>, vector<1x8x1xf32>
    %578 = vector.shape_cast %577 : vector<1x8x1xf32> to vector<8x1xf32>
    %579 = vector.broadcast %578 : vector<8x1xf32> to vector<8x512xf32>
    %580 = arith.addf %576, %579 : vector<8x512xf32>
    %581 = arith.addf %408, %580 : vector<8x512xf32>
    %cst_232 = arith.constant 0.000000e+00 : f32
    %582 = vector.broadcast %cst_232 : f32 to vector<8x512xf32>
    %583 = arith.maximumf %235, %582 : vector<8x512xf32>
    %cst_233 = arith.constant 0.000000e+00 : f32
    %584 = vector.broadcast %cst_233 : f32 to vector<8x512xf32>
    %c17_i32_234 = arith.constant 17 : i32
    %585 = tpu.dynamic_rotate %583 by %c17_i32_234 dim 1 : vector<8x512xf32>, i32 -> vector<8x512xf32>
    %cst_235 = arith.constant 0.000000e+00 : f32
    %586 = vector.shape_cast %20 : vector<1x512xi1> to vector<1x512xi1>
    %587 = vector.broadcast %586 : vector<1x512xi1> to vector<8x512xi1>
    %588 = vector.broadcast %cst_235 : f32 to vector<8x512xf32>
    %589 = arith.select %587, %585, %588 : vector<8x512xi1>, vector<8x512xf32>
    %c0_236 = arith.constant 0 : index
    %c36 = arith.constant 36 : index
    %590 = vector.load %arg5[%c0_236, %c36] : memref<8x99xf32, #tpu.memory_space<vmem>>, vector<8x1xf32>
    %591 = vector.broadcast %590 : vector<8x1xf32> to vector<8x512xf32>
    %592 = arith.mulf %589, %591 : vector<8x512xf32>
    %593 = arith.addf %584, %592 : vector<8x512xf32>
    %c16_i32_237 = arith.constant 16 : i32
    %594 = tpu.dynamic_rotate %583 by %c16_i32_237 dim 1 : vector<8x512xf32>, i32 -> vector<8x512xf32>
    %cst_238 = arith.constant 0.000000e+00 : f32
    %595 = vector.shape_cast %29 : vector<1x512xi1> to vector<1x512xi1>
    %596 = vector.broadcast %595 : vector<1x512xi1> to vector<8x512xi1>
    %597 = vector.broadcast %cst_238 : f32 to vector<8x512xf32>
    %598 = arith.select %596, %594, %597 : vector<8x512xi1>, vector<8x512xf32>
    %c0_239 = arith.constant 0 : index
    %c37 = arith.constant 37 : index
    %599 = vector.load %arg5[%c0_239, %c37] : memref<8x99xf32, #tpu.memory_space<vmem>>, vector<8x1xf32>
    %600 = vector.broadcast %599 : vector<8x1xf32> to vector<8x512xf32>
    %601 = arith.mulf %598, %600 : vector<8x512xf32>
    %602 = arith.addf %593, %601 : vector<8x512xf32>
    %c15_i32_240 = arith.constant 15 : i32
    %603 = tpu.dynamic_rotate %583 by %c15_i32_240 dim 1 : vector<8x512xf32>, i32 -> vector<8x512xf32>
    %cst_241 = arith.constant 0.000000e+00 : f32
    %604 = vector.shape_cast %48 : vector<1x512xi1> to vector<1x512xi1>
    %605 = vector.broadcast %604 : vector<1x512xi1> to vector<8x512xi1>
    %606 = vector.broadcast %cst_241 : f32 to vector<8x512xf32>
    %607 = arith.select %605, %603, %606 : vector<8x512xi1>, vector<8x512xf32>
    %c0_242 = arith.constant 0 : index
    %c38 = arith.constant 38 : index
    %608 = vector.load %arg5[%c0_242, %c38] : memref<8x99xf32, #tpu.memory_space<vmem>>, vector<8x1xf32>
    %609 = vector.broadcast %608 : vector<8x1xf32> to vector<8x512xf32>
    %610 = arith.mulf %607, %609 : vector<8x512xf32>
    %611 = arith.addf %602, %610 : vector<8x512xf32>
    %c1_i32_243 = arith.constant 1 : i32
    %612 = tpu.dynamic_rotate %583 by %c1_i32_243 dim 1 : vector<8x512xf32>, i32 -> vector<8x512xf32>
    %cst_244 = arith.constant 0.000000e+00 : f32
    %613 = vector.shape_cast %57 : vector<1x512xi1> to vector<1x512xi1>
    %614 = vector.broadcast %613 : vector<1x512xi1> to vector<8x512xi1>
    %615 = vector.broadcast %cst_244 : f32 to vector<8x512xf32>
    %616 = arith.select %614, %612, %615 : vector<8x512xi1>, vector<8x512xf32>
    %c0_245 = arith.constant 0 : index
    %c39 = arith.constant 39 : index
    %617 = vector.load %arg5[%c0_245, %c39] : memref<8x99xf32, #tpu.memory_space<vmem>>, vector<8x1xf32>
    %618 = vector.broadcast %617 : vector<8x1xf32> to vector<8x512xf32>
    %619 = arith.mulf %616, %618 : vector<8x512xf32>
    %620 = arith.addf %611, %619 : vector<8x512xf32>
    %c0_246 = arith.constant 0 : index
    %c40 = arith.constant 40 : index
    %621 = vector.load %arg5[%c0_246, %c40] : memref<8x99xf32, #tpu.memory_space<vmem>>, vector<8x1xf32>
    %622 = vector.broadcast %621 : vector<8x1xf32> to vector<8x512xf32>
    %623 = arith.mulf %583, %622 : vector<8x512xf32>
    %624 = arith.addf %620, %623 : vector<8x512xf32>
    %c511_i32_247 = arith.constant 511 : i32
    %625 = tpu.dynamic_rotate %583 by %c511_i32_247 dim 1 : vector<8x512xf32>, i32 -> vector<8x512xf32>
    %cst_248 = arith.constant 0.000000e+00 : f32
    %626 = vector.shape_cast %66 : vector<1x512xi1> to vector<1x512xi1>
    %627 = vector.broadcast %626 : vector<1x512xi1> to vector<8x512xi1>
    %628 = vector.broadcast %cst_248 : f32 to vector<8x512xf32>
    %629 = arith.select %627, %625, %628 : vector<8x512xi1>, vector<8x512xf32>
    %c0_249 = arith.constant 0 : index
    %c41 = arith.constant 41 : index
    %630 = vector.load %arg5[%c0_249, %c41] : memref<8x99xf32, #tpu.memory_space<vmem>>, vector<8x1xf32>
    %631 = vector.broadcast %630 : vector<8x1xf32> to vector<8x512xf32>
    %632 = arith.mulf %629, %631 : vector<8x512xf32>
    %633 = arith.addf %624, %632 : vector<8x512xf32>
    %c497_i32_250 = arith.constant 497 : i32
    %634 = tpu.dynamic_rotate %583 by %c497_i32_250 dim 1 : vector<8x512xf32>, i32 -> vector<8x512xf32>
    %cst_251 = arith.constant 0.000000e+00 : f32
    %635 = vector.shape_cast %85 : vector<1x512xi1> to vector<1x512xi1>
    %636 = vector.broadcast %635 : vector<1x512xi1> to vector<8x512xi1>
    %637 = vector.broadcast %cst_251 : f32 to vector<8x512xf32>
    %638 = arith.select %636, %634, %637 : vector<8x512xi1>, vector<8x512xf32>
    %c0_252 = arith.constant 0 : index
    %c42 = arith.constant 42 : index
    %639 = vector.load %arg5[%c0_252, %c42] : memref<8x99xf32, #tpu.memory_space<vmem>>, vector<8x1xf32>
    %640 = vector.broadcast %639 : vector<8x1xf32> to vector<8x512xf32>
    %641 = arith.mulf %638, %640 : vector<8x512xf32>
    %642 = arith.addf %633, %641 : vector<8x512xf32>
    %c496_i32_253 = arith.constant 496 : i32
    %643 = tpu.dynamic_rotate %583 by %c496_i32_253 dim 1 : vector<8x512xf32>, i32 -> vector<8x512xf32>
    %cst_254 = arith.constant 0.000000e+00 : f32
    %644 = vector.shape_cast %94 : vector<1x512xi1> to vector<1x512xi1>
    %645 = vector.broadcast %644 : vector<1x512xi1> to vector<8x512xi1>
    %646 = vector.broadcast %cst_254 : f32 to vector<8x512xf32>
    %647 = arith.select %645, %643, %646 : vector<8x512xi1>, vector<8x512xf32>
    %c0_255 = arith.constant 0 : index
    %c43 = arith.constant 43 : index
    %648 = vector.load %arg5[%c0_255, %c43] : memref<8x99xf32, #tpu.memory_space<vmem>>, vector<8x1xf32>
    %649 = vector.broadcast %648 : vector<8x1xf32> to vector<8x512xf32>
    %650 = arith.mulf %647, %649 : vector<8x512xf32>
    %651 = arith.addf %642, %650 : vector<8x512xf32>
    %c495_i32_256 = arith.constant 495 : i32
    %652 = tpu.dynamic_rotate %583 by %c495_i32_256 dim 1 : vector<8x512xf32>, i32 -> vector<8x512xf32>
    %cst_257 = arith.constant 0.000000e+00 : f32
    %653 = vector.shape_cast %113 : vector<1x512xi1> to vector<1x512xi1>
    %654 = vector.broadcast %653 : vector<1x512xi1> to vector<8x512xi1>
    %655 = vector.broadcast %cst_257 : f32 to vector<8x512xf32>
    %656 = arith.select %654, %652, %655 : vector<8x512xi1>, vector<8x512xf32>
    %c0_258 = arith.constant 0 : index
    %c44 = arith.constant 44 : index
    %657 = vector.load %arg5[%c0_258, %c44] : memref<8x99xf32, #tpu.memory_space<vmem>>, vector<8x1xf32>
    %658 = vector.broadcast %657 : vector<8x1xf32> to vector<8x512xf32>
    %659 = arith.mulf %656, %658 : vector<8x512xf32>
    %660 = arith.addf %651, %659 : vector<8x512xf32>
    %c4_259 = arith.constant 4 : index
    %c0_260 = arith.constant 0 : index
    %c0_261 = arith.constant 0 : index
    %661 = vector.load %arg6[%c4_259, %c0_260, %c0_261] : memref<11x8x8xf32, #tpu.memory_space<vmem>>, vector<1x8x8xf32>
    %662 = vector.shape_cast %661 : vector<1x8x8xf32> to vector<8x8xf32>
    %cst_262 = arith.constant dense<0.000000e+00> : vector<8x512xf32>
    %663 = tpu.matmul %662, %660, %cst_262 {dimension_numbers = #tpu.dot_dimension_numbers<[1], [0], [0], [1], [0, 0, 1, 1], [], []>} : vector<8x8xf32>, vector<8x512xf32>, vector<8x512xf32> -> vector<8x512xf32>
    %c4_263 = arith.constant 4 : index
    %c0_264 = arith.constant 0 : index
    %c0_265 = arith.constant 0 : index
    %664 = vector.load %arg7[%c4_263, %c0_264, %c0_265] : memref<11x8x1xf32, #tpu.memory_space<vmem>>, vector<1x8x1xf32>
    %665 = vector.shape_cast %664 : vector<1x8x1xf32> to vector<8x1xf32>
    %666 = vector.broadcast %665 : vector<8x1xf32> to vector<8x512xf32>
    %667 = arith.addf %663, %666 : vector<8x512xf32>
    %cst_266 = arith.constant 0.000000e+00 : f32
    %668 = vector.broadcast %cst_266 : f32 to vector<8x512xf32>
    %669 = arith.maximumf %667, %668 : vector<8x512xf32>
    %cst_267 = arith.constant 0.000000e+00 : f32
    %670 = vector.broadcast %cst_267 : f32 to vector<8x512xf32>
    %c17_i32_268 = arith.constant 17 : i32
    %671 = tpu.dynamic_rotate %669 by %c17_i32_268 dim 1 : vector<8x512xf32>, i32 -> vector<8x512xf32>
    %cst_269 = arith.constant 0.000000e+00 : f32
    %672 = vector.shape_cast %20 : vector<1x512xi1> to vector<1x512xi1>
    %673 = vector.broadcast %672 : vector<1x512xi1> to vector<8x512xi1>
    %674 = vector.broadcast %cst_269 : f32 to vector<8x512xf32>
    %675 = arith.select %673, %671, %674 : vector<8x512xi1>, vector<8x512xf32>
    %c0_270 = arith.constant 0 : index
    %c45 = arith.constant 45 : index
    %676 = vector.load %arg5[%c0_270, %c45] : memref<8x99xf32, #tpu.memory_space<vmem>>, vector<8x1xf32>
    %677 = vector.broadcast %676 : vector<8x1xf32> to vector<8x512xf32>
    %678 = arith.mulf %675, %677 : vector<8x512xf32>
    %679 = arith.addf %670, %678 : vector<8x512xf32>
    %c16_i32_271 = arith.constant 16 : i32
    %680 = tpu.dynamic_rotate %669 by %c16_i32_271 dim 1 : vector<8x512xf32>, i32 -> vector<8x512xf32>
    %cst_272 = arith.constant 0.000000e+00 : f32
    %681 = vector.shape_cast %29 : vector<1x512xi1> to vector<1x512xi1>
    %682 = vector.broadcast %681 : vector<1x512xi1> to vector<8x512xi1>
    %683 = vector.broadcast %cst_272 : f32 to vector<8x512xf32>
    %684 = arith.select %682, %680, %683 : vector<8x512xi1>, vector<8x512xf32>
    %c0_273 = arith.constant 0 : index
    %c46 = arith.constant 46 : index
    %685 = vector.load %arg5[%c0_273, %c46] : memref<8x99xf32, #tpu.memory_space<vmem>>, vector<8x1xf32>
    %686 = vector.broadcast %685 : vector<8x1xf32> to vector<8x512xf32>
    %687 = arith.mulf %684, %686 : vector<8x512xf32>
    %688 = arith.addf %679, %687 : vector<8x512xf32>
    %c15_i32_274 = arith.constant 15 : i32
    %689 = tpu.dynamic_rotate %669 by %c15_i32_274 dim 1 : vector<8x512xf32>, i32 -> vector<8x512xf32>
    %cst_275 = arith.constant 0.000000e+00 : f32
    %690 = vector.shape_cast %48 : vector<1x512xi1> to vector<1x512xi1>
    %691 = vector.broadcast %690 : vector<1x512xi1> to vector<8x512xi1>
    %692 = vector.broadcast %cst_275 : f32 to vector<8x512xf32>
    %693 = arith.select %691, %689, %692 : vector<8x512xi1>, vector<8x512xf32>
    %c0_276 = arith.constant 0 : index
    %c47 = arith.constant 47 : index
    %694 = vector.load %arg5[%c0_276, %c47] : memref<8x99xf32, #tpu.memory_space<vmem>>, vector<8x1xf32>
    %695 = vector.broadcast %694 : vector<8x1xf32> to vector<8x512xf32>
    %696 = arith.mulf %693, %695 : vector<8x512xf32>
    %697 = arith.addf %688, %696 : vector<8x512xf32>
    %c1_i32_277 = arith.constant 1 : i32
    %698 = tpu.dynamic_rotate %669 by %c1_i32_277 dim 1 : vector<8x512xf32>, i32 -> vector<8x512xf32>
    %cst_278 = arith.constant 0.000000e+00 : f32
    %699 = vector.shape_cast %57 : vector<1x512xi1> to vector<1x512xi1>
    %700 = vector.broadcast %699 : vector<1x512xi1> to vector<8x512xi1>
    %701 = vector.broadcast %cst_278 : f32 to vector<8x512xf32>
    %702 = arith.select %700, %698, %701 : vector<8x512xi1>, vector<8x512xf32>
    %c0_279 = arith.constant 0 : index
    %c48 = arith.constant 48 : index
    %703 = vector.load %arg5[%c0_279, %c48] : memref<8x99xf32, #tpu.memory_space<vmem>>, vector<8x1xf32>
    %704 = vector.broadcast %703 : vector<8x1xf32> to vector<8x512xf32>
    %705 = arith.mulf %702, %704 : vector<8x512xf32>
    %706 = arith.addf %697, %705 : vector<8x512xf32>
    %c0_280 = arith.constant 0 : index
    %c49 = arith.constant 49 : index
    %707 = vector.load %arg5[%c0_280, %c49] : memref<8x99xf32, #tpu.memory_space<vmem>>, vector<8x1xf32>
    %708 = vector.broadcast %707 : vector<8x1xf32> to vector<8x512xf32>
    %709 = arith.mulf %669, %708 : vector<8x512xf32>
    %710 = arith.addf %706, %709 : vector<8x512xf32>
    %c511_i32_281 = arith.constant 511 : i32
    %711 = tpu.dynamic_rotate %669 by %c511_i32_281 dim 1 : vector<8x512xf32>, i32 -> vector<8x512xf32>
    %cst_282 = arith.constant 0.000000e+00 : f32
    %712 = vector.shape_cast %66 : vector<1x512xi1> to vector<1x512xi1>
    %713 = vector.broadcast %712 : vector<1x512xi1> to vector<8x512xi1>
    %714 = vector.broadcast %cst_282 : f32 to vector<8x512xf32>
    %715 = arith.select %713, %711, %714 : vector<8x512xi1>, vector<8x512xf32>
    %c0_283 = arith.constant 0 : index
    %c50 = arith.constant 50 : index
    %716 = vector.load %arg5[%c0_283, %c50] : memref<8x99xf32, #tpu.memory_space<vmem>>, vector<8x1xf32>
    %717 = vector.broadcast %716 : vector<8x1xf32> to vector<8x512xf32>
    %718 = arith.mulf %715, %717 : vector<8x512xf32>
    %719 = arith.addf %710, %718 : vector<8x512xf32>
    %c497_i32_284 = arith.constant 497 : i32
    %720 = tpu.dynamic_rotate %669 by %c497_i32_284 dim 1 : vector<8x512xf32>, i32 -> vector<8x512xf32>
    %cst_285 = arith.constant 0.000000e+00 : f32
    %721 = vector.shape_cast %85 : vector<1x512xi1> to vector<1x512xi1>
    %722 = vector.broadcast %721 : vector<1x512xi1> to vector<8x512xi1>
    %723 = vector.broadcast %cst_285 : f32 to vector<8x512xf32>
    %724 = arith.select %722, %720, %723 : vector<8x512xi1>, vector<8x512xf32>
    %c0_286 = arith.constant 0 : index
    %c51 = arith.constant 51 : index
    %725 = vector.load %arg5[%c0_286, %c51] : memref<8x99xf32, #tpu.memory_space<vmem>>, vector<8x1xf32>
    %726 = vector.broadcast %725 : vector<8x1xf32> to vector<8x512xf32>
    %727 = arith.mulf %724, %726 : vector<8x512xf32>
    %728 = arith.addf %719, %727 : vector<8x512xf32>
    %c496_i32_287 = arith.constant 496 : i32
    %729 = tpu.dynamic_rotate %669 by %c496_i32_287 dim 1 : vector<8x512xf32>, i32 -> vector<8x512xf32>
    %cst_288 = arith.constant 0.000000e+00 : f32
    %730 = vector.shape_cast %94 : vector<1x512xi1> to vector<1x512xi1>
    %731 = vector.broadcast %730 : vector<1x512xi1> to vector<8x512xi1>
    %732 = vector.broadcast %cst_288 : f32 to vector<8x512xf32>
    %733 = arith.select %731, %729, %732 : vector<8x512xi1>, vector<8x512xf32>
    %c0_289 = arith.constant 0 : index
    %c52 = arith.constant 52 : index
    %734 = vector.load %arg5[%c0_289, %c52] : memref<8x99xf32, #tpu.memory_space<vmem>>, vector<8x1xf32>
    %735 = vector.broadcast %734 : vector<8x1xf32> to vector<8x512xf32>
    %736 = arith.mulf %733, %735 : vector<8x512xf32>
    %737 = arith.addf %728, %736 : vector<8x512xf32>
    %c495_i32_290 = arith.constant 495 : i32
    %738 = tpu.dynamic_rotate %669 by %c495_i32_290 dim 1 : vector<8x512xf32>, i32 -> vector<8x512xf32>
    %cst_291 = arith.constant 0.000000e+00 : f32
    %739 = vector.shape_cast %113 : vector<1x512xi1> to vector<1x512xi1>
    %740 = vector.broadcast %739 : vector<1x512xi1> to vector<8x512xi1>
    %741 = vector.broadcast %cst_291 : f32 to vector<8x512xf32>
    %742 = arith.select %740, %738, %741 : vector<8x512xi1>, vector<8x512xf32>
    %c0_292 = arith.constant 0 : index
    %c53 = arith.constant 53 : index
    %743 = vector.load %arg5[%c0_292, %c53] : memref<8x99xf32, #tpu.memory_space<vmem>>, vector<8x1xf32>
    %744 = vector.broadcast %743 : vector<8x1xf32> to vector<8x512xf32>
    %745 = arith.mulf %742, %744 : vector<8x512xf32>
    %746 = arith.addf %737, %745 : vector<8x512xf32>
    %c5_293 = arith.constant 5 : index
    %c0_294 = arith.constant 0 : index
    %c0_295 = arith.constant 0 : index
    %747 = vector.load %arg6[%c5_293, %c0_294, %c0_295] : memref<11x8x8xf32, #tpu.memory_space<vmem>>, vector<1x8x8xf32>
    %748 = vector.shape_cast %747 : vector<1x8x8xf32> to vector<8x8xf32>
    %cst_296 = arith.constant dense<0.000000e+00> : vector<8x512xf32>
    %749 = tpu.matmul %748, %746, %cst_296 {dimension_numbers = #tpu.dot_dimension_numbers<[1], [0], [0], [1], [0, 0, 1, 1], [], []>} : vector<8x8xf32>, vector<8x512xf32>, vector<8x512xf32> -> vector<8x512xf32>
    %c5_297 = arith.constant 5 : index
    %c0_298 = arith.constant 0 : index
    %c0_299 = arith.constant 0 : index
    %750 = vector.load %arg7[%c5_297, %c0_298, %c0_299] : memref<11x8x1xf32, #tpu.memory_space<vmem>>, vector<1x8x1xf32>
    %751 = vector.shape_cast %750 : vector<1x8x1xf32> to vector<8x1xf32>
    %752 = vector.broadcast %751 : vector<8x1xf32> to vector<8x512xf32>
    %753 = arith.addf %749, %752 : vector<8x512xf32>
    %cst_300 = arith.constant 0.000000e+00 : f32
    %754 = vector.broadcast %cst_300 : f32 to vector<8x512xf32>
    %755 = arith.maximumf %236, %754 : vector<8x512xf32>
    %cst_301 = arith.constant 0.000000e+00 : f32
    %756 = vector.broadcast %cst_301 : f32 to vector<8x512xf32>
    %c17_i32_302 = arith.constant 17 : i32
    %757 = tpu.dynamic_rotate %755 by %c17_i32_302 dim 1 : vector<8x512xf32>, i32 -> vector<8x512xf32>
    %cst_303 = arith.constant 0.000000e+00 : f32
    %758 = vector.shape_cast %20 : vector<1x512xi1> to vector<1x512xi1>
    %759 = vector.broadcast %758 : vector<1x512xi1> to vector<8x512xi1>
    %760 = vector.broadcast %cst_303 : f32 to vector<8x512xf32>
    %761 = arith.select %759, %757, %760 : vector<8x512xi1>, vector<8x512xf32>
    %c0_304 = arith.constant 0 : index
    %c54 = arith.constant 54 : index
    %762 = vector.load %arg5[%c0_304, %c54] : memref<8x99xf32, #tpu.memory_space<vmem>>, vector<8x1xf32>
    %763 = vector.broadcast %762 : vector<8x1xf32> to vector<8x512xf32>
    %764 = arith.mulf %761, %763 : vector<8x512xf32>
    %765 = arith.addf %756, %764 : vector<8x512xf32>
    %c16_i32_305 = arith.constant 16 : i32
    %766 = tpu.dynamic_rotate %755 by %c16_i32_305 dim 1 : vector<8x512xf32>, i32 -> vector<8x512xf32>
    %cst_306 = arith.constant 0.000000e+00 : f32
    %767 = vector.shape_cast %29 : vector<1x512xi1> to vector<1x512xi1>
    %768 = vector.broadcast %767 : vector<1x512xi1> to vector<8x512xi1>
    %769 = vector.broadcast %cst_306 : f32 to vector<8x512xf32>
    %770 = arith.select %768, %766, %769 : vector<8x512xi1>, vector<8x512xf32>
    %c0_307 = arith.constant 0 : index
    %c55 = arith.constant 55 : index
    %771 = vector.load %arg5[%c0_307, %c55] : memref<8x99xf32, #tpu.memory_space<vmem>>, vector<8x1xf32>
    %772 = vector.broadcast %771 : vector<8x1xf32> to vector<8x512xf32>
    %773 = arith.mulf %770, %772 : vector<8x512xf32>
    %774 = arith.addf %765, %773 : vector<8x512xf32>
    %c15_i32_308 = arith.constant 15 : i32
    %775 = tpu.dynamic_rotate %755 by %c15_i32_308 dim 1 : vector<8x512xf32>, i32 -> vector<8x512xf32>
    %cst_309 = arith.constant 0.000000e+00 : f32
    %776 = vector.shape_cast %48 : vector<1x512xi1> to vector<1x512xi1>
    %777 = vector.broadcast %776 : vector<1x512xi1> to vector<8x512xi1>
    %778 = vector.broadcast %cst_309 : f32 to vector<8x512xf32>
    %779 = arith.select %777, %775, %778 : vector<8x512xi1>, vector<8x512xf32>
    %c0_310 = arith.constant 0 : index
    %c56 = arith.constant 56 : index
    %780 = vector.load %arg5[%c0_310, %c56] : memref<8x99xf32, #tpu.memory_space<vmem>>, vector<8x1xf32>
    %781 = vector.broadcast %780 : vector<8x1xf32> to vector<8x512xf32>
    %782 = arith.mulf %779, %781 : vector<8x512xf32>
    %783 = arith.addf %774, %782 : vector<8x512xf32>
    %c1_i32_311 = arith.constant 1 : i32
    %784 = tpu.dynamic_rotate %755 by %c1_i32_311 dim 1 : vector<8x512xf32>, i32 -> vector<8x512xf32>
    %cst_312 = arith.constant 0.000000e+00 : f32
    %785 = vector.shape_cast %57 : vector<1x512xi1> to vector<1x512xi1>
    %786 = vector.broadcast %785 : vector<1x512xi1> to vector<8x512xi1>
    %787 = vector.broadcast %cst_312 : f32 to vector<8x512xf32>
    %788 = arith.select %786, %784, %787 : vector<8x512xi1>, vector<8x512xf32>
    %c0_313 = arith.constant 0 : index
    %c57 = arith.constant 57 : index
    %789 = vector.load %arg5[%c0_313, %c57] : memref<8x99xf32, #tpu.memory_space<vmem>>, vector<8x1xf32>
    %790 = vector.broadcast %789 : vector<8x1xf32> to vector<8x512xf32>
    %791 = arith.mulf %788, %790 : vector<8x512xf32>
    %792 = arith.addf %783, %791 : vector<8x512xf32>
    %c0_314 = arith.constant 0 : index
    %c58 = arith.constant 58 : index
    %793 = vector.load %arg5[%c0_314, %c58] : memref<8x99xf32, #tpu.memory_space<vmem>>, vector<8x1xf32>
    %794 = vector.broadcast %793 : vector<8x1xf32> to vector<8x512xf32>
    %795 = arith.mulf %755, %794 : vector<8x512xf32>
    %796 = arith.addf %792, %795 : vector<8x512xf32>
    %c511_i32_315 = arith.constant 511 : i32
    %797 = tpu.dynamic_rotate %755 by %c511_i32_315 dim 1 : vector<8x512xf32>, i32 -> vector<8x512xf32>
    %cst_316 = arith.constant 0.000000e+00 : f32
    %798 = vector.shape_cast %66 : vector<1x512xi1> to vector<1x512xi1>
    %799 = vector.broadcast %798 : vector<1x512xi1> to vector<8x512xi1>
    %800 = vector.broadcast %cst_316 : f32 to vector<8x512xf32>
    %801 = arith.select %799, %797, %800 : vector<8x512xi1>, vector<8x512xf32>
    %c0_317 = arith.constant 0 : index
    %c59 = arith.constant 59 : index
    %802 = vector.load %arg5[%c0_317, %c59] : memref<8x99xf32, #tpu.memory_space<vmem>>, vector<8x1xf32>
    %803 = vector.broadcast %802 : vector<8x1xf32> to vector<8x512xf32>
    %804 = arith.mulf %801, %803 : vector<8x512xf32>
    %805 = arith.addf %796, %804 : vector<8x512xf32>
    %c497_i32_318 = arith.constant 497 : i32
    %806 = tpu.dynamic_rotate %755 by %c497_i32_318 dim 1 : vector<8x512xf32>, i32 -> vector<8x512xf32>
    %cst_319 = arith.constant 0.000000e+00 : f32
    %807 = vector.shape_cast %85 : vector<1x512xi1> to vector<1x512xi1>
    %808 = vector.broadcast %807 : vector<1x512xi1> to vector<8x512xi1>
    %809 = vector.broadcast %cst_319 : f32 to vector<8x512xf32>
    %810 = arith.select %808, %806, %809 : vector<8x512xi1>, vector<8x512xf32>
    %c0_320 = arith.constant 0 : index
    %c60 = arith.constant 60 : index
    %811 = vector.load %arg5[%c0_320, %c60] : memref<8x99xf32, #tpu.memory_space<vmem>>, vector<8x1xf32>
    %812 = vector.broadcast %811 : vector<8x1xf32> to vector<8x512xf32>
    %813 = arith.mulf %810, %812 : vector<8x512xf32>
    %814 = arith.addf %805, %813 : vector<8x512xf32>
    %c496_i32_321 = arith.constant 496 : i32
    %815 = tpu.dynamic_rotate %755 by %c496_i32_321 dim 1 : vector<8x512xf32>, i32 -> vector<8x512xf32>
    %cst_322 = arith.constant 0.000000e+00 : f32
    %816 = vector.shape_cast %94 : vector<1x512xi1> to vector<1x512xi1>
    %817 = vector.broadcast %816 : vector<1x512xi1> to vector<8x512xi1>
    %818 = vector.broadcast %cst_322 : f32 to vector<8x512xf32>
    %819 = arith.select %817, %815, %818 : vector<8x512xi1>, vector<8x512xf32>
    %c0_323 = arith.constant 0 : index
    %c61 = arith.constant 61 : index
    %820 = vector.load %arg5[%c0_323, %c61] : memref<8x99xf32, #tpu.memory_space<vmem>>, vector<8x1xf32>
    %821 = vector.broadcast %820 : vector<8x1xf32> to vector<8x512xf32>
    %822 = arith.mulf %819, %821 : vector<8x512xf32>
    %823 = arith.addf %814, %822 : vector<8x512xf32>
    %c495_i32_324 = arith.constant 495 : i32
    %824 = tpu.dynamic_rotate %755 by %c495_i32_324 dim 1 : vector<8x512xf32>, i32 -> vector<8x512xf32>
    %cst_325 = arith.constant 0.000000e+00 : f32
    %825 = vector.shape_cast %113 : vector<1x512xi1> to vector<1x512xi1>
    %826 = vector.broadcast %825 : vector<1x512xi1> to vector<8x512xi1>
    %827 = vector.broadcast %cst_325 : f32 to vector<8x512xf32>
    %828 = arith.select %826, %824, %827 : vector<8x512xi1>, vector<8x512xf32>
    %c0_326 = arith.constant 0 : index
    %c62 = arith.constant 62 : index
    %829 = vector.load %arg5[%c0_326, %c62] : memref<8x99xf32, #tpu.memory_space<vmem>>, vector<8x1xf32>
    %830 = vector.broadcast %829 : vector<8x1xf32> to vector<8x512xf32>
    %831 = arith.mulf %828, %830 : vector<8x512xf32>
    %832 = arith.addf %823, %831 : vector<8x512xf32>
    %c6_327 = arith.constant 6 : index
    %c0_328 = arith.constant 0 : index
    %c0_329 = arith.constant 0 : index
    %833 = vector.load %arg6[%c6_327, %c0_328, %c0_329] : memref<11x8x8xf32, #tpu.memory_space<vmem>>, vector<1x8x8xf32>
    %834 = vector.shape_cast %833 : vector<1x8x8xf32> to vector<8x8xf32>
    %cst_330 = arith.constant dense<0.000000e+00> : vector<8x512xf32>
    %835 = tpu.matmul %834, %832, %cst_330 {dimension_numbers = #tpu.dot_dimension_numbers<[1], [0], [0], [1], [0, 0, 1, 1], [], []>} : vector<8x8xf32>, vector<8x512xf32>, vector<8x512xf32> -> vector<8x512xf32>
    %c6_331 = arith.constant 6 : index
    %c0_332 = arith.constant 0 : index
    %c0_333 = arith.constant 0 : index
    %836 = vector.load %arg7[%c6_331, %c0_332, %c0_333] : memref<11x8x1xf32, #tpu.memory_space<vmem>>, vector<1x8x1xf32>
    %837 = vector.shape_cast %836 : vector<1x8x1xf32> to vector<8x1xf32>
    %838 = vector.broadcast %837 : vector<8x1xf32> to vector<8x512xf32>
    %839 = arith.addf %835, %838 : vector<8x512xf32>
    %cst_334 = arith.constant 0.000000e+00 : f32
    %840 = vector.broadcast %cst_334 : f32 to vector<8x512xf32>
    %841 = arith.maximumf %839, %840 : vector<8x512xf32>
    %cst_335 = arith.constant 0.000000e+00 : f32
    %842 = vector.broadcast %cst_335 : f32 to vector<8x512xf32>
    %c17_i32_336 = arith.constant 17 : i32
    %843 = tpu.dynamic_rotate %841 by %c17_i32_336 dim 1 : vector<8x512xf32>, i32 -> vector<8x512xf32>
    %cst_337 = arith.constant 0.000000e+00 : f32
    %844 = vector.shape_cast %20 : vector<1x512xi1> to vector<1x512xi1>
    %845 = vector.broadcast %844 : vector<1x512xi1> to vector<8x512xi1>
    %846 = vector.broadcast %cst_337 : f32 to vector<8x512xf32>
    %847 = arith.select %845, %843, %846 : vector<8x512xi1>, vector<8x512xf32>
    %c0_338 = arith.constant 0 : index
    %c63 = arith.constant 63 : index
    %848 = vector.load %arg5[%c0_338, %c63] : memref<8x99xf32, #tpu.memory_space<vmem>>, vector<8x1xf32>
    %849 = vector.broadcast %848 : vector<8x1xf32> to vector<8x512xf32>
    %850 = arith.mulf %847, %849 : vector<8x512xf32>
    %851 = arith.addf %842, %850 : vector<8x512xf32>
    %c16_i32_339 = arith.constant 16 : i32
    %852 = tpu.dynamic_rotate %841 by %c16_i32_339 dim 1 : vector<8x512xf32>, i32 -> vector<8x512xf32>
    %cst_340 = arith.constant 0.000000e+00 : f32
    %853 = vector.shape_cast %29 : vector<1x512xi1> to vector<1x512xi1>
    %854 = vector.broadcast %853 : vector<1x512xi1> to vector<8x512xi1>
    %855 = vector.broadcast %cst_340 : f32 to vector<8x512xf32>
    %856 = arith.select %854, %852, %855 : vector<8x512xi1>, vector<8x512xf32>
    %c0_341 = arith.constant 0 : index
    %c64 = arith.constant 64 : index
    %857 = vector.load %arg5[%c0_341, %c64] : memref<8x99xf32, #tpu.memory_space<vmem>>, vector<8x1xf32>
    %858 = vector.broadcast %857 : vector<8x1xf32> to vector<8x512xf32>
    %859 = arith.mulf %856, %858 : vector<8x512xf32>
    %860 = arith.addf %851, %859 : vector<8x512xf32>
    %c15_i32_342 = arith.constant 15 : i32
    %861 = tpu.dynamic_rotate %841 by %c15_i32_342 dim 1 : vector<8x512xf32>, i32 -> vector<8x512xf32>
    %cst_343 = arith.constant 0.000000e+00 : f32
    %862 = vector.shape_cast %48 : vector<1x512xi1> to vector<1x512xi1>
    %863 = vector.broadcast %862 : vector<1x512xi1> to vector<8x512xi1>
    %864 = vector.broadcast %cst_343 : f32 to vector<8x512xf32>
    %865 = arith.select %863, %861, %864 : vector<8x512xi1>, vector<8x512xf32>
    %c0_344 = arith.constant 0 : index
    %c65 = arith.constant 65 : index
    %866 = vector.load %arg5[%c0_344, %c65] : memref<8x99xf32, #tpu.memory_space<vmem>>, vector<8x1xf32>
    %867 = vector.broadcast %866 : vector<8x1xf32> to vector<8x512xf32>
    %868 = arith.mulf %865, %867 : vector<8x512xf32>
    %869 = arith.addf %860, %868 : vector<8x512xf32>
    %c1_i32_345 = arith.constant 1 : i32
    %870 = tpu.dynamic_rotate %841 by %c1_i32_345 dim 1 : vector<8x512xf32>, i32 -> vector<8x512xf32>
    %cst_346 = arith.constant 0.000000e+00 : f32
    %871 = vector.shape_cast %57 : vector<1x512xi1> to vector<1x512xi1>
    %872 = vector.broadcast %871 : vector<1x512xi1> to vector<8x512xi1>
    %873 = vector.broadcast %cst_346 : f32 to vector<8x512xf32>
    %874 = arith.select %872, %870, %873 : vector<8x512xi1>, vector<8x512xf32>
    %c0_347 = arith.constant 0 : index
    %c66 = arith.constant 66 : index
    %875 = vector.load %arg5[%c0_347, %c66] : memref<8x99xf32, #tpu.memory_space<vmem>>, vector<8x1xf32>
    %876 = vector.broadcast %875 : vector<8x1xf32> to vector<8x512xf32>
    %877 = arith.mulf %874, %876 : vector<8x512xf32>
    %878 = arith.addf %869, %877 : vector<8x512xf32>
    %c0_348 = arith.constant 0 : index
    %c67 = arith.constant 67 : index
    %879 = vector.load %arg5[%c0_348, %c67] : memref<8x99xf32, #tpu.memory_space<vmem>>, vector<8x1xf32>
    %880 = vector.broadcast %879 : vector<8x1xf32> to vector<8x512xf32>
    %881 = arith.mulf %841, %880 : vector<8x512xf32>
    %882 = arith.addf %878, %881 : vector<8x512xf32>
    %c511_i32_349 = arith.constant 511 : i32
    %883 = tpu.dynamic_rotate %841 by %c511_i32_349 dim 1 : vector<8x512xf32>, i32 -> vector<8x512xf32>
    %cst_350 = arith.constant 0.000000e+00 : f32
    %884 = vector.shape_cast %66 : vector<1x512xi1> to vector<1x512xi1>
    %885 = vector.broadcast %884 : vector<1x512xi1> to vector<8x512xi1>
    %886 = vector.broadcast %cst_350 : f32 to vector<8x512xf32>
    %887 = arith.select %885, %883, %886 : vector<8x512xi1>, vector<8x512xf32>
    %c0_351 = arith.constant 0 : index
    %c68 = arith.constant 68 : index
    %888 = vector.load %arg5[%c0_351, %c68] : memref<8x99xf32, #tpu.memory_space<vmem>>, vector<8x1xf32>
    %889 = vector.broadcast %888 : vector<8x1xf32> to vector<8x512xf32>
    %890 = arith.mulf %887, %889 : vector<8x512xf32>
    %891 = arith.addf %882, %890 : vector<8x512xf32>
    %c497_i32_352 = arith.constant 497 : i32
    %892 = tpu.dynamic_rotate %841 by %c497_i32_352 dim 1 : vector<8x512xf32>, i32 -> vector<8x512xf32>
    %cst_353 = arith.constant 0.000000e+00 : f32
    %893 = vector.shape_cast %85 : vector<1x512xi1> to vector<1x512xi1>
    %894 = vector.broadcast %893 : vector<1x512xi1> to vector<8x512xi1>
    %895 = vector.broadcast %cst_353 : f32 to vector<8x512xf32>
    %896 = arith.select %894, %892, %895 : vector<8x512xi1>, vector<8x512xf32>
    %c0_354 = arith.constant 0 : index
    %c69 = arith.constant 69 : index
    %897 = vector.load %arg5[%c0_354, %c69] : memref<8x99xf32, #tpu.memory_space<vmem>>, vector<8x1xf32>
    %898 = vector.broadcast %897 : vector<8x1xf32> to vector<8x512xf32>
    %899 = arith.mulf %896, %898 : vector<8x512xf32>
    %900 = arith.addf %891, %899 : vector<8x512xf32>
    %c496_i32_355 = arith.constant 496 : i32
    %901 = tpu.dynamic_rotate %841 by %c496_i32_355 dim 1 : vector<8x512xf32>, i32 -> vector<8x512xf32>
    %cst_356 = arith.constant 0.000000e+00 : f32
    %902 = vector.shape_cast %94 : vector<1x512xi1> to vector<1x512xi1>
    %903 = vector.broadcast %902 : vector<1x512xi1> to vector<8x512xi1>
    %904 = vector.broadcast %cst_356 : f32 to vector<8x512xf32>
    %905 = arith.select %903, %901, %904 : vector<8x512xi1>, vector<8x512xf32>
    %c0_357 = arith.constant 0 : index
    %c70 = arith.constant 70 : index
    %906 = vector.load %arg5[%c0_357, %c70] : memref<8x99xf32, #tpu.memory_space<vmem>>, vector<8x1xf32>
    %907 = vector.broadcast %906 : vector<8x1xf32> to vector<8x512xf32>
    %908 = arith.mulf %905, %907 : vector<8x512xf32>
    %909 = arith.addf %900, %908 : vector<8x512xf32>
    %c495_i32_358 = arith.constant 495 : i32
    %910 = tpu.dynamic_rotate %841 by %c495_i32_358 dim 1 : vector<8x512xf32>, i32 -> vector<8x512xf32>
    %cst_359 = arith.constant 0.000000e+00 : f32
    %911 = vector.shape_cast %113 : vector<1x512xi1> to vector<1x512xi1>
    %912 = vector.broadcast %911 : vector<1x512xi1> to vector<8x512xi1>
    %913 = vector.broadcast %cst_359 : f32 to vector<8x512xf32>
    %914 = arith.select %912, %910, %913 : vector<8x512xi1>, vector<8x512xf32>
    %c0_360 = arith.constant 0 : index
    %c71 = arith.constant 71 : index
    %915 = vector.load %arg5[%c0_360, %c71] : memref<8x99xf32, #tpu.memory_space<vmem>>, vector<8x1xf32>
    %916 = vector.broadcast %915 : vector<8x1xf32> to vector<8x512xf32>
    %917 = arith.mulf %914, %916 : vector<8x512xf32>
    %918 = arith.addf %909, %917 : vector<8x512xf32>
    %c7_361 = arith.constant 7 : index
    %c0_362 = arith.constant 0 : index
    %c0_363 = arith.constant 0 : index
    %919 = vector.load %arg6[%c7_361, %c0_362, %c0_363] : memref<11x8x8xf32, #tpu.memory_space<vmem>>, vector<1x8x8xf32>
    %920 = vector.shape_cast %919 : vector<1x8x8xf32> to vector<8x8xf32>
    %cst_364 = arith.constant dense<0.000000e+00> : vector<8x512xf32>
    %921 = tpu.matmul %920, %918, %cst_364 {dimension_numbers = #tpu.dot_dimension_numbers<[1], [0], [0], [1], [0, 0, 1, 1], [], []>} : vector<8x8xf32>, vector<8x512xf32>, vector<8x512xf32> -> vector<8x512xf32>
    %c7_365 = arith.constant 7 : index
    %c0_366 = arith.constant 0 : index
    %c0_367 = arith.constant 0 : index
    %922 = vector.load %arg7[%c7_365, %c0_366, %c0_367] : memref<11x8x1xf32, #tpu.memory_space<vmem>>, vector<1x8x1xf32>
    %923 = vector.shape_cast %922 : vector<1x8x1xf32> to vector<8x1xf32>
    %924 = vector.broadcast %923 : vector<8x1xf32> to vector<8x512xf32>
    %925 = arith.addf %921, %924 : vector<8x512xf32>
    %926 = arith.addf %753, %925 : vector<8x512xf32>
    %cst_368 = arith.constant 0.000000e+00 : f32
    %927 = vector.broadcast %cst_368 : f32 to vector<8x512xf32>
    %928 = arith.maximumf %236, %927 : vector<8x512xf32>
    %cst_369 = arith.constant 0.000000e+00 : f32
    %929 = vector.broadcast %cst_369 : f32 to vector<8x512xf32>
    %c17_i32_370 = arith.constant 17 : i32
    %930 = tpu.dynamic_rotate %928 by %c17_i32_370 dim 1 : vector<8x512xf32>, i32 -> vector<8x512xf32>
    %cst_371 = arith.constant 0.000000e+00 : f32
    %931 = vector.shape_cast %20 : vector<1x512xi1> to vector<1x512xi1>
    %932 = vector.broadcast %931 : vector<1x512xi1> to vector<8x512xi1>
    %933 = vector.broadcast %cst_371 : f32 to vector<8x512xf32>
    %934 = arith.select %932, %930, %933 : vector<8x512xi1>, vector<8x512xf32>
    %c0_372 = arith.constant 0 : index
    %c72 = arith.constant 72 : index
    %935 = vector.load %arg5[%c0_372, %c72] : memref<8x99xf32, #tpu.memory_space<vmem>>, vector<8x1xf32>
    %936 = vector.broadcast %935 : vector<8x1xf32> to vector<8x512xf32>
    %937 = arith.mulf %934, %936 : vector<8x512xf32>
    %938 = arith.addf %929, %937 : vector<8x512xf32>
    %c16_i32_373 = arith.constant 16 : i32
    %939 = tpu.dynamic_rotate %928 by %c16_i32_373 dim 1 : vector<8x512xf32>, i32 -> vector<8x512xf32>
    %cst_374 = arith.constant 0.000000e+00 : f32
    %940 = vector.shape_cast %29 : vector<1x512xi1> to vector<1x512xi1>
    %941 = vector.broadcast %940 : vector<1x512xi1> to vector<8x512xi1>
    %942 = vector.broadcast %cst_374 : f32 to vector<8x512xf32>
    %943 = arith.select %941, %939, %942 : vector<8x512xi1>, vector<8x512xf32>
    %c0_375 = arith.constant 0 : index
    %c73 = arith.constant 73 : index
    %944 = vector.load %arg5[%c0_375, %c73] : memref<8x99xf32, #tpu.memory_space<vmem>>, vector<8x1xf32>
    %945 = vector.broadcast %944 : vector<8x1xf32> to vector<8x512xf32>
    %946 = arith.mulf %943, %945 : vector<8x512xf32>
    %947 = arith.addf %938, %946 : vector<8x512xf32>
    %c15_i32_376 = arith.constant 15 : i32
    %948 = tpu.dynamic_rotate %928 by %c15_i32_376 dim 1 : vector<8x512xf32>, i32 -> vector<8x512xf32>
    %cst_377 = arith.constant 0.000000e+00 : f32
    %949 = vector.shape_cast %48 : vector<1x512xi1> to vector<1x512xi1>
    %950 = vector.broadcast %949 : vector<1x512xi1> to vector<8x512xi1>
    %951 = vector.broadcast %cst_377 : f32 to vector<8x512xf32>
    %952 = arith.select %950, %948, %951 : vector<8x512xi1>, vector<8x512xf32>
    %c0_378 = arith.constant 0 : index
    %c74 = arith.constant 74 : index
    %953 = vector.load %arg5[%c0_378, %c74] : memref<8x99xf32, #tpu.memory_space<vmem>>, vector<8x1xf32>
    %954 = vector.broadcast %953 : vector<8x1xf32> to vector<8x512xf32>
    %955 = arith.mulf %952, %954 : vector<8x512xf32>
    %956 = arith.addf %947, %955 : vector<8x512xf32>
    %c1_i32_379 = arith.constant 1 : i32
    %957 = tpu.dynamic_rotate %928 by %c1_i32_379 dim 1 : vector<8x512xf32>, i32 -> vector<8x512xf32>
    %cst_380 = arith.constant 0.000000e+00 : f32
    %958 = vector.shape_cast %57 : vector<1x512xi1> to vector<1x512xi1>
    %959 = vector.broadcast %958 : vector<1x512xi1> to vector<8x512xi1>
    %960 = vector.broadcast %cst_380 : f32 to vector<8x512xf32>
    %961 = arith.select %959, %957, %960 : vector<8x512xi1>, vector<8x512xf32>
    %c0_381 = arith.constant 0 : index
    %c75 = arith.constant 75 : index
    %962 = vector.load %arg5[%c0_381, %c75] : memref<8x99xf32, #tpu.memory_space<vmem>>, vector<8x1xf32>
    %963 = vector.broadcast %962 : vector<8x1xf32> to vector<8x512xf32>
    %964 = arith.mulf %961, %963 : vector<8x512xf32>
    %965 = arith.addf %956, %964 : vector<8x512xf32>
    %c0_382 = arith.constant 0 : index
    %c76 = arith.constant 76 : index
    %966 = vector.load %arg5[%c0_382, %c76] : memref<8x99xf32, #tpu.memory_space<vmem>>, vector<8x1xf32>
    %967 = vector.broadcast %966 : vector<8x1xf32> to vector<8x512xf32>
    %968 = arith.mulf %928, %967 : vector<8x512xf32>
    %969 = arith.addf %965, %968 : vector<8x512xf32>
    %c511_i32_383 = arith.constant 511 : i32
    %970 = tpu.dynamic_rotate %928 by %c511_i32_383 dim 1 : vector<8x512xf32>, i32 -> vector<8x512xf32>
    %cst_384 = arith.constant 0.000000e+00 : f32
    %971 = vector.shape_cast %66 : vector<1x512xi1> to vector<1x512xi1>
    %972 = vector.broadcast %971 : vector<1x512xi1> to vector<8x512xi1>
    %973 = vector.broadcast %cst_384 : f32 to vector<8x512xf32>
    %974 = arith.select %972, %970, %973 : vector<8x512xi1>, vector<8x512xf32>
    %c0_385 = arith.constant 0 : index
    %c77 = arith.constant 77 : index
    %975 = vector.load %arg5[%c0_385, %c77] : memref<8x99xf32, #tpu.memory_space<vmem>>, vector<8x1xf32>
    %976 = vector.broadcast %975 : vector<8x1xf32> to vector<8x512xf32>
    %977 = arith.mulf %974, %976 : vector<8x512xf32>
    %978 = arith.addf %969, %977 : vector<8x512xf32>
    %c497_i32_386 = arith.constant 497 : i32
    %979 = tpu.dynamic_rotate %928 by %c497_i32_386 dim 1 : vector<8x512xf32>, i32 -> vector<8x512xf32>
    %cst_387 = arith.constant 0.000000e+00 : f32
    %980 = vector.shape_cast %85 : vector<1x512xi1> to vector<1x512xi1>
    %981 = vector.broadcast %980 : vector<1x512xi1> to vector<8x512xi1>
    %982 = vector.broadcast %cst_387 : f32 to vector<8x512xf32>
    %983 = arith.select %981, %979, %982 : vector<8x512xi1>, vector<8x512xf32>
    %c0_388 = arith.constant 0 : index
    %c78 = arith.constant 78 : index
    %984 = vector.load %arg5[%c0_388, %c78] : memref<8x99xf32, #tpu.memory_space<vmem>>, vector<8x1xf32>
    %985 = vector.broadcast %984 : vector<8x1xf32> to vector<8x512xf32>
    %986 = arith.mulf %983, %985 : vector<8x512xf32>
    %987 = arith.addf %978, %986 : vector<8x512xf32>
    %c496_i32_389 = arith.constant 496 : i32
    %988 = tpu.dynamic_rotate %928 by %c496_i32_389 dim 1 : vector<8x512xf32>, i32 -> vector<8x512xf32>
    %cst_390 = arith.constant 0.000000e+00 : f32
    %989 = vector.shape_cast %94 : vector<1x512xi1> to vector<1x512xi1>
    %990 = vector.broadcast %989 : vector<1x512xi1> to vector<8x512xi1>
    %991 = vector.broadcast %cst_390 : f32 to vector<8x512xf32>
    %992 = arith.select %990, %988, %991 : vector<8x512xi1>, vector<8x512xf32>
    %c0_391 = arith.constant 0 : index
    %c79 = arith.constant 79 : index
    %993 = vector.load %arg5[%c0_391, %c79] : memref<8x99xf32, #tpu.memory_space<vmem>>, vector<8x1xf32>
    %994 = vector.broadcast %993 : vector<8x1xf32> to vector<8x512xf32>
    %995 = arith.mulf %992, %994 : vector<8x512xf32>
    %996 = arith.addf %987, %995 : vector<8x512xf32>
    %c495_i32_392 = arith.constant 495 : i32
    %997 = tpu.dynamic_rotate %928 by %c495_i32_392 dim 1 : vector<8x512xf32>, i32 -> vector<8x512xf32>
    %cst_393 = arith.constant 0.000000e+00 : f32
    %998 = vector.shape_cast %113 : vector<1x512xi1> to vector<1x512xi1>
    %999 = vector.broadcast %998 : vector<1x512xi1> to vector<8x512xi1>
    %1000 = vector.broadcast %cst_393 : f32 to vector<8x512xf32>
    %1001 = arith.select %999, %997, %1000 : vector<8x512xi1>, vector<8x512xf32>
    %c0_394 = arith.constant 0 : index
    %c80 = arith.constant 80 : index
    %1002 = vector.load %arg5[%c0_394, %c80] : memref<8x99xf32, #tpu.memory_space<vmem>>, vector<8x1xf32>
    %1003 = vector.broadcast %1002 : vector<8x1xf32> to vector<8x512xf32>
    %1004 = arith.mulf %1001, %1003 : vector<8x512xf32>
    %1005 = arith.addf %996, %1004 : vector<8x512xf32>
    %c8_395 = arith.constant 8 : index
    %c0_396 = arith.constant 0 : index
    %c0_397 = arith.constant 0 : index
    %1006 = vector.load %arg6[%c8_395, %c0_396, %c0_397] : memref<11x8x8xf32, #tpu.memory_space<vmem>>, vector<1x8x8xf32>
    %1007 = vector.shape_cast %1006 : vector<1x8x8xf32> to vector<8x8xf32>
    %cst_398 = arith.constant dense<0.000000e+00> : vector<8x512xf32>
    %1008 = tpu.matmul %1007, %1005, %cst_398 {dimension_numbers = #tpu.dot_dimension_numbers<[1], [0], [0], [1], [0, 0, 1, 1], [], []>} : vector<8x8xf32>, vector<8x512xf32>, vector<8x512xf32> -> vector<8x512xf32>
    %c8_399 = arith.constant 8 : index
    %c0_400 = arith.constant 0 : index
    %c0_401 = arith.constant 0 : index
    %1009 = vector.load %arg7[%c8_399, %c0_400, %c0_401] : memref<11x8x1xf32, #tpu.memory_space<vmem>>, vector<1x8x1xf32>
    %1010 = vector.shape_cast %1009 : vector<1x8x1xf32> to vector<8x1xf32>
    %1011 = vector.broadcast %1010 : vector<8x1xf32> to vector<8x512xf32>
    %1012 = arith.addf %1008, %1011 : vector<8x512xf32>
    %cst_402 = arith.constant 0.000000e+00 : f32
    %1013 = vector.broadcast %cst_402 : f32 to vector<8x512xf32>
    %1014 = arith.maximumf %1012, %1013 : vector<8x512xf32>
    %cst_403 = arith.constant 0.000000e+00 : f32
    %1015 = vector.broadcast %cst_403 : f32 to vector<8x512xf32>
    %c17_i32_404 = arith.constant 17 : i32
    %1016 = tpu.dynamic_rotate %1014 by %c17_i32_404 dim 1 : vector<8x512xf32>, i32 -> vector<8x512xf32>
    %cst_405 = arith.constant 0.000000e+00 : f32
    %1017 = vector.shape_cast %20 : vector<1x512xi1> to vector<1x512xi1>
    %1018 = vector.broadcast %1017 : vector<1x512xi1> to vector<8x512xi1>
    %1019 = vector.broadcast %cst_405 : f32 to vector<8x512xf32>
    %1020 = arith.select %1018, %1016, %1019 : vector<8x512xi1>, vector<8x512xf32>
    %c0_406 = arith.constant 0 : index
    %c81 = arith.constant 81 : index
    %1021 = vector.load %arg5[%c0_406, %c81] : memref<8x99xf32, #tpu.memory_space<vmem>>, vector<8x1xf32>
    %1022 = vector.broadcast %1021 : vector<8x1xf32> to vector<8x512xf32>
    %1023 = arith.mulf %1020, %1022 : vector<8x512xf32>
    %1024 = arith.addf %1015, %1023 : vector<8x512xf32>
    %c16_i32_407 = arith.constant 16 : i32
    %1025 = tpu.dynamic_rotate %1014 by %c16_i32_407 dim 1 : vector<8x512xf32>, i32 -> vector<8x512xf32>
    %cst_408 = arith.constant 0.000000e+00 : f32
    %1026 = vector.shape_cast %29 : vector<1x512xi1> to vector<1x512xi1>
    %1027 = vector.broadcast %1026 : vector<1x512xi1> to vector<8x512xi1>
    %1028 = vector.broadcast %cst_408 : f32 to vector<8x512xf32>
    %1029 = arith.select %1027, %1025, %1028 : vector<8x512xi1>, vector<8x512xf32>
    %c0_409 = arith.constant 0 : index
    %c82 = arith.constant 82 : index
    %1030 = vector.load %arg5[%c0_409, %c82] : memref<8x99xf32, #tpu.memory_space<vmem>>, vector<8x1xf32>
    %1031 = vector.broadcast %1030 : vector<8x1xf32> to vector<8x512xf32>
    %1032 = arith.mulf %1029, %1031 : vector<8x512xf32>
    %1033 = arith.addf %1024, %1032 : vector<8x512xf32>
    %c15_i32_410 = arith.constant 15 : i32
    %1034 = tpu.dynamic_rotate %1014 by %c15_i32_410 dim 1 : vector<8x512xf32>, i32 -> vector<8x512xf32>
    %cst_411 = arith.constant 0.000000e+00 : f32
    %1035 = vector.shape_cast %48 : vector<1x512xi1> to vector<1x512xi1>
    %1036 = vector.broadcast %1035 : vector<1x512xi1> to vector<8x512xi1>
    %1037 = vector.broadcast %cst_411 : f32 to vector<8x512xf32>
    %1038 = arith.select %1036, %1034, %1037 : vector<8x512xi1>, vector<8x512xf32>
    %c0_412 = arith.constant 0 : index
    %c83 = arith.constant 83 : index
    %1039 = vector.load %arg5[%c0_412, %c83] : memref<8x99xf32, #tpu.memory_space<vmem>>, vector<8x1xf32>
    %1040 = vector.broadcast %1039 : vector<8x1xf32> to vector<8x512xf32>
    %1041 = arith.mulf %1038, %1040 : vector<8x512xf32>
    %1042 = arith.addf %1033, %1041 : vector<8x512xf32>
    %c1_i32_413 = arith.constant 1 : i32
    %1043 = tpu.dynamic_rotate %1014 by %c1_i32_413 dim 1 : vector<8x512xf32>, i32 -> vector<8x512xf32>
    %cst_414 = arith.constant 0.000000e+00 : f32
    %1044 = vector.shape_cast %57 : vector<1x512xi1> to vector<1x512xi1>
    %1045 = vector.broadcast %1044 : vector<1x512xi1> to vector<8x512xi1>
    %1046 = vector.broadcast %cst_414 : f32 to vector<8x512xf32>
    %1047 = arith.select %1045, %1043, %1046 : vector<8x512xi1>, vector<8x512xf32>
    %c0_415 = arith.constant 0 : index
    %c84 = arith.constant 84 : index
    %1048 = vector.load %arg5[%c0_415, %c84] : memref<8x99xf32, #tpu.memory_space<vmem>>, vector<8x1xf32>
    %1049 = vector.broadcast %1048 : vector<8x1xf32> to vector<8x512xf32>
    %1050 = arith.mulf %1047, %1049 : vector<8x512xf32>
    %1051 = arith.addf %1042, %1050 : vector<8x512xf32>
    %c0_416 = arith.constant 0 : index
    %c85 = arith.constant 85 : index
    %1052 = vector.load %arg5[%c0_416, %c85] : memref<8x99xf32, #tpu.memory_space<vmem>>, vector<8x1xf32>
    %1053 = vector.broadcast %1052 : vector<8x1xf32> to vector<8x512xf32>
    %1054 = arith.mulf %1014, %1053 : vector<8x512xf32>
    %1055 = arith.addf %1051, %1054 : vector<8x512xf32>
    %c511_i32_417 = arith.constant 511 : i32
    %1056 = tpu.dynamic_rotate %1014 by %c511_i32_417 dim 1 : vector<8x512xf32>, i32 -> vector<8x512xf32>
    %cst_418 = arith.constant 0.000000e+00 : f32
    %1057 = vector.shape_cast %66 : vector<1x512xi1> to vector<1x512xi1>
    %1058 = vector.broadcast %1057 : vector<1x512xi1> to vector<8x512xi1>
    %1059 = vector.broadcast %cst_418 : f32 to vector<8x512xf32>
    %1060 = arith.select %1058, %1056, %1059 : vector<8x512xi1>, vector<8x512xf32>
    %c0_419 = arith.constant 0 : index
    %c86 = arith.constant 86 : index
    %1061 = vector.load %arg5[%c0_419, %c86] : memref<8x99xf32, #tpu.memory_space<vmem>>, vector<8x1xf32>
    %1062 = vector.broadcast %1061 : vector<8x1xf32> to vector<8x512xf32>
    %1063 = arith.mulf %1060, %1062 : vector<8x512xf32>
    %1064 = arith.addf %1055, %1063 : vector<8x512xf32>
    %c497_i32_420 = arith.constant 497 : i32
    %1065 = tpu.dynamic_rotate %1014 by %c497_i32_420 dim 1 : vector<8x512xf32>, i32 -> vector<8x512xf32>
    %cst_421 = arith.constant 0.000000e+00 : f32
    %1066 = vector.shape_cast %85 : vector<1x512xi1> to vector<1x512xi1>
    %1067 = vector.broadcast %1066 : vector<1x512xi1> to vector<8x512xi1>
    %1068 = vector.broadcast %cst_421 : f32 to vector<8x512xf32>
    %1069 = arith.select %1067, %1065, %1068 : vector<8x512xi1>, vector<8x512xf32>
    %c0_422 = arith.constant 0 : index
    %c87 = arith.constant 87 : index
    %1070 = vector.load %arg5[%c0_422, %c87] : memref<8x99xf32, #tpu.memory_space<vmem>>, vector<8x1xf32>
    %1071 = vector.broadcast %1070 : vector<8x1xf32> to vector<8x512xf32>
    %1072 = arith.mulf %1069, %1071 : vector<8x512xf32>
    %1073 = arith.addf %1064, %1072 : vector<8x512xf32>
    %c496_i32_423 = arith.constant 496 : i32
    %1074 = tpu.dynamic_rotate %1014 by %c496_i32_423 dim 1 : vector<8x512xf32>, i32 -> vector<8x512xf32>
    %cst_424 = arith.constant 0.000000e+00 : f32
    %1075 = vector.shape_cast %94 : vector<1x512xi1> to vector<1x512xi1>
    %1076 = vector.broadcast %1075 : vector<1x512xi1> to vector<8x512xi1>
    %1077 = vector.broadcast %cst_424 : f32 to vector<8x512xf32>
    %1078 = arith.select %1076, %1074, %1077 : vector<8x512xi1>, vector<8x512xf32>
    %c0_425 = arith.constant 0 : index
    %c88 = arith.constant 88 : index
    %1079 = vector.load %arg5[%c0_425, %c88] : memref<8x99xf32, #tpu.memory_space<vmem>>, vector<8x1xf32>
    %1080 = vector.broadcast %1079 : vector<8x1xf32> to vector<8x512xf32>
    %1081 = arith.mulf %1078, %1080 : vector<8x512xf32>
    %1082 = arith.addf %1073, %1081 : vector<8x512xf32>
    %c495_i32_426 = arith.constant 495 : i32
    %1083 = tpu.dynamic_rotate %1014 by %c495_i32_426 dim 1 : vector<8x512xf32>, i32 -> vector<8x512xf32>
    %cst_427 = arith.constant 0.000000e+00 : f32
    %1084 = vector.shape_cast %113 : vector<1x512xi1> to vector<1x512xi1>
    %1085 = vector.broadcast %1084 : vector<1x512xi1> to vector<8x512xi1>
    %1086 = vector.broadcast %cst_427 : f32 to vector<8x512xf32>
    %1087 = arith.select %1085, %1083, %1086 : vector<8x512xi1>, vector<8x512xf32>
    %c0_428 = arith.constant 0 : index
    %c89 = arith.constant 89 : index
    %1088 = vector.load %arg5[%c0_428, %c89] : memref<8x99xf32, #tpu.memory_space<vmem>>, vector<8x1xf32>
    %1089 = vector.broadcast %1088 : vector<8x1xf32> to vector<8x512xf32>
    %1090 = arith.mulf %1087, %1089 : vector<8x512xf32>
    %1091 = arith.addf %1082, %1090 : vector<8x512xf32>
    %c9_429 = arith.constant 9 : index
    %c0_430 = arith.constant 0 : index
    %c0_431 = arith.constant 0 : index
    %1092 = vector.load %arg6[%c9_429, %c0_430, %c0_431] : memref<11x8x8xf32, #tpu.memory_space<vmem>>, vector<1x8x8xf32>
    %1093 = vector.shape_cast %1092 : vector<1x8x8xf32> to vector<8x8xf32>
    %cst_432 = arith.constant dense<0.000000e+00> : vector<8x512xf32>
    %1094 = tpu.matmul %1093, %1091, %cst_432 {dimension_numbers = #tpu.dot_dimension_numbers<[1], [0], [0], [1], [0, 0, 1, 1], [], []>} : vector<8x8xf32>, vector<8x512xf32>, vector<8x512xf32> -> vector<8x512xf32>
    %c9_433 = arith.constant 9 : index
    %c0_434 = arith.constant 0 : index
    %c0_435 = arith.constant 0 : index
    %1095 = vector.load %arg7[%c9_433, %c0_434, %c0_435] : memref<11x8x1xf32, #tpu.memory_space<vmem>>, vector<1x8x1xf32>
    %1096 = vector.shape_cast %1095 : vector<1x8x1xf32> to vector<8x1xf32>
    %1097 = vector.broadcast %1096 : vector<8x1xf32> to vector<8x512xf32>
    %1098 = arith.addf %1094, %1097 : vector<8x512xf32>
    %1099 = arith.addf %1098, %235 : vector<8x512xf32>
    %cst_436 = arith.constant 0.000000e+00 : f32
    %1100 = vector.broadcast %cst_436 : f32 to vector<8x512xf32>
    %1101 = arith.maximumf %581, %1100 : vector<8x512xf32>
    %cst_437 = arith.constant 0.000000e+00 : f32
    %1102 = vector.broadcast %cst_437 : f32 to vector<8x512xf32>
    %c34_i32 = arith.constant 34 : i32
    %1103 = tpu.dynamic_rotate %1101 by %c34_i32 dim 1 : vector<8x512xf32>, i32 -> vector<8x512xf32>
    %cst_438 = arith.constant 0.000000e+00 : f32
    %1104 = vector.shape_cast %132 : vector<1x512xi1> to vector<1x512xi1>
    %1105 = vector.broadcast %1104 : vector<1x512xi1> to vector<8x512xi1>
    %1106 = vector.broadcast %cst_438 : f32 to vector<8x512xf32>
    %1107 = arith.select %1105, %1103, %1106 : vector<8x512xi1>, vector<8x512xf32>
    %c0_439 = arith.constant 0 : index
    %c90 = arith.constant 90 : index
    %1108 = vector.load %arg5[%c0_439, %c90] : memref<8x99xf32, #tpu.memory_space<vmem>>, vector<8x1xf32>
    %1109 = vector.broadcast %1108 : vector<8x1xf32> to vector<8x512xf32>
    %1110 = arith.mulf %1107, %1109 : vector<8x512xf32>
    %1111 = arith.addf %1102, %1110 : vector<8x512xf32>
    %c32_i32 = arith.constant 32 : i32
    %1112 = tpu.dynamic_rotate %1101 by %c32_i32 dim 1 : vector<8x512xf32>, i32 -> vector<8x512xf32>
    %cst_440 = arith.constant 0.000000e+00 : f32
    %1113 = vector.shape_cast %141 : vector<1x512xi1> to vector<1x512xi1>
    %1114 = vector.broadcast %1113 : vector<1x512xi1> to vector<8x512xi1>
    %1115 = vector.broadcast %cst_440 : f32 to vector<8x512xf32>
    %1116 = arith.select %1114, %1112, %1115 : vector<8x512xi1>, vector<8x512xf32>
    %c0_441 = arith.constant 0 : index
    %c91 = arith.constant 91 : index
    %1117 = vector.load %arg5[%c0_441, %c91] : memref<8x99xf32, #tpu.memory_space<vmem>>, vector<8x1xf32>
    %1118 = vector.broadcast %1117 : vector<8x1xf32> to vector<8x512xf32>
    %1119 = arith.mulf %1116, %1118 : vector<8x512xf32>
    %1120 = arith.addf %1111, %1119 : vector<8x512xf32>
    %c30_i32 = arith.constant 30 : i32
    %1121 = tpu.dynamic_rotate %1101 by %c30_i32 dim 1 : vector<8x512xf32>, i32 -> vector<8x512xf32>
    %cst_442 = arith.constant 0.000000e+00 : f32
    %1122 = vector.shape_cast %160 : vector<1x512xi1> to vector<1x512xi1>
    %1123 = vector.broadcast %1122 : vector<1x512xi1> to vector<8x512xi1>
    %1124 = vector.broadcast %cst_442 : f32 to vector<8x512xf32>
    %1125 = arith.select %1123, %1121, %1124 : vector<8x512xi1>, vector<8x512xf32>
    %c0_443 = arith.constant 0 : index
    %c92 = arith.constant 92 : index
    %1126 = vector.load %arg5[%c0_443, %c92] : memref<8x99xf32, #tpu.memory_space<vmem>>, vector<8x1xf32>
    %1127 = vector.broadcast %1126 : vector<8x1xf32> to vector<8x512xf32>
    %1128 = arith.mulf %1125, %1127 : vector<8x512xf32>
    %1129 = arith.addf %1120, %1128 : vector<8x512xf32>
    %c2_i32_444 = arith.constant 2 : i32
    %1130 = tpu.dynamic_rotate %1101 by %c2_i32_444 dim 1 : vector<8x512xf32>, i32 -> vector<8x512xf32>
    %cst_445 = arith.constant 0.000000e+00 : f32
    %1131 = vector.shape_cast %169 : vector<1x512xi1> to vector<1x512xi1>
    %1132 = vector.broadcast %1131 : vector<1x512xi1> to vector<8x512xi1>
    %1133 = vector.broadcast %cst_445 : f32 to vector<8x512xf32>
    %1134 = arith.select %1132, %1130, %1133 : vector<8x512xi1>, vector<8x512xf32>
    %c0_446 = arith.constant 0 : index
    %c93 = arith.constant 93 : index
    %1135 = vector.load %arg5[%c0_446, %c93] : memref<8x99xf32, #tpu.memory_space<vmem>>, vector<8x1xf32>
    %1136 = vector.broadcast %1135 : vector<8x1xf32> to vector<8x512xf32>
    %1137 = arith.mulf %1134, %1136 : vector<8x512xf32>
    %1138 = arith.addf %1129, %1137 : vector<8x512xf32>
    %c0_447 = arith.constant 0 : index
    %c94 = arith.constant 94 : index
    %1139 = vector.load %arg5[%c0_447, %c94] : memref<8x99xf32, #tpu.memory_space<vmem>>, vector<8x1xf32>
    %1140 = vector.broadcast %1139 : vector<8x1xf32> to vector<8x512xf32>
    %1141 = arith.mulf %1101, %1140 : vector<8x512xf32>
    %1142 = arith.addf %1138, %1141 : vector<8x512xf32>
    %c510_i32 = arith.constant 510 : i32
    %1143 = tpu.dynamic_rotate %1101 by %c510_i32 dim 1 : vector<8x512xf32>, i32 -> vector<8x512xf32>
    %cst_448 = arith.constant 0.000000e+00 : f32
    %1144 = vector.shape_cast %178 : vector<1x512xi1> to vector<1x512xi1>
    %1145 = vector.broadcast %1144 : vector<1x512xi1> to vector<8x512xi1>
    %1146 = vector.broadcast %cst_448 : f32 to vector<8x512xf32>
    %1147 = arith.select %1145, %1143, %1146 : vector<8x512xi1>, vector<8x512xf32>
    %c0_449 = arith.constant 0 : index
    %c95 = arith.constant 95 : index
    %1148 = vector.load %arg5[%c0_449, %c95] : memref<8x99xf32, #tpu.memory_space<vmem>>, vector<8x1xf32>
    %1149 = vector.broadcast %1148 : vector<8x1xf32> to vector<8x512xf32>
    %1150 = arith.mulf %1147, %1149 : vector<8x512xf32>
    %1151 = arith.addf %1142, %1150 : vector<8x512xf32>
    %c482_i32 = arith.constant 482 : i32
    %1152 = tpu.dynamic_rotate %1101 by %c482_i32 dim 1 : vector<8x512xf32>, i32 -> vector<8x512xf32>
    %cst_450 = arith.constant 0.000000e+00 : f32
    %1153 = vector.shape_cast %197 : vector<1x512xi1> to vector<1x512xi1>
    %1154 = vector.broadcast %1153 : vector<1x512xi1> to vector<8x512xi1>
    %1155 = vector.broadcast %cst_450 : f32 to vector<8x512xf32>
    %1156 = arith.select %1154, %1152, %1155 : vector<8x512xi1>, vector<8x512xf32>
    %c0_451 = arith.constant 0 : index
    %c96 = arith.constant 96 : index
    %1157 = vector.load %arg5[%c0_451, %c96] : memref<8x99xf32, #tpu.memory_space<vmem>>, vector<8x1xf32>
    %1158 = vector.broadcast %1157 : vector<8x1xf32> to vector<8x512xf32>
    %1159 = arith.mulf %1156, %1158 : vector<8x512xf32>
    %1160 = arith.addf %1151, %1159 : vector<8x512xf32>
    %c480_i32 = arith.constant 480 : i32
    %1161 = tpu.dynamic_rotate %1101 by %c480_i32 dim 1 : vector<8x512xf32>, i32 -> vector<8x512xf32>
    %cst_452 = arith.constant 0.000000e+00 : f32
    %1162 = vector.shape_cast %206 : vector<1x512xi1> to vector<1x512xi1>
    %1163 = vector.broadcast %1162 : vector<1x512xi1> to vector<8x512xi1>
    %1164 = vector.broadcast %cst_452 : f32 to vector<8x512xf32>
    %1165 = arith.select %1163, %1161, %1164 : vector<8x512xi1>, vector<8x512xf32>
    %c0_453 = arith.constant 0 : index
    %c97 = arith.constant 97 : index
    %1166 = vector.load %arg5[%c0_453, %c97] : memref<8x99xf32, #tpu.memory_space<vmem>>, vector<8x1xf32>
    %1167 = vector.broadcast %1166 : vector<8x1xf32> to vector<8x512xf32>
    %1168 = arith.mulf %1165, %1167 : vector<8x512xf32>
    %1169 = arith.addf %1160, %1168 : vector<8x512xf32>
    %c478_i32 = arith.constant 478 : i32
    %1170 = tpu.dynamic_rotate %1101 by %c478_i32 dim 1 : vector<8x512xf32>, i32 -> vector<8x512xf32>
    %cst_454 = arith.constant 0.000000e+00 : f32
    %1171 = vector.shape_cast %225 : vector<1x512xi1> to vector<1x512xi1>
    %1172 = vector.broadcast %1171 : vector<1x512xi1> to vector<8x512xi1>
    %1173 = vector.broadcast %cst_454 : f32 to vector<8x512xf32>
    %1174 = arith.select %1172, %1170, %1173 : vector<8x512xi1>, vector<8x512xf32>
    %c0_455 = arith.constant 0 : index
    %c98 = arith.constant 98 : index
    %1175 = vector.load %arg5[%c0_455, %c98] : memref<8x99xf32, #tpu.memory_space<vmem>>, vector<8x1xf32>
    %1176 = vector.broadcast %1175 : vector<8x1xf32> to vector<8x512xf32>
    %1177 = arith.mulf %1174, %1176 : vector<8x512xf32>
    %1178 = arith.addf %1169, %1177 : vector<8x512xf32>
    %c10_456 = arith.constant 10 : index
    %c0_457 = arith.constant 0 : index
    %c0_458 = arith.constant 0 : index
    %1179 = vector.load %arg6[%c10_456, %c0_457, %c0_458] : memref<11x8x8xf32, #tpu.memory_space<vmem>>, vector<1x8x8xf32>
    %1180 = vector.shape_cast %1179 : vector<1x8x8xf32> to vector<8x8xf32>
    %cst_459 = arith.constant dense<0.000000e+00> : vector<8x512xf32>
    %1181 = tpu.matmul %1180, %1178, %cst_459 {dimension_numbers = #tpu.dot_dimension_numbers<[1], [0], [0], [1], [0, 0, 1, 1], [], []>} : vector<8x8xf32>, vector<8x512xf32>, vector<8x512xf32> -> vector<8x512xf32>
    %c10_460 = arith.constant 10 : index
    %c0_461 = arith.constant 0 : index
    %c0_462 = arith.constant 0 : index
    %1182 = vector.load %arg7[%c10_460, %c0_461, %c0_462] : memref<11x8x1xf32, #tpu.memory_space<vmem>>, vector<1x8x1xf32>
    %1183 = vector.shape_cast %1182 : vector<1x8x1xf32> to vector<8x1xf32>
    %1184 = vector.broadcast %1183 : vector<8x1xf32> to vector<8x512xf32>
    %1185 = arith.addf %1181, %1184 : vector<8x512xf32>
    %1186 = arith.addf %235, %1185 : vector<8x512xf32>
    %c0_463 = arith.constant 0 : index
    %c0_464 = arith.constant 0 : index
    %c0_465 = arith.constant 0 : index
    %1187 = vector.load %arg8[%c0_463, %c0_464, %c0_465] : memref<1x32x512xf32, #tpu.memory_space<vmem>>, vector<1x8x512xf32>
    %1188 = vector.shape_cast %1187 : vector<1x8x512xf32> to vector<8x512xf32>
    %1189 = vector.shape_cast %581 : vector<8x512xf32> to vector<1x8x512xf32>
    tpu.vector_store %arg8[%c0_463, %c0_464, %c0_465], %1189 {strides = array<i32>} : memref<1x32x512xf32, #tpu.memory_space<vmem>>, vector<1x8x512xf32>,
    %c0_466 = arith.constant 0 : index
    %c8_467 = arith.constant 8 : index
    %c0_468 = arith.constant 0 : index
    %1190 = vector.load %arg8[%c0_466, %c8_467, %c0_468] : memref<1x32x512xf32, #tpu.memory_space<vmem>>, vector<1x8x512xf32>
    %1191 = vector.shape_cast %1190 : vector<1x8x512xf32> to vector<8x512xf32>
    %1192 = vector.shape_cast %926 : vector<8x512xf32> to vector<1x8x512xf32>
    tpu.vector_store %arg8[%c0_466, %c8_467, %c0_468], %1192 {strides = array<i32>} : memref<1x32x512xf32, #tpu.memory_space<vmem>>, vector<1x8x512xf32>,
    %c0_469 = arith.constant 0 : index
    %c16_470 = arith.constant 16 : index
    %c0_471 = arith.constant 0 : index
    %1193 = vector.load %arg8[%c0_469, %c16_470, %c0_471] : memref<1x32x512xf32, #tpu.memory_space<vmem>>, vector<1x8x512xf32>
    %1194 = vector.shape_cast %1193 : vector<1x8x512xf32> to vector<8x512xf32>
    %1195 = vector.shape_cast %1099 : vector<8x512xf32> to vector<1x8x512xf32>
    tpu.vector_store %arg8[%c0_469, %c16_470, %c0_471], %1195 {strides = array<i32>} : memref<1x32x512xf32, #tpu.memory_space<vmem>>, vector<1x8x512xf32>,
    %c0_472 = arith.constant 0 : index
    %c24_473 = arith.constant 24 : index
    %c0_474 = arith.constant 0 : index
    %1196 = vector.load %arg8[%c0_472, %c24_473, %c0_474] : memref<1x32x512xf32, #tpu.memory_space<vmem>>, vector<1x8x512xf32>
    %1197 = vector.shape_cast %1196 : vector<1x8x512xf32> to vector<8x512xf32>
    %1198 = vector.shape_cast %1186 : vector<8x512xf32> to vector<1x8x512xf32>
    tpu.vector_store %arg8[%c0_472, %c24_473, %c0_474], %1198 {strides = array<i32>} : memref<1x32x512xf32, #tpu.memory_space<vmem>>, vector<1x8x512xf32>,
    return
  }
  func.func @transform_0(%arg0: i32) -> (i32, i32, i32) {
    %c0_i32 = arith.constant 0 : i32
    %c0_i32_0 = arith.constant 0 : i32
    %c0_i32_1 = arith.constant 0 : i32
    return %arg0, %c0_i32, %c0_i32_0 : i32, i32, i32
  }
  func.func @transform_1(%arg0: i32) -> (i32, i32) {
    %c0_i32 = arith.constant 0 : i32
    %c0_i32_0 = arith.constant 0 : i32
    %c0_i32_1 = arith.constant 0 : i32
    return %c0_i32, %c0_i32_0 : i32, i32
  }
  func.func @transform_2(%arg0: i32) -> (i32, i32) {
    %c0_i32 = arith.constant 0 : i32
    %c0_i32_0 = arith.constant 0 : i32
    %c0_i32_1 = arith.constant 0 : i32
    return %c0_i32, %c0_i32_0 : i32, i32
  }
  func.func @transform_3(%arg0: i32) -> (i32, i32) {
    %c0_i32 = arith.constant 0 : i32
    %c0_i32_0 = arith.constant 0 : i32
    %c0_i32_1 = arith.constant 0 : i32
    return %c0_i32, %c0_i32_0 : i32, i32
  }
  func.func @transform_4(%arg0: i32) -> (i32, i32) {
    %c0_i32 = arith.constant 0 : i32
    %c0_i32_0 = arith.constant 0 : i32
    %c0_i32_1 = arith.constant 0 : i32
    return %c0_i32, %c0_i32_0 : i32, i32
  }
  func.func @transform_5(%arg0: i32) -> (i32, i32, i32) {
    %c0_i32 = arith.constant 0 : i32
    %c0_i32_0 = arith.constant 0 : i32
    %c0_i32_1 = arith.constant 0 : i32
    %c0_i32_2 = arith.constant 0 : i32
    return %c0_i32, %c0_i32_0, %c0_i32_1 : i32, i32, i32
  }
  func.func @transform_6(%arg0: i32) -> (i32, i32, i32) {
    %c0_i32 = arith.constant 0 : i32
    %c0_i32_0 = arith.constant 0 : i32
    %c0_i32_1 = arith.constant 0 : i32
    %c0_i32_2 = arith.constant 0 : i32
    return %c0_i32, %c0_i32_0, %c0_i32_1 : i32, i32, i32
  }
  func.func @transform_7(%arg0: i32) -> (i32, i32, i32) {
    %c0_i32 = arith.constant 0 : i32
    %c0_i32_0 = arith.constant 0 : i32
    %c0_i32_1 = arith.constant 0 : i32
    return %arg0, %c0_i32, %c0_i32_0 : i32, i32, i32
  }
}

</mosaic_0001>

<llo_original>
// kernel: tpu_custom_call.1
$region0: #{tpu_custom_call.1}
  #allocation0 [shape = 'u32[]', space=smem, size = 0x4, offset = 0x4, fixed_abs, tag = 'smem constant byte address 0x4 - core index']
  #allocation1 [shape = 'u32[144,128]{1,0:T(1,128)}', space=vmem, size = 0x12000, scoped, tag = 'internal scratch']
  %s0 = inlined_call_operand.vmem [shape: f32[2,16,512], index: 0, kind: input, shape index: {}]
  %s1 = inlined_call_operand.vmem [shape: s32[2,512], index: 1, kind: input, shape index: {}]
  %s2 = inlined_call_operand.vmem [shape: f32[16,16], index: 2, kind: input, shape index: {}]
  %s3 = inlined_call_operand.vmem [shape: f32[16,1], index: 3, kind: input, shape index: {}]
  %s4 = inlined_call_operand.vmem [shape: f32[8,99], index: 4, kind: input, shape index: {}]
  %s5 = inlined_call_operand.vmem [shape: f32[11,8,8], index: 5, kind: input, shape index: {}]
  %s6 = inlined_call_operand.vmem [shape: f32[11,8,1], index: 6, kind: input, shape index: {}]
  %s7 = inlined_call_operand.hbm [shape: f32[2,32,512], index: 7, kind: output, shape index: {}]
  %s8 = sld [smem:[#allocation0]]
  $region61: #{tpu_custom_call.1} parent=0
    _
  %s10 = ssub.s32 1, %s8
  %s11 = scalar_select 0, %s10, %s8
  $region1: #{tpu_custom_call.1} parent=0
    #allocation2 [shape = 'u8[131072]{0}', space=vmem, size = 0x20000, scoped, tag = 'output window, operand 0']
    #allocation3 [shape = 's32[2]{0}', space=sflag, size = 0x8, scoped, tag = 'scoped memory for tpu_custom_call.1']
    %12 = vsyncpa [#allocation3], 0
    %s13 = scalar_lea.sflag [#allocation3], 1
    %14 = vsyncpa %s13, 0
    loop: start=0, step=1, limit=4
    $region2: #{tpu_custom_call.1} parent=1 // loop_pre_header
      _
    $region3: #{tpu_custom_call.1} parent=1 // loop_header
      %s16 = sphi 0, %s20
      %p17 = scmp.ge.s32.totalorder %s16, 4
      %s26 = sphi 0, %s28
      %s29 = sphi 0, %s26
      %s30 = sphi 0, %s29
      %s46 = sphi 0, %s30
      %s50 = sphi 0, %s50
      %s52 = sphi 0, %s50
      %s53 = sphi 0, %s52
      %s67 = sphi 0, %s53
      %s71 = sphi 0, %s71
      %s73 = sphi 0, %s71
      %s74 = sphi 0, %s73
      %s88 = sphi 0, %s74
      %s92 = sphi 0, %s92
      %s94 = sphi 0, %s92
      %s95 = sphi 0, %s94
      %s109 = sphi 0, %s95
      %s113 = sphi 0, %s113
      %s115 = sphi 0, %s113
      %s116 = sphi 0, %s115
      %s130 = sphi 0, %s116
      %s134 = sphi 0, %s134
      %s136 = sphi 0, %s134
      %s137 = sphi 0, %s136
      %s151 = sphi 0, %s137
      %s155 = sphi 0, %s155
      %s157 = sphi 0, %s155
      %s158 = sphi 0, %s157
      %s172 = sphi 0, %s158
      %s178 = sphi 0, %s180
      %s181 = sphi 0, %s178
      %s182 = sphi 0, %s181
      %s198 = sphi 0, %s182
    $region4: #{tpu_custom_call.1} parent=1 // loop_header_branch
      %19 = sbr.rel (%p17) target = $region8
    $region5: #{tpu_custom_call.1} parent=1 // loop_body
      %s21 = ssub.s32 %s16, 1
      %s22 = ssub.s32 %s16, 2
      %s23 = sadd.s32 %s16, 1
      %s24 = ssub.s32 %s16, %s23
      %p25 = scmp.eq.s32.totalorder %s24, 0
      %s27 = sadd.s32 %s26, 1
      %s28 = scalar_select %p25, %s26, %s27
      %p31 = pneg %p25
      %p32 = scmp.eq.s32.totalorder %s16, 1
      %p33 = por %p31, %p32
      %p34 = scmp.ne.s32.totalorder %s26, %s29
      %p35 = scmp.eq.s32.totalorder %s16, 0
      %p36 = por %p34, %p35
      %p37 = scmp.ne.s32.totalorder %s26, %s29
      %p38 = scmp.eq.s32.totalorder %s21, 1
      %p39 = por %p37, %p38
      %p40 = scmp.ne.s32.totalorder %s29, %s30
      %p41 = scmp.eq.s32.totalorder %s21, 0
      %p42 = por %p40, %p41
      %p43 = scmp.ne.s32.totalorder %s29, %s30
      %p44 = scmp.eq.s32.totalorder %s22, 1
      %p45 = por %p43, %p44
      %p47 = scmp.ne.s32.totalorder %s30, %s46
      %p48 = scmp.eq.s32.totalorder %s22, 0
      %p49 = por %p47, %p48
      %s51 = sadd.s32 %s50, 1
      %p54 = scmp.eq.s32.totalorder %s16, 1
      %p55 = scmp.ne.s32.totalorder %s50, %s52
      %p56 = scmp.eq.s32.totalorder %s16, 0
      %p57 = por %p55, %p56
      %p58 = scmp.ne.s32.totalorder %s50, %s52
      %p59 = scmp.eq.s32.totalorder %s21, 1
      %p60 = por %p58, %p59
      %p61 = scmp.ne.s32.totalorder %s52, %s53
      %p62 = scmp.eq.s32.totalorder %s21, 0
      %p63 = por %p61, %p62
      %p64 = scmp.ne.s32.totalorder %s52, %s53
      %p65 = scmp.eq.s32.totalorder %s22, 1
      %p66 = por %p64, %p65
      %p68 = scmp.ne.s32.totalorder %s53, %s67
      %p69 = scmp.eq.s32.totalorder %s22, 0
      %p70 = por %p68, %p69
      %s72 = sadd.s32 %s71, 1
      %p75 = scmp.eq.s32.totalorder %s16, 1
      %p76 = scmp.ne.s32.totalorder %s71, %s73
      %p77 = scmp.eq.s32.totalorder %s16, 0
      %p78 = por %p76, %p77
      %p79 = scmp.ne.s32.totalorder %s71, %s73
      %p80 = scmp.eq.s32.totalorder %s21, 1
      %p81 = por %p79, %p80
      %p82 = scmp.ne.s32.totalorder %s73, %s74
      %p83 = scmp.eq.s32.totalorder %s21, 0
      %p84 = por %p82, %p83
      %p85 = scmp.ne.s32.totalorder %s73, %s74
      %p86 = scmp.eq.s32.totalorder %s22, 1
      %p87 = por %p85, %p86
      %p89 = scmp.ne.s32.totalorder %s74, %s88
      %p90 = scmp.eq.s32.totalorder %s22, 0
      %p91 = por %p89, %p90
      %s93 = sadd.s32 %s92, 1
      %p96 = scmp.eq.s32.totalorder %s16, 1
      %p97 = scmp.ne.s32.totalorder %s92, %s94
      %p98 = scmp.eq.s32.totalorder %s16, 0
      %p99 = por %p97, %p98
      %p100 = scmp.ne.s32.totalorder %s92, %s94
      %p101 = scmp.eq.s32.totalorder %s21, 1
      %p102 = por %p100, %p101
      %p103 = scmp.ne.s32.totalorder %s94, %s95
      %p104 = scmp.eq.s32.totalorder %s21, 0
      %p105 = por %p103, %p104
      %p106 = scmp.ne.s32.totalorder %s94, %s95
      %p107 = scmp.eq.s32.totalorder %s22, 1
      %p108 = por %p106, %p107
      %p110 = scmp.ne.s32.totalorder %s95, %s109
      %p111 = scmp.eq.s32.totalorder %s22, 0
      %p112 = por %p110, %p111
      %s114 = sadd.s32 %s113, 1
      %p117 = scmp.eq.s32.totalorder %s16, 1
      %p118 = scmp.ne.s32.totalorder %s113, %s115
      %p119 = scmp.eq.s32.totalorder %s16, 0
      %p120 = por %p118, %p119
      %p121 = scmp.ne.s32.totalorder %s113, %s115
      %p122 = scmp.eq.s32.totalorder %s21, 1
      %p123 = por %p121, %p122
      %p124 = scmp.ne.s32.totalorder %s115, %s116
      %p125 = scmp.eq.s32.totalorder %s21, 0
      %p126 = por %p124, %p125
      %p127 = scmp.ne.s32.totalorder %s115, %s116
      %p128 = scmp.eq.s32.totalorder %s22, 1
      %p129 = por %p127, %p128
      %p131 = scmp.ne.s32.totalorder %s116, %s130
      %p132 = scmp.eq.s32.totalorder %s22, 0
      %p133 = por %p131, %p132
      %s135 = sadd.s32 %s134, 1
      %p138 = scmp.eq.s32.totalorder %s16, 1
      %p139 = scmp.ne.s32.totalorder %s134, %s136
      %p140 = scmp.eq.s32.totalorder %s16, 0
      %p141 = por %p139, %p140
      %p142 = scmp.ne.s32.totalorder %s134, %s136
      %p143 = scmp.eq.s32.totalorder %s21, 1
      %p144 = por %p142, %p143
      %p145 = scmp.ne.s32.totalorder %s136, %s137
      %p146 = scmp.eq.s32.totalorder %s21, 0
      %p147 = por %p145, %p146
      %p148 = scmp.ne.s32.totalorder %s136, %s137
      %p149 = scmp.eq.s32.totalorder %s22, 1
      %p150 = por %p148, %p149
      %p152 = scmp.ne.s32.totalorder %s137, %s151
      %p153 = scmp.eq.s32.totalorder %s22, 0
      %p154 = por %p152, %p153
      %s156 = sadd.s32 %s155, 1
      %p159 = scmp.eq.s32.totalorder %s16, 1
      %p160 = scmp.ne.s32.totalorder %s155, %s157
      %p161 = scmp.eq.s32.totalorder %s16, 0
      %p162 = por %p160, %p161
      %p163 = scmp.ne.s32.totalorder %s155, %s157
      %p164 = scmp.eq.s32.totalorder %s21, 1
      %p165 = por %p163, %p164
      %p166 = scmp.ne.s32.totalorder %s157, %s158
      %p167 = scmp.eq.s32.totalorder %s21, 0
      %p168 = por %p166, %p167
      %p169 = scmp.ne.s32.totalorder %s157, %s158
      %p170 = scmp.eq.s32.totalorder %s22, 1
      %p171 = por %p169, %p170
      %p173 = scmp.ne.s32.totalorder %s158, %s172
      %p174 = scmp.eq.s32.totalorder %s22, 0
      %p175 = por %p173, %p174
      %s176 = ssub.s32 %s16, %s23
      %p177 = scmp.eq.s32.totalorder %s176, 0
      %s179 = sadd.s32 %s178, 1
      %s180 = scalar_select %p177, %s178, %s179
      %p183 = pneg %p177
      %p184 = scmp.eq.s32.totalorder %s16, 1
      %p185 = por %p183, %p184
      %p186 = scmp.ne.s32.totalorder %s178, %s181
      %p187 = scmp.eq.s32.totalorder %s16, 0
      %p188 = por %p186, %p187
      %p189 = scmp.ne.s32.totalorder %s178, %s181
      %p190 = scmp.eq.s32.totalorder %s21, 1
      %p191 = por %p189, %p190
      %p192 = scmp.ne.s32.totalorder %s181, %s182
      %p193 = scmp.eq.s32.totalorder %s21, 0
      %p194 = por %p192, %p193
      %p195 = scmp.ne.s32.totalorder %s181, %s182
      %p196 = scmp.eq.s32.totalorder %s22, 1
      %p197 = por %p195, %p196
      %p199 = scmp.ne.s32.totalorder %s182, %s198
      %p200 = scmp.eq.s32.totalorder %s22, 0
      %p201 = por %p199, %p200
      %p202 = scmp.le.s32.totalorder 1, %s16
      %p203 = scmp.lt.s32.totalorder %s16, 3
      %p204 = pnand %p202, %p203
      %p205 = pneg %p204
      // Predicated region
      $region9: #{tpu_custom_call.1} parent=5 // pred_check
        _
      $region10: #{tpu_custom_call.1} parent=5 // pred_check_branch
        %207 = sbr.rel (%p204) target = $region12
      $region11: #{tpu_custom_call.1} parent=5 // pred_region
        %s208 = ssub.s32 %s16, 1
        // Predicated region
        $region13: #{tpu_custom_call.1} parent=11 // pred_check
          %p209 = pneg %p63
        $region14: #{tpu_custom_call.1} parent=11 // pred_check_branch
          %211 = sbr.rel (%p209) target = $region16
        $region15: #{tpu_custom_call.1} parent=11 // pred_region
          _
        $region16: #{tpu_custom_call.1} parent=11 // pred_fallthru
          _
        // Predicated region
        $region17: #{tpu_custom_call.1} parent=11 // pred_check
          %p212 = pneg %p84
        $region18: #{tpu_custom_call.1} parent=11 // pred_check_branch
          %214 = sbr.rel (%p212) target = $region20
        $region19: #{tpu_custom_call.1} parent=11 // pred_region
          _
        $region20: #{tpu_custom_call.1} parent=11 // pred_fallthru
          _
        // Predicated region
        $region21: #{tpu_custom_call.1} parent=11 // pred_check
          %p215 = pneg %p105
        $region22: #{tpu_custom_call.1} parent=11 // pred_check_branch
          %217 = sbr.rel (%p215) target = $region24
        $region23: #{tpu_custom_call.1} parent=11 // pred_region
          _
        $region24: #{tpu_custom_call.1} parent=11 // pred_fallthru
          _
        // Predicated region
        $region25: #{tpu_custom_call.1} parent=11 // pred_check
          %p218 = pneg %p126
        $region26: #{tpu_custom_call.1} parent=11 // pred_check_branch
          %220 = sbr.rel (%p218) target = $region28
        $region27: #{tpu_custom_call.1} parent=11 // pred_region
          _
        $region28: #{tpu_custom_call.1} parent=11 // pred_fallthru
          _
        // Predicated region
        $region29: #{tpu_custom_call.1} parent=11 // pred_check
          %p221 = pneg %p147
        $region30: #{tpu_custom_call.1} parent=11 // pred_check_branch
          %223 = sbr.rel (%p221) target = $region32
        $region31: #{tpu_custom_call.1} parent=11 // pred_region
          _
        $region32: #{tpu_custom_call.1} parent=11 // pred_fallthru
          _
        // Predicated region
        $region33: #{tpu_custom_call.1} parent=11 // pred_check
          %p224 = pneg %p168
        $region34: #{tpu_custom_call.1} parent=11 // pred_check_branch
          %226 = sbr.rel (%p224) target = $region36
        $region35: #{tpu_custom_call.1} parent=11 // pred_region
          _
        $region36: #{tpu_custom_call.1} parent=11 // pred_fallthru
          _
      $region12: #{tpu_custom_call.1} parent=5 // pred_fallthru
        _
      %p227 = scmp.lt.s32.totalorder %s16, 2
      // Predicated region
      $region37: #{tpu_custom_call.1} parent=5 // pred_check
        %p228 = pneg %p227
      $region38: #{tpu_custom_call.1} parent=5 // pred_check_branch
        %230 = sbr.rel (%p228) target = $region40
      $region39: #{tpu_custom_call.1} parent=5 // pred_region
        // Predicated region
        $region41: #{tpu_custom_call.1} parent=39 // pred_check
          %p231 = pneg %p36
        $region42: #{tpu_custom_call.1} parent=39 // pred_check_branch
          %233 = sbr.rel (%p231) target = $region44
        $region43: #{tpu_custom_call.1} parent=39 // pred_region
          %p234 = scmp.lt.s32.totalorder %s16, 1
          %s235 = scalar_select %p234, %s16, 1
          %s236 = smul.addr %s235, 8
          %s237 = smul.addr %s236, 8
          %s238 = scalar_lea.vmem %s0, %s237
        $region44: #{tpu_custom_call.1} parent=39 // pred_fallthru
          _
      $region40: #{tpu_custom_call.1} parent=5 // pred_fallthru
        _
      %p239 = scmp.le.s32.totalorder 1, %s16
      %p240 = scmp.lt.s32.totalorder %s16, 3
      %p241 = pnand %p239, %p240
      %p242 = pneg %p241
      // Predicated region
      $region45: #{tpu_custom_call.1} parent=5 // pred_check
        _
      $region46: #{tpu_custom_call.1} parent=5 // pred_check_branch
        %244 = sbr.rel (%p241) target = $region48
      $region47: #{tpu_custom_call.1} parent=5 // pred_region
        %s245 = ssub.s32 %s16, 1
        %p246 = scmp.lt.s32.totalorder %s21, 1
        %s247 = scalar_select %p246, %s21, 1
        %s248 = smul.addr %s247, 8
        %s249 = smul.addr %s248, 8
        %s250 = scalar_lea.vmem %s0, %s249
        %p251 = pneg %p42
        %p252 = pneg %p39
        %p253 = pneg %p63
        %p254 = pneg %p60
        %p255 = pneg %p84
        %p256 = pneg %p81
        %p257 = pneg %p105
        %p258 = pneg %p102
        %p259 = pneg %p126
        %p260 = pneg %p123
        %p261 = pneg %p147
        %p262 = pneg %p144
        %p263 = pneg %p168
        %p264 = pneg %p165
        %p265 = pneg %p194
        %p266 = pneg %p191
        %s267 = sand.u32 %s181, 1
        %s268 = scalar_lea.sflag [#allocation3], %s267
        %s269 = sand.u32 %s181, 1
        %s270 = smul.addr %s269, 128
        %s271 = scalar_lea.vmem [#allocation2], %s270
        %p272 = scmp.lt.s32.totalorder %s21, 1
        %s273 = scalar_select %p272, %s21, 1
        %s274 = smul.addr %s273, 8
        %s275 = smul.addr %s274, 8
        %s276 = scalar_lea.vmem %s0, %s275
        %v277 = vld [vmem:[%s1] ss:$2 sm:$0xf]
        %s278 = scalar_lea.vmem %s1, 1
        %v279 = vld [vmem:[%s278] ss:$2 sm:$0xf]
        %v280 = vadd.s32 %v277, 4294967295
        %vm281 = vcmp.ge.s32.totalorder %v280, 0
        %vm282 = vcmp.lt.s32.totalorder %v280, 16
        %vm283 = vmand %vm281, %vm282
        %v284 = vadd.s32 %v279, 4294967295
        %vm285 = vcmp.ge.s32.totalorder %v284, 0
        %vm286 = vcmp.lt.s32.totalorder %v284, 16
        %vm287 = vmand %vm285, %vm286
        %vm288 = vmand %vm283, %vm287
        %v289 = vadd.s32 %v279, 1
        %vm290 = vcmp.ge.s32.totalorder %v289, 0
        %vm291 = vcmp.lt.s32.totalorder %v289, 16
        %vm292 = vmand %vm290, %vm291
        %vm293 = vmand %vm283, %vm292
        %v294 = vadd.s32 %v277, 1
        %vm295 = vcmp.ge.s32.totalorder %v294, 0
        %vm296 = vcmp.lt.s32.totalorder %v294, 16
        %vm297 = vmand %vm295, %vm296
        %vm298 = vmand %vm297, %vm287
        %vm299 = vmand %vm297, %vm292
        %v300 = vadd.s32 %v277, 4294967294
        %vm301 = vcmp.ge.s32.totalorder %v300, 0
        %vm302 = vcmp.lt.s32.totalorder %v300, 16
        %vm303 = vmand %vm301, %vm302
        %v304 = vadd.s32 %v279, 4294967294
        %vm305 = vcmp.ge.s32.totalorder %v304, 0
        %vm306 = vcmp.lt.s32.totalorder %v304, 16
        %vm307 = vmand %vm305, %vm306
        %vm308 = vmand %vm303, %vm307
        %v309 = vadd.s32 %v279, 2
        %vm310 = vcmp.ge.s32.totalorder %v309, 0
        %vm311 = vcmp.lt.s32.totalorder %v309, 16
        %vm312 = vmand %vm310, %vm311
        %vm313 = vmand %vm303, %vm312
        %v314 = vadd.s32 %v277, 2
        %vm315 = vcmp.ge.s32.totalorder %v314, 0
        %vm316 = vcmp.lt.s32.totalorder %v314, 16
        %vm317 = vmand %vm315, %vm316
        %vm318 = vmand %vm317, %vm307
        %vm319 = vmand %vm317, %vm312
        %v320 = vld [vmem:[%s276] sm:$0xff]
        %v321 = vld [vmem:[%s276 + $0x8] sm:$0xff]
        %v322 = vld [vmem:[%s276 + $0x10] sm:$0xff]
        %v323 = vld [vmem:[%s276 + $0x18] sm:$0xff]
        %v324 = vld [vmem:[%s276 + $0x20] sm:$0xff]
        %v325 = vld [vmem:[%s276 + $0x28] sm:$0xff]
        %v326 = vld [vmem:[%s276 + $0x30] sm:$0xff]
        %v327 = vld [vmem:[%s276 + $0x38] sm:$0xff]
        %v328 = vmax.f32 %v320, 0.0
        %v329 = vmax.f32 %v321, 0.0
        %v330 = vmax.f32 %v322, 0.0
        %v331 = vmax.f32 %v323, 0.0
        %v332 = vmax.f32 %v324, 0.0
        %v333 = vmax.f32 %v325, 0.0
        %v334 = vmax.f32 %v326, 0.0
        %v335 = vmax.f32 %v327, 0.0
        %v336 = vld [vmem:[%s2] sm:$0xff]
        %v337 = vld [vmem:[%s2 + $0x8] sm:$0xff]
        %v338 = vld [vmem:[%s3] sm:$0xff]
        %v339 = vld [vmem:[%s3 + $0x8] sm:$0xff]
        %341 = vset.pattern.permute.xlu0 0
        %342 = vperm.xlu0 %341, %v338
        %v343 = vpop.permute.xlu0 %342
        %346 = vset.pattern.permute.xlu0 0
        %347 = vperm.xlu0 %346, %v339
        %v348 = vpop.permute.xlu0 %347
        %vm350 = vcmask 130048
        %v352 = vsel %vm350, %v336, 0
        %v355 = vsel %vm350, %v337, 0
        %357 = vmatprep.subr.mxu0 0.0
        %358 = vmatpush1.msra.mxu0 0.0
        %359 = vmatprep.subr.mxu0 0.0
        %360 = vmatpush1.msra.mxu0 0.0
        %361 = vmatprep.subr.mxu0 0.0
        %362 = vmatpush1.msra.mxu0 0.0
        %363 = vmatprep.subr.mxu0 0.0
        %364 = vmatpush1.msra.mxu0 0.0
        %365 = vmatprep.subr.mxu0 0.0
        %366 = vmatpush1.msra.mxu0 0.0
        %367 = vmatprep.subr.mxu0 0.0
        %368 = vmatpush1.msra.mxu0 0.0
        %369 = vmatprep.subr.mxu0 0.0
        %370 = vmatpush1.msra.mxu0 0.0
        %371 = vmatprep.subr.mxu0 0.0
        %372 = vmatpush1.msra.mxu0 0.0
        %373 = vmatprep.subr.mxu0 0.0
        %374 = vmatpush1.msra.mxu0 0.0
        %375 = vmatprep.subr.mxu0 0.0
        %376 = vmatpush1.msra.mxu0 0.0
        %377 = vmatprep.subr.mxu0 0.0
        %378 = vmatpush1.msra.mxu0 0.0
        %379 = vmatprep.subr.mxu0 0.0
        %380 = vmatpush1.msra.mxu0 0.0
        %381 = vmatprep.subr.mxu0 0.0
        %382 = vmatpush1.msra.mxu0 0.0
        %383 = vmatprep.subr.mxu0 0.0
        %384 = vmatpush1.msra.mxu0 0.0
        %385 = vmatprep.subr.mxu0 %v333
        %386 = vmatpush1.msra.mxu0 %v332
        %387 = vmatprep.subr.mxu0 %v329
        %388 = vmatpush1.msra.mxu0 %v328
        %389 = vmatprep.subr.mxu0 0.0
        %390 = vmatpush2.msra.mxu0 0.0
        %391 = vmatprep.subr.mxu0 0.0
        %392 = vmatpush2.msra.mxu0 0.0
        %393 = vmatprep.subr.mxu0 0.0
        %394 = vmatpush2.msra.mxu0 0.0
        %395 = vmatprep.subr.mxu0 0.0
        %396 = vmatpush2.msra.mxu0 0.0
        %397 = vmatprep.subr.mxu0 0.0
        %398 = vmatpush2.msra.mxu0 0.0
        %399 = vmatprep.subr.mxu0 0.0
        %400 = vmatpush2.msra.mxu0 0.0
        %401 = vmatprep.subr.mxu0 0.0
        %402 = vmatpush2.msra.mxu0 0.0
        %403 = vmatprep.subr.mxu0 0.0
        %404 = vmatpush2.msra.mxu0 0.0
        %405 = vmatprep.subr.mxu0 0.0
        %406 = vmatpush2.msra.mxu0 0.0
        %407 = vmatprep.subr.mxu0 0.0
        %408 = vmatpush2.msra.mxu0 0.0
        %409 = vmatprep.subr.mxu0 0.0
        %410 = vmatpush2.msra.mxu0 0.0
        %411 = vmatprep.subr.mxu0 0.0
        %412 = vmatpush2.msra.mxu0 0.0
        %413 = vmatprep.subr.mxu0 0.0
        %414 = vmatpush2.msra.mxu0 0.0
        %415 = vmatprep.subr.mxu0 0.0
        %416 = vmatpush2.msra.mxu0 0.0
        %417 = vmatprep.subr.mxu0 0.0
        %418 = vmatpush2.msra.mxu0 0.0
        %419 = vmatprep.subr.mxu0 0.0
        %420 = vmatpush2.msra.mxu0 0.0
        %421 = vmatprep.mubr.f32.mxu0 0.0
        %422 = vmatmul.mubr.f32.gmra.mxu0 %v352
        %v423 = vpop.f32.mrf.mxu0
        %v424 = vadd.f32 %v343, %v423
        %v425 = vpop.f32.mrf.mxu0
        %v426 = vadd.f32 %v343, %v425
        %427 = vmatprep.mubr.f32.mxu0 0.0
        %428 = vmatmul.mubr.f32.gmra.mxu0 %v355
        %v429 = vpop.f32.mrf.mxu0
        %v430 = vadd.f32 %v348, %v429
        %v431 = vpop.f32.mrf.mxu0
        %v432 = vadd.f32 %v348, %v431
        %433 = vdwg.mxu0
        %434 = vmatprep.subr.mxu0 0.0
        %435 = vmatpush1.msra.mxu0 0.0
        %436 = vmatprep.subr.mxu0 0.0
        %437 = vmatpush1.msra.mxu0 0.0
        %438 = vmatprep.subr.mxu0 0.0
        %439 = vmatpush1.msra.mxu0 0.0
        %440 = vmatprep.subr.mxu0 0.0
        %441 = vmatpush1.msra.mxu0 0.0
        %442 = vmatprep.subr.mxu0 0.0
        %443 = vmatpush1.msra.mxu0 0.0
        %444 = vmatprep.subr.mxu0 0.0
        %445 = vmatpush1.msra.mxu0 0.0
        %446 = vmatprep.subr.mxu0 0.0
        %447 = vmatpush1.msra.mxu0 0.0
        %448 = vmatprep.subr.mxu0 0.0
        %449 = vmatpush1.msra.mxu0 0.0
        %450 = vmatprep.subr.mxu0 0.0
        %451 = vmatpush1.msra.mxu0 0.0
        %452 = vmatprep.subr.mxu0 0.0
        %453 = vmatpush1.msra.mxu0 0.0
        %454 = vmatprep.subr.mxu0 0.0
        %455 = vmatpush1.msra.mxu0 0.0
        %456 = vmatprep.subr.mxu0 0.0
        %457 = vmatpush1.msra.mxu0 0.0
        %458 = vmatprep.subr.mxu0 0.0
        %459 = vmatpush1.msra.mxu0 0.0
        %460 = vmatprep.subr.mxu0 0.0
        %461 = vmatpush1.msra.mxu0 0.0
        %462 = vmatprep.subr.mxu0 %v335
        %463 = vmatpush1.msra.mxu0 %v334
        %464 = vmatprep.subr.mxu0 %v331
        %465 = vmatpush1.msra.mxu0 %v330
        %466 = vmatprep.subr.mxu0 0.0
        %467 = vmatpush2.msra.mxu0 0.0
        %468 = vmatprep.subr.mxu0 0.0
        %469 = vmatpush2.msra.mxu0 0.0
        %470 = vmatprep.subr.mxu0 0.0
        %471 = vmatpush2.msra.mxu0 0.0
        %472 = vmatprep.subr.mxu0 0.0
        %473 = vmatpush2.msra.mxu0 0.0
        %474 = vmatprep.subr.mxu0 0.0
        %475 = vmatpush2.msra.mxu0 0.0
        %476 = vmatprep.subr.mxu0 0.0
        %477 = vmatpush2.msra.mxu0 0.0
        %478 = vmatprep.subr.mxu0 0.0
        %479 = vmatpush2.msra.mxu0 0.0
        %480 = vmatprep.subr.mxu0 0.0
        %481 = vmatpush2.msra.mxu0 0.0
        %482 = vmatprep.subr.mxu0 0.0
        %483 = vmatpush2.msra.mxu0 0.0
        %484 = vmatprep.subr.mxu0 0.0
        %485 = vmatpush2.msra.mxu0 0.0
        %486 = vmatprep.subr.mxu0 0.0
        %487 = vmatpush2.msra.mxu0 0.0
        %488 = vmatprep.subr.mxu0 0.0
        %489 = vmatpush2.msra.mxu0 0.0
        %490 = vmatprep.subr.mxu0 0.0
        %491 = vmatpush2.msra.mxu0 0.0
        %492 = vmatprep.subr.mxu0 0.0
        %493 = vmatpush2.msra.mxu0 0.0
        %494 = vmatprep.subr.mxu0 0.0
        %495 = vmatpush2.msra.mxu0 0.0
        %496 = vmatprep.subr.mxu0 0.0
        %497 = vmatpush2.msra.mxu0 0.0
        %498 = vmatprep.mubr.f32.mxu0 0.0
        %499 = vmatmul.mubr.f32.gmra.mxu0 %v352
        %v500 = vpop.f32.mrf.mxu0
        %v501 = vadd.f32 %v343, %v500
        %v502 = vpop.f32.mrf.mxu0
        %v503 = vadd.f32 %v343, %v502
        %504 = vmatprep.mubr.f32.mxu0 0.0
        %505 = vmatmul.mubr.f32.gmra.mxu0 %v355
        %v506 = vpop.f32.mrf.mxu0
        %v507 = vadd.f32 %v348, %v506
        %v508 = vpop.f32.mrf.mxu0
        %v509 = vadd.f32 %v348, %v508
        %510 = vdwg.mxu0
        %v511 = vmax.f32 %v424, 0.0
        %v512 = vmax.f32 %v426, 0.0
        %v513 = vmax.f32 %v501, 0.0
        %v514 = vmax.f32 %v503, 0.0
        %515 = vrot.lane.b32.xlu0 %v511, 17
        %v516 = vpop.permute.xlu0 %515
        %517 = vrot.lane.b32.xlu0 %v512, 17
        %v518 = vpop.permute.xlu0 %517
        %519 = vrot.lane.b32.xlu0 %v513, 17
        %v520 = vpop.permute.xlu0 %519
        %521 = vrot.lane.b32.xlu0 %v514, 17
        %v522 = vpop.permute.xlu0 %521
        %v523 = vlaneseq
        %v524 = vand.u32 %v523, 127
        %vm525 = vcmp.lt.s32.totalorder %v524, 17
        %v526 = vsel %vm525, %v520, %v522
        %v527 = vsel %vm525, %v518, %v520
        %v528 = vsel %vm525, %v516, %v518
        %v529 = vsel %vm525, %v522, %v516
        %v530 = vsel %vm288, 1, 0
        %v531 = vlaneseq
        %v532 = vshrl.u32 %v531, 7
        %v533 = vsub.s32 0, %v532
        %v534 = vrot.slane %v530, %v533
        %v535 = vlaneseq
        %v536 = vshrl.u32 %v535, 7
        %v537 = vsub.s32 1, %v536
        %v538 = vrot.slane %v530, %v537
        %v539 = vlaneseq
        %v540 = vshrl.u32 %v539, 7
        %v541 = vsub.s32 2, %v540
        %v542 = vrot.slane %v530, %v541
        %v543 = vlaneseq
        %v544 = vshrl.u32 %v543, 7
        %v545 = vsub.s32 3, %v544
        %v546 = vrot.slane %v530, %v545
        %vm547 = vcmp.eq.s32.totalorder %v534, 1
        %vm548 = vcmp.eq.s32.totalorder %v538, 1
        %vm549 = vcmp.eq.s32.totalorder %v542, 1
        %vm550 = vcmp.eq.s32.totalorder %v546, 1
        %v551 = vsel %vm547, %v529, 0.0
        %v552 = vsel %vm548, %v528, 0.0
        %v553 = vsel %vm549, %v527, 0.0
        %v554 = vsel %vm550, %v526, 0.0
        %v555 = vld [vmem:[%s4] sm:$0xff]
        %557 = vset.pattern.permute.xlu0 0
        %558 = vperm.xlu0 %557, %v555
        %v559 = vpop.permute.xlu0 %558
        %v561 = vmul.f32 %v551, %v559
        %v562 = vmul.f32 %v552, %v559
        %v563 = vmul.f32 %v553, %v559
        %v564 = vmul.f32 %v554, %v559
        %v565 = vadd.f32 %v561, 0.0
        %v566 = vadd.f32 %v562, 0.0
        %v567 = vadd.f32 %v563, 0.0
        %v568 = vadd.f32 %v564, 0.0
        %569 = vrot.lane.b32.xlu0 %v511, 16
        %v570 = vpop.permute.xlu0 %569
        %571 = vrot.lane.b32.xlu0 %v512, 16
        %v572 = vpop.permute.xlu0 %571
        %573 = vrot.lane.b32.xlu0 %v513, 16
        %v574 = vpop.permute.xlu0 %573
        %575 = vrot.lane.b32.xlu0 %v514, 16
        %v576 = vpop.permute.xlu0 %575
        %vm577 = vcmp.lt.s32.totalorder %v524, 16
        %v578 = vsel %vm577, %v574, %v576
        %v579 = vsel %vm577, %v572, %v574
        %v580 = vsel %vm577, %v570, %v572
        %v581 = vsel %vm577, %v576, %v570
        %v582 = vsel %vm283, 1, 0
        %v583 = vlaneseq
        %v584 = vshrl.u32 %v583, 7
        %v585 = vsub.s32 0, %v584
        %v586 = vrot.slane %v582, %v585
        %v587 = vlaneseq
        %v588 = vshrl.u32 %v587, 7
        %v589 = vsub.s32 1, %v588
        %v590 = vrot.slane %v582, %v589
        %v591 = vlaneseq
        %v592 = vshrl.u32 %v591, 7
        %v593 = vsub.s32 2, %v592
        %v594 = vrot.slane %v582, %v593
        %v595 = vlaneseq
        %v596 = vshrl.u32 %v595, 7
        %v597 = vsub.s32 3, %v596
        %v598 = vrot.slane %v582, %v597
        %vm599 = vcmp.eq.s32.totalorder %v586, 1
        %vm600 = vcmp.eq.s32.totalorder %v590, 1
        %vm601 = vcmp.eq.s32.totalorder %v594, 1
        %vm602 = vcmp.eq.s32.totalorder %v598, 1
        %v603 = vsel %vm599, %v581, 0.0
        %v604 = vsel %vm600, %v580, 0.0
        %v605 = vsel %vm601, %v579, 0.0
        %v606 = vsel %vm602, %v578, 0.0
        %607 = vset.pattern.permute.xlu0 1
        %608 = vperm.xlu0 %607, %v555
        %v609 = vpop.permute.xlu0 %608
        %v611 = vmul.f32 %v603, %v609
        %v612 = vmul.f32 %v604, %v609
        %v613 = vmul.f32 %v605, %v609
        %v614 = vmul.f32 %v606, %v609
        %v615 = vadd.f32 %v565, %v611
        %v616 = vadd.f32 %v566, %v612
        %v617 = vadd.f32 %v567, %v613
        %v618 = vadd.f32 %v568, %v614
        %619 = vrot.lane.b32.xlu0 %v511, 15
        %v620 = vpop.permute.xlu0 %619
        %621 = vrot.lane.b32.xlu0 %v512, 15
        %v622 = vpop.permute.xlu0 %621
        %623 = vrot.lane.b32.xlu0 %v513, 15
        %v624 = vpop.permute.xlu0 %623
        %625 = vrot.lane.b32.xlu0 %v514, 15
        %v626 = vpop.permute.xlu0 %625
        %vm627 = vcmp.lt.s32.totalorder %v524, 15
        %v628 = vsel %vm627, %v624, %v626
        %v629 = vsel %vm627, %v622, %v624
        %v630 = vsel %vm627, %v620, %v622
        %v631 = vsel %vm627, %v626, %v620
        %v632 = vsel %vm293, 1, 0
        %v633 = vlaneseq
        %v634 = vshrl.u32 %v633, 7
        %v635 = vsub.s32 0, %v634
        %v636 = vrot.slane %v632, %v635
        %v637 = vlaneseq
        %v638 = vshrl.u32 %v637, 7
        %v639 = vsub.s32 1, %v638
        %v640 = vrot.slane %v632, %v639
        %v641 = vlaneseq
        %v642 = vshrl.u32 %v641, 7
        %v643 = vsub.s32 2, %v642
        %v644 = vrot.slane %v632, %v643
        %v645 = vlaneseq
        %v646 = vshrl.u32 %v645, 7
        %v647 = vsub.s32 3, %v646
        %v648 = vrot.slane %v632, %v647
        %vm649 = vcmp.eq.s32.totalorder %v636, 1
        %vm650 = vcmp.eq.s32.totalorder %v640, 1
        %vm651 = vcmp.eq.s32.totalorder %v644, 1
        %vm652 = vcmp.eq.s32.totalorder %v648, 1
        %v653 = vsel %vm649, %v631, 0.0
        %v654 = vsel %vm650, %v630, 0.0
        %v655 = vsel %vm651, %v629, 0.0
        %v656 = vsel %vm652, %v628, 0.0
        %657 = vset.pattern.permute.xlu0 2
        %658 = vperm.xlu0 %657, %v555
        %v659 = vpop.permute.xlu0 %658
        %v661 = vmul.f32 %v653, %v659
        %v662 = vmul.f32 %v654, %v659
        %v663 = vmul.f32 %v655, %v659
        %v664 = vmul.f32 %v656, %v659
        %v665 = vadd.f32 %v615, %v661
        %v666 = vadd.f32 %v616, %v662
        %v667 = vadd.f32 %v617, %v663
        %v668 = vadd.f32 %v618, %v664
        %669 = vrot.lane.b32.xlu0 %v511, 1
        %v670 = vpop.permute.xlu0 %669
        %671 = vrot.lane.b32.xlu0 %v512, 1
        %v672 = vpop.permute.xlu0 %671
        %673 = vrot.lane.b32.xlu0 %v513, 1
        %v674 = vpop.permute.xlu0 %673
        %675 = vrot.lane.b32.xlu0 %v514, 1
        %v676 = vpop.permute.xlu0 %675
        %vm677 = vcmp.lt.s32.totalorder %v524, 1
        %v678 = vsel %vm677, %v674, %v676
        %v679 = vsel %vm677, %v672, %v674
        %v680 = vsel %vm677, %v670, %v672
        %v681 = vsel %vm677, %v676, %v670
        %v682 = vsel %vm287, 1, 0
        %v683 = vlaneseq
        %v684 = vshrl.u32 %v683, 7
        %v685 = vsub.s32 0, %v684
        %v686 = vrot.slane %v682, %v685
        %v687 = vlaneseq
        %v688 = vshrl.u32 %v687, 7
        %v689 = vsub.s32 1, %v688
        %v690 = vrot.slane %v682, %v689
        %v691 = vlaneseq
        %v692 = vshrl.u32 %v691, 7
        %v693 = vsub.s32 2, %v692
        %v694 = vrot.slane %v682, %v693
        %v695 = vlaneseq
        %v696 = vshrl.u32 %v695, 7
        %v697 = vsub.s32 3, %v696
        %v698 = vrot.slane %v682, %v697
        %vm699 = vcmp.eq.s32.totalorder %v686, 1
        %vm700 = vcmp.eq.s32.totalorder %v690, 1
        %vm701 = vcmp.eq.s32.totalorder %v694, 1
        %vm702 = vcmp.eq.s32.totalorder %v698, 1
        %v703 = vsel %vm699, %v681, 0.0
        %v704 = vsel %vm700, %v680, 0.0
        %v705 = vsel %vm701, %v679, 0.0
        %v706 = vsel %vm702, %v678, 0.0
        %707 = vset.pattern.permute.xlu0 3
        %708 = vperm.xlu0 %707, %v555
        %v709 = vpop.permute.xlu0 %708
        %v711 = vmul.f32 %v703, %v709
        %v712 = vmul.f32 %v704, %v709
        %v713 = vmul.f32 %v705, %v709
        %v714 = vmul.f32 %v706, %v709
        %v715 = vadd.f32 %v665, %v711
        %v716 = vadd.f32 %v666, %v712
        %v717 = vadd.f32 %v667, %v713
        %v718 = vadd.f32 %v668, %v714
        %719 = vset.pattern.permute.xlu0 4
        %720 = vperm.xlu0 %719, %v555
        %v721 = vpop.permute.xlu0 %720
        %v723 = vmul.f32 %v511, %v721
        %v724 = vmul.f32 %v512, %v721
        %v725 = vmul.f32 %v513, %v721
        %v726 = vmul.f32 %v514, %v721
        %v727 = vadd.f32 %v715, %v723
        %v728 = vadd.f32 %v716, %v724
        %v729 = vadd.f32 %v717, %v725
        %v730 = vadd.f32 %v718, %v726
        %731 = vrot.lane.b32.xlu0 %v511, 127
        %v732 = vpop.permute.xlu0 %731
        %733 = vrot.lane.b32.xlu0 %v512, 127
        %v734 = vpop.permute.xlu0 %733
        %735 = vrot.lane.b32.xlu0 %v513, 127
        %v736 = vpop.permute.xlu0 %735
        %737 = vrot.lane.b32.xlu0 %v514, 127
        %v738 = vpop.permute.xlu0 %737
        %vm739 = vcmp.lt.s32.totalorder %v524, 127
        %v740 = vsel %vm739, %v736, %v738
        %v741 = vsel %vm739, %v734, %v736
        %v742 = vsel %vm739, %v732, %v734
        %v743 = vsel %vm739, %v738, %v732
        %v744 = vsel %vm292, 1, 0
        %v745 = vlaneseq
        %v746 = vshrl.u32 %v745, 7
        %v747 = vsub.s32 0, %v746
        %v748 = vrot.slane %v744, %v747
        %v749 = vlaneseq
        %v750 = vshrl.u32 %v749, 7
        %v751 = vsub.s32 1, %v750
        %v752 = vrot.slane %v744, %v751
        %v753 = vlaneseq
        %v754 = vshrl.u32 %v753, 7
        %v755 = vsub.s32 2, %v754
        %v756 = vrot.slane %v744, %v755
        %v757 = vlaneseq
        %v758 = vshrl.u32 %v757, 7
        %v759 = vsub.s32 3, %v758
        %v760 = vrot.slane %v744, %v759
        %vm761 = vcmp.eq.s32.totalorder %v748, 1
        %vm762 = vcmp.eq.s32.totalorder %v752, 1
        %vm763 = vcmp.eq.s32.totalorder %v756, 1
        %vm764 = vcmp.eq.s32.totalorder %v760, 1
        %v765 = vsel %vm761, %v742, 0.0
        %v766 = vsel %vm762, %v741, 0.0
        %v767 = vsel %vm763, %v740, 0.0
        %v768 = vsel %vm764, %v743, 0.0
        %769 = vset.pattern.permute.xlu0 5
        %770 = vperm.xlu0 %769, %v555
        %v771 = vpop.permute.xlu0 %770
        %v773 = vmul.f32 %v765, %v771
        %v774 = vmul.f32 %v766, %v771
        %v775 = vmul.f32 %v767, %v771
        %v776 = vmul.f32 %v768, %v771
        %v777 = vadd.f32 %v727, %v773
        %v778 = vadd.f32 %v728, %v774
        %v779 = vadd.f32 %v729, %v775
        %v780 = vadd.f32 %v730, %v776
        %781 = vrot.lane.b32.xlu0 %v511, 113
        %v782 = vpop.permute.xlu0 %781
        %783 = vrot.lane.b32.xlu0 %v512, 113
        %v784 = vpop.permute.xlu0 %783
        %785 = vrot.lane.b32.xlu0 %v513, 113
        %v786 = vpop.permute.xlu0 %785
        %787 = vrot.lane.b32.xlu0 %v514, 113
        %v788 = vpop.permute.xlu0 %787
        %vm789 = vcmp.lt.s32.totalorder %v524, 113
        %v790 = vsel %vm789, %v786, %v788
        %v791 = vsel %vm789, %v784, %v786
        %v792 = vsel %vm789, %v782, %v784
        %v793 = vsel %vm789, %v788, %v782
        %v794 = vsel %vm298, 1, 0
        %v795 = vlaneseq
        %v796 = vshrl.u32 %v795, 7
        %v797 = vsub.s32 0, %v796
        %v798 = vrot.slane %v794, %v797
        %v799 = vlaneseq
        %v800 = vshrl.u32 %v799, 7
        %v801 = vsub.s32 1, %v800
        %v802 = vrot.slane %v794, %v801
        %v803 = vlaneseq
        %v804 = vshrl.u32 %v803, 7
        %v805 = vsub.s32 2, %v804
        %v806 = vrot.slane %v794, %v805
        %v807 = vlaneseq
        %v808 = vshrl.u32 %v807, 7
        %v809 = vsub.s32 3, %v808
        %v810 = vrot.slane %v794, %v809
        %vm811 = vcmp.eq.s32.totalorder %v798, 1
        %vm812 = vcmp.eq.s32.totalorder %v802, 1
        %vm813 = vcmp.eq.s32.totalorder %v806, 1
        %vm814 = vcmp.eq.s32.totalorder %v810, 1
        %v815 = vsel %vm811, %v792, 0.0
        %v816 = vsel %vm812, %v791, 0.0
        %v817 = vsel %vm813, %v790, 0.0
        %v818 = vsel %vm814, %v793, 0.0
        %819 = vset.pattern.permute.xlu0 6
        %820 = vperm.xlu0 %819, %v555
        %v821 = vpop.permute.xlu0 %820
        %v823 = vmul.f32 %v815, %v821
        %v824 = vmul.f32 %v816, %v821
        %v825 = vmul.f32 %v817, %v821
        %v826 = vmul.f32 %v818, %v821
        %v827 = vadd.f32 %v777, %v823
        %v828 = vadd.f32 %v778, %v824
        %v829 = vadd.f32 %v779, %v825
        %v830 = vadd.f32 %v780, %v826
        %831 = vrot.lane.b32.xlu0 %v511, 112
        %v832 = vpop.permute.xlu0 %831
        %833 = vrot.lane.b32.xlu0 %v512, 112
        %v834 = vpop.permute.xlu0 %833
        %835 = vrot.lane.b32.xlu0 %v513, 112
        %v836 = vpop.permute.xlu0 %835
        %837 = vrot.lane.b32.xlu0 %v514, 112
        %v838 = vpop.permute.xlu0 %837
        %vm839 = vcmp.lt.s32.totalorder %v524, 112
        %v840 = vsel %vm839, %v836, %v838
        %v841 = vsel %vm839, %v834, %v836
        %v842 = vsel %vm839, %v832, %v834
        %v843 = vsel %vm839, %v838, %v832
        %v844 = vsel %vm297, 1, 0
        %v845 = vlaneseq
        %v846 = vshrl.u32 %v845, 7
        %v847 = vsub.s32 0, %v846
        %v848 = vrot.slane %v844, %v847
        %v849 = vlaneseq
        %v850 = vshrl.u32 %v849, 7
        %v851 = vsub.s32 1, %v850
        %v852 = vrot.slane %v844, %v851
        %v853 = vlaneseq
        %v854 = vshrl.u32 %v853, 7
        %v855 = vsub.s32 2, %v854
        %v856 = vrot.slane %v844, %v855
        %v857 = vlaneseq
        %v858 = vshrl.u32 %v857, 7
        %v859 = vsub.s32 3, %v858
        %v860 = vrot.slane %v844, %v859
        %vm861 = vcmp.eq.s32.totalorder %v848, 1
        %vm862 = vcmp.eq.s32.totalorder %v852, 1
        %vm863 = vcmp.eq.s32.totalorder %v856, 1
        %vm864 = vcmp.eq.s32.totalorder %v860, 1
        %v865 = vsel %vm861, %v842, 0.0
        %v866 = vsel %vm862, %v841, 0.0
        %v867 = vsel %vm863, %v840, 0.0
        %v868 = vsel %vm864, %v843, 0.0
        %869 = vset.pattern.permute.xlu0 7
        %870 = vperm.xlu0 %869, %v555
        %v871 = vpop.permute.xlu0 %870
        %v873 = vmul.f32 %v865, %v871
        %v874 = vmul.f32 %v866, %v871
        %v875 = vmul.f32 %v867, %v871
        %v876 = vmul.f32 %v868, %v871
        %v877 = vadd.f32 %v827, %v873
        %v878 = vadd.f32 %v828, %v874
        %v879 = vadd.f32 %v829, %v875
        %v880 = vadd.f32 %v830, %v876
        %881 = vrot.lane.b32.xlu0 %v511, 111
        %v882 = vpop.permute.xlu0 %881
        %883 = vrot.lane.b32.xlu0 %v512, 111
        %v884 = vpop.permute.xlu0 %883
        %885 = vrot.lane.b32.xlu0 %v513, 111
        %v886 = vpop.permute.xlu0 %885
        %887 = vrot.lane.b32.xlu0 %v514, 111
        %v888 = vpop.permute.xlu0 %887
        %vm889 = vcmp.lt.s32.totalorder %v524, 111
        %v890 = vsel %vm889, %v886, %v888
        %v891 = vsel %vm889, %v884, %v886
        %v892 = vsel %vm889, %v882, %v884
        %v893 = vsel %vm889, %v888, %v882
        %v894 = vsel %vm299, 1, 0
        %v895 = vlaneseq
        %v896 = vshrl.u32 %v895, 7
        %v897 = vsub.s32 0, %v896
        %v898 = vrot.slane %v894, %v897
        %v899 = vlaneseq
        %v900 = vshrl.u32 %v899, 7
        %v901 = vsub.s32 1, %v900
        %v902 = vrot.slane %v894, %v901
        %v903 = vlaneseq
        %v904 = vshrl.u32 %v903, 7
        %v905 = vsub.s32 2, %v904
        %v906 = vrot.slane %v894, %v905
        %v907 = vlaneseq
        %v908 = vshrl.u32 %v907, 7
        %v909 = vsub.s32 3, %v908
        %v910 = vrot.slane %v894, %v909
        %vm911 = vcmp.eq.s32.totalorder %v898, 1
        %vm912 = vcmp.eq.s32.totalorder %v902, 1
        %vm913 = vcmp.eq.s32.totalorder %v906, 1
        %vm914 = vcmp.eq.s32.totalorder %v910, 1
        %v915 = vsel %vm911, %v892, 0.0
        %v916 = vsel %vm912, %v891, 0.0
        %v917 = vsel %vm913, %v890, 0.0
        %v918 = vsel %vm914, %v893, 0.0
        %919 = vset.pattern.permute.xlu0 8
        %920 = vperm.xlu0 %919, %v555
        %v921 = vpop.permute.xlu0 %920
        %v923 = vmul.f32 %v915, %v921
        %v924 = vmul.f32 %v916, %v921
        %v925 = vmul.f32 %v917, %v921
        %v926 = vmul.f32 %v918, %v921
        %v927 = vadd.f32 %v877, %v923
        %v928 = vadd.f32 %v878, %v924
        %v929 = vadd.f32 %v879, %v925
        %v930 = vadd.f32 %v880, %v926
        %v931 = vld [vmem:[%s5] sm:$0xff]
        %v932 = vld [vmem:[%s6] sm:$0xff]
        %934 = vset.pattern.permute.xlu0 0
        %935 = vperm.xlu0 %934, %v932
        %v936 = vpop.permute.xlu0 %935
        %vm938 = vcmask 64512
        %v940 = vsel %vm938, %v931, 0
        %942 = vmatprep.subr.mxu0 0.0
        %943 = vmatpush1.msra.mxu0 0.0
        %944 = vmatprep.subr.mxu0 0.0
        %945 = vmatpush1.msra.mxu0 0.0
        %946 = vmatprep.subr.mxu0 0.0
        %947 = vmatpush1.msra.mxu0 0.0
        %948 = vmatprep.subr.mxu0 0.0
        %949 = vmatpush1.msra.mxu0 0.0
        %950 = vmatprep.subr.mxu0 0.0
        %951 = vmatpush1.msra.mxu0 0.0
        %952 = vmatprep.subr.mxu0 0.0
        %953 = vmatpush1.msra.mxu0 0.0
        %954 = vmatprep.subr.mxu0 0.0
        %955 = vmatpush1.msra.mxu0 0.0
        %956 = vmatprep.subr.mxu0 0.0
        %957 = vmatpush1.msra.mxu0 0.0
        %958 = vmatprep.subr.mxu0 0.0
        %959 = vmatpush1.msra.mxu0 0.0
        %960 = vmatprep.subr.mxu0 0.0
        %961 = vmatpush1.msra.mxu0 0.0
        %962 = vmatprep.subr.mxu0 0.0
        %963 = vmatpush1.msra.mxu0 0.0
        %964 = vmatprep.subr.mxu0 0.0
        %965 = vmatpush1.msra.mxu0 0.0
        %966 = vmatprep.subr.mxu0 0.0
        %967 = vmatpush1.msra.mxu0 0.0
        %968 = vmatprep.subr.mxu0 0.0
        %969 = vmatpush1.msra.mxu0 0.0
        %970 = vmatprep.subr.mxu0 0.0
        %971 = vmatpush1.msra.mxu0 0.0
        %972 = vmatprep.subr.mxu0 %v928
        %973 = vmatpush1.msra.mxu0 %v927
        %974 = vmatprep.subr.mxu0 0.0
        %975 = vmatpush2.msra.mxu0 0.0
        %976 = vmatprep.subr.mxu0 0.0
        %977 = vmatpush2.msra.mxu0 0.0
        %978 = vmatprep.subr.mxu0 0.0
        %979 = vmatpush2.msra.mxu0 0.0
        %980 = vmatprep.subr.mxu0 0.0
        %981 = vmatpush2.msra.mxu0 0.0
        %982 = vmatprep.subr.mxu0 0.0
        %983 = vmatpush2.msra.mxu0 0.0
        %984 = vmatprep.subr.mxu0 0.0
        %985 = vmatpush2.msra.mxu0 0.0
        %986 = vmatprep.subr.mxu0 0.0
        %987 = vmatpush2.msra.mxu0 0.0
        %988 = vmatprep.subr.mxu0 0.0
        %989 = vmatpush2.msra.mxu0 0.0
        %990 = vmatprep.subr.mxu0 0.0
        %991 = vmatpush2.msra.mxu0 0.0
        %992 = vmatprep.subr.mxu0 0.0
        %993 = vmatpush2.msra.mxu0 0.0
        %994 = vmatprep.subr.mxu0 0.0
        %995 = vmatpush2.msra.mxu0 0.0
        %996 = vmatprep.subr.mxu0 0.0
        %997 = vmatpush2.msra.mxu0 0.0
        %998 = vmatprep.subr.mxu0 0.0
        %999 = vmatpush2.msra.mxu0 0.0
        %1000 = vmatprep.subr.mxu0 0.0
        %1001 = vmatpush2.msra.mxu0 0.0
        %1002 = vmatprep.subr.mxu0 0.0
        %1003 = vmatpush2.msra.mxu0 0.0
        %1004 = vmatprep.subr.mxu0 0.0
        %1005 = vmatpush2.msra.mxu0 0.0
        %1006 = vmatprep.mubr.f32.mxu0 0.0
        %1007 = vmatmul.mubr.f32.gmra.mxu0 %v940
        %v1008 = vpop.f32.mrf.mxu0
        %v1009 = vadd.f32 %v936, %v1008
        %v1010 = vpop.f32.mrf.mxu0
        %v1011 = vadd.f32 %v936, %v1010
        %1012 = vdwg.mxu0
        %1013 = vmatprep.subr.mxu0 0.0
        %1014 = vmatpush1.msra.mxu0 0.0
        %1015 = vmatprep.subr.mxu0 0.0
        %1016 = vmatpush1.msra.mxu0 0.0
        %1017 = vmatprep.subr.mxu0 0.0
        %1018 = vmatpush1.msra.mxu0 0.0
        %1019 = vmatprep.subr.mxu0 0.0
        %1020 = vmatpush1.msra.mxu0 0.0
        %1021 = vmatprep.subr.mxu0 0.0
        %1022 = vmatpush1.msra.mxu0 0.0
        %1023 = vmatprep.subr.mxu0 0.0
        %1024 = vmatpush1.msra.mxu0 0.0
        %1025 = vmatprep.subr.mxu0 0.0
        %1026 = vmatpush1.msra.mxu0 0.0
        %1027 = vmatprep.subr.mxu0 0.0
        %1028 = vmatpush1.msra.mxu0 0.0
        %1029 = vmatprep.subr.mxu0 0.0
        %1030 = vmatpush1.msra.mxu0 0.0
        %1031 = vmatprep.subr.mxu0 0.0
        %1032 = vmatpush1.msra.mxu0 0.0
        %1033 = vmatprep.subr.mxu0 0.0
        %1034 = vmatpush1.msra.mxu0 0.0
        %1035 = vmatprep.subr.mxu0 0.0
        %1036 = vmatpush1.msra.mxu0 0.0
        %1037 = vmatprep.subr.mxu0 0.0
        %1038 = vmatpush1.msra.mxu0 0.0
        %1039 = vmatprep.subr.mxu0 0.0
        %1040 = vmatpush1.msra.mxu0 0.0
        %1041 = vmatprep.subr.mxu0 0.0
        %1042 = vmatpush1.msra.mxu0 0.0
        %1043 = vmatprep.subr.mxu0 %v930
        %1044 = vmatpush1.msra.mxu0 %v929
        %1045 = vmatprep.subr.mxu0 0.0
        %1046 = vmatpush2.msra.mxu0 0.0
        %1047 = vmatprep.subr.mxu0 0.0
        %1048 = vmatpush2.msra.mxu0 0.0
        %1049 = vmatprep.subr.mxu0 0.0
        %1050 = vmatpush2.msra.mxu0 0.0
        %1051 = vmatprep.subr.mxu0 0.0
        %1052 = vmatpush2.msra.mxu0 0.0
        %1053 = vmatprep.subr.mxu0 0.0
        %1054 = vmatpush2.msra.mxu0 0.0
        %1055 = vmatprep.subr.mxu0 0.0
        %1056 = vmatpush2.msra.mxu0 0.0
        %1057 = vmatprep.subr.mxu0 0.0
        %1058 = vmatpush2.msra.mxu0 0.0
        %1059 = vmatprep.subr.mxu0 0.0
        %1060 = vmatpush2.msra.mxu0 0.0
        %1061 = vmatprep.subr.mxu0 0.0
        %1062 = vmatpush2.msra.mxu0 0.0
        %1063 = vmatprep.subr.mxu0 0.0
        %1064 = vmatpush2.msra.mxu0 0.0
        %1065 = vmatprep.subr.mxu0 0.0
        %1066 = vmatpush2.msra.mxu0 0.0
        %1067 = vmatprep.subr.mxu0 0.0
        %1068 = vmatpush2.msra.mxu0 0.0
        %1069 = vmatprep.subr.mxu0 0.0
        %1070 = vmatpush2.msra.mxu0 0.0
        %1071 = vmatprep.subr.mxu0 0.0
        %1072 = vmatpush2.msra.mxu0 0.0
        %1073 = vmatprep.subr.mxu0 0.0
        %1074 = vmatpush2.msra.mxu0 0.0
        %1075 = vmatprep.subr.mxu0 0.0
        %1076 = vmatpush2.msra.mxu0 0.0
        %1077 = vmatprep.mubr.f32.mxu0 0.0
        %1078 = vmatmul.mubr.f32.gmra.mxu0 %v940
        %v1079 = vpop.f32.mrf.mxu0
        %v1080 = vadd.f32 %v936, %v1079
        %v1081 = vpop.f32.mrf.mxu0
        %v1082 = vadd.f32 %v936, %v1081
        %1083 = vdwg.mxu0
        %v1084 = vmax.f32 %v1009, 0.0
        %v1085 = vmax.f32 %v1011, 0.0
        %v1086 = vmax.f32 %v1080, 0.0
        %v1087 = vmax.f32 %v1082, 0.0
        %1088 = vrot.lane.b32.xlu0 %v1084, 17
        %v1089 = vpop.permute.xlu0 %1088
        %1090 = vrot.lane.b32.xlu0 %v1085, 17
        %v1091 = vpop.permute.xlu0 %1090
        %1092 = vrot.lane.b32.xlu0 %v1086, 17
        %v1093 = vpop.permute.xlu0 %1092
        %1094 = vrot.lane.b32.xlu0 %v1087, 17
        %v1095 = vpop.permute.xlu0 %1094
        %v1096 = vsel %vm525, %v1093, %v1095
        %v1097 = vsel %vm525, %v1091, %v1093
        %v1098 = vsel %vm525, %v1089, %v1091
        %v1099 = vsel %vm525, %v1095, %v1089
        %v1100 = vsel %vm547, %v1099, 0.0
        %v1101 = vsel %vm548, %v1098, 0.0
        %v1102 = vsel %vm549, %v1097, 0.0
        %v1103 = vsel %vm550, %v1096, 0.0
        %1104 = vset.pattern.permute.xlu0 9
        %1105 = vperm.xlu0 %1104, %v555
        %v1106 = vpop.permute.xlu0 %1105
        %v1108 = vmul.f32 %v1100, %v1106
        %v1109 = vmul.f32 %v1101, %v1106
        %v1110 = vmul.f32 %v1102, %v1106
        %v1111 = vmul.f32 %v1103, %v1106
        %v1112 = vadd.f32 %v1108, 0.0
        %v1113 = vadd.f32 %v1109, 0.0
        %v1114 = vadd.f32 %v1110, 0.0
        %v1115 = vadd.f32 %v1111, 0.0
        %1116 = vrot.lane.b32.xlu0 %v1084, 16
        %v1117 = vpop.permute.xlu0 %1116
        %1118 = vrot.lane.b32.xlu0 %v1085, 16
        %v1119 = vpop.permute.xlu0 %1118
        %1120 = vrot.lane.b32.xlu0 %v1086, 16
        %v1121 = vpop.permute.xlu0 %1120
        %1122 = vrot.lane.b32.xlu0 %v1087, 16
        %v1123 = vpop.permute.xlu0 %1122
        %v1124 = vsel %vm577, %v1121, %v1123
        %v1125 = vsel %vm577, %v1119, %v1121
        %v1126 = vsel %vm577, %v1117, %v1119
        %v1127 = vsel %vm577, %v1123, %v1117
        %v1128 = vsel %vm599, %v1127, 0.0
        %v1129 = vsel %vm600, %v1126, 0.0
        %v1130 = vsel %vm601, %v1125, 0.0
        %v1131 = vsel %vm602, %v1124, 0.0
        %1132 = vset.pattern.permute.xlu0 10
        %1133 = vperm.xlu0 %1132, %v555
        %v1134 = vpop.permute.xlu0 %1133
        %v1136 = vmul.f32 %v1128, %v1134
        %v1137 = vmul.f32 %v1129, %v1134
        %v1138 = vmul.f32 %v1130, %v1134
        %v1139 = vmul.f32 %v1131, %v1134
        %v1140 = vadd.f32 %v1112, %v1136
        %v1141 = vadd.f32 %v1113, %v1137
        %v1142 = vadd.f32 %v1114, %v1138
        %v1143 = vadd.f32 %v1115, %v1139
        %1144 = vrot.lane.b32.xlu0 %v1084, 15
        %v1145 = vpop.permute.xlu0 %1144
        %1146 = vrot.lane.b32.xlu0 %v1085, 15
        %v1147 = vpop.permute.xlu0 %1146
        %1148 = vrot.lane.b32.xlu0 %v1086, 15
        %v1149 = vpop.permute.xlu0 %1148
        %1150 = vrot.lane.b32.xlu0 %v1087, 15
        %v1151 = vpop.permute.xlu0 %1150
        %v1152 = vsel %vm627, %v1149, %v1151
        %v1153 = vsel %vm627, %v1147, %v1149
        %v1154 = vsel %vm627, %v1145, %v1147
        %v1155 = vsel %vm627, %v1151, %v1145
        %v1156 = vsel %vm649, %v1155, 0.0
        %v1157 = vsel %vm650, %v1154, 0.0
        %v1158 = vsel %vm651, %v1153, 0.0
        %v1159 = vsel %vm652, %v1152, 0.0
        %1160 = vset.pattern.permute.xlu0 11
        %1161 = vperm.xlu0 %1160, %v555
        %v1162 = vpop.permute.xlu0 %1161
        %v1164 = vmul.f32 %v1156, %v1162
        %v1165 = vmul.f32 %v1157, %v1162
        %v1166 = vmul.f32 %v1158, %v1162
        %v1167 = vmul.f32 %v1159, %v1162
        %v1168 = vadd.f32 %v1140, %v1164
        %v1169 = vadd.f32 %v1141, %v1165
        %v1170 = vadd.f32 %v1142, %v1166
        %v1171 = vadd.f32 %v1143, %v1167
        %1172 = vrot.lane.b32.xlu0 %v1084, 1
        %v1173 = vpop.permute.xlu0 %1172
        %1174 = vrot.lane.b32.xlu0 %v1085, 1
        %v1175 = vpop.permute.xlu0 %1174
        %1176 = vrot.lane.b32.xlu0 %v1086, 1
        %v1177 = vpop.permute.xlu0 %1176
        %1178 = vrot.lane.b32.xlu0 %v1087, 1
        %v1179 = vpop.permute.xlu0 %1178
        %v1180 = vsel %vm677, %v1177, %v1179
        %v1181 = vsel %vm677, %v1175, %v1177
        %v1182 = vsel %vm677, %v1173, %v1175
        %v1183 = vsel %vm677, %v1179, %v1173
        %v1184 = vsel %vm699, %v1183, 0.0
        %v1185 = vsel %vm700, %v1182, 0.0
        %v1186 = vsel %vm701, %v1181, 0.0
        %v1187 = vsel %vm702, %v1180, 0.0
        %1188 = vset.pattern.permute.xlu0 12
        %1189 = vperm.xlu0 %1188, %v555
        %v1190 = vpop.permute.xlu0 %1189
        %v1192 = vmul.f32 %v1184, %v1190
        %v1193 = vmul.f32 %v1185, %v1190
        %v1194 = vmul.f32 %v1186, %v1190
        %v1195 = vmul.f32 %v1187, %v1190
        %v1196 = vadd.f32 %v1168, %v1192
        %v1197 = vadd.f32 %v1169, %v1193
        %v1198 = vadd.f32 %v1170, %v1194
        %v1199 = vadd.f32 %v1171, %v1195
        %1200 = vset.pattern.permute.xlu0 13
        %1201 = vperm.xlu0 %1200, %v555
        %v1202 = vpop.permute.xlu0 %1201
        %v1204 = vmul.f32 %v1084, %v1202
        %v1205 = vmul.f32 %v1085, %v1202
        %v1206 = vmul.f32 %v1086, %v1202
        %v1207 = vmul.f32 %v1087, %v1202
        %v1208 = vadd.f32 %v1196, %v1204
        %v1209 = vadd.f32 %v1197, %v1205
        %v1210 = vadd.f32 %v1198, %v1206
        %v1211 = vadd.f32 %v1199, %v1207
        %1212 = vrot.lane.b32.xlu0 %v1084, 127
        %v1213 = vpop.permute.xlu0 %1212
        %1214 = vrot.lane.b32.xlu0 %v1085, 127
        %v1215 = vpop.permute.xlu0 %1214
        %1216 = vrot.lane.b32.xlu0 %v1086, 127
        %v1217 = vpop.permute.xlu0 %1216
        %1218 = vrot.lane.b32.xlu0 %v1087, 127
        %v1219 = vpop.permute.xlu0 %1218
        %v1220 = vsel %vm739, %v1217, %v1219
        %v1221 = vsel %vm739, %v1215, %v1217
        %v1222 = vsel %vm739, %v1213, %v1215
        %v1223 = vsel %vm739, %v1219, %v1213
        %v1224 = vsel %vm761, %v1222, 0.0
        %v1225 = vsel %vm762, %v1221, 0.0
        %v1226 = vsel %vm763, %v1220, 0.0
        %v1227 = vsel %vm764, %v1223, 0.0
        %1228 = vset.pattern.permute.xlu0 14
        %1229 = vperm.xlu0 %1228, %v555
        %v1230 = vpop.permute.xlu0 %1229
        %v1232 = vmul.f32 %v1224, %v1230
        %v1233 = vmul.f32 %v1225, %v1230
        %v1234 = vmul.f32 %v1226, %v1230
        %v1235 = vmul.f32 %v1227, %v1230
        %v1236 = vadd.f32 %v1208, %v1232
        %v1237 = vadd.f32 %v1209, %v1233
        %v1238 = vadd.f32 %v1210, %v1234
        %v1239 = vadd.f32 %v1211, %v1235
        %1240 = vrot.lane.b32.xlu0 %v1084, 113
        %v1241 = vpop.permute.xlu0 %1240
        %1242 = vrot.lane.b32.xlu0 %v1085, 113
        %v1243 = vpop.permute.xlu0 %1242
        %1244 = vrot.lane.b32.xlu0 %v1086, 113
        %v1245 = vpop.permute.xlu0 %1244
        %1246 = vrot.lane.b32.xlu0 %v1087, 113
        %v1247 = vpop.permute.xlu0 %1246
        %v1248 = vsel %vm789, %v1245, %v1247
        %v1249 = vsel %vm789, %v1243, %v1245
        %v1250 = vsel %vm789, %v1241, %v1243
        %v1251 = vsel %vm789, %v1247, %v1241
        %v1252 = vsel %vm811, %v1250, 0.0
        %v1253 = vsel %vm812, %v1249, 0.0
        %v1254 = vsel %vm813, %v1248, 0.0
        %v1255 = vsel %vm814, %v1251, 0.0
        %1256 = vset.pattern.permute.xlu0 15
        %1257 = vperm.xlu0 %1256, %v555
        %v1258 = vpop.permute.xlu0 %1257
        %v1260 = vmul.f32 %v1252, %v1258
        %v1261 = vmul.f32 %v1253, %v1258
        %v1262 = vmul.f32 %v1254, %v1258
        %v1263 = vmul.f32 %v1255, %v1258
        %v1264 = vadd.f32 %v1236, %v1260
        %v1265 = vadd.f32 %v1237, %v1261
        %v1266 = vadd.f32 %v1238, %v1262
        %v1267 = vadd.f32 %v1239, %v1263
        %1268 = vrot.lane.b32.xlu0 %v1084, 112
        %v1269 = vpop.permute.xlu0 %1268
        %1270 = vrot.lane.b32.xlu0 %v1085, 112
        %v1271 = vpop.permute.xlu0 %1270
        %1272 = vrot.lane.b32.xlu0 %v1086, 112
        %v1273 = vpop.permute.xlu0 %1272
        %1274 = vrot.lane.b32.xlu0 %v1087, 112
        %v1275 = vpop.permute.xlu0 %1274
        %v1276 = vsel %vm839, %v1273, %v1275
        %v1277 = vsel %vm839, %v1271, %v1273
        %v1278 = vsel %vm839, %v1269, %v1271
        %v1279 = vsel %vm839, %v1275, %v1269
        %v1280 = vsel %vm861, %v1278, 0.0
        %v1281 = vsel %vm862, %v1277, 0.0
        %v1282 = vsel %vm863, %v1276, 0.0
        %v1283 = vsel %vm864, %v1279, 0.0
        %1284 = vset.pattern.permute.xlu0 16
        %1285 = vperm.xlu0 %1284, %v555
        %v1286 = vpop.permute.xlu0 %1285
        %v1288 = vmul.f32 %v1280, %v1286
        %v1289 = vmul.f32 %v1281, %v1286
        %v1290 = vmul.f32 %v1282, %v1286
        %v1291 = vmul.f32 %v1283, %v1286
        %v1292 = vadd.f32 %v1264, %v1288
        %v1293 = vadd.f32 %v1265, %v1289
        %v1294 = vadd.f32 %v1266, %v1290
        %v1295 = vadd.f32 %v1267, %v1291
        %1296 = vrot.lane.b32.xlu0 %v1084, 111
        %v1297 = vpop.permute.xlu0 %1296
        %1298 = vrot.lane.b32.xlu0 %v1085, 111
        %v1299 = vpop.permute.xlu0 %1298
        %1300 = vrot.lane.b32.xlu0 %v1086, 111
        %v1301 = vpop.permute.xlu0 %1300
        %1302 = vrot.lane.b32.xlu0 %v1087, 111
        %v1303 = vpop.permute.xlu0 %1302
        %v1304 = vsel %vm889, %v1301, %v1303
        %v1305 = vsel %vm889, %v1299, %v1301
        %v1306 = vsel %vm889, %v1297, %v1299
        %v1307 = vsel %vm889, %v1303, %v1297
        %v1308 = vsel %vm911, %v1306, 0.0
        %v1309 = vsel %vm912, %v1305, 0.0
        %v1310 = vsel %vm913, %v1304, 0.0
        %v1311 = vsel %vm914, %v1307, 0.0
        %1312 = vset.pattern.permute.xlu0 17
        %1313 = vperm.xlu0 %1312, %v555
        %v1314 = vpop.permute.xlu0 %1313
        %v1316 = vmul.f32 %v1308, %v1314
        %v1317 = vmul.f32 %v1309, %v1314
        %v1318 = vmul.f32 %v1310, %v1314
        %v1319 = vmul.f32 %v1311, %v1314
        %v1320 = vadd.f32 %v1292, %v1316
        %v1321 = vadd.f32 %v1293, %v1317
        %v1322 = vadd.f32 %v1294, %v1318
        %v1323 = vadd.f32 %v1295, %v1319
        %s1324 = scalar_lea.vmem %s5, 8
        %v1325 = vld [vmem:[%s1324] sm:$0xff]
        %s1326 = scalar_lea.vmem %s6, 8
        %v1327 = vld [vmem:[%s1326] sm:$0xff]
        %1329 = vset.pattern.permute.xlu0 0
        %1330 = vperm.xlu0 %1329, %v1327
        %v1331 = vpop.permute.xlu0 %1330
        %v1334 = vsel %vm938, %v1325, 0
        %1336 = vmatprep.subr.mxu0 0.0
        %1337 = vmatpush1.msra.mxu0 0.0
        %1338 = vmatprep.subr.mxu0 0.0
        %1339 = vmatpush1.msra.mxu0 0.0
        %1340 = vmatprep.subr.mxu0 0.0
        %1341 = vmatpush1.msra.mxu0 0.0
        %1342 = vmatprep.subr.mxu0 0.0
        %1343 = vmatpush1.msra.mxu0 0.0
        %1344 = vmatprep.subr.mxu0 0.0
        %1345 = vmatpush1.msra.mxu0 0.0
        %1346 = vmatprep.subr.mxu0 0.0
        %1347 = vmatpush1.msra.mxu0 0.0
        %1348 = vmatprep.subr.mxu0 0.0
        %1349 = vmatpush1.msra.mxu0 0.0
        %1350 = vmatprep.subr.mxu0 0.0
        %1351 = vmatpush1.msra.mxu0 0.0
        %1352 = vmatprep.subr.mxu0 0.0
        %1353 = vmatpush1.msra.mxu0 0.0
        %1354 = vmatprep.subr.mxu0 0.0
        %1355 = vmatpush1.msra.mxu0 0.0
        %1356 = vmatprep.subr.mxu0 0.0
        %1357 = vmatpush1.msra.mxu0 0.0
        %1358 = vmatprep.subr.mxu0 0.0
        %1359 = vmatpush1.msra.mxu0 0.0
        %1360 = vmatprep.subr.mxu0 0.0
        %1361 = vmatpush1.msra.mxu0 0.0
        %1362 = vmatprep.subr.mxu0 0.0
        %1363 = vmatpush1.msra.mxu0 0.0
        %1364 = vmatprep.subr.mxu0 0.0
        %1365 = vmatpush1.msra.mxu0 0.0
        %1366 = vmatprep.subr.mxu0 %v1321
        %1367 = vmatpush1.msra.mxu0 %v1320
        %1368 = vmatprep.subr.mxu0 0.0
        %1369 = vmatpush2.msra.mxu0 0.0
        %1370 = vmatprep.subr.mxu0 0.0
        %1371 = vmatpush2.msra.mxu0 0.0
        %1372 = vmatprep.subr.mxu0 0.0
        %1373 = vmatpush2.msra.mxu0 0.0
        %1374 = vmatprep.subr.mxu0 0.0
        %1375 = vmatpush2.msra.mxu0 0.0
        %1376 = vmatprep.subr.mxu0 0.0
        %1377 = vmatpush2.msra.mxu0 0.0
        %1378 = vmatprep.subr.mxu0 0.0
        %1379 = vmatpush2.msra.mxu0 0.0
        %1380 = vmatprep.subr.mxu0 0.0
        %1381 = vmatpush2.msra.mxu0 0.0
        %1382 = vmatprep.subr.mxu0 0.0
        %1383 = vmatpush2.msra.mxu0 0.0
        %1384 = vmatprep.subr.mxu0 0.0
        %1385 = vmatpush2.msra.mxu0 0.0
        %1386 = vmatprep.subr.mxu0 0.0
        %1387 = vmatpush2.msra.mxu0 0.0
        %1388 = vmatprep.subr.mxu0 0.0
        %1389 = vmatpush2.msra.mxu0 0.0
        %1390 = vmatprep.subr.mxu0 0.0
        %1391 = vmatpush2.msra.mxu0 0.0
        %1392 = vmatprep.subr.mxu0 0.0
        %1393 = vmatpush2.msra.mxu0 0.0
        %1394 = vmatprep.subr.mxu0 0.0
        %1395 = vmatpush2.msra.mxu0 0.0
        %1396 = vmatprep.subr.mxu0 0.0
        %1397 = vmatpush2.msra.mxu0 0.0
        %1398 = vmatprep.subr.mxu0 0.0
        %1399 = vmatpush2.msra.mxu0 0.0
        %1400 = vmatprep.mubr.f32.mxu0 0.0
        %1401 = vmatmul.mubr.f32.gmra.mxu0 %v1334
        %v1402 = vpop.f32.mrf.mxu0
        %v1403 = vadd.f32 %v1331, %v1402
        %v1404 = vpop.f32.mrf.mxu0
        %v1405 = vadd.f32 %v1331, %v1404
        %1406 = vdwg.mxu0
        %1407 = vmatprep.subr.mxu0 0.0
        %1408 = vmatpush1.msra.mxu0 0.0
        %1409 = vmatprep.subr.mxu0 0.0
        %1410 = vmatpush1.msra.mxu0 0.0
        %1411 = vmatprep.subr.mxu0 0.0
        %1412 = vmatpush1.msra.mxu0 0.0
        %1413 = vmatprep.subr.mxu0 0.0
        %1414 = vmatpush1.msra.mxu0 0.0
        %1415 = vmatprep.subr.mxu0 0.0
        %1416 = vmatpush1.msra.mxu0 0.0
        %1417 = vmatprep.subr.mxu0 0.0
        %1418 = vmatpush1.msra.mxu0 0.0
        %1419 = vmatprep.subr.mxu0 0.0
        %1420 = vmatpush1.msra.mxu0 0.0
        %1421 = vmatprep.subr.mxu0 0.0
        %1422 = vmatpush1.msra.mxu0 0.0
        %1423 = vmatprep.subr.mxu0 0.0
        %1424 = vmatpush1.msra.mxu0 0.0
        %1425 = vmatprep.subr.mxu0 0.0
        %1426 = vmatpush1.msra.mxu0 0.0
        %1427 = vmatprep.subr.mxu0 0.0
        %1428 = vmatpush1.msra.mxu0 0.0
        %1429 = vmatprep.subr.mxu0 0.0
        %1430 = vmatpush1.msra.mxu0 0.0
        %1431 = vmatprep.subr.mxu0 0.0
        %1432 = vmatpush1.msra.mxu0 0.0
        %1433 = vmatprep.subr.mxu0 0.0
        %1434 = vmatpush1.msra.mxu0 0.0
        %1435 = vmatprep.subr.mxu0 0.0
        %1436 = vmatpush1.msra.mxu0 0.0
        %1437 = vmatprep.subr.mxu0 %v1323
        %1438 = vmatpush1.msra.mxu0 %v1322
        %1439 = vmatprep.subr.mxu0 0.0
        %1440 = vmatpush2.msra.mxu0 0.0
        %1441 = vmatprep.subr.mxu0 0.0
        %1442 = vmatpush2.msra.mxu0 0.0
        %1443 = vmatprep.subr.mxu0 0.0
        %1444 = vmatpush2.msra.mxu0 0.0
        %1445 = vmatprep.subr.mxu0 0.0
        %1446 = vmatpush2.msra.mxu0 0.0
        %1447 = vmatprep.subr.mxu0 0.0
        %1448 = vmatpush2.msra.mxu0 0.0
        %1449 = vmatprep.subr.mxu0 0.0
        %1450 = vmatpush2.msra.mxu0 0.0
        %1451 = vmatprep.subr.mxu0 0.0
        %1452 = vmatpush2.msra.mxu0 0.0
        %1453 = vmatprep.subr.mxu0 0.0
        %1454 = vmatpush2.msra.mxu0 0.0
        %1455 = vmatprep.subr.mxu0 0.0
        %1456 = vmatpush2.msra.mxu0 0.0
        %1457 = vmatprep.subr.mxu0 0.0
        %1458 = vmatpush2.msra.mxu0 0.0
        %1459 = vmatprep.subr.mxu0 0.0
        %1460 = vmatpush2.msra.mxu0 0.0
        %1461 = vmatprep.subr.mxu0 0.0
        %1462 = vmatpush2.msra.mxu0 0.0
        %1463 = vmatprep.subr.mxu0 0.0
        %1464 = vmatpush2.msra.mxu0 0.0
        %1465 = vmatprep.subr.mxu0 0.0
        %1466 = vmatpush2.msra.mxu0 0.0
        %1467 = vmatprep.subr.mxu0 0.0
        %1468 = vmatpush2.msra.mxu0 0.0
        %1469 = vmatprep.subr.mxu0 0.0
        %1470 = vmatpush2.msra.mxu0 0.0
        %1471 = vmatprep.mubr.f32.mxu0 0.0
        %1472 = vmatmul.mubr.f32.gmra.mxu0 %v1334
        %v1473 = vpop.f32.mrf.mxu0
        %v1474 = vadd.f32 %v1331, %v1473
        %v1475 = vpop.f32.mrf.mxu0
        %v1476 = vadd.f32 %v1331, %v1475
        %1477 = vdwg.mxu0
        %v1478 = vmax.f32 %v430, 0.0
        %v1479 = vmax.f32 %v432, 0.0
        %v1480 = vmax.f32 %v507, 0.0
        %v1481 = vmax.f32 %v509, 0.0
        %1482 = vrot.lane.b32.xlu0 %v1478, 17
        %v1483 = vpop.permute.xlu0 %1482
        %1484 = vrot.lane.b32.xlu0 %v1479, 17
        %v1485 = vpop.permute.xlu0 %1484
        %1486 = vrot.lane.b32.xlu0 %v1480, 17
        %v1487 = vpop.permute.xlu0 %1486
        %1488 = vrot.lane.b32.xlu0 %v1481, 17
        %v1489 = vpop.permute.xlu0 %1488
        %v1490 = vsel %vm525, %v1487, %v1489
        %v1491 = vsel %vm525, %v1485, %v1487
        %v1492 = vsel %vm525, %v1483, %v1485
        %v1493 = vsel %vm525, %v1489, %v1483
        %v1494 = vsel %vm547, %v1493, 0.0
        %v1495 = vsel %vm548, %v1492, 0.0
        %v1496 = vsel %vm549, %v1491, 0.0
        %v1497 = vsel %vm550, %v1490, 0.0
        %1498 = vset.pattern.permute.xlu0 18
        %1499 = vperm.xlu0 %1498, %v555
        %v1500 = vpop.permute.xlu0 %1499
        %v1502 = vmul.f32 %v1494, %v1500
        %v1503 = vmul.f32 %v1495, %v1500
        %v1504 = vmul.f32 %v1496, %v1500
        %v1505 = vmul.f32 %v1497, %v1500
        %v1506 = vadd.f32 %v1502, 0.0
        %v1507 = vadd.f32 %v1503, 0.0
        %v1508 = vadd.f32 %v1504, 0.0
        %v1509 = vadd.f32 %v1505, 0.0
        %1510 = vrot.lane.b32.xlu0 %v1478, 16
        %v1511 = vpop.permute.xlu0 %1510
        %1512 = vrot.lane.b32.xlu0 %v1479, 16
        %v1513 = vpop.permute.xlu0 %1512
        %1514 = vrot.lane.b32.xlu0 %v1480, 16
        %v1515 = vpop.permute.xlu0 %1514
        %1516 = vrot.lane.b32.xlu0 %v1481, 16
        %v1517 = vpop.permute.xlu0 %1516
        %v1518 = vsel %vm577, %v1515, %v1517
        %v1519 = vsel %vm577, %v1513, %v1515
        %v1520 = vsel %vm577, %v1511, %v1513
        %v1521 = vsel %vm577, %v1517, %v1511
        %v1522 = vsel %vm599, %v1521, 0.0
        %v1523 = vsel %vm600, %v1520, 0.0
        %v1524 = vsel %vm601, %v1519, 0.0
        %v1525 = vsel %vm602, %v1518, 0.0
        %1526 = vset.pattern.permute.xlu0 19
        %1527 = vperm.xlu0 %1526, %v555
        %v1528 = vpop.permute.xlu0 %1527
        %v1530 = vmul.f32 %v1522, %v1528
        %v1531 = vmul.f32 %v1523, %v1528
        %v1532 = vmul.f32 %v1524, %v1528
        %v1533 = vmul.f32 %v1525, %v1528
        %v1534 = vadd.f32 %v1506, %v1530
        %v1535 = vadd.f32 %v1507, %v1531
        %v1536 = vadd.f32 %v1508, %v1532
        %v1537 = vadd.f32 %v1509, %v1533
        %1538 = vrot.lane.b32.xlu0 %v1478, 15
        %v1539 = vpop.permute.xlu0 %1538
        %1540 = vrot.lane.b32.xlu0 %v1479, 15
        %v1541 = vpop.permute.xlu0 %1540
        %1542 = vrot.lane.b32.xlu0 %v1480, 15
        %v1543 = vpop.permute.xlu0 %1542
        %1544 = vrot.lane.b32.xlu0 %v1481, 15
        %v1545 = vpop.permute.xlu0 %1544
        %v1546 = vsel %vm627, %v1543, %v1545
        %v1547 = vsel %vm627, %v1541, %v1543
        %v1548 = vsel %vm627, %v1539, %v1541
        %v1549 = vsel %vm627, %v1545, %v1539
        %v1550 = vsel %vm649, %v1549, 0.0
        %v1551 = vsel %vm650, %v1548, 0.0
        %v1552 = vsel %vm651, %v1547, 0.0
        %v1553 = vsel %vm652, %v1546, 0.0
        %1554 = vset.pattern.permute.xlu0 20
        %1555 = vperm.xlu0 %1554, %v555
        %v1556 = vpop.permute.xlu0 %1555
        %v1558 = vmul.f32 %v1550, %v1556
        %v1559 = vmul.f32 %v1551, %v1556
        %v1560 = vmul.f32 %v1552, %v1556
        %v1561 = vmul.f32 %v1553, %v1556
        %v1562 = vadd.f32 %v1534, %v1558
        %v1563 = vadd.f32 %v1535, %v1559
        %v1564 = vadd.f32 %v1536, %v1560
        %v1565 = vadd.f32 %v1537, %v1561
        %1566 = vrot.lane.b32.xlu0 %v1478, 1
        %v1567 = vpop.permute.xlu0 %1566
        %1568 = vrot.lane.b32.xlu0 %v1479, 1
        %v1569 = vpop.permute.xlu0 %1568
        %1570 = vrot.lane.b32.xlu0 %v1480, 1
        %v1571 = vpop.permute.xlu0 %1570
        %1572 = vrot.lane.b32.xlu0 %v1481, 1
        %v1573 = vpop.permute.xlu0 %1572
        %v1574 = vsel %vm677, %v1571, %v1573
        %v1575 = vsel %vm677, %v1569, %v1571
        %v1576 = vsel %vm677, %v1567, %v1569
        %v1577 = vsel %vm677, %v1573, %v1567
        %v1578 = vsel %vm699, %v1577, 0.0
        %v1579 = vsel %vm700, %v1576, 0.0
        %v1580 = vsel %vm701, %v1575, 0.0
        %v1581 = vsel %vm702, %v1574, 0.0
        %1582 = vset.pattern.permute.xlu0 21
        %1583 = vperm.xlu0 %1582, %v555
        %v1584 = vpop.permute.xlu0 %1583
        %v1586 = vmul.f32 %v1578, %v1584
        %v1587 = vmul.f32 %v1579, %v1584
        %v1588 = vmul.f32 %v1580, %v1584
        %v1589 = vmul.f32 %v1581, %v1584
        %v1590 = vadd.f32 %v1562, %v1586
        %v1591 = vadd.f32 %v1563, %v1587
        %v1592 = vadd.f32 %v1564, %v1588
        %v1593 = vadd.f32 %v1565, %v1589
        %1594 = vset.pattern.permute.xlu0 22
        %1595 = vperm.xlu0 %1594, %v555
        %v1596 = vpop.permute.xlu0 %1595
        %v1598 = vmul.f32 %v1478, %v1596
        %v1599 = vmul.f32 %v1479, %v1596
        %v1600 = vmul.f32 %v1480, %v1596
        %v1601 = vmul.f32 %v1481, %v1596
        %v1602 = vadd.f32 %v1590, %v1598
        %v1603 = vadd.f32 %v1591, %v1599
        %v1604 = vadd.f32 %v1592, %v1600
        %v1605 = vadd.f32 %v1593, %v1601
        %1606 = vrot.lane.b32.xlu0 %v1478, 127
        %v1607 = vpop.permute.xlu0 %1606
        %1608 = vrot.lane.b32.xlu0 %v1479, 127
        %v1609 = vpop.permute.xlu0 %1608
        %1610 = vrot.lane.b32.xlu0 %v1480, 127
        %v1611 = vpop.permute.xlu0 %1610
        %1612 = vrot.lane.b32.xlu0 %v1481, 127
        %v1613 = vpop.permute.xlu0 %1612
        %v1614 = vsel %vm739, %v1611, %v1613
        %v1615 = vsel %vm739, %v1609, %v1611
        %v1616 = vsel %vm739, %v1607, %v1609
        %v1617 = vsel %vm739, %v1613, %v1607
        %v1618 = vsel %vm761, %v1616, 0.0
        %v1619 = vsel %vm762, %v1615, 0.0
        %v1620 = vsel %vm763, %v1614, 0.0
        %v1621 = vsel %vm764, %v1617, 0.0
        %1622 = vset.pattern.permute.xlu0 23
        %1623 = vperm.xlu0 %1622, %v555
        %v1624 = vpop.permute.xlu0 %1623
        %v1626 = vmul.f32 %v1618, %v1624
        %v1627 = vmul.f32 %v1619, %v1624
        %v1628 = vmul.f32 %v1620, %v1624
        %v1629 = vmul.f32 %v1621, %v1624
        %v1630 = vadd.f32 %v1602, %v1626
        %v1631 = vadd.f32 %v1603, %v1627
        %v1632 = vadd.f32 %v1604, %v1628
        %v1633 = vadd.f32 %v1605, %v1629
        %1634 = vrot.lane.b32.xlu0 %v1478, 113
        %v1635 = vpop.permute.xlu0 %1634
        %1636 = vrot.lane.b32.xlu0 %v1479, 113
        %v1637 = vpop.permute.xlu0 %1636
        %1638 = vrot.lane.b32.xlu0 %v1480, 113
        %v1639 = vpop.permute.xlu0 %1638
        %1640 = vrot.lane.b32.xlu0 %v1481, 113
        %v1641 = vpop.permute.xlu0 %1640
        %v1642 = vsel %vm789, %v1639, %v1641
        %v1643 = vsel %vm789, %v1637, %v1639
        %v1644 = vsel %vm789, %v1635, %v1637
        %v1645 = vsel %vm789, %v1641, %v1635
        %v1646 = vsel %vm811, %v1644, 0.0
        %v1647 = vsel %vm812, %v1643, 0.0
        %v1648 = vsel %vm813, %v1642, 0.0
        %v1649 = vsel %vm814, %v1645, 0.0
        %1650 = vset.pattern.permute.xlu0 24
        %1651 = vperm.xlu0 %1650, %v555
        %v1652 = vpop.permute.xlu0 %1651
        %v1654 = vmul.f32 %v1646, %v1652
        %v1655 = vmul.f32 %v1647, %v1652
        %v1656 = vmul.f32 %v1648, %v1652
        %v1657 = vmul.f32 %v1649, %v1652
        %v1658 = vadd.f32 %v1630, %v1654
        %v1659 = vadd.f32 %v1631, %v1655
        %v1660 = vadd.f32 %v1632, %v1656
        %v1661 = vadd.f32 %v1633, %v1657
        %1662 = vrot.lane.b32.xlu0 %v1478, 112
        %v1663 = vpop.permute.xlu0 %1662
        %1664 = vrot.lane.b32.xlu0 %v1479, 112
        %v1665 = vpop.permute.xlu0 %1664
        %1666 = vrot.lane.b32.xlu0 %v1480, 112
        %v1667 = vpop.permute.xlu0 %1666
        %1668 = vrot.lane.b32.xlu0 %v1481, 112
        %v1669 = vpop.permute.xlu0 %1668
        %v1670 = vsel %vm839, %v1667, %v1669
        %v1671 = vsel %vm839, %v1665, %v1667
        %v1672 = vsel %vm839, %v1663, %v1665
        %v1673 = vsel %vm839, %v1669, %v1663
        %v1674 = vsel %vm861, %v1672, 0.0
        %v1675 = vsel %vm862, %v1671, 0.0
        %v1676 = vsel %vm863, %v1670, 0.0
        %v1677 = vsel %vm864, %v1673, 0.0
        %1678 = vset.pattern.permute.xlu0 25
        %1679 = vperm.xlu0 %1678, %v555
        %v1680 = vpop.permute.xlu0 %1679
        %v1682 = vmul.f32 %v1674, %v1680
        %v1683 = vmul.f32 %v1675, %v1680
        %v1684 = vmul.f32 %v1676, %v1680
        %v1685 = vmul.f32 %v1677, %v1680
        %v1686 = vadd.f32 %v1658, %v1682
        %v1687 = vadd.f32 %v1659, %v1683
        %v1688 = vadd.f32 %v1660, %v1684
        %v1689 = vadd.f32 %v1661, %v1685
        %1690 = vrot.lane.b32.xlu0 %v1478, 111
        %v1691 = vpop.permute.xlu0 %1690
        %1692 = vrot.lane.b32.xlu0 %v1479, 111
        %v1693 = vpop.permute.xlu0 %1692
        %1694 = vrot.lane.b32.xlu0 %v1480, 111
        %v1695 = vpop.permute.xlu0 %1694
        %1696 = vrot.lane.b32.xlu0 %v1481, 111
        %v1697 = vpop.permute.xlu0 %1696
        %v1698 = vsel %vm889, %v1695, %v1697
        %v1699 = vsel %vm889, %v1693, %v1695
        %v1700 = vsel %vm889, %v1691, %v1693
        %v1701 = vsel %vm889, %v1697, %v1691
        %v1702 = vsel %vm911, %v1700, 0.0
        %v1703 = vsel %vm912, %v1699, 0.0
        %v1704 = vsel %vm913, %v1698, 0.0
        %v1705 = vsel %vm914, %v1701, 0.0
        %1706 = vset.pattern.permute.xlu0 26
        %1707 = vperm.xlu0 %1706, %v555
        %v1708 = vpop.permute.xlu0 %1707
        %v1710 = vmul.f32 %v1702, %v1708
        %v1711 = vmul.f32 %v1703, %v1708
        %v1712 = vmul.f32 %v1704, %v1708
        %v1713 = vmul.f32 %v1705, %v1708
        %v1714 = vadd.f32 %v1686, %v1710
        %v1715 = vadd.f32 %v1687, %v1711
        %v1716 = vadd.f32 %v1688, %v1712
        %v1717 = vadd.f32 %v1689, %v1713
        %s1718 = scalar_lea.vmem %s5, 16
        %v1719 = vld [vmem:[%s1718] sm:$0xff]
        %s1720 = scalar_lea.vmem %s6, 16
        %v1721 = vld [vmem:[%s1720] sm:$0xff]
        %1723 = vset.pattern.permute.xlu0 0
        %1724 = vperm.xlu0 %1723, %v1721
        %v1725 = vpop.permute.xlu0 %1724
        %v1728 = vsel %vm938, %v1719, 0
        %1730 = vmatprep.subr.mxu0 0.0
        %1731 = vmatpush1.msra.mxu0 0.0
        %1732 = vmatprep.subr.mxu0 0.0
        %1733 = vmatpush1.msra.mxu0 0.0
        %1734 = vmatprep.subr.mxu0 0.0
        %1735 = vmatpush1.msra.mxu0 0.0
        %1736 = vmatprep.subr.mxu0 0.0
        %1737 = vmatpush1.msra.mxu0 0.0
        %1738 = vmatprep.subr.mxu0 0.0
        %1739 = vmatpush1.msra.mxu0 0.0
        %1740 = vmatprep.subr.mxu0 0.0
        %1741 = vmatpush1.msra.mxu0 0.0
        %1742 = vmatprep.subr.mxu0 0.0
        %1743 = vmatpush1.msra.mxu0 0.0
        %1744 = vmatprep.subr.mxu0 0.0
        %1745 = vmatpush1.msra.mxu0 0.0
        %1746 = vmatprep.subr.mxu0 0.0
        %1747 = vmatpush1.msra.mxu0 0.0
        %1748 = vmatprep.subr.mxu0 0.0
        %1749 = vmatpush1.msra.mxu0 0.0
        %1750 = vmatprep.subr.mxu0 0.0
        %1751 = vmatpush1.msra.mxu0 0.0
        %1752 = vmatprep.subr.mxu0 0.0
        %1753 = vmatpush1.msra.mxu0 0.0
        %1754 = vmatprep.subr.mxu0 0.0
        %1755 = vmatpush1.msra.mxu0 0.0
        %1756 = vmatprep.subr.mxu0 0.0
        %1757 = vmatpush1.msra.mxu0 0.0
        %1758 = vmatprep.subr.mxu0 0.0
        %1759 = vmatpush1.msra.mxu0 0.0
        %1760 = vmatprep.subr.mxu0 %v1715
        %1761 = vmatpush1.msra.mxu0 %v1714
        %1762 = vmatprep.subr.mxu0 0.0
        %1763 = vmatpush2.msra.mxu0 0.0
        %1764 = vmatprep.subr.mxu0 0.0
        %1765 = vmatpush2.msra.mxu0 0.0
        %1766 = vmatprep.subr.mxu0 0.0
        %1767 = vmatpush2.msra.mxu0 0.0
        %1768 = vmatprep.subr.mxu0 0.0
        %1769 = vmatpush2.msra.mxu0 0.0
        %1770 = vmatprep.subr.mxu0 0.0
        %1771 = vmatpush2.msra.mxu0 0.0
        %1772 = vmatprep.subr.mxu0 0.0
        %1773 = vmatpush2.msra.mxu0 0.0
        %1774 = vmatprep.subr.mxu0 0.0
        %1775 = vmatpush2.msra.mxu0 0.0
        %1776 = vmatprep.subr.mxu0 0.0
        %1777 = vmatpush2.msra.mxu0 0.0
        %1778 = vmatprep.subr.mxu0 0.0
        %1779 = vmatpush2.msra.mxu0 0.0
        %1780 = vmatprep.subr.mxu0 0.0
        %1781 = vmatpush2.msra.mxu0 0.0
        %1782 = vmatprep.subr.mxu0 0.0
        %1783 = vmatpush2.msra.mxu0 0.0
        %1784 = vmatprep.subr.mxu0 0.0
        %1785 = vmatpush2.msra.mxu0 0.0
        %1786 = vmatprep.subr.mxu0 0.0
        %1787 = vmatpush2.msra.mxu0 0.0
        %1788 = vmatprep.subr.mxu0 0.0
        %1789 = vmatpush2.msra.mxu0 0.0
        %1790 = vmatprep.subr.mxu0 0.0
        %1791 = vmatpush2.msra.mxu0 0.0
        %1792 = vmatprep.subr.mxu0 0.0
        %1793 = vmatpush2.msra.mxu0 0.0
        %1794 = vmatprep.mubr.f32.mxu0 0.0
        %1795 = vmatmul.mubr.f32.gmra.mxu0 %v1728
        %v1796 = vpop.f32.mrf.mxu0
        %v1797 = vadd.f32 %v1725, %v1796
        %v1798 = vpop.f32.mrf.mxu0
        %v1799 = vadd.f32 %v1725, %v1798
        %1800 = vdwg.mxu0
        %1801 = vmatprep.subr.mxu0 0.0
        %1802 = vmatpush1.msra.mxu0 0.0
        %1803 = vmatprep.subr.mxu0 0.0
        %1804 = vmatpush1.msra.mxu0 0.0
        %1805 = vmatprep.subr.mxu0 0.0
        %1806 = vmatpush1.msra.mxu0 0.0
        %1807 = vmatprep.subr.mxu0 0.0
        %1808 = vmatpush1.msra.mxu0 0.0
        %1809 = vmatprep.subr.mxu0 0.0
        %1810 = vmatpush1.msra.mxu0 0.0
        %1811 = vmatprep.subr.mxu0 0.0
        %1812 = vmatpush1.msra.mxu0 0.0
        %1813 = vmatprep.subr.mxu0 0.0
        %1814 = vmatpush1.msra.mxu0 0.0
        %1815 = vmatprep.subr.mxu0 0.0
        %1816 = vmatpush1.msra.mxu0 0.0
        %1817 = vmatprep.subr.mxu0 0.0
        %1818 = vmatpush1.msra.mxu0 0.0
        %1819 = vmatprep.subr.mxu0 0.0
        %1820 = vmatpush1.msra.mxu0 0.0
        %1821 = vmatprep.subr.mxu0 0.0
        %1822 = vmatpush1.msra.mxu0 0.0
        %1823 = vmatprep.subr.mxu0 0.0
        %1824 = vmatpush1.msra.mxu0 0.0
        %1825 = vmatprep.subr.mxu0 0.0
        %1826 = vmatpush1.msra.mxu0 0.0
        %1827 = vmatprep.subr.mxu0 0.0
        %1828 = vmatpush1.msra.mxu0 0.0
        %1829 = vmatprep.subr.mxu0 0.0
        %1830 = vmatpush1.msra.mxu0 0.0
        %1831 = vmatprep.subr.mxu0 %v1717
        %1832 = vmatpush1.msra.mxu0 %v1716
        %1833 = vmatprep.subr.mxu0 0.0
        %1834 = vmatpush2.msra.mxu0 0.0
        %1835 = vmatprep.subr.mxu0 0.0
        %1836 = vmatpush2.msra.mxu0 0.0
        %1837 = vmatprep.subr.mxu0 0.0
        %1838 = vmatpush2.msra.mxu0 0.0
        %1839 = vmatprep.subr.mxu0 0.0
        %1840 = vmatpush2.msra.mxu0 0.0
        %1841 = vmatprep.subr.mxu0 0.0
        %1842 = vmatpush2.msra.mxu0 0.0
        %1843 = vmatprep.subr.mxu0 0.0
        %1844 = vmatpush2.msra.mxu0 0.0
        %1845 = vmatprep.subr.mxu0 0.0
        %1846 = vmatpush2.msra.mxu0 0.0
        %1847 = vmatprep.subr.mxu0 0.0
        %1848 = vmatpush2.msra.mxu0 0.0
        %1849 = vmatprep.subr.mxu0 0.0
        %1850 = vmatpush2.msra.mxu0 0.0
        %1851 = vmatprep.subr.mxu0 0.0
        %1852 = vmatpush2.msra.mxu0 0.0
        %1853 = vmatprep.subr.mxu0 0.0
        %1854 = vmatpush2.msra.mxu0 0.0
        %1855 = vmatprep.subr.mxu0 0.0
        %1856 = vmatpush2.msra.mxu0 0.0
        %1857 = vmatprep.subr.mxu0 0.0
        %1858 = vmatpush2.msra.mxu0 0.0
        %1859 = vmatprep.subr.mxu0 0.0
        %1860 = vmatpush2.msra.mxu0 0.0
        %1861 = vmatprep.subr.mxu0 0.0
        %1862 = vmatpush2.msra.mxu0 0.0
        %1863 = vmatprep.subr.mxu0 0.0
        %1864 = vmatpush2.msra.mxu0 0.0
        %1865 = vmatprep.mubr.f32.mxu0 0.0
        %1866 = vmatmul.mubr.f32.gmra.mxu0 %v1728
        %v1867 = vpop.f32.mrf.mxu0
        %v1868 = vadd.f32 %v1725, %v1867
        %v1869 = vpop.f32.mrf.mxu0
        %v1870 = vadd.f32 %v1725, %v1869
        %1871 = vdwg.mxu0
        %v1872 = vmax.f32 %v1797, 0.0
        %v1873 = vmax.f32 %v1799, 0.0
        %v1874 = vmax.f32 %v1868, 0.0
        %v1875 = vmax.f32 %v1870, 0.0
        %1876 = vrot.lane.b32.xlu0 %v1872, 17
        %v1877 = vpop.permute.xlu0 %1876
        %1878 = vrot.lane.b32.xlu0 %v1873, 17
        %v1879 = vpop.permute.xlu0 %1878
        %1880 = vrot.lane.b32.xlu0 %v1874, 17
        %v1881 = vpop.permute.xlu0 %1880
        %1882 = vrot.lane.b32.xlu0 %v1875, 17
        %v1883 = vpop.permute.xlu0 %1882
        %v1884 = vsel %vm525, %v1881, %v1883
        %v1885 = vsel %vm525, %v1879, %v1881
        %v1886 = vsel %vm525, %v1877, %v1879
        %v1887 = vsel %vm525, %v1883, %v1877
        %v1888 = vsel %vm547, %v1887, 0.0
        %v1889 = vsel %vm548, %v1886, 0.0
        %v1890 = vsel %vm549, %v1885, 0.0
        %v1891 = vsel %vm550, %v1884, 0.0
        %1892 = vset.pattern.permute.xlu0 27
        %1893 = vperm.xlu0 %1892, %v555
        %v1894 = vpop.permute.xlu0 %1893
        %v1896 = vmul.f32 %v1888, %v1894
        %v1897 = vmul.f32 %v1889, %v1894
        %v1898 = vmul.f32 %v1890, %v1894
        %v1899 = vmul.f32 %v1891, %v1894
        %v1900 = vadd.f32 %v1896, 0.0
        %v1901 = vadd.f32 %v1897, 0.0
        %v1902 = vadd.f32 %v1898, 0.0
        %v1903 = vadd.f32 %v1899, 0.0
        %1904 = vrot.lane.b32.xlu0 %v1872, 16
        %v1905 = vpop.permute.xlu0 %1904
        %1906 = vrot.lane.b32.xlu0 %v1873, 16
        %v1907 = vpop.permute.xlu0 %1906
        %1908 = vrot.lane.b32.xlu0 %v1874, 16
        %v1909 = vpop.permute.xlu0 %1908
        %1910 = vrot.lane.b32.xlu0 %v1875, 16
        %v1911 = vpop.permute.xlu0 %1910
        %v1912 = vsel %vm577, %v1909, %v1911
        %v1913 = vsel %vm577, %v1907, %v1909
        %v1914 = vsel %vm577, %v1905, %v1907
        %v1915 = vsel %vm577, %v1911, %v1905
        %v1916 = vsel %vm599, %v1915, 0.0
        %v1917 = vsel %vm600, %v1914, 0.0
        %v1918 = vsel %vm601, %v1913, 0.0
        %v1919 = vsel %vm602, %v1912, 0.0
        %1920 = vset.pattern.permute.xlu0 28
        %1921 = vperm.xlu0 %1920, %v555
        %v1922 = vpop.permute.xlu0 %1921
        %v1924 = vmul.f32 %v1916, %v1922
        %v1925 = vmul.f32 %v1917, %v1922
        %v1926 = vmul.f32 %v1918, %v1922
        %v1927 = vmul.f32 %v1919, %v1922
        %v1928 = vadd.f32 %v1900, %v1924
        %v1929 = vadd.f32 %v1901, %v1925
        %v1930 = vadd.f32 %v1902, %v1926
        %v1931 = vadd.f32 %v1903, %v1927
        %1932 = vrot.lane.b32.xlu0 %v1872, 15
        %v1933 = vpop.permute.xlu0 %1932
        %1934 = vrot.lane.b32.xlu0 %v1873, 15
        %v1935 = vpop.permute.xlu0 %1934
        %1936 = vrot.lane.b32.xlu0 %v1874, 15
        %v1937 = vpop.permute.xlu0 %1936
        %1938 = vrot.lane.b32.xlu0 %v1875, 15
        %v1939 = vpop.permute.xlu0 %1938
        %v1940 = vsel %vm627, %v1937, %v1939
        %v1941 = vsel %vm627, %v1935, %v1937
        %v1942 = vsel %vm627, %v1933, %v1935
        %v1943 = vsel %vm627, %v1939, %v1933
        %v1944 = vsel %vm649, %v1943, 0.0
        %v1945 = vsel %vm650, %v1942, 0.0
        %v1946 = vsel %vm651, %v1941, 0.0
        %v1947 = vsel %vm652, %v1940, 0.0
        %1948 = vset.pattern.permute.xlu0 29
        %1949 = vperm.xlu0 %1948, %v555
        %v1950 = vpop.permute.xlu0 %1949
        %v1952 = vmul.f32 %v1944, %v1950
        %v1953 = vmul.f32 %v1945, %v1950
        %v1954 = vmul.f32 %v1946, %v1950
        %v1955 = vmul.f32 %v1947, %v1950
        %v1956 = vadd.f32 %v1928, %v1952
        %v1957 = vadd.f32 %v1929, %v1953
        %v1958 = vadd.f32 %v1930, %v1954
        %v1959 = vadd.f32 %v1931, %v1955
        %1960 = vrot.lane.b32.xlu0 %v1872, 1
        %v1961 = vpop.permute.xlu0 %1960
        %1962 = vrot.lane.b32.xlu0 %v1873, 1
        %v1963 = vpop.permute.xlu0 %1962
        %1964 = vrot.lane.b32.xlu0 %v1874, 1
        %v1965 = vpop.permute.xlu0 %1964
        %1966 = vrot.lane.b32.xlu0 %v1875, 1
        %v1967 = vpop.permute.xlu0 %1966
        %v1968 = vsel %vm677, %v1965, %v1967
        %v1969 = vsel %vm677, %v1963, %v1965
        %v1970 = vsel %vm677, %v1961, %v1963
        %v1971 = vsel %vm677, %v1967, %v1961
        %v1972 = vsel %vm699, %v1971, 0.0
        %v1973 = vsel %vm700, %v1970, 0.0
        %v1974 = vsel %vm701, %v1969, 0.0
        %v1975 = vsel %vm702, %v1968, 0.0
        %1976 = vset.pattern.permute.xlu0 30
        %1977 = vperm.xlu0 %1976, %v555
        %v1978 = vpop.permute.xlu0 %1977
        %v1980 = vmul.f32 %v1972, %v1978
        %v1981 = vmul.f32 %v1973, %v1978
        %v1982 = vmul.f32 %v1974, %v1978
        %v1983 = vmul.f32 %v1975, %v1978
        %v1984 = vadd.f32 %v1956, %v1980
        %v1985 = vadd.f32 %v1957, %v1981
        %v1986 = vadd.f32 %v1958, %v1982
        %v1987 = vadd.f32 %v1959, %v1983
        %1988 = vset.pattern.permute.xlu0 31
        %1989 = vperm.xlu0 %1988, %v555
        %v1990 = vpop.permute.xlu0 %1989
        %v1992 = vmul.f32 %v1872, %v1990
        %v1993 = vmul.f32 %v1873, %v1990
        %v1994 = vmul.f32 %v1874, %v1990
        %v1995 = vmul.f32 %v1875, %v1990
        %v1996 = vadd.f32 %v1984, %v1992
        %v1997 = vadd.f32 %v1985, %v1993
        %v1998 = vadd.f32 %v1986, %v1994
        %v1999 = vadd.f32 %v1987, %v1995
        %2000 = vrot.lane.b32.xlu0 %v1872, 127
        %v2001 = vpop.permute.xlu0 %2000
        %2002 = vrot.lane.b32.xlu0 %v1873, 127
        %v2003 = vpop.permute.xlu0 %2002
        %2004 = vrot.lane.b32.xlu0 %v1874, 127
        %v2005 = vpop.permute.xlu0 %2004
        %2006 = vrot.lane.b32.xlu0 %v1875, 127
        %v2007 = vpop.permute.xlu0 %2006
        %v2008 = vsel %vm739, %v2005, %v2007
        %v2009 = vsel %vm739, %v2003, %v2005
        %v2010 = vsel %vm739, %v2001, %v2003
        %v2011 = vsel %vm739, %v2007, %v2001
        %v2012 = vsel %vm761, %v2010, 0.0
        %v2013 = vsel %vm762, %v2009, 0.0
        %v2014 = vsel %vm763, %v2008, 0.0
        %v2015 = vsel %vm764, %v2011, 0.0
        %2016 = vset.pattern.permute.xlu0 32
        %2017 = vperm.xlu0 %2016, %v555
        %v2018 = vpop.permute.xlu0 %2017
        %v2020 = vmul.f32 %v2012, %v2018
        %v2021 = vmul.f32 %v2013, %v2018
        %v2022 = vmul.f32 %v2014, %v2018
        %v2023 = vmul.f32 %v2015, %v2018
        %v2024 = vadd.f32 %v1996, %v2020
        %v2025 = vadd.f32 %v1997, %v2021
        %v2026 = vadd.f32 %v1998, %v2022
        %v2027 = vadd.f32 %v1999, %v2023
        %2028 = vrot.lane.b32.xlu0 %v1872, 113
        %v2029 = vpop.permute.xlu0 %2028
        %2030 = vrot.lane.b32.xlu0 %v1873, 113
        %v2031 = vpop.permute.xlu0 %2030
        %2032 = vrot.lane.b32.xlu0 %v1874, 113
        %v2033 = vpop.permute.xlu0 %2032
        %2034 = vrot.lane.b32.xlu0 %v1875, 113
        %v2035 = vpop.permute.xlu0 %2034
        %v2036 = vsel %vm789, %v2033, %v2035
        %v2037 = vsel %vm789, %v2031, %v2033
        %v2038 = vsel %vm789, %v2029, %v2031
        %v2039 = vsel %vm789, %v2035, %v2029
        %v2040 = vsel %vm811, %v2038, 0.0
        %v2041 = vsel %vm812, %v2037, 0.0
        %v2042 = vsel %vm813, %v2036, 0.0
        %v2043 = vsel %vm814, %v2039, 0.0
        %2044 = vset.pattern.permute.xlu0 33
        %2045 = vperm.xlu0 %2044, %v555
        %v2046 = vpop.permute.xlu0 %2045
        %v2048 = vmul.f32 %v2040, %v2046
        %v2049 = vmul.f32 %v2041, %v2046
        %v2050 = vmul.f32 %v2042, %v2046
        %v2051 = vmul.f32 %v2043, %v2046
        %v2052 = vadd.f32 %v2024, %v2048
        %v2053 = vadd.f32 %v2025, %v2049
        %v2054 = vadd.f32 %v2026, %v2050
        %v2055 = vadd.f32 %v2027, %v2051
        %2056 = vrot.lane.b32.xlu0 %v1872, 112
        %v2057 = vpop.permute.xlu0 %2056
        %2058 = vrot.lane.b32.xlu0 %v1873, 112
        %v2059 = vpop.permute.xlu0 %2058
        %2060 = vrot.lane.b32.xlu0 %v1874, 112
        %v2061 = vpop.permute.xlu0 %2060
        %2062 = vrot.lane.b32.xlu0 %v1875, 112
        %v2063 = vpop.permute.xlu0 %2062
        %v2064 = vsel %vm839, %v2061, %v2063
        %v2065 = vsel %vm839, %v2059, %v2061
        %v2066 = vsel %vm839, %v2057, %v2059
        %v2067 = vsel %vm839, %v2063, %v2057
        %v2068 = vsel %vm861, %v2066, 0.0
        %v2069 = vsel %vm862, %v2065, 0.0
        %v2070 = vsel %vm863, %v2064, 0.0
        %v2071 = vsel %vm864, %v2067, 0.0
        %2072 = vset.pattern.permute.xlu0 34
        %2073 = vperm.xlu0 %2072, %v555
        %v2074 = vpop.permute.xlu0 %2073
        %v2076 = vmul.f32 %v2068, %v2074
        %v2077 = vmul.f32 %v2069, %v2074
        %v2078 = vmul.f32 %v2070, %v2074
        %v2079 = vmul.f32 %v2071, %v2074
        %v2080 = vadd.f32 %v2052, %v2076
        %v2081 = vadd.f32 %v2053, %v2077
        %v2082 = vadd.f32 %v2054, %v2078
        %v2083 = vadd.f32 %v2055, %v2079
        %2084 = vrot.lane.b32.xlu0 %v1872, 111
        %v2085 = vpop.permute.xlu0 %2084
        %2086 = vrot.lane.b32.xlu0 %v1873, 111
        %v2087 = vpop.permute.xlu0 %2086
        %2088 = vrot.lane.b32.xlu0 %v1874, 111
        %v2089 = vpop.permute.xlu0 %2088
        %2090 = vrot.lane.b32.xlu0 %v1875, 111
        %v2091 = vpop.permute.xlu0 %2090
        %v2092 = vsel %vm889, %v2089, %v2091
        %v2093 = vsel %vm889, %v2087, %v2089
        %v2094 = vsel %vm889, %v2085, %v2087
        %v2095 = vsel %vm889, %v2091, %v2085
        %v2096 = vsel %vm911, %v2094, 0.0
        %v2097 = vsel %vm912, %v2093, 0.0
        %v2098 = vsel %vm913, %v2092, 0.0
        %v2099 = vsel %vm914, %v2095, 0.0
        %2100 = vset.pattern.permute.xlu0 35
        %2101 = vperm.xlu0 %2100, %v555
        %v2102 = vpop.permute.xlu0 %2101
        %v2104 = vmul.f32 %v2096, %v2102
        %v2105 = vmul.f32 %v2097, %v2102
        %v2106 = vmul.f32 %v2098, %v2102
        %v2107 = vmul.f32 %v2099, %v2102
        %v2108 = vadd.f32 %v2080, %v2104
        %v2109 = vadd.f32 %v2081, %v2105
        %v2110 = vadd.f32 %v2082, %v2106
        %v2111 = vadd.f32 %v2083, %v2107
        %s2112 = scalar_lea.vmem %s5, 24
        %v2113 = vld [vmem:[%s2112] sm:$0xff]
        %s2114 = scalar_lea.vmem %s6, 24
        %v2115 = vld [vmem:[%s2114] sm:$0xff]
        %2117 = vset.pattern.permute.xlu0 0
        %2118 = vperm.xlu0 %2117, %v2115
        %v2119 = vpop.permute.xlu0 %2118
        %v2122 = vsel %vm938, %v2113, 0
        %2124 = vmatprep.subr.mxu0 0.0
        %2125 = vmatpush1.msra.mxu0 0.0
        %2126 = vmatprep.subr.mxu0 0.0
        %2127 = vmatpush1.msra.mxu0 0.0
        %2128 = vmatprep.subr.mxu0 0.0
        %2129 = vmatpush1.msra.mxu0 0.0
        %2130 = vmatprep.subr.mxu0 0.0
        %2131 = vmatpush1.msra.mxu0 0.0
        %2132 = vmatprep.subr.mxu0 0.0
        %2133 = vmatpush1.msra.mxu0 0.0
        %2134 = vmatprep.subr.mxu0 0.0
        %2135 = vmatpush1.msra.mxu0 0.0
        %2136 = vmatprep.subr.mxu0 0.0
        %2137 = vmatpush1.msra.mxu0 0.0
        %2138 = vmatprep.subr.mxu0 0.0
        %2139 = vmatpush1.msra.mxu0 0.0
        %2140 = vmatprep.subr.mxu0 0.0
        %2141 = vmatpush1.msra.mxu0 0.0
        %2142 = vmatprep.subr.mxu0 0.0
        %2143 = vmatpush1.msra.mxu0 0.0
        %2144 = vmatprep.subr.mxu0 0.0
        %2145 = vmatpush1.msra.mxu0 0.0
        %2146 = vmatprep.subr.mxu0 0.0
        %2147 = vmatpush1.msra.mxu0 0.0
        %2148 = vmatprep.subr.mxu0 0.0
        %2149 = vmatpush1.msra.mxu0 0.0
        %2150 = vmatprep.subr.mxu0 0.0
        %2151 = vmatpush1.msra.mxu0 0.0
        %2152 = vmatprep.subr.mxu0 0.0
        %2153 = vmatpush1.msra.mxu0 0.0
        %2154 = vmatprep.subr.mxu0 %v2109
        %2155 = vmatpush1.msra.mxu0 %v2108
        %2156 = vmatprep.subr.mxu0 0.0
        %2157 = vmatpush2.msra.mxu0 0.0
        %2158 = vmatprep.subr.mxu0 0.0
        %2159 = vmatpush2.msra.mxu0 0.0
        %2160 = vmatprep.subr.mxu0 0.0
        %2161 = vmatpush2.msra.mxu0 0.0
        %2162 = vmatprep.subr.mxu0 0.0
        %2163 = vmatpush2.msra.mxu0 0.0
        %2164 = vmatprep.subr.mxu0 0.0
        %2165 = vmatpush2.msra.mxu0 0.0
        %2166 = vmatprep.subr.mxu0 0.0
        %2167 = vmatpush2.msra.mxu0 0.0
        %2168 = vmatprep.subr.mxu0 0.0
        %2169 = vmatpush2.msra.mxu0 0.0
        %2170 = vmatprep.subr.mxu0 0.0
        %2171 = vmatpush2.msra.mxu0 0.0
        %2172 = vmatprep.subr.mxu0 0.0
        %2173 = vmatpush2.msra.mxu0 0.0
        %2174 = vmatprep.subr.mxu0 0.0
        %2175 = vmatpush2.msra.mxu0 0.0
        %2176 = vmatprep.subr.mxu0 0.0
        %2177 = vmatpush2.msra.mxu0 0.0
        %2178 = vmatprep.subr.mxu0 0.0
        %2179 = vmatpush2.msra.mxu0 0.0
        %2180 = vmatprep.subr.mxu0 0.0
        %2181 = vmatpush2.msra.mxu0 0.0
        %2182 = vmatprep.subr.mxu0 0.0
        %2183 = vmatpush2.msra.mxu0 0.0
        %2184 = vmatprep.subr.mxu0 0.0
        %2185 = vmatpush2.msra.mxu0 0.0
        %2186 = vmatprep.subr.mxu0 0.0
        %2187 = vmatpush2.msra.mxu0 0.0
        %2188 = vmatprep.mubr.f32.mxu0 0.0
        %2189 = vmatmul.mubr.f32.gmra.mxu0 %v2122
        %v2190 = vpop.f32.mrf.mxu0
        %v2191 = vadd.f32 %v2119, %v2190
        %v2192 = vpop.f32.mrf.mxu0
        %v2193 = vadd.f32 %v2119, %v2192
        %2194 = vdwg.mxu0
        %2195 = vmatprep.subr.mxu0 0.0
        %2196 = vmatpush1.msra.mxu0 0.0
        %2197 = vmatprep.subr.mxu0 0.0
        %2198 = vmatpush1.msra.mxu0 0.0
        %2199 = vmatprep.subr.mxu0 0.0
        %2200 = vmatpush1.msra.mxu0 0.0
        %2201 = vmatprep.subr.mxu0 0.0
        %2202 = vmatpush1.msra.mxu0 0.0
        %2203 = vmatprep.subr.mxu0 0.0
        %2204 = vmatpush1.msra.mxu0 0.0
        %2205 = vmatprep.subr.mxu0 0.0
        %2206 = vmatpush1.msra.mxu0 0.0
        %2207 = vmatprep.subr.mxu0 0.0
        %2208 = vmatpush1.msra.mxu0 0.0
        %2209 = vmatprep.subr.mxu0 0.0
        %2210 = vmatpush1.msra.mxu0 0.0
        %2211 = vmatprep.subr.mxu0 0.0
        %2212 = vmatpush1.msra.mxu0 0.0
        %2213 = vmatprep.subr.mxu0 0.0
        %2214 = vmatpush1.msra.mxu0 0.0
        %2215 = vmatprep.subr.mxu0 0.0
        %2216 = vmatpush1.msra.mxu0 0.0
        %2217 = vmatprep.subr.mxu0 0.0
        %2218 = vmatpush1.msra.mxu0 0.0
        %2219 = vmatprep.subr.mxu0 0.0
        %2220 = vmatpush1.msra.mxu0 0.0
        %2221 = vmatprep.subr.mxu0 0.0
        %2222 = vmatpush1.msra.mxu0 0.0
        %2223 = vmatprep.subr.mxu0 0.0
        %2224 = vmatpush1.msra.mxu0 0.0
        %2225 = vmatprep.subr.mxu0 %v2111
        %2226 = vmatpush1.msra.mxu0 %v2110
        %2227 = vmatprep.subr.mxu0 0.0
        %2228 = vmatpush2.msra.mxu0 0.0
        %2229 = vmatprep.subr.mxu0 0.0
        %2230 = vmatpush2.msra.mxu0 0.0
        %2231 = vmatprep.subr.mxu0 0.0
        %2232 = vmatpush2.msra.mxu0 0.0
        %2233 = vmatprep.subr.mxu0 0.0
        %2234 = vmatpush2.msra.mxu0 0.0
        %2235 = vmatprep.subr.mxu0 0.0
        %2236 = vmatpush2.msra.mxu0 0.0
        %2237 = vmatprep.subr.mxu0 0.0
        %2238 = vmatpush2.msra.mxu0 0.0
        %2239 = vmatprep.subr.mxu0 0.0
        %2240 = vmatpush2.msra.mxu0 0.0
        %2241 = vmatprep.subr.mxu0 0.0
        %2242 = vmatpush2.msra.mxu0 0.0
        %2243 = vmatprep.subr.mxu0 0.0
        %2244 = vmatpush2.msra.mxu0 0.0
        %2245 = vmatprep.subr.mxu0 0.0
        %2246 = vmatpush2.msra.mxu0 0.0
        %2247 = vmatprep.subr.mxu0 0.0
        %2248 = vmatpush2.msra.mxu0 0.0
        %2249 = vmatprep.subr.mxu0 0.0
        %2250 = vmatpush2.msra.mxu0 0.0
        %2251 = vmatprep.subr.mxu0 0.0
        %2252 = vmatpush2.msra.mxu0 0.0
        %2253 = vmatprep.subr.mxu0 0.0
        %2254 = vmatpush2.msra.mxu0 0.0
        %2255 = vmatprep.subr.mxu0 0.0
        %2256 = vmatpush2.msra.mxu0 0.0
        %2257 = vmatprep.subr.mxu0 0.0
        %2258 = vmatpush2.msra.mxu0 0.0
        %2259 = vmatprep.mubr.f32.mxu0 0.0
        %2260 = vmatmul.mubr.f32.gmra.mxu0 %v2122
        %v2261 = vpop.f32.mrf.mxu0
        %v2262 = vadd.f32 %v2119, %v2261
        %v2263 = vpop.f32.mrf.mxu0
        %v2264 = vadd.f32 %v2119, %v2263
        %2265 = vdwg.mxu0
        %v2266 = vadd.f32 %v1403, %v2191
        %v2267 = vadd.f32 %v1405, %v2193
        %v2268 = vadd.f32 %v1474, %v2262
        %v2269 = vadd.f32 %v1476, %v2264
        %2270 = vset.pattern.permute.xlu0 36
        %2271 = vperm.xlu0 %2270, %v555
        %v2272 = vpop.permute.xlu0 %2271
        %v2274 = vmul.f32 %v551, %v2272
        %v2275 = vmul.f32 %v552, %v2272
        %v2276 = vmul.f32 %v553, %v2272
        %v2277 = vmul.f32 %v554, %v2272
        %v2278 = vadd.f32 %v2274, 0.0
        %v2279 = vadd.f32 %v2275, 0.0
        %v2280 = vadd.f32 %v2276, 0.0
        %v2281 = vadd.f32 %v2277, 0.0
        %2282 = vset.pattern.permute.xlu0 37
        %2283 = vperm.xlu0 %2282, %v555
        %v2284 = vpop.permute.xlu0 %2283
        %v2286 = vmul.f32 %v603, %v2284
        %v2287 = vmul.f32 %v604, %v2284
        %v2288 = vmul.f32 %v605, %v2284
        %v2289 = vmul.f32 %v606, %v2284
        %v2290 = vadd.f32 %v2278, %v2286
        %v2291 = vadd.f32 %v2279, %v2287
        %v2292 = vadd.f32 %v2280, %v2288
        %v2293 = vadd.f32 %v2281, %v2289
        %2294 = vset.pattern.permute.xlu0 38
        %2295 = vperm.xlu0 %2294, %v555
        %v2296 = vpop.permute.xlu0 %2295
        %v2298 = vmul.f32 %v653, %v2296
        %v2299 = vmul.f32 %v654, %v2296
        %v2300 = vmul.f32 %v655, %v2296
        %v2301 = vmul.f32 %v656, %v2296
        %v2302 = vadd.f32 %v2290, %v2298
        %v2303 = vadd.f32 %v2291, %v2299
        %v2304 = vadd.f32 %v2292, %v2300
        %v2305 = vadd.f32 %v2293, %v2301
        %2306 = vset.pattern.permute.xlu0 39
        %2307 = vperm.xlu0 %2306, %v555
        %v2308 = vpop.permute.xlu0 %2307
        %v2310 = vmul.f32 %v703, %v2308
        %v2311 = vmul.f32 %v704, %v2308
        %v2312 = vmul.f32 %v705, %v2308
        %v2313 = vmul.f32 %v706, %v2308
        %v2314 = vadd.f32 %v2302, %v2310
        %v2315 = vadd.f32 %v2303, %v2311
        %v2316 = vadd.f32 %v2304, %v2312
        %v2317 = vadd.f32 %v2305, %v2313
        %2318 = vset.pattern.permute.xlu0 40
        %2319 = vperm.xlu0 %2318, %v555
        %v2320 = vpop.permute.xlu0 %2319
        %v2322 = vmul.f32 %v511, %v2320
        %v2323 = vmul.f32 %v512, %v2320
        %v2324 = vmul.f32 %v513, %v2320
        %v2325 = vmul.f32 %v514, %v2320
        %v2326 = vadd.f32 %v2314, %v2322
        %v2327 = vadd.f32 %v2315, %v2323
        %v2328 = vadd.f32 %v2316, %v2324
        %v2329 = vadd.f32 %v2317, %v2325
        %2330 = vset.pattern.permute.xlu0 41
        %2331 = vperm.xlu0 %2330, %v555
        %v2332 = vpop.permute.xlu0 %2331
        %v2334 = vmul.f32 %v765, %v2332
        %v2335 = vmul.f32 %v766, %v2332
        %v2336 = vmul.f32 %v767, %v2332
        %v2337 = vmul.f32 %v768, %v2332
        %v2338 = vadd.f32 %v2326, %v2334
        %v2339 = vadd.f32 %v2327, %v2335
        %v2340 = vadd.f32 %v2328, %v2336
        %v2341 = vadd.f32 %v2329, %v2337
        %2342 = vset.pattern.permute.xlu0 42
        %2343 = vperm.xlu0 %2342, %v555
        %v2344 = vpop.permute.xlu0 %2343
        %v2346 = vmul.f32 %v815, %v2344
        %v2347 = vmul.f32 %v816, %v2344
        %v2348 = vmul.f32 %v817, %v2344
        %v2349 = vmul.f32 %v818, %v2344
        %v2350 = vadd.f32 %v2338, %v2346
        %v2351 = vadd.f32 %v2339, %v2347
        %v2352 = vadd.f32 %v2340, %v2348
        %v2353 = vadd.f32 %v2341, %v2349
        %2354 = vset.pattern.permute.xlu0 43
        %2355 = vperm.xlu0 %2354, %v555
        %v2356 = vpop.permute.xlu0 %2355
        %v2358 = vmul.f32 %v865, %v2356
        %v2359 = vmul.f32 %v866, %v2356
        %v2360 = vmul.f32 %v867, %v2356
        %v2361 = vmul.f32 %v868, %v2356
        %v2362 = vadd.f32 %v2350, %v2358
        %v2363 = vadd.f32 %v2351, %v2359
        %v2364 = vadd.f32 %v2352, %v2360
        %v2365 = vadd.f32 %v2353, %v2361
        %2366 = vset.pattern.permute.xlu0 44
        %2367 = vperm.xlu0 %2366, %v555
        %v2368 = vpop.permute.xlu0 %2367
        %v2370 = vmul.f32 %v915, %v2368
        %v2371 = vmul.f32 %v916, %v2368
        %v2372 = vmul.f32 %v917, %v2368
        %v2373 = vmul.f32 %v918, %v2368
        %v2374 = vadd.f32 %v2362, %v2370
        %v2375 = vadd.f32 %v2363, %v2371
        %v2376 = vadd.f32 %v2364, %v2372
        %v2377 = vadd.f32 %v2365, %v2373
        %s2378 = scalar_lea.vmem %s5, 32
        %v2379 = vld [vmem:[%s2378] sm:$0xff]
        %s2380 = scalar_lea.vmem %s6, 32
        %v2381 = vld [vmem:[%s2380] sm:$0xff]
        %2383 = vset.pattern.permute.xlu0 0
        %2384 = vperm.xlu0 %2383, %v2381
        %v2385 = vpop.permute.xlu0 %2384
        %v2388 = vsel %vm938, %v2379, 0
        %2390 = vmatprep.subr.mxu0 0.0
        %2391 = vmatpush1.msra.mxu0 0.0
        %2392 = vmatprep.subr.mxu0 0.0
        %2393 = vmatpush1.msra.mxu0 0.0
        %2394 = vmatprep.subr.mxu0 0.0
        %2395 = vmatpush1.msra.mxu0 0.0
        %2396 = vmatprep.subr.mxu0 0.0
        %2397 = vmatpush1.msra.mxu0 0.0
        %2398 = vmatprep.subr.mxu0 0.0
        %2399 = vmatpush1.msra.mxu0 0.0
        %2400 = vmatprep.subr.mxu0 0.0
        %2401 = vmatpush1.msra.mxu0 0.0
        %2402 = vmatprep.subr.mxu0 0.0
        %2403 = vmatpush1.msra.mxu0 0.0
        %2404 = vmatprep.subr.mxu0 0.0
        %2405 = vmatpush1.msra.mxu0 0.0
        %2406 = vmatprep.subr.mxu0 0.0
        %2407 = vmatpush1.msra.mxu0 0.0
        %2408 = vmatprep.subr.mxu0 0.0
        %2409 = vmatpush1.msra.mxu0 0.0
        %2410 = vmatprep.subr.mxu0 0.0
        %2411 = vmatpush1.msra.mxu0 0.0
        %2412 = vmatprep.subr.mxu0 0.0
        %2413 = vmatpush1.msra.mxu0 0.0
        %2414 = vmatprep.subr.mxu0 0.0
        %2415 = vmatpush1.msra.mxu0 0.0
        %2416 = vmatprep.subr.mxu0 0.0
        %2417 = vmatpush1.msra.mxu0 0.0
        %2418 = vmatprep.subr.mxu0 0.0
        %2419 = vmatpush1.msra.mxu0 0.0
        %2420 = vmatprep.subr.mxu0 %v2375
        %2421 = vmatpush1.msra.mxu0 %v2374
        %2422 = vmatprep.subr.mxu0 0.0
        %2423 = vmatpush2.msra.mxu0 0.0
        %2424 = vmatprep.subr.mxu0 0.0
        %2425 = vmatpush2.msra.mxu0 0.0
        %2426 = vmatprep.subr.mxu0 0.0
        %2427 = vmatpush2.msra.mxu0 0.0
        %2428 = vmatprep.subr.mxu0 0.0
        %2429 = vmatpush2.msra.mxu0 0.0
        %2430 = vmatprep.subr.mxu0 0.0
        %2431 = vmatpush2.msra.mxu0 0.0
        %2432 = vmatprep.subr.mxu0 0.0
        %2433 = vmatpush2.msra.mxu0 0.0
        %2434 = vmatprep.subr.mxu0 0.0
        %2435 = vmatpush2.msra.mxu0 0.0
        %2436 = vmatprep.subr.mxu0 0.0
        %2437 = vmatpush2.msra.mxu0 0.0
        %2438 = vmatprep.subr.mxu0 0.0
        %2439 = vmatpush2.msra.mxu0 0.0
        %2440 = vmatprep.subr.mxu0 0.0
        %2441 = vmatpush2.msra.mxu0 0.0
        %2442 = vmatprep.subr.mxu0 0.0
        %2443 = vmatpush2.msra.mxu0 0.0
        %2444 = vmatprep.subr.mxu0 0.0
        %2445 = vmatpush2.msra.mxu0 0.0
        %2446 = vmatprep.subr.mxu0 0.0
        %2447 = vmatpush2.msra.mxu0 0.0
        %2448 = vmatprep.subr.mxu0 0.0
        %2449 = vmatpush2.msra.mxu0 0.0
        %2450 = vmatprep.subr.mxu0 0.0
        %2451 = vmatpush2.msra.mxu0 0.0
        %2452 = vmatprep.subr.mxu0 0.0
        %2453 = vmatpush2.msra.mxu0 0.0
        %2454 = vmatprep.mubr.f32.mxu0 0.0
        %2455 = vmatmul.mubr.f32.gmra.mxu0 %v2388
        %v2456 = vpop.f32.mrf.mxu0
        %v2457 = vadd.f32 %v2385, %v2456
        %v2458 = vpop.f32.mrf.mxu0
        %v2459 = vadd.f32 %v2385, %v2458
        %2460 = vdwg.mxu0
        %2461 = vmatprep.subr.mxu0 0.0
        %2462 = vmatpush1.msra.mxu0 0.0
        %2463 = vmatprep.subr.mxu0 0.0
        %2464 = vmatpush1.msra.mxu0 0.0
        %2465 = vmatprep.subr.mxu0 0.0
        %2466 = vmatpush1.msra.mxu0 0.0
        %2467 = vmatprep.subr.mxu0 0.0
        %2468 = vmatpush1.msra.mxu0 0.0
        %2469 = vmatprep.subr.mxu0 0.0
        %2470 = vmatpush1.msra.mxu0 0.0
        %2471 = vmatprep.subr.mxu0 0.0
        %2472 = vmatpush1.msra.mxu0 0.0
        %2473 = vmatprep.subr.mxu0 0.0
        %2474 = vmatpush1.msra.mxu0 0.0
        %2475 = vmatprep.subr.mxu0 0.0
        %2476 = vmatpush1.msra.mxu0 0.0
        %2477 = vmatprep.subr.mxu0 0.0
        %2478 = vmatpush1.msra.mxu0 0.0
        %2479 = vmatprep.subr.mxu0 0.0
        %2480 = vmatpush1.msra.mxu0 0.0
        %2481 = vmatprep.subr.mxu0 0.0
        %2482 = vmatpush1.msra.mxu0 0.0
        %2483 = vmatprep.subr.mxu0 0.0
        %2484 = vmatpush1.msra.mxu0 0.0
        %2485 = vmatprep.subr.mxu0 0.0
        %2486 = vmatpush1.msra.mxu0 0.0
        %2487 = vmatprep.subr.mxu0 0.0
        %2488 = vmatpush1.msra.mxu0 0.0
        %2489 = vmatprep.subr.mxu0 0.0
        %2490 = vmatpush1.msra.mxu0 0.0
        %2491 = vmatprep.subr.mxu0 %v2377
        %2492 = vmatpush1.msra.mxu0 %v2376
        %2493 = vmatprep.subr.mxu0 0.0
        %2494 = vmatpush2.msra.mxu0 0.0
        %2495 = vmatprep.subr.mxu0 0.0
        %2496 = vmatpush2.msra.mxu0 0.0
        %2497 = vmatprep.subr.mxu0 0.0
        %2498 = vmatpush2.msra.mxu0 0.0
        %2499 = vmatprep.subr.mxu0 0.0
        %2500 = vmatpush2.msra.mxu0 0.0
        %2501 = vmatprep.subr.mxu0 0.0
        %2502 = vmatpush2.msra.mxu0 0.0
        %2503 = vmatprep.subr.mxu0 0.0
        %2504 = vmatpush2.msra.mxu0 0.0
        %2505 = vmatprep.subr.mxu0 0.0
        %2506 = vmatpush2.msra.mxu0 0.0
        %2507 = vmatprep.subr.mxu0 0.0
        %2508 = vmatpush2.msra.mxu0 0.0
        %2509 = vmatprep.subr.mxu0 0.0
        %2510 = vmatpush2.msra.mxu0 0.0
        %2511 = vmatprep.subr.mxu0 0.0
        %2512 = vmatpush2.msra.mxu0 0.0
        %2513 = vmatprep.subr.mxu0 0.0
        %2514 = vmatpush2.msra.mxu0 0.0
        %2515 = vmatprep.subr.mxu0 0.0
        %2516 = vmatpush2.msra.mxu0 0.0
        %2517 = vmatprep.subr.mxu0 0.0
        %2518 = vmatpush2.msra.mxu0 0.0
        %2519 = vmatprep.subr.mxu0 0.0
        %2520 = vmatpush2.msra.mxu0 0.0
        %2521 = vmatprep.subr.mxu0 0.0
        %2522 = vmatpush2.msra.mxu0 0.0
        %2523 = vmatprep.subr.mxu0 0.0
        %2524 = vmatpush2.msra.mxu0 0.0
        %2525 = vmatprep.mubr.f32.mxu0 0.0
        %2526 = vmatmul.mubr.f32.gmra.mxu0 %v2388
        %v2527 = vpop.f32.mrf.mxu0
        %v2528 = vadd.f32 %v2385, %v2527
        %v2529 = vpop.f32.mrf.mxu0
        %v2530 = vadd.f32 %v2385, %v2529
        %2531 = vdwg.mxu0
        %v2532 = vmax.f32 %v2457, 0.0
        %v2533 = vmax.f32 %v2459, 0.0
        %v2534 = vmax.f32 %v2528, 0.0
        %v2535 = vmax.f32 %v2530, 0.0
        %2536 = vrot.lane.b32.xlu0 %v2532, 17
        %v2537 = vpop.permute.xlu0 %2536
        %2538 = vrot.lane.b32.xlu0 %v2533, 17
        %v2539 = vpop.permute.xlu0 %2538
        %2540 = vrot.lane.b32.xlu0 %v2534, 17
        %v2541 = vpop.permute.xlu0 %2540
        %2542 = vrot.lane.b32.xlu0 %v2535, 17
        %v2543 = vpop.permute.xlu0 %2542
        %v2544 = vsel %vm525, %v2541, %v2543
        %v2545 = vsel %vm525, %v2539, %v2541
        %v2546 = vsel %vm525, %v2537, %v2539
        %v2547 = vsel %vm525, %v2543, %v2537
        %v2548 = vsel %vm547, %v2547, 0.0
        %v2549 = vsel %vm548, %v2546, 0.0
        %v2550 = vsel %vm549, %v2545, 0.0
        %v2551 = vsel %vm550, %v2544, 0.0
        %2552 = vset.pattern.permute.xlu0 45
        %2553 = vperm.xlu0 %2552, %v555
        %v2554 = vpop.permute.xlu0 %2553
        %v2556 = vmul.f32 %v2548, %v2554
        %v2557 = vmul.f32 %v2549, %v2554
        %v2558 = vmul.f32 %v2550, %v2554
        %v2559 = vmul.f32 %v2551, %v2554
        %v2560 = vadd.f32 %v2556, 0.0
        %v2561 = vadd.f32 %v2557, 0.0
        %v2562 = vadd.f32 %v2558, 0.0
        %v2563 = vadd.f32 %v2559, 0.0
        %2564 = vrot.lane.b32.xlu0 %v2532, 16
        %v2565 = vpop.permute.xlu0 %2564
        %2566 = vrot.lane.b32.xlu0 %v2533, 16
        %v2567 = vpop.permute.xlu0 %2566
        %2568 = vrot.lane.b32.xlu0 %v2534, 16
        %v2569 = vpop.permute.xlu0 %2568
        %2570 = vrot.lane.b32.xlu0 %v2535, 16
        %v2571 = vpop.permute.xlu0 %2570
        %v2572 = vsel %vm577, %v2569, %v2571
        %v2573 = vsel %vm577, %v2567, %v2569
        %v2574 = vsel %vm577, %v2565, %v2567
        %v2575 = vsel %vm577, %v2571, %v2565
        %v2576 = vsel %vm599, %v2575, 0.0
        %v2577 = vsel %vm600, %v2574, 0.0
        %v2578 = vsel %vm601, %v2573, 0.0
        %v2579 = vsel %vm602, %v2572, 0.0
        %2580 = vset.pattern.permute.xlu0 46
        %2581 = vperm.xlu0 %2580, %v555
        %v2582 = vpop.permute.xlu0 %2581
        %v2584 = vmul.f32 %v2576, %v2582
        %v2585 = vmul.f32 %v2577, %v2582
        %v2586 = vmul.f32 %v2578, %v2582
        %v2587 = vmul.f32 %v2579, %v2582
        %v2588 = vadd.f32 %v2560, %v2584
        %v2589 = vadd.f32 %v2561, %v2585
        %v2590 = vadd.f32 %v2562, %v2586
        %v2591 = vadd.f32 %v2563, %v2587
        %2592 = vrot.lane.b32.xlu0 %v2532, 15
        %v2593 = vpop.permute.xlu0 %2592
        %2594 = vrot.lane.b32.xlu0 %v2533, 15
        %v2595 = vpop.permute.xlu0 %2594
        %2596 = vrot.lane.b32.xlu0 %v2534, 15
        %v2597 = vpop.permute.xlu0 %2596
        %2598 = vrot.lane.b32.xlu0 %v2535, 15
        %v2599 = vpop.permute.xlu0 %2598
        %v2600 = vsel %vm627, %v2597, %v2599
        %v2601 = vsel %vm627, %v2595, %v2597
        %v2602 = vsel %vm627, %v2593, %v2595
        %v2603 = vsel %vm627, %v2599, %v2593
        %v2604 = vsel %vm649, %v2603, 0.0
        %v2605 = vsel %vm650, %v2602, 0.0
        %v2606 = vsel %vm651, %v2601, 0.0
        %v2607 = vsel %vm652, %v2600, 0.0
        %2608 = vset.pattern.permute.xlu0 47
        %2609 = vperm.xlu0 %2608, %v555
        %v2610 = vpop.permute.xlu0 %2609
        %v2612 = vmul.f32 %v2604, %v2610
        %v2613 = vmul.f32 %v2605, %v2610
        %v2614 = vmul.f32 %v2606, %v2610
        %v2615 = vmul.f32 %v2607, %v2610
        %v2616 = vadd.f32 %v2588, %v2612
        %v2617 = vadd.f32 %v2589, %v2613
        %v2618 = vadd.f32 %v2590, %v2614
        %v2619 = vadd.f32 %v2591, %v2615
        %2620 = vrot.lane.b32.xlu0 %v2532, 1
        %v2621 = vpop.permute.xlu0 %2620
        %2622 = vrot.lane.b32.xlu0 %v2533, 1
        %v2623 = vpop.permute.xlu0 %2622
        %2624 = vrot.lane.b32.xlu0 %v2534, 1
        %v2625 = vpop.permute.xlu0 %2624
        %2626 = vrot.lane.b32.xlu0 %v2535, 1
        %v2627 = vpop.permute.xlu0 %2626
        %v2628 = vsel %vm677, %v2625, %v2627
        %v2629 = vsel %vm677, %v2623, %v2625
        %v2630 = vsel %vm677, %v2621, %v2623
        %v2631 = vsel %vm677, %v2627, %v2621
        %v2632 = vsel %vm699, %v2631, 0.0
        %v2633 = vsel %vm700, %v2630, 0.0
        %v2634 = vsel %vm701, %v2629, 0.0
        %v2635 = vsel %vm702, %v2628, 0.0
        %2636 = vset.pattern.permute.xlu0 48
        %2637 = vperm.xlu0 %2636, %v555
        %v2638 = vpop.permute.xlu0 %2637
        %v2640 = vmul.f32 %v2632, %v2638
        %v2641 = vmul.f32 %v2633, %v2638
        %v2642 = vmul.f32 %v2634, %v2638
        %v2643 = vmul.f32 %v2635, %v2638
        %v2644 = vadd.f32 %v2616, %v2640
        %v2645 = vadd.f32 %v2617, %v2641
        %v2646 = vadd.f32 %v2618, %v2642
        %v2647 = vadd.f32 %v2619, %v2643
        %2648 = vset.pattern.permute.xlu0 49
        %2649 = vperm.xlu0 %2648, %v555
        %v2650 = vpop.permute.xlu0 %2649
        %v2652 = vmul.f32 %v2532, %v2650
        %v2653 = vmul.f32 %v2533, %v2650
        %v2654 = vmul.f32 %v2534, %v2650
        %v2655 = vmul.f32 %v2535, %v2650
        %v2656 = vadd.f32 %v2644, %v2652
        %v2657 = vadd.f32 %v2645, %v2653
        %v2658 = vadd.f32 %v2646, %v2654
        %v2659 = vadd.f32 %v2647, %v2655
        %2660 = vrot.lane.b32.xlu0 %v2532, 127
        %v2661 = vpop.permute.xlu0 %2660
        %2662 = vrot.lane.b32.xlu0 %v2533, 127
        %v2663 = vpop.permute.xlu0 %2662
        %2664 = vrot.lane.b32.xlu0 %v2534, 127
        %v2665 = vpop.permute.xlu0 %2664
        %2666 = vrot.lane.b32.xlu0 %v2535, 127
        %v2667 = vpop.permute.xlu0 %2666
        %v2668 = vsel %vm739, %v2665, %v2667
        %v2669 = vsel %vm739, %v2663, %v2665
        %v2670 = vsel %vm739, %v2661, %v2663
        %v2671 = vsel %vm739, %v2667, %v2661
        %v2672 = vsel %vm761, %v2670, 0.0
        %v2673 = vsel %vm762, %v2669, 0.0
        %v2674 = vsel %vm763, %v2668, 0.0
        %v2675 = vsel %vm764, %v2671, 0.0
        %2676 = vset.pattern.permute.xlu0 50
        %2677 = vperm.xlu0 %2676, %v555
        %v2678 = vpop.permute.xlu0 %2677
        %v2680 = vmul.f32 %v2672, %v2678
        %v2681 = vmul.f32 %v2673, %v2678
        %v2682 = vmul.f32 %v2674, %v2678
        %v2683 = vmul.f32 %v2675, %v2678
        %v2684 = vadd.f32 %v2656, %v2680
        %v2685 = vadd.f32 %v2657, %v2681
        %v2686 = vadd.f32 %v2658, %v2682
        %v2687 = vadd.f32 %v2659, %v2683
        %2688 = vrot.lane.b32.xlu0 %v2532, 113
        %v2689 = vpop.permute.xlu0 %2688
        %2690 = vrot.lane.b32.xlu0 %v2533, 113
        %v2691 = vpop.permute.xlu0 %2690
        %2692 = vrot.lane.b32.xlu0 %v2534, 113
        %v2693 = vpop.permute.xlu0 %2692
        %2694 = vrot.lane.b32.xlu0 %v2535, 113
        %v2695 = vpop.permute.xlu0 %2694
        %v2696 = vsel %vm789, %v2693, %v2695
        %v2697 = vsel %vm789, %v2691, %v2693
        %v2698 = vsel %vm789, %v2689, %v2691
        %v2699 = vsel %vm789, %v2695, %v2689
        %v2700 = vsel %vm811, %v2698, 0.0
        %v2701 = vsel %vm812, %v2697, 0.0
        %v2702 = vsel %vm813, %v2696, 0.0
        %v2703 = vsel %vm814, %v2699, 0.0
        %2704 = vset.pattern.permute.xlu0 51
        %2705 = vperm.xlu0 %2704, %v555
        %v2706 = vpop.permute.xlu0 %2705
        %v2708 = vmul.f32 %v2700, %v2706
        %v2709 = vmul.f32 %v2701, %v2706
        %v2710 = vmul.f32 %v2702, %v2706
        %v2711 = vmul.f32 %v2703, %v2706
        %v2712 = vadd.f32 %v2684, %v2708
        %v2713 = vadd.f32 %v2685, %v2709
        %v2714 = vadd.f32 %v2686, %v2710
        %v2715 = vadd.f32 %v2687, %v2711
        %2716 = vrot.lane.b32.xlu0 %v2532, 112
        %v2717 = vpop.permute.xlu0 %2716
        %2718 = vrot.lane.b32.xlu0 %v2533, 112
        %v2719 = vpop.permute.xlu0 %2718
        %2720 = vrot.lane.b32.xlu0 %v2534, 112
        %v2721 = vpop.permute.xlu0 %2720
        %2722 = vrot.lane.b32.xlu0 %v2535, 112
        %v2723 = vpop.permute.xlu0 %2722
        %v2724 = vsel %vm839, %v2721, %v2723
        %v2725 = vsel %vm839, %v2719, %v2721
        %v2726 = vsel %vm839, %v2717, %v2719
        %v2727 = vsel %vm839, %v2723, %v2717
        %v2728 = vsel %vm861, %v2726, 0.0
        %v2729 = vsel %vm862, %v2725, 0.0
        %v2730 = vsel %vm863, %v2724, 0.0
        %v2731 = vsel %vm864, %v2727, 0.0
        %2732 = vset.pattern.permute.xlu0 52
        %2733 = vperm.xlu0 %2732, %v555
        %v2734 = vpop.permute.xlu0 %2733
        %v2736 = vmul.f32 %v2728, %v2734
        %v2737 = vmul.f32 %v2729, %v2734
        %v2738 = vmul.f32 %v2730, %v2734
        %v2739 = vmul.f32 %v2731, %v2734
        %v2740 = vadd.f32 %v2712, %v2736
        %v2741 = vadd.f32 %v2713, %v2737
        %v2742 = vadd.f32 %v2714, %v2738
        %v2743 = vadd.f32 %v2715, %v2739
        %2744 = vrot.lane.b32.xlu0 %v2532, 111
        %v2745 = vpop.permute.xlu0 %2744
        %2746 = vrot.lane.b32.xlu0 %v2533, 111
        %v2747 = vpop.permute.xlu0 %2746
        %2748 = vrot.lane.b32.xlu0 %v2534, 111
        %v2749 = vpop.permute.xlu0 %2748
        %2750 = vrot.lane.b32.xlu0 %v2535, 111
        %v2751 = vpop.permute.xlu0 %2750
        %v2752 = vsel %vm889, %v2749, %v2751
        %v2753 = vsel %vm889, %v2747, %v2749
        %v2754 = vsel %vm889, %v2745, %v2747
        %v2755 = vsel %vm889, %v2751, %v2745
        %v2756 = vsel %vm911, %v2754, 0.0
        %v2757 = vsel %vm912, %v2753, 0.0
        %v2758 = vsel %vm913, %v2752, 0.0
        %v2759 = vsel %vm914, %v2755, 0.0
        %2760 = vset.pattern.permute.xlu0 53
        %2761 = vperm.xlu0 %2760, %v555
        %v2762 = vpop.permute.xlu0 %2761
        %v2764 = vmul.f32 %v2756, %v2762
        %v2765 = vmul.f32 %v2757, %v2762
        %v2766 = vmul.f32 %v2758, %v2762
        %v2767 = vmul.f32 %v2759, %v2762
        %v2768 = vadd.f32 %v2740, %v2764
        %v2769 = vadd.f32 %v2741, %v2765
        %v2770 = vadd.f32 %v2742, %v2766
        %v2771 = vadd.f32 %v2743, %v2767
        %s2772 = scalar_lea.vmem %s5, 40
        %v2773 = vld [vmem:[%s2772] sm:$0xff]
        %s2774 = scalar_lea.vmem %s6, 40
        %v2775 = vld [vmem:[%s2774] sm:$0xff]
        %2777 = vset.pattern.permute.xlu0 0
        %2778 = vperm.xlu0 %2777, %v2775
        %v2779 = vpop.permute.xlu0 %2778
        %v2782 = vsel %vm938, %v2773, 0
        %2784 = vmatprep.subr.mxu0 0.0
        %2785 = vmatpush1.msra.mxu0 0.0
        %2786 = vmatprep.subr.mxu0 0.0
        %2787 = vmatpush1.msra.mxu0 0.0
        %2788 = vmatprep.subr.mxu0 0.0
        %2789 = vmatpush1.msra.mxu0 0.0
        %2790 = vmatprep.subr.mxu0 0.0
        %2791 = vmatpush1.msra.mxu0 0.0
        %2792 = vmatprep.subr.mxu0 0.0
        %2793 = vmatpush1.msra.mxu0 0.0
        %2794 = vmatprep.subr.mxu0 0.0
        %2795 = vmatpush1.msra.mxu0 0.0
        %2796 = vmatprep.subr.mxu0 0.0
        %2797 = vmatpush1.msra.mxu0 0.0
        %2798 = vmatprep.subr.mxu0 0.0
        %2799 = vmatpush1.msra.mxu0 0.0
        %2800 = vmatprep.subr.mxu0 0.0
        %2801 = vmatpush1.msra.mxu0 0.0
        %2802 = vmatprep.subr.mxu0 0.0
        %2803 = vmatpush1.msra.mxu0 0.0
        %2804 = vmatprep.subr.mxu0 0.0
        %2805 = vmatpush1.msra.mxu0 0.0
        %2806 = vmatprep.subr.mxu0 0.0
        %2807 = vmatpush1.msra.mxu0 0.0
        %2808 = vmatprep.subr.mxu0 0.0
        %2809 = vmatpush1.msra.mxu0 0.0
        %2810 = vmatprep.subr.mxu0 0.0
        %2811 = vmatpush1.msra.mxu0 0.0
        %2812 = vmatprep.subr.mxu0 0.0
        %2813 = vmatpush1.msra.mxu0 0.0
        %2814 = vmatprep.subr.mxu0 %v2769
        %2815 = vmatpush1.msra.mxu0 %v2768
        %2816 = vmatprep.subr.mxu0 0.0
        %2817 = vmatpush2.msra.mxu0 0.0
        %2818 = vmatprep.subr.mxu0 0.0
        %2819 = vmatpush2.msra.mxu0 0.0
        %2820 = vmatprep.subr.mxu0 0.0
        %2821 = vmatpush2.msra.mxu0 0.0
        %2822 = vmatprep.subr.mxu0 0.0
        %2823 = vmatpush2.msra.mxu0 0.0
        %2824 = vmatprep.subr.mxu0 0.0
        %2825 = vmatpush2.msra.mxu0 0.0
        %2826 = vmatprep.subr.mxu0 0.0
        %2827 = vmatpush2.msra.mxu0 0.0
        %2828 = vmatprep.subr.mxu0 0.0
        %2829 = vmatpush2.msra.mxu0 0.0
        %2830 = vmatprep.subr.mxu0 0.0
        %2831 = vmatpush2.msra.mxu0 0.0
        %2832 = vmatprep.subr.mxu0 0.0
        %2833 = vmatpush2.msra.mxu0 0.0
        %2834 = vmatprep.subr.mxu0 0.0
        %2835 = vmatpush2.msra.mxu0 0.0
        %2836 = vmatprep.subr.mxu0 0.0
        %2837 = vmatpush2.msra.mxu0 0.0
        %2838 = vmatprep.subr.mxu0 0.0
        %2839 = vmatpush2.msra.mxu0 0.0
        %2840 = vmatprep.subr.mxu0 0.0
        %2841 = vmatpush2.msra.mxu0 0.0
        %2842 = vmatprep.subr.mxu0 0.0
        %2843 = vmatpush2.msra.mxu0 0.0
        %2844 = vmatprep.subr.mxu0 0.0
        %2845 = vmatpush2.msra.mxu0 0.0
        %2846 = vmatprep.subr.mxu0 0.0
        %2847 = vmatpush2.msra.mxu0 0.0
        %2848 = vmatprep.mubr.f32.mxu0 0.0
        %2849 = vmatmul.mubr.f32.gmra.mxu0 %v2782
        %v2850 = vpop.f32.mrf.mxu0
        %v2851 = vadd.f32 %v2779, %v2850
        %v2852 = vpop.f32.mrf.mxu0
        %v2853 = vadd.f32 %v2779, %v2852
        %2854 = vdwg.mxu0
        %2855 = vmatprep.subr.mxu0 0.0
        %2856 = vmatpush1.msra.mxu0 0.0
        %2857 = vmatprep.subr.mxu0 0.0
        %2858 = vmatpush1.msra.mxu0 0.0
        %2859 = vmatprep.subr.mxu0 0.0
        %2860 = vmatpush1.msra.mxu0 0.0
        %2861 = vmatprep.subr.mxu0 0.0
        %2862 = vmatpush1.msra.mxu0 0.0
        %2863 = vmatprep.subr.mxu0 0.0
        %2864 = vmatpush1.msra.mxu0 0.0
        %2865 = vmatprep.subr.mxu0 0.0
        %2866 = vmatpush1.msra.mxu0 0.0
        %2867 = vmatprep.subr.mxu0 0.0
        %2868 = vmatpush1.msra.mxu0 0.0
        %2869 = vmatprep.subr.mxu0 0.0
        %2870 = vmatpush1.msra.mxu0 0.0
        %2871 = vmatprep.subr.mxu0 0.0
        %2872 = vmatpush1.msra.mxu0 0.0
        %2873 = vmatprep.subr.mxu0 0.0
        %2874 = vmatpush1.msra.mxu0 0.0
        %2875 = vmatprep.subr.mxu0 0.0
        %2876 = vmatpush1.msra.mxu0 0.0
        %2877 = vmatprep.subr.mxu0 0.0
        %2878 = vmatpush1.msra.mxu0 0.0
        %2879 = vmatprep.subr.mxu0 0.0
        %2880 = vmatpush1.msra.mxu0 0.0
        %2881 = vmatprep.subr.mxu0 0.0
        %2882 = vmatpush1.msra.mxu0 0.0
        %2883 = vmatprep.subr.mxu0 0.0
        %2884 = vmatpush1.msra.mxu0 0.0
        %2885 = vmatprep.subr.mxu0 %v2771
        %2886 = vmatpush1.msra.mxu0 %v2770
        %2887 = vmatprep.subr.mxu0 0.0
        %2888 = vmatpush2.msra.mxu0 0.0
        %2889 = vmatprep.subr.mxu0 0.0
        %2890 = vmatpush2.msra.mxu0 0.0
        %2891 = vmatprep.subr.mxu0 0.0
        %2892 = vmatpush2.msra.mxu0 0.0
        %2893 = vmatprep.subr.mxu0 0.0
        %2894 = vmatpush2.msra.mxu0 0.0
        %2895 = vmatprep.subr.mxu0 0.0
        %2896 = vmatpush2.msra.mxu0 0.0
        %2897 = vmatprep.subr.mxu0 0.0
        %2898 = vmatpush2.msra.mxu0 0.0
        %2899 = vmatprep.subr.mxu0 0.0
        %2900 = vmatpush2.msra.mxu0 0.0
        %2901 = vmatprep.subr.mxu0 0.0
        %2902 = vmatpush2.msra.mxu0 0.0
        %2903 = vmatprep.subr.mxu0 0.0
        %2904 = vmatpush2.msra.mxu0 0.0
        %2905 = vmatprep.subr.mxu0 0.0
        %2906 = vmatpush2.msra.mxu0 0.0
        %2907 = vmatprep.subr.mxu0 0.0
        %2908 = vmatpush2.msra.mxu0 0.0
        %2909 = vmatprep.subr.mxu0 0.0
        %2910 = vmatpush2.msra.mxu0 0.0
        %2911 = vmatprep.subr.mxu0 0.0
        %2912 = vmatpush2.msra.mxu0 0.0
        %2913 = vmatprep.subr.mxu0 0.0
        %2914 = vmatpush2.msra.mxu0 0.0
        %2915 = vmatprep.subr.mxu0 0.0
        %2916 = vmatpush2.msra.mxu0 0.0
        %2917 = vmatprep.subr.mxu0 0.0
        %2918 = vmatpush2.msra.mxu0 0.0
        %2919 = vmatprep.mubr.f32.mxu0 0.0
        %2920 = vmatmul.mubr.f32.gmra.mxu0 %v2782
        %v2921 = vpop.f32.mrf.mxu0
        %v2922 = vadd.f32 %v2779, %v2921
        %v2923 = vpop.f32.mrf.mxu0
        %v2924 = vadd.f32 %v2779, %v2923
        %2925 = vdwg.mxu0
        %2926 = vset.pattern.permute.xlu0 54
        %2927 = vperm.xlu0 %2926, %v555
        %v2928 = vpop.permute.xlu0 %2927
        %v2930 = vmul.f32 %v1494, %v2928
        %v2931 = vmul.f32 %v1495, %v2928
        %v2932 = vmul.f32 %v1496, %v2928
        %v2933 = vmul.f32 %v1497, %v2928
        %v2934 = vadd.f32 %v2930, 0.0
        %v2935 = vadd.f32 %v2931, 0.0
        %v2936 = vadd.f32 %v2932, 0.0
        %v2937 = vadd.f32 %v2933, 0.0
        %2938 = vset.pattern.permute.xlu0 55
        %2939 = vperm.xlu0 %2938, %v555
        %v2940 = vpop.permute.xlu0 %2939
        %v2942 = vmul.f32 %v1522, %v2940
        %v2943 = vmul.f32 %v1523, %v2940
        %v2944 = vmul.f32 %v1524, %v2940
        %v2945 = vmul.f32 %v1525, %v2940
        %v2946 = vadd.f32 %v2934, %v2942
        %v2947 = vadd.f32 %v2935, %v2943
        %v2948 = vadd.f32 %v2936, %v2944
        %v2949 = vadd.f32 %v2937, %v2945
        %2950 = vset.pattern.permute.xlu0 56
        %2951 = vperm.xlu0 %2950, %v555
        %v2952 = vpop.permute.xlu0 %2951
        %v2954 = vmul.f32 %v1550, %v2952
        %v2955 = vmul.f32 %v1551, %v2952
        %v2956 = vmul.f32 %v1552, %v2952
        %v2957 = vmul.f32 %v1553, %v2952
        %v2958 = vadd.f32 %v2946, %v2954
        %v2959 = vadd.f32 %v2947, %v2955
        %v2960 = vadd.f32 %v2948, %v2956
        %v2961 = vadd.f32 %v2949, %v2957
        %2962 = vset.pattern.permute.xlu0 57
        %2963 = vperm.xlu0 %2962, %v555
        %v2964 = vpop.permute.xlu0 %2963
        %v2966 = vmul.f32 %v1578, %v2964
        %v2967 = vmul.f32 %v1579, %v2964
        %v2968 = vmul.f32 %v1580, %v2964
        %v2969 = vmul.f32 %v1581, %v2964
        %v2970 = vadd.f32 %v2958, %v2966
        %v2971 = vadd.f32 %v2959, %v2967
        %v2972 = vadd.f32 %v2960, %v2968
        %v2973 = vadd.f32 %v2961, %v2969
        %2974 = vset.pattern.permute.xlu0 58
        %2975 = vperm.xlu0 %2974, %v555
        %v2976 = vpop.permute.xlu0 %2975
        %v2978 = vmul.f32 %v1478, %v2976
        %v2979 = vmul.f32 %v1479, %v2976
        %v2980 = vmul.f32 %v1480, %v2976
        %v2981 = vmul.f32 %v1481, %v2976
        %v2982 = vadd.f32 %v2970, %v2978
        %v2983 = vadd.f32 %v2971, %v2979
        %v2984 = vadd.f32 %v2972, %v2980
        %v2985 = vadd.f32 %v2973, %v2981
        %2986 = vset.pattern.permute.xlu0 59
        %2987 = vperm.xlu0 %2986, %v555
        %v2988 = vpop.permute.xlu0 %2987
        %v2990 = vmul.f32 %v1618, %v2988
        %v2991 = vmul.f32 %v1619, %v2988
        %v2992 = vmul.f32 %v1620, %v2988
        %v2993 = vmul.f32 %v1621, %v2988
        %v2994 = vadd.f32 %v2982, %v2990
        %v2995 = vadd.f32 %v2983, %v2991
        %v2996 = vadd.f32 %v2984, %v2992
        %v2997 = vadd.f32 %v2985, %v2993
        %2998 = vset.pattern.permute.xlu0 60
        %2999 = vperm.xlu0 %2998, %v555
        %v3000 = vpop.permute.xlu0 %2999
        %v3002 = vmul.f32 %v1646, %v3000
        %v3003 = vmul.f32 %v1647, %v3000
        %v3004 = vmul.f32 %v1648, %v3000
        %v3005 = vmul.f32 %v1649, %v3000
        %v3006 = vadd.f32 %v2994, %v3002
        %v3007 = vadd.f32 %v2995, %v3003
        %v3008 = vadd.f32 %v2996, %v3004
        %v3009 = vadd.f32 %v2997, %v3005
        %3010 = vset.pattern.permute.xlu0 61
        %3011 = vperm.xlu0 %3010, %v555
        %v3012 = vpop.permute.xlu0 %3011
        %v3014 = vmul.f32 %v1674, %v3012
        %v3015 = vmul.f32 %v1675, %v3012
        %v3016 = vmul.f32 %v1676, %v3012
        %v3017 = vmul.f32 %v1677, %v3012
        %v3018 = vadd.f32 %v3006, %v3014
        %v3019 = vadd.f32 %v3007, %v3015
        %v3020 = vadd.f32 %v3008, %v3016
        %v3021 = vadd.f32 %v3009, %v3017
        %3022 = vset.pattern.permute.xlu0 62
        %3023 = vperm.xlu0 %3022, %v555
        %v3024 = vpop.permute.xlu0 %3023
        %v3026 = vmul.f32 %v1702, %v3024
        %v3027 = vmul.f32 %v1703, %v3024
        %v3028 = vmul.f32 %v1704, %v3024
        %v3029 = vmul.f32 %v1705, %v3024
        %v3030 = vadd.f32 %v3018, %v3026
        %v3031 = vadd.f32 %v3019, %v3027
        %v3032 = vadd.f32 %v3020, %v3028
        %v3033 = vadd.f32 %v3021, %v3029
        %s3034 = scalar_lea.vmem %s5, 48
        %v3035 = vld [vmem:[%s3034] sm:$0xff]
        %s3036 = scalar_lea.vmem %s6, 48
        %v3037 = vld [vmem:[%s3036] sm:$0xff]
        %3039 = vset.pattern.permute.xlu0 0
        %3040 = vperm.xlu0 %3039, %v3037
        %v3041 = vpop.permute.xlu0 %3040
        %v3044 = vsel %vm938, %v3035, 0
        %3046 = vmatprep.subr.mxu0 0.0
        %3047 = vmatpush1.msra.mxu0 0.0
        %3048 = vmatprep.subr.mxu0 0.0
        %3049 = vmatpush1.msra.mxu0 0.0
        %3050 = vmatprep.subr.mxu0 0.0
        %3051 = vmatpush1.msra.mxu0 0.0
        %3052 = vmatprep.subr.mxu0 0.0
        %3053 = vmatpush1.msra.mxu0 0.0
        %3054 = vmatprep.subr.mxu0 0.0
        %3055 = vmatpush1.msra.mxu0 0.0
        %3056 = vmatprep.subr.mxu0 0.0
        %3057 = vmatpush1.msra.mxu0 0.0
        %3058 = vmatprep.subr.mxu0 0.0
        %3059 = vmatpush1.msra.mxu0 0.0
        %3060 = vmatprep.subr.mxu0 0.0
        %3061 = vmatpush1.msra.mxu0 0.0
        %3062 = vmatprep.subr.mxu0 0.0
        %3063 = vmatpush1.msra.mxu0 0.0
        %3064 = vmatprep.subr.mxu0 0.0
        %3065 = vmatpush1.msra.mxu0 0.0
        %3066 = vmatprep.subr.mxu0 0.0
        %3067 = vmatpush1.msra.mxu0 0.0
        %3068 = vmatprep.subr.mxu0 0.0
        %3069 = vmatpush1.msra.mxu0 0.0
        %3070 = vmatprep.subr.mxu0 0.0
        %3071 = vmatpush1.msra.mxu0 0.0
        %3072 = vmatprep.subr.mxu0 0.0
        %3073 = vmatpush1.msra.mxu0 0.0
        %3074 = vmatprep.subr.mxu0 0.0
        %3075 = vmatpush1.msra.mxu0 0.0
        %3076 = vmatprep.subr.mxu0 %v3031
        %3077 = vmatpush1.msra.mxu0 %v3030
        %3078 = vmatprep.subr.mxu0 0.0
        %3079 = vmatpush2.msra.mxu0 0.0
        %3080 = vmatprep.subr.mxu0 0.0
        %3081 = vmatpush2.msra.mxu0 0.0
        %3082 = vmatprep.subr.mxu0 0.0
        %3083 = vmatpush2.msra.mxu0 0.0
        %3084 = vmatprep.subr.mxu0 0.0
        %3085 = vmatpush2.msra.mxu0 0.0
        %3086 = vmatprep.subr.mxu0 0.0
        %3087 = vmatpush2.msra.mxu0 0.0
        %3088 = vmatprep.subr.mxu0 0.0
        %3089 = vmatpush2.msra.mxu0 0.0
        %3090 = vmatprep.subr.mxu0 0.0
        %3091 = vmatpush2.msra.mxu0 0.0
        %3092 = vmatprep.subr.mxu0 0.0
        %3093 = vmatpush2.msra.mxu0 0.0
        %3094 = vmatprep.subr.mxu0 0.0
        %3095 = vmatpush2.msra.mxu0 0.0
        %3096 = vmatprep.subr.mxu0 0.0
        %3097 = vmatpush2.msra.mxu0 0.0
        %3098 = vmatprep.subr.mxu0 0.0
        %3099 = vmatpush2.msra.mxu0 0.0
        %3100 = vmatprep.subr.mxu0 0.0
        %3101 = vmatpush2.msra.mxu0 0.0
        %3102 = vmatprep.subr.mxu0 0.0
        %3103 = vmatpush2.msra.mxu0 0.0
        %3104 = vmatprep.subr.mxu0 0.0
        %3105 = vmatpush2.msra.mxu0 0.0
        %3106 = vmatprep.subr.mxu0 0.0
        %3107 = vmatpush2.msra.mxu0 0.0
        %3108 = vmatprep.subr.mxu0 0.0
        %3109 = vmatpush2.msra.mxu0 0.0
        %3110 = vmatprep.mubr.f32.mxu0 0.0
        %3111 = vmatmul.mubr.f32.gmra.mxu0 %v3044
        %v3112 = vpop.f32.mrf.mxu0
        %v3113 = vadd.f32 %v3041, %v3112
        %v3114 = vpop.f32.mrf.mxu0
        %v3115 = vadd.f32 %v3041, %v3114
        %3116 = vdwg.mxu0
        %3117 = vmatprep.subr.mxu0 0.0
        %3118 = vmatpush1.msra.mxu0 0.0
        %3119 = vmatprep.subr.mxu0 0.0
        %3120 = vmatpush1.msra.mxu0 0.0
        %3121 = vmatprep.subr.mxu0 0.0
        %3122 = vmatpush1.msra.mxu0 0.0
        %3123 = vmatprep.subr.mxu0 0.0
        %3124 = vmatpush1.msra.mxu0 0.0
        %3125 = vmatprep.subr.mxu0 0.0
        %3126 = vmatpush1.msra.mxu0 0.0
        %3127 = vmatprep.subr.mxu0 0.0
        %3128 = vmatpush1.msra.mxu0 0.0
        %3129 = vmatprep.subr.mxu0 0.0
        %3130 = vmatpush1.msra.mxu0 0.0
        %3131 = vmatprep.subr.mxu0 0.0
        %3132 = vmatpush1.msra.mxu0 0.0
        %3133 = vmatprep.subr.mxu0 0.0
        %3134 = vmatpush1.msra.mxu0 0.0
        %3135 = vmatprep.subr.mxu0 0.0
        %3136 = vmatpush1.msra.mxu0 0.0
        %3137 = vmatprep.subr.mxu0 0.0
        %3138 = vmatpush1.msra.mxu0 0.0
        %3139 = vmatprep.subr.mxu0 0.0
        %3140 = vmatpush1.msra.mxu0 0.0
        %3141 = vmatprep.subr.mxu0 0.0
        %3142 = vmatpush1.msra.mxu0 0.0
        %3143 = vmatprep.subr.mxu0 0.0
        %3144 = vmatpush1.msra.mxu0 0.0
        %3145 = vmatprep.subr.mxu0 0.0
        %3146 = vmatpush1.msra.mxu0 0.0
        %3147 = vmatprep.subr.mxu0 %v3033
        %3148 = vmatpush1.msra.mxu0 %v3032
        %3149 = vmatprep.subr.mxu0 0.0
        %3150 = vmatpush2.msra.mxu0 0.0
        %3151 = vmatprep.subr.mxu0 0.0
        %3152 = vmatpush2.msra.mxu0 0.0
        %3153 = vmatprep.subr.mxu0 0.0
        %3154 = vmatpush2.msra.mxu0 0.0
        %3155 = vmatprep.subr.mxu0 0.0
        %3156 = vmatpush2.msra.mxu0 0.0
        %3157 = vmatprep.subr.mxu0 0.0
        %3158 = vmatpush2.msra.mxu0 0.0
        %3159 = vmatprep.subr.mxu0 0.0
        %3160 = vmatpush2.msra.mxu0 0.0
        %3161 = vmatprep.subr.mxu0 0.0
        %3162 = vmatpush2.msra.mxu0 0.0
        %3163 = vmatprep.subr.mxu0 0.0
        %3164 = vmatpush2.msra.mxu0 0.0
        %3165 = vmatprep.subr.mxu0 0.0
        %3166 = vmatpush2.msra.mxu0 0.0
        %3167 = vmatprep.subr.mxu0 0.0
        %3168 = vmatpush2.msra.mxu0 0.0
        %3169 = vmatprep.subr.mxu0 0.0
        %3170 = vmatpush2.msra.mxu0 0.0
        %3171 = vmatprep.subr.mxu0 0.0
        %3172 = vmatpush2.msra.mxu0 0.0
        %3173 = vmatprep.subr.mxu0 0.0
        %3174 = vmatpush2.msra.mxu0 0.0
        %3175 = vmatprep.subr.mxu0 0.0
        %3176 = vmatpush2.msra.mxu0 0.0
        %3177 = vmatprep.subr.mxu0 0.0
        %3178 = vmatpush2.msra.mxu0 0.0
        %3179 = vmatprep.subr.mxu0 0.0
        %3180 = vmatpush2.msra.mxu0 0.0
        %3181 = vmatprep.mubr.f32.mxu0 0.0
        %3182 = vmatmul.mubr.f32.gmra.mxu0 %v3044
        %v3183 = vpop.f32.mrf.mxu0
        %v3184 = vadd.f32 %v3041, %v3183
        %v3185 = vpop.f32.mrf.mxu0
        %v3186 = vadd.f32 %v3041, %v3185
        %3187 = vdwg.mxu0
        %v3188 = vmax.f32 %v3113, 0.0
        %v3189 = vmax.f32 %v3115, 0.0
        %v3190 = vmax.f32 %v3184, 0.0
        %v3191 = vmax.f32 %v3186, 0.0
        %3192 = vrot.lane.b32.xlu0 %v3188, 17
        %v3193 = vpop.permute.xlu0 %3192
        %3194 = vrot.lane.b32.xlu0 %v3189, 17
        %v3195 = vpop.permute.xlu0 %3194
        %3196 = vrot.lane.b32.xlu0 %v3190, 17
        %v3197 = vpop.permute.xlu0 %3196
        %3198 = vrot.lane.b32.xlu0 %v3191, 17
        %v3199 = vpop.permute.xlu0 %3198
        %v3200 = vsel %vm525, %v3197, %v3199
        %v3201 = vsel %vm525, %v3195, %v3197
        %v3202 = vsel %vm525, %v3193, %v3195
        %v3203 = vsel %vm525, %v3199, %v3193
        %v3204 = vsel %vm547, %v3203, 0.0
        %v3205 = vsel %vm548, %v3202, 0.0
        %v3206 = vsel %vm549, %v3201, 0.0
        %v3207 = vsel %vm550, %v3200, 0.0
        %3208 = vset.pattern.permute.xlu0 63
        %3209 = vperm.xlu0 %3208, %v555
        %v3210 = vpop.permute.xlu0 %3209
        %v3212 = vmul.f32 %v3204, %v3210
        %v3213 = vmul.f32 %v3205, %v3210
        %v3214 = vmul.f32 %v3206, %v3210
        %v3215 = vmul.f32 %v3207, %v3210
        %v3216 = vadd.f32 %v3212, 0.0
        %v3217 = vadd.f32 %v3213, 0.0
        %v3218 = vadd.f32 %v3214, 0.0
        %v3219 = vadd.f32 %v3215, 0.0
        %3220 = vrot.lane.b32.xlu0 %v3188, 16
        %v3221 = vpop.permute.xlu0 %3220
        %3222 = vrot.lane.b32.xlu0 %v3189, 16
        %v3223 = vpop.permute.xlu0 %3222
        %3224 = vrot.lane.b32.xlu0 %v3190, 16
        %v3225 = vpop.permute.xlu0 %3224
        %3226 = vrot.lane.b32.xlu0 %v3191, 16
        %v3227 = vpop.permute.xlu0 %3226
        %v3228 = vsel %vm577, %v3225, %v3227
        %v3229 = vsel %vm577, %v3223, %v3225
        %v3230 = vsel %vm577, %v3221, %v3223
        %v3231 = vsel %vm577, %v3227, %v3221
        %v3232 = vsel %vm599, %v3231, 0.0
        %v3233 = vsel %vm600, %v3230, 0.0
        %v3234 = vsel %vm601, %v3229, 0.0
        %v3235 = vsel %vm602, %v3228, 0.0
        %3236 = vset.pattern.permute.xlu0 64
        %3237 = vperm.xlu0 %3236, %v555
        %v3238 = vpop.permute.xlu0 %3237
        %v3240 = vmul.f32 %v3232, %v3238
        %v3241 = vmul.f32 %v3233, %v3238
        %v3242 = vmul.f32 %v3234, %v3238
        %v3243 = vmul.f32 %v3235, %v3238
        %v3244 = vadd.f32 %v3216, %v3240
        %v3245 = vadd.f32 %v3217, %v3241
        %v3246 = vadd.f32 %v3218, %v3242
        %v3247 = vadd.f32 %v3219, %v3243
        %3248 = vrot.lane.b32.xlu0 %v3188, 15
        %v3249 = vpop.permute.xlu0 %3248
        %3250 = vrot.lane.b32.xlu0 %v3189, 15
        %v3251 = vpop.permute.xlu0 %3250
        %3252 = vrot.lane.b32.xlu0 %v3190, 15
        %v3253 = vpop.permute.xlu0 %3252
        %3254 = vrot.lane.b32.xlu0 %v3191, 15
        %v3255 = vpop.permute.xlu0 %3254
        %v3256 = vsel %vm627, %v3253, %v3255
        %v3257 = vsel %vm627, %v3251, %v3253
        %v3258 = vsel %vm627, %v3249, %v3251
        %v3259 = vsel %vm627, %v3255, %v3249
        %v3260 = vsel %vm649, %v3259, 0.0
        %v3261 = vsel %vm650, %v3258, 0.0
        %v3262 = vsel %vm651, %v3257, 0.0
        %v3263 = vsel %vm652, %v3256, 0.0
        %3264 = vset.pattern.permute.xlu0 65
        %3265 = vperm.xlu0 %3264, %v555
        %v3266 = vpop.permute.xlu0 %3265
        %v3268 = vmul.f32 %v3260, %v3266
        %v3269 = vmul.f32 %v3261, %v3266
        %v3270 = vmul.f32 %v3262, %v3266
        %v3271 = vmul.f32 %v3263, %v3266
        %v3272 = vadd.f32 %v3244, %v3268
        %v3273 = vadd.f32 %v3245, %v3269
        %v3274 = vadd.f32 %v3246, %v3270
        %v3275 = vadd.f32 %v3247, %v3271
        %3276 = vrot.lane.b32.xlu0 %v3188, 1
        %v3277 = vpop.permute.xlu0 %3276
        %3278 = vrot.lane.b32.xlu0 %v3189, 1
        %v3279 = vpop.permute.xlu0 %3278
        %3280 = vrot.lane.b32.xlu0 %v3190, 1
        %v3281 = vpop.permute.xlu0 %3280
        %3282 = vrot.lane.b32.xlu0 %v3191, 1
        %v3283 = vpop.permute.xlu0 %3282
        %v3284 = vsel %vm677, %v3281, %v3283
        %v3285 = vsel %vm677, %v3279, %v3281
        %v3286 = vsel %vm677, %v3277, %v3279
        %v3287 = vsel %vm677, %v3283, %v3277
        %v3288 = vsel %vm699, %v3287, 0.0
        %v3289 = vsel %vm700, %v3286, 0.0
        %v3290 = vsel %vm701, %v3285, 0.0
        %v3291 = vsel %vm702, %v3284, 0.0
        %3292 = vset.pattern.permute.xlu0 66
        %3293 = vperm.xlu0 %3292, %v555
        %v3294 = vpop.permute.xlu0 %3293
        %v3296 = vmul.f32 %v3288, %v3294
        %v3297 = vmul.f32 %v3289, %v3294
        %v3298 = vmul.f32 %v3290, %v3294
        %v3299 = vmul.f32 %v3291, %v3294
        %v3300 = vadd.f32 %v3272, %v3296
        %v3301 = vadd.f32 %v3273, %v3297
        %v3302 = vadd.f32 %v3274, %v3298
        %v3303 = vadd.f32 %v3275, %v3299
        %3304 = vset.pattern.permute.xlu0 67
        %3305 = vperm.xlu0 %3304, %v555
        %v3306 = vpop.permute.xlu0 %3305
        %v3308 = vmul.f32 %v3188, %v3306
        %v3309 = vmul.f32 %v3189, %v3306
        %v3310 = vmul.f32 %v3190, %v3306
        %v3311 = vmul.f32 %v3191, %v3306
        %v3312 = vadd.f32 %v3300, %v3308
        %v3313 = vadd.f32 %v3301, %v3309
        %v3314 = vadd.f32 %v3302, %v3310
        %v3315 = vadd.f32 %v3303, %v3311
        %3316 = vrot.lane.b32.xlu0 %v3188, 127
        %v3317 = vpop.permute.xlu0 %3316
        %3318 = vrot.lane.b32.xlu0 %v3189, 127
        %v3319 = vpop.permute.xlu0 %3318
        %3320 = vrot.lane.b32.xlu0 %v3190, 127
        %v3321 = vpop.permute.xlu0 %3320
        %3322 = vrot.lane.b32.xlu0 %v3191, 127
        %v3323 = vpop.permute.xlu0 %3322
        %v3324 = vsel %vm739, %v3321, %v3323
        %v3325 = vsel %vm739, %v3319, %v3321
        %v3326 = vsel %vm739, %v3317, %v3319
        %v3327 = vsel %vm739, %v3323, %v3317
        %v3328 = vsel %vm761, %v3326, 0.0
        %v3329 = vsel %vm762, %v3325, 0.0
        %v3330 = vsel %vm763, %v3324, 0.0
        %v3331 = vsel %vm764, %v3327, 0.0
        %3332 = vset.pattern.permute.xlu0 68
        %3333 = vperm.xlu0 %3332, %v555
        %v3334 = vpop.permute.xlu0 %3333
        %v3336 = vmul.f32 %v3328, %v3334
        %v3337 = vmul.f32 %v3329, %v3334
        %v3338 = vmul.f32 %v3330, %v3334
        %v3339 = vmul.f32 %v3331, %v3334
        %v3340 = vadd.f32 %v3312, %v3336
        %v3341 = vadd.f32 %v3313, %v3337
        %v3342 = vadd.f32 %v3314, %v3338
        %v3343 = vadd.f32 %v3315, %v3339
        %3344 = vrot.lane.b32.xlu0 %v3188, 113
        %v3345 = vpop.permute.xlu0 %3344
        %3346 = vrot.lane.b32.xlu0 %v3189, 113
        %v3347 = vpop.permute.xlu0 %3346
        %3348 = vrot.lane.b32.xlu0 %v3190, 113
        %v3349 = vpop.permute.xlu0 %3348
        %3350 = vrot.lane.b32.xlu0 %v3191, 113
        %v3351 = vpop.permute.xlu0 %3350
        %v3352 = vsel %vm789, %v3349, %v3351
        %v3353 = vsel %vm789, %v3347, %v3349
        %v3354 = vsel %vm789, %v3345, %v3347
        %v3355 = vsel %vm789, %v3351, %v3345
        %v3356 = vsel %vm811, %v3354, 0.0
        %v3357 = vsel %vm812, %v3353, 0.0
        %v3358 = vsel %vm813, %v3352, 0.0
        %v3359 = vsel %vm814, %v3355, 0.0
        %3360 = vset.pattern.permute.xlu0 69
        %3361 = vperm.xlu0 %3360, %v555
        %v3362 = vpop.permute.xlu0 %3361
        %v3364 = vmul.f32 %v3356, %v3362
        %v3365 = vmul.f32 %v3357, %v3362
        %v3366 = vmul.f32 %v3358, %v3362
        %v3367 = vmul.f32 %v3359, %v3362
        %v3368 = vadd.f32 %v3340, %v3364
        %v3369 = vadd.f32 %v3341, %v3365
        %v3370 = vadd.f32 %v3342, %v3366
        %v3371 = vadd.f32 %v3343, %v3367
        %3372 = vrot.lane.b32.xlu0 %v3188, 112
        %v3373 = vpop.permute.xlu0 %3372
        %3374 = vrot.lane.b32.xlu0 %v3189, 112
        %v3375 = vpop.permute.xlu0 %3374
        %3376 = vrot.lane.b32.xlu0 %v3190, 112
        %v3377 = vpop.permute.xlu0 %3376
        %3378 = vrot.lane.b32.xlu0 %v3191, 112
        %v3379 = vpop.permute.xlu0 %3378
        %v3380 = vsel %vm839, %v3377, %v3379
        %v3381 = vsel %vm839, %v3375, %v3377
        %v3382 = vsel %vm839, %v3373, %v3375
        %v3383 = vsel %vm839, %v3379, %v3373
        %v3384 = vsel %vm861, %v3382, 0.0
        %v3385 = vsel %vm862, %v3381, 0.0
        %v3386 = vsel %vm863, %v3380, 0.0
        %v3387 = vsel %vm864, %v3383, 0.0
        %3388 = vset.pattern.permute.xlu0 70
        %3389 = vperm.xlu0 %3388, %v555
        %v3390 = vpop.permute.xlu0 %3389
        %v3392 = vmul.f32 %v3384, %v3390
        %v3393 = vmul.f32 %v3385, %v3390
        %v3394 = vmul.f32 %v3386, %v3390
        %v3395 = vmul.f32 %v3387, %v3390
        %v3396 = vadd.f32 %v3368, %v3392
        %v3397 = vadd.f32 %v3369, %v3393
        %v3398 = vadd.f32 %v3370, %v3394
        %v3399 = vadd.f32 %v3371, %v3395
        %3400 = vrot.lane.b32.xlu0 %v3188, 111
        %v3401 = vpop.permute.xlu0 %3400
        %3402 = vrot.lane.b32.xlu0 %v3189, 111
        %v3403 = vpop.permute.xlu0 %3402
        %3404 = vrot.lane.b32.xlu0 %v3190, 111
        %v3405 = vpop.permute.xlu0 %3404
        %3406 = vrot.lane.b32.xlu0 %v3191, 111
        %v3407 = vpop.permute.xlu0 %3406
        %v3408 = vsel %vm889, %v3405, %v3407
        %v3409 = vsel %vm889, %v3403, %v3405
        %v3410 = vsel %vm889, %v3401, %v3403
        %v3411 = vsel %vm889, %v3407, %v3401
        %v3412 = vsel %vm911, %v3410, 0.0
        %v3413 = vsel %vm912, %v3409, 0.0
        %v3414 = vsel %vm913, %v3408, 0.0
        %v3415 = vsel %vm914, %v3411, 0.0
        %3416 = vset.pattern.permute.xlu0 71
        %3417 = vperm.xlu0 %3416, %v555
        %v3418 = vpop.permute.xlu0 %3417
        %v3420 = vmul.f32 %v3412, %v3418
        %v3421 = vmul.f32 %v3413, %v3418
        %v3422 = vmul.f32 %v3414, %v3418
        %v3423 = vmul.f32 %v3415, %v3418
        %v3424 = vadd.f32 %v3396, %v3420
        %v3425 = vadd.f32 %v3397, %v3421
        %v3426 = vadd.f32 %v3398, %v3422
        %v3427 = vadd.f32 %v3399, %v3423
        %s3428 = scalar_lea.vmem %s5, 56
        %v3429 = vld [vmem:[%s3428] sm:$0xff]
        %s3430 = scalar_lea.vmem %s6, 56
        %v3431 = vld [vmem:[%s3430] sm:$0xff]
        %3433 = vset.pattern.permute.xlu0 0
        %3434 = vperm.xlu0 %3433, %v3431
        %v3435 = vpop.permute.xlu0 %3434
        %v3438 = vsel %vm938, %v3429, 0
        %3440 = vmatprep.subr.mxu0 0.0
        %3441 = vmatpush1.msra.mxu0 0.0
        %3442 = vmatprep.subr.mxu0 0.0
        %3443 = vmatpush1.msra.mxu0 0.0
        %3444 = vmatprep.subr.mxu0 0.0
        %3445 = vmatpush1.msra.mxu0 0.0
        %3446 = vmatprep.subr.mxu0 0.0
        %3447 = vmatpush1.msra.mxu0 0.0
        %3448 = vmatprep.subr.mxu0 0.0
        %3449 = vmatpush1.msra.mxu0 0.0
        %3450 = vmatprep.subr.mxu0 0.0
        %3451 = vmatpush1.msra.mxu0 0.0
        %3452 = vmatprep.subr.mxu0 0.0
        %3453 = vmatpush1.msra.mxu0 0.0
        %3454 = vmatprep.subr.mxu0 0.0
        %3455 = vmatpush1.msra.mxu0 0.0
        %3456 = vmatprep.subr.mxu0 0.0
        %3457 = vmatpush1.msra.mxu0 0.0
        %3458 = vmatprep.subr.mxu0 0.0
        %3459 = vmatpush1.msra.mxu0 0.0
        %3460 = vmatprep.subr.mxu0 0.0
        %3461 = vmatpush1.msra.mxu0 0.0
        %3462 = vmatprep.subr.mxu0 0.0
        %3463 = vmatpush1.msra.mxu0 0.0
        %3464 = vmatprep.subr.mxu0 0.0
        %3465 = vmatpush1.msra.mxu0 0.0
        %3466 = vmatprep.subr.mxu0 0.0
        %3467 = vmatpush1.msra.mxu0 0.0
        %3468 = vmatprep.subr.mxu0 0.0
        %3469 = vmatpush1.msra.mxu0 0.0
        %3470 = vmatprep.subr.mxu0 %v3425
        %3471 = vmatpush1.msra.mxu0 %v3424
        %3472 = vmatprep.subr.mxu0 0.0
        %3473 = vmatpush2.msra.mxu0 0.0
        %3474 = vmatprep.subr.mxu0 0.0
        %3475 = vmatpush2.msra.mxu0 0.0
        %3476 = vmatprep.subr.mxu0 0.0
        %3477 = vmatpush2.msra.mxu0 0.0
        %3478 = vmatprep.subr.mxu0 0.0
        %3479 = vmatpush2.msra.mxu0 0.0
        %3480 = vmatprep.subr.mxu0 0.0
        %3481 = vmatpush2.msra.mxu0 0.0
        %3482 = vmatprep.subr.mxu0 0.0
        %3483 = vmatpush2.msra.mxu0 0.0
        %3484 = vmatprep.subr.mxu0 0.0
        %3485 = vmatpush2.msra.mxu0 0.0
        %3486 = vmatprep.subr.mxu0 0.0
        %3487 = vmatpush2.msra.mxu0 0.0
        %3488 = vmatprep.subr.mxu0 0.0
        %3489 = vmatpush2.msra.mxu0 0.0
        %3490 = vmatprep.subr.mxu0 0.0
        %3491 = vmatpush2.msra.mxu0 0.0
        %3492 = vmatprep.subr.mxu0 0.0
        %3493 = vmatpush2.msra.mxu0 0.0
        %3494 = vmatprep.subr.mxu0 0.0
        %3495 = vmatpush2.msra.mxu0 0.0
        %3496 = vmatprep.subr.mxu0 0.0
        %3497 = vmatpush2.msra.mxu0 0.0
        %3498 = vmatprep.subr.mxu0 0.0
        %3499 = vmatpush2.msra.mxu0 0.0
        %3500 = vmatprep.subr.mxu0 0.0
        %3501 = vmatpush2.msra.mxu0 0.0
        %3502 = vmatprep.subr.mxu0 0.0
        %3503 = vmatpush2.msra.mxu0 0.0
        %3504 = vmatprep.mubr.f32.mxu0 0.0
        %3505 = vmatmul.mubr.f32.gmra.mxu0 %v3438
        %v3506 = vpop.f32.mrf.mxu0
        %v3507 = vadd.f32 %v3435, %v3506
        %v3508 = vpop.f32.mrf.mxu0
        %v3509 = vadd.f32 %v3435, %v3508
        %3510 = vdwg.mxu0
        %3511 = vmatprep.subr.mxu0 0.0
        %3512 = vmatpush1.msra.mxu0 0.0
        %3513 = vmatprep.subr.mxu0 0.0
        %3514 = vmatpush1.msra.mxu0 0.0
        %3515 = vmatprep.subr.mxu0 0.0
        %3516 = vmatpush1.msra.mxu0 0.0
        %3517 = vmatprep.subr.mxu0 0.0
        %3518 = vmatpush1.msra.mxu0 0.0
        %3519 = vmatprep.subr.mxu0 0.0
        %3520 = vmatpush1.msra.mxu0 0.0
        %3521 = vmatprep.subr.mxu0 0.0
        %3522 = vmatpush1.msra.mxu0 0.0
        %3523 = vmatprep.subr.mxu0 0.0
        %3524 = vmatpush1.msra.mxu0 0.0
        %3525 = vmatprep.subr.mxu0 0.0
        %3526 = vmatpush1.msra.mxu0 0.0
        %3527 = vmatprep.subr.mxu0 0.0
        %3528 = vmatpush1.msra.mxu0 0.0
        %3529 = vmatprep.subr.mxu0 0.0
        %3530 = vmatpush1.msra.mxu0 0.0
        %3531 = vmatprep.subr.mxu0 0.0
        %3532 = vmatpush1.msra.mxu0 0.0
        %3533 = vmatprep.subr.mxu0 0.0
        %3534 = vmatpush1.msra.mxu0 0.0
        %3535 = vmatprep.subr.mxu0 0.0
        %3536 = vmatpush1.msra.mxu0 0.0
        %3537 = vmatprep.subr.mxu0 0.0
        %3538 = vmatpush1.msra.mxu0 0.0
        %3539 = vmatprep.subr.mxu0 0.0
        %3540 = vmatpush1.msra.mxu0 0.0
        %3541 = vmatprep.subr.mxu0 %v3427
        %3542 = vmatpush1.msra.mxu0 %v3426
        %3543 = vmatprep.subr.mxu0 0.0
        %3544 = vmatpush2.msra.mxu0 0.0
        %3545 = vmatprep.subr.mxu0 0.0
        %3546 = vmatpush2.msra.mxu0 0.0
        %3547 = vmatprep.subr.mxu0 0.0
        %3548 = vmatpush2.msra.mxu0 0.0
        %3549 = vmatprep.subr.mxu0 0.0
        %3550 = vmatpush2.msra.mxu0 0.0
        %3551 = vmatprep.subr.mxu0 0.0
        %3552 = vmatpush2.msra.mxu0 0.0
        %3553 = vmatprep.subr.mxu0 0.0
        %3554 = vmatpush2.msra.mxu0 0.0
        %3555 = vmatprep.subr.mxu0 0.0
        %3556 = vmatpush2.msra.mxu0 0.0
        %3557 = vmatprep.subr.mxu0 0.0
        %3558 = vmatpush2.msra.mxu0 0.0
        %3559 = vmatprep.subr.mxu0 0.0
        %3560 = vmatpush2.msra.mxu0 0.0
        %3561 = vmatprep.subr.mxu0 0.0
        %3562 = vmatpush2.msra.mxu0 0.0
        %3563 = vmatprep.subr.mxu0 0.0
        %3564 = vmatpush2.msra.mxu0 0.0
        %3565 = vmatprep.subr.mxu0 0.0
        %3566 = vmatpush2.msra.mxu0 0.0
        %3567 = vmatprep.subr.mxu0 0.0
        %3568 = vmatpush2.msra.mxu0 0.0
        %3569 = vmatprep.subr.mxu0 0.0
        %3570 = vmatpush2.msra.mxu0 0.0
        %3571 = vmatprep.subr.mxu0 0.0
        %3572 = vmatpush2.msra.mxu0 0.0
        %3573 = vmatprep.subr.mxu0 0.0
        %3574 = vmatpush2.msra.mxu0 0.0
        %3575 = vmatprep.mubr.f32.mxu0 0.0
        %3576 = vmatmul.mubr.f32.gmra.mxu0 %v3438
        %v3577 = vpop.f32.mrf.mxu0
        %v3578 = vadd.f32 %v3435, %v3577
        %v3579 = vpop.f32.mrf.mxu0
        %v3580 = vadd.f32 %v3435, %v3579
        %3581 = vdwg.mxu0
        %v3582 = vadd.f32 %v2851, %v3507
        %v3583 = vadd.f32 %v2853, %v3509
        %v3584 = vadd.f32 %v2922, %v3578
        %v3585 = vadd.f32 %v2924, %v3580
        %3586 = vset.pattern.permute.xlu0 72
        %3587 = vperm.xlu0 %3586, %v555
        %v3588 = vpop.permute.xlu0 %3587
        %v3590 = vmul.f32 %v1494, %v3588
        %v3591 = vmul.f32 %v1495, %v3588
        %v3592 = vmul.f32 %v1496, %v3588
        %v3593 = vmul.f32 %v1497, %v3588
        %v3594 = vadd.f32 %v3590, 0.0
        %v3595 = vadd.f32 %v3591, 0.0
        %v3596 = vadd.f32 %v3592, 0.0
        %v3597 = vadd.f32 %v3593, 0.0
        %3598 = vset.pattern.permute.xlu0 73
        %3599 = vperm.xlu0 %3598, %v555
        %v3600 = vpop.permute.xlu0 %3599
        %v3602 = vmul.f32 %v1522, %v3600
        %v3603 = vmul.f32 %v1523, %v3600
        %v3604 = vmul.f32 %v1524, %v3600
        %v3605 = vmul.f32 %v1525, %v3600
        %v3606 = vadd.f32 %v3594, %v3602
        %v3607 = vadd.f32 %v3595, %v3603
        %v3608 = vadd.f32 %v3596, %v3604
        %v3609 = vadd.f32 %v3597, %v3605
        %3610 = vset.pattern.permute.xlu0 74
        %3611 = vperm.xlu0 %3610, %v555
        %v3612 = vpop.permute.xlu0 %3611
        %v3614 = vmul.f32 %v1550, %v3612
        %v3615 = vmul.f32 %v1551, %v3612
        %v3616 = vmul.f32 %v1552, %v3612
        %v3617 = vmul.f32 %v1553, %v3612
        %v3618 = vadd.f32 %v3606, %v3614
        %v3619 = vadd.f32 %v3607, %v3615
        %v3620 = vadd.f32 %v3608, %v3616
        %v3621 = vadd.f32 %v3609, %v3617
        %3622 = vset.pattern.permute.xlu0 75
        %3623 = vperm.xlu0 %3622, %v555
        %v3624 = vpop.permute.xlu0 %3623
        %v3626 = vmul.f32 %v1578, %v3624
        %v3627 = vmul.f32 %v1579, %v3624
        %v3628 = vmul.f32 %v1580, %v3624
        %v3629 = vmul.f32 %v1581, %v3624
        %v3630 = vadd.f32 %v3618, %v3626
        %v3631 = vadd.f32 %v3619, %v3627
        %v3632 = vadd.f32 %v3620, %v3628
        %v3633 = vadd.f32 %v3621, %v3629
        %3634 = vset.pattern.permute.xlu0 76
        %3635 = vperm.xlu0 %3634, %v555
        %v3636 = vpop.permute.xlu0 %3635
        %v3638 = vmul.f32 %v1478, %v3636
        %v3639 = vmul.f32 %v1479, %v3636
        %v3640 = vmul.f32 %v1480, %v3636
        %v3641 = vmul.f32 %v1481, %v3636
        %v3642 = vadd.f32 %v3630, %v3638
        %v3643 = vadd.f32 %v3631, %v3639
        %v3644 = vadd.f32 %v3632, %v3640
        %v3645 = vadd.f32 %v3633, %v3641
        %3646 = vset.pattern.permute.xlu0 77
        %3647 = vperm.xlu0 %3646, %v555
        %v3648 = vpop.permute.xlu0 %3647
        %v3650 = vmul.f32 %v1618, %v3648
        %v3651 = vmul.f32 %v1619, %v3648
        %v3652 = vmul.f32 %v1620, %v3648
        %v3653 = vmul.f32 %v1621, %v3648
        %v3654 = vadd.f32 %v3642, %v3650
        %v3655 = vadd.f32 %v3643, %v3651
        %v3656 = vadd.f32 %v3644, %v3652
        %v3657 = vadd.f32 %v3645, %v3653
        %3658 = vset.pattern.permute.xlu0 78
        %3659 = vperm.xlu0 %3658, %v555
        %v3660 = vpop.permute.xlu0 %3659
        %v3662 = vmul.f32 %v1646, %v3660
        %v3663 = vmul.f32 %v1647, %v3660
        %v3664 = vmul.f32 %v1648, %v3660
        %v3665 = vmul.f32 %v1649, %v3660
        %v3666 = vadd.f32 %v3654, %v3662
        %v3667 = vadd.f32 %v3655, %v3663
        %v3668 = vadd.f32 %v3656, %v3664
        %v3669 = vadd.f32 %v3657, %v3665
        %3670 = vset.pattern.permute.xlu0 79
        %3671 = vperm.xlu0 %3670, %v555
        %v3672 = vpop.permute.xlu0 %3671
        %v3674 = vmul.f32 %v1674, %v3672
        %v3675 = vmul.f32 %v1675, %v3672
        %v3676 = vmul.f32 %v1676, %v3672
        %v3677 = vmul.f32 %v1677, %v3672
        %v3678 = vadd.f32 %v3666, %v3674
        %v3679 = vadd.f32 %v3667, %v3675
        %v3680 = vadd.f32 %v3668, %v3676
        %v3681 = vadd.f32 %v3669, %v3677
        %3682 = vset.pattern.permute.xlu0 80
        %3683 = vperm.xlu0 %3682, %v555
        %v3684 = vpop.permute.xlu0 %3683
        %v3686 = vmul.f32 %v1702, %v3684
        %v3687 = vmul.f32 %v1703, %v3684
        %v3688 = vmul.f32 %v1704, %v3684
        %v3689 = vmul.f32 %v1705, %v3684
        %v3690 = vadd.f32 %v3678, %v3686
        %v3691 = vadd.f32 %v3679, %v3687
        %v3692 = vadd.f32 %v3680, %v3688
        %v3693 = vadd.f32 %v3681, %v3689
        %s3694 = scalar_lea.vmem %s5, 64
        %v3695 = vld [vmem:[%s3694] sm:$0xff]
        %s3696 = scalar_lea.vmem %s6, 64
        %v3697 = vld [vmem:[%s3696] sm:$0xff]
        %3699 = vset.pattern.permute.xlu0 0
        %3700 = vperm.xlu0 %3699, %v3697
        %v3701 = vpop.permute.xlu0 %3700
        %v3704 = vsel %vm938, %v3695, 0
        %3706 = vmatprep.subr.mxu0 0.0
        %3707 = vmatpush1.msra.mxu0 0.0
        %3708 = vmatprep.subr.mxu0 0.0
        %3709 = vmatpush1.msra.mxu0 0.0
        %3710 = vmatprep.subr.mxu0 0.0
        %3711 = vmatpush1.msra.mxu0 0.0
        %3712 = vmatprep.subr.mxu0 0.0
        %3713 = vmatpush1.msra.mxu0 0.0
        %3714 = vmatprep.subr.mxu0 0.0
        %3715 = vmatpush1.msra.mxu0 0.0
        %3716 = vmatprep.subr.mxu0 0.0
        %3717 = vmatpush1.msra.mxu0 0.0
        %3718 = vmatprep.subr.mxu0 0.0
        %3719 = vmatpush1.msra.mxu0 0.0
        %3720 = vmatprep.subr.mxu0 0.0
        %3721 = vmatpush1.msra.mxu0 0.0
        %3722 = vmatprep.subr.mxu0 0.0
        %3723 = vmatpush1.msra.mxu0 0.0
        %3724 = vmatprep.subr.mxu0 0.0
        %3725 = vmatpush1.msra.mxu0 0.0
        %3726 = vmatprep.subr.mxu0 0.0
        %3727 = vmatpush1.msra.mxu0 0.0
        %3728 = vmatprep.subr.mxu0 0.0
        %3729 = vmatpush1.msra.mxu0 0.0
        %3730 = vmatprep.subr.mxu0 0.0
        %3731 = vmatpush1.msra.mxu0 0.0
        %3732 = vmatprep.subr.mxu0 0.0
        %3733 = vmatpush1.msra.mxu0 0.0
        %3734 = vmatprep.subr.mxu0 0.0
        %3735 = vmatpush1.msra.mxu0 0.0
        %3736 = vmatprep.subr.mxu0 %v3691
        %3737 = vmatpush1.msra.mxu0 %v3690
        %3738 = vmatprep.subr.mxu0 0.0
        %3739 = vmatpush2.msra.mxu0 0.0
        %3740 = vmatprep.subr.mxu0 0.0
        %3741 = vmatpush2.msra.mxu0 0.0
        %3742 = vmatprep.subr.mxu0 0.0
        %3743 = vmatpush2.msra.mxu0 0.0
        %3744 = vmatprep.subr.mxu0 0.0
        %3745 = vmatpush2.msra.mxu0 0.0
        %3746 = vmatprep.subr.mxu0 0.0
        %3747 = vmatpush2.msra.mxu0 0.0
        %3748 = vmatprep.subr.mxu0 0.0
        %3749 = vmatpush2.msra.mxu0 0.0
        %3750 = vmatprep.subr.mxu0 0.0
        %3751 = vmatpush2.msra.mxu0 0.0
        %3752 = vmatprep.subr.mxu0 0.0
        %3753 = vmatpush2.msra.mxu0 0.0
        %3754 = vmatprep.subr.mxu0 0.0
        %3755 = vmatpush2.msra.mxu0 0.0
        %3756 = vmatprep.subr.mxu0 0.0
        %3757 = vmatpush2.msra.mxu0 0.0
        %3758 = vmatprep.subr.mxu0 0.0
        %3759 = vmatpush2.msra.mxu0 0.0
        %3760 = vmatprep.subr.mxu0 0.0
        %3761 = vmatpush2.msra.mxu0 0.0
        %3762 = vmatprep.subr.mxu0 0.0
        %3763 = vmatpush2.msra.mxu0 0.0
        %3764 = vmatprep.subr.mxu0 0.0
        %3765 = vmatpush2.msra.mxu0 0.0
        %3766 = vmatprep.subr.mxu0 0.0
        %3767 = vmatpush2.msra.mxu0 0.0
        %3768 = vmatprep.subr.mxu0 0.0
        %3769 = vmatpush2.msra.mxu0 0.0
        %3770 = vmatprep.mubr.f32.mxu0 0.0
        %3771 = vmatmul.mubr.f32.gmra.mxu0 %v3704
        %v3772 = vpop.f32.mrf.mxu0
        %v3773 = vadd.f32 %v3701, %v3772
        %v3774 = vpop.f32.mrf.mxu0
        %v3775 = vadd.f32 %v3701, %v3774
        %3776 = vdwg.mxu0
        %3777 = vmatprep.subr.mxu0 0.0
        %3778 = vmatpush1.msra.mxu0 0.0
        %3779 = vmatprep.subr.mxu0 0.0
        %3780 = vmatpush1.msra.mxu0 0.0
        %3781 = vmatprep.subr.mxu0 0.0
        %3782 = vmatpush1.msra.mxu0 0.0
        %3783 = vmatprep.subr.mxu0 0.0
        %3784 = vmatpush1.msra.mxu0 0.0
        %3785 = vmatprep.subr.mxu0 0.0
        %3786 = vmatpush1.msra.mxu0 0.0
        %3787 = vmatprep.subr.mxu0 0.0
        %3788 = vmatpush1.msra.mxu0 0.0
        %3789 = vmatprep.subr.mxu0 0.0
        %3790 = vmatpush1.msra.mxu0 0.0
        %3791 = vmatprep.subr.mxu0 0.0
        %3792 = vmatpush1.msra.mxu0 0.0
        %3793 = vmatprep.subr.mxu0 0.0
        %3794 = vmatpush1.msra.mxu0 0.0
        %3795 = vmatprep.subr.mxu0 0.0
        %3796 = vmatpush1.msra.mxu0 0.0
        %3797 = vmatprep.subr.mxu0 0.0
        %3798 = vmatpush1.msra.mxu0 0.0
        %3799 = vmatprep.subr.mxu0 0.0
        %3800 = vmatpush1.msra.mxu0 0.0
        %3801 = vmatprep.subr.mxu0 0.0
        %3802 = vmatpush1.msra.mxu0 0.0
        %3803 = vmatprep.subr.mxu0 0.0
        %3804 = vmatpush1.msra.mxu0 0.0
        %3805 = vmatprep.subr.mxu0 0.0
        %3806 = vmatpush1.msra.mxu0 0.0
        %3807 = vmatprep.subr.mxu0 %v3693
        %3808 = vmatpush1.msra.mxu0 %v3692
        %3809 = vmatprep.subr.mxu0 0.0
        %3810 = vmatpush2.msra.mxu0 0.0
        %3811 = vmatprep.subr.mxu0 0.0
        %3812 = vmatpush2.msra.mxu0 0.0
        %3813 = vmatprep.subr.mxu0 0.0
        %3814 = vmatpush2.msra.mxu0 0.0
        %3815 = vmatprep.subr.mxu0 0.0
        %3816 = vmatpush2.msra.mxu0 0.0
        %3817 = vmatprep.subr.mxu0 0.0
        %3818 = vmatpush2.msra.mxu0 0.0
        %3819 = vmatprep.subr.mxu0 0.0
        %3820 = vmatpush2.msra.mxu0 0.0
        %3821 = vmatprep.subr.mxu0 0.0
        %3822 = vmatpush2.msra.mxu0 0.0
        %3823 = vmatprep.subr.mxu0 0.0
        %3824 = vmatpush2.msra.mxu0 0.0
        %3825 = vmatprep.subr.mxu0 0.0
        %3826 = vmatpush2.msra.mxu0 0.0
        %3827 = vmatprep.subr.mxu0 0.0
        %3828 = vmatpush2.msra.mxu0 0.0
        %3829 = vmatprep.subr.mxu0 0.0
        %3830 = vmatpush2.msra.mxu0 0.0
        %3831 = vmatprep.subr.mxu0 0.0
        %3832 = vmatpush2.msra.mxu0 0.0
        %3833 = vmatprep.subr.mxu0 0.0
        %3834 = vmatpush2.msra.mxu0 0.0
        %3835 = vmatprep.subr.mxu0 0.0
        %3836 = vmatpush2.msra.mxu0 0.0
        %3837 = vmatprep.subr.mxu0 0.0
        %3838 = vmatpush2.msra.mxu0 0.0
        %3839 = vmatprep.subr.mxu0 0.0
        %3840 = vmatpush2.msra.mxu0 0.0
        %3841 = vmatprep.mubr.f32.mxu0 0.0
        %3842 = vmatmul.mubr.f32.gmra.mxu0 %v3704
        %v3843 = vpop.f32.mrf.mxu0
        %v3844 = vadd.f32 %v3701, %v3843
        %v3845 = vpop.f32.mrf.mxu0
        %v3846 = vadd.f32 %v3701, %v3845
        %3847 = vdwg.mxu0
        %v3848 = vmax.f32 %v3773, 0.0
        %v3849 = vmax.f32 %v3775, 0.0
        %v3850 = vmax.f32 %v3844, 0.0
        %v3851 = vmax.f32 %v3846, 0.0
        %3852 = vrot.lane.b32.xlu0 %v3848, 17
        %v3853 = vpop.permute.xlu0 %3852
        %3854 = vrot.lane.b32.xlu0 %v3849, 17
        %v3855 = vpop.permute.xlu0 %3854
        %3856 = vrot.lane.b32.xlu0 %v3850, 17
        %v3857 = vpop.permute.xlu0 %3856
        %3858 = vrot.lane.b32.xlu0 %v3851, 17
        %v3859 = vpop.permute.xlu0 %3858
        %v3860 = vsel %vm525, %v3857, %v3859
        %v3861 = vsel %vm525, %v3855, %v3857
        %v3862 = vsel %vm525, %v3853, %v3855
        %v3863 = vsel %vm525, %v3859, %v3853
        %v3864 = vsel %vm547, %v3863, 0.0
        %v3865 = vsel %vm548, %v3862, 0.0
        %v3866 = vsel %vm549, %v3861, 0.0
        %v3867 = vsel %vm550, %v3860, 0.0
        %3868 = vset.pattern.permute.xlu0 81
        %3869 = vperm.xlu0 %3868, %v555
        %v3870 = vpop.permute.xlu0 %3869
        %v3872 = vmul.f32 %v3864, %v3870
        %v3873 = vmul.f32 %v3865, %v3870
        %v3874 = vmul.f32 %v3866, %v3870
        %v3875 = vmul.f32 %v3867, %v3870
        %v3876 = vadd.f32 %v3872, 0.0
        %v3877 = vadd.f32 %v3873, 0.0
        %v3878 = vadd.f32 %v3874, 0.0
        %v3879 = vadd.f32 %v3875, 0.0
        %3880 = vrot.lane.b32.xlu0 %v3848, 16
        %v3881 = vpop.permute.xlu0 %3880
        %3882 = vrot.lane.b32.xlu0 %v3849, 16
        %v3883 = vpop.permute.xlu0 %3882
        %3884 = vrot.lane.b32.xlu0 %v3850, 16
        %v3885 = vpop.permute.xlu0 %3884
        %3886 = vrot.lane.b32.xlu0 %v3851, 16
        %v3887 = vpop.permute.xlu0 %3886
        %v3888 = vsel %vm577, %v3885, %v3887
        %v3889 = vsel %vm577, %v3883, %v3885
        %v3890 = vsel %vm577, %v3881, %v3883
        %v3891 = vsel %vm577, %v3887, %v3881
        %v3892 = vsel %vm599, %v3891, 0.0
        %v3893 = vsel %vm600, %v3890, 0.0
        %v3894 = vsel %vm601, %v3889, 0.0
        %v3895 = vsel %vm602, %v3888, 0.0
        %3896 = vset.pattern.permute.xlu0 82
        %3897 = vperm.xlu0 %3896, %v555
        %v3898 = vpop.permute.xlu0 %3897
        %v3900 = vmul.f32 %v3892, %v3898
        %v3901 = vmul.f32 %v3893, %v3898
        %v3902 = vmul.f32 %v3894, %v3898
        %v3903 = vmul.f32 %v3895, %v3898
        %v3904 = vadd.f32 %v3876, %v3900
        %v3905 = vadd.f32 %v3877, %v3901
        %v3906 = vadd.f32 %v3878, %v3902
        %v3907 = vadd.f32 %v3879, %v3903
        %3908 = vrot.lane.b32.xlu0 %v3848, 15
        %v3909 = vpop.permute.xlu0 %3908
        %3910 = vrot.lane.b32.xlu0 %v3849, 15
        %v3911 = vpop.permute.xlu0 %3910
        %3912 = vrot.lane.b32.xlu0 %v3850, 15
        %v3913 = vpop.permute.xlu0 %3912
        %3914 = vrot.lane.b32.xlu0 %v3851, 15
        %v3915 = vpop.permute.xlu0 %3914
        %v3916 = vsel %vm627, %v3913, %v3915
        %v3917 = vsel %vm627, %v3911, %v3913
        %v3918 = vsel %vm627, %v3909, %v3911
        %v3919 = vsel %vm627, %v3915, %v3909
        %v3920 = vsel %vm649, %v3919, 0.0
        %v3921 = vsel %vm650, %v3918, 0.0
        %v3922 = vsel %vm651, %v3917, 0.0
        %v3923 = vsel %vm652, %v3916, 0.0
        %3924 = vset.pattern.permute.xlu0 83
        %3925 = vperm.xlu0 %3924, %v555
        %v3926 = vpop.permute.xlu0 %3925
        %v3928 = vmul.f32 %v3920, %v3926
        %v3929 = vmul.f32 %v3921, %v3926
        %v3930 = vmul.f32 %v3922, %v3926
        %v3931 = vmul.f32 %v3923, %v3926
        %v3932 = vadd.f32 %v3904, %v3928
        %v3933 = vadd.f32 %v3905, %v3929
        %v3934 = vadd.f32 %v3906, %v3930
        %v3935 = vadd.f32 %v3907, %v3931
        %3936 = vrot.lane.b32.xlu0 %v3848, 1
        %v3937 = vpop.permute.xlu0 %3936
        %3938 = vrot.lane.b32.xlu0 %v3849, 1
        %v3939 = vpop.permute.xlu0 %3938
        %3940 = vrot.lane.b32.xlu0 %v3850, 1
        %v3941 = vpop.permute.xlu0 %3940
        %3942 = vrot.lane.b32.xlu0 %v3851, 1
        %v3943 = vpop.permute.xlu0 %3942
        %v3944 = vsel %vm677, %v3941, %v3943
        %v3945 = vsel %vm677, %v3939, %v3941
        %v3946 = vsel %vm677, %v3937, %v3939
        %v3947 = vsel %vm677, %v3943, %v3937
        %v3948 = vsel %vm699, %v3947, 0.0
        %v3949 = vsel %vm700, %v3946, 0.0
        %v3950 = vsel %vm701, %v3945, 0.0
        %v3951 = vsel %vm702, %v3944, 0.0
        %3952 = vset.pattern.permute.xlu0 84
        %3953 = vperm.xlu0 %3952, %v555
        %v3954 = vpop.permute.xlu0 %3953
        %v3956 = vmul.f32 %v3948, %v3954
        %v3957 = vmul.f32 %v3949, %v3954
        %v3958 = vmul.f32 %v3950, %v3954
        %v3959 = vmul.f32 %v3951, %v3954
        %v3960 = vadd.f32 %v3932, %v3956
        %v3961 = vadd.f32 %v3933, %v3957
        %v3962 = vadd.f32 %v3934, %v3958
        %v3963 = vadd.f32 %v3935, %v3959
        %3964 = vset.pattern.permute.xlu0 85
        %3965 = vperm.xlu0 %3964, %v555
        %v3966 = vpop.permute.xlu0 %3965
        %v3968 = vmul.f32 %v3848, %v3966
        %v3969 = vmul.f32 %v3849, %v3966
        %v3970 = vmul.f32 %v3850, %v3966
        %v3971 = vmul.f32 %v3851, %v3966
        %v3972 = vadd.f32 %v3960, %v3968
        %v3973 = vadd.f32 %v3961, %v3969
        %v3974 = vadd.f32 %v3962, %v3970
        %v3975 = vadd.f32 %v3963, %v3971
        %3976 = vrot.lane.b32.xlu0 %v3848, 127
        %v3977 = vpop.permute.xlu0 %3976
        %3978 = vrot.lane.b32.xlu0 %v3849, 127
        %v3979 = vpop.permute.xlu0 %3978
        %3980 = vrot.lane.b32.xlu0 %v3850, 127
        %v3981 = vpop.permute.xlu0 %3980
        %3982 = vrot.lane.b32.xlu0 %v3851, 127
        %v3983 = vpop.permute.xlu0 %3982
        %v3984 = vsel %vm739, %v3981, %v3983
        %v3985 = vsel %vm739, %v3979, %v3981
        %v3986 = vsel %vm739, %v3977, %v3979
        %v3987 = vsel %vm739, %v3983, %v3977
        %v3988 = vsel %vm761, %v3986, 0.0
        %v3989 = vsel %vm762, %v3985, 0.0
        %v3990 = vsel %vm763, %v3984, 0.0
        %v3991 = vsel %vm764, %v3987, 0.0
        %3992 = vset.pattern.permute.xlu0 86
        %3993 = vperm.xlu0 %3992, %v555
        %v3994 = vpop.permute.xlu0 %3993
        %v3996 = vmul.f32 %v3988, %v3994
        %v3997 = vmul.f32 %v3989, %v3994
        %v3998 = vmul.f32 %v3990, %v3994
        %v3999 = vmul.f32 %v3991, %v3994
        %v4000 = vadd.f32 %v3972, %v3996
        %v4001 = vadd.f32 %v3973, %v3997
        %v4002 = vadd.f32 %v3974, %v3998
        %v4003 = vadd.f32 %v3975, %v3999
        %4004 = vrot.lane.b32.xlu0 %v3848, 113
        %v4005 = vpop.permute.xlu0 %4004
        %4006 = vrot.lane.b32.xlu0 %v3849, 113
        %v4007 = vpop.permute.xlu0 %4006
        %4008 = vrot.lane.b32.xlu0 %v3850, 113
        %v4009 = vpop.permute.xlu0 %4008
        %4010 = vrot.lane.b32.xlu0 %v3851, 113
        %v4011 = vpop.permute.xlu0 %4010
        %v4012 = vsel %vm789, %v4009, %v4011
        %v4013 = vsel %vm789, %v4007, %v4009
        %v4014 = vsel %vm789, %v4005, %v4007
        %v4015 = vsel %vm789, %v4011, %v4005
        %v4016 = vsel %vm811, %v4014, 0.0
        %v4017 = vsel %vm812, %v4013, 0.0
        %v4018 = vsel %vm813, %v4012, 0.0
        %v4019 = vsel %vm814, %v4015, 0.0
        %4020 = vset.pattern.permute.xlu0 87
        %4021 = vperm.xlu0 %4020, %v555
        %v4022 = vpop.permute.xlu0 %4021
        %v4024 = vmul.f32 %v4016, %v4022
        %v4025 = vmul.f32 %v4017, %v4022
        %v4026 = vmul.f32 %v4018, %v4022
        %v4027 = vmul.f32 %v4019, %v4022
        %v4028 = vadd.f32 %v4000, %v4024
        %v4029 = vadd.f32 %v4001, %v4025
        %v4030 = vadd.f32 %v4002, %v4026
        %v4031 = vadd.f32 %v4003, %v4027
        %4032 = vrot.lane.b32.xlu0 %v3848, 112
        %v4033 = vpop.permute.xlu0 %4032
        %4034 = vrot.lane.b32.xlu0 %v3849, 112
        %v4035 = vpop.permute.xlu0 %4034
        %4036 = vrot.lane.b32.xlu0 %v3850, 112
        %v4037 = vpop.permute.xlu0 %4036
        %4038 = vrot.lane.b32.xlu0 %v3851, 112
        %v4039 = vpop.permute.xlu0 %4038
        %v4040 = vsel %vm839, %v4037, %v4039
        %v4041 = vsel %vm839, %v4035, %v4037
        %v4042 = vsel %vm839, %v4033, %v4035
        %v4043 = vsel %vm839, %v4039, %v4033
        %v4044 = vsel %vm861, %v4042, 0.0
        %v4045 = vsel %vm862, %v4041, 0.0
        %v4046 = vsel %vm863, %v4040, 0.0
        %v4047 = vsel %vm864, %v4043, 0.0
        %4048 = vset.pattern.permute.xlu0 88
        %4049 = vperm.xlu0 %4048, %v555
        %v4050 = vpop.permute.xlu0 %4049
        %v4052 = vmul.f32 %v4044, %v4050
        %v4053 = vmul.f32 %v4045, %v4050
        %v4054 = vmul.f32 %v4046, %v4050
        %v4055 = vmul.f32 %v4047, %v4050
        %v4056 = vadd.f32 %v4028, %v4052
        %v4057 = vadd.f32 %v4029, %v4053
        %v4058 = vadd.f32 %v4030, %v4054
        %v4059 = vadd.f32 %v4031, %v4055
        %4060 = vrot.lane.b32.xlu0 %v3848, 111
        %v4061 = vpop.permute.xlu0 %4060
        %4062 = vrot.lane.b32.xlu0 %v3849, 111
        %v4063 = vpop.permute.xlu0 %4062
        %4064 = vrot.lane.b32.xlu0 %v3850, 111
        %v4065 = vpop.permute.xlu0 %4064
        %4066 = vrot.lane.b32.xlu0 %v3851, 111
        %v4067 = vpop.permute.xlu0 %4066
        %v4068 = vsel %vm889, %v4065, %v4067
        %v4069 = vsel %vm889, %v4063, %v4065
        %v4070 = vsel %vm889, %v4061, %v4063
        %v4071 = vsel %vm889, %v4067, %v4061
        %v4072 = vsel %vm911, %v4070, 0.0
        %v4073 = vsel %vm912, %v4069, 0.0
        %v4074 = vsel %vm913, %v4068, 0.0
        %v4075 = vsel %vm914, %v4071, 0.0
        %4076 = vset.pattern.permute.xlu0 89
        %4077 = vperm.xlu0 %4076, %v555
        %v4078 = vpop.permute.xlu0 %4077
        %v4080 = vmul.f32 %v4072, %v4078
        %v4081 = vmul.f32 %v4073, %v4078
        %v4082 = vmul.f32 %v4074, %v4078
        %v4083 = vmul.f32 %v4075, %v4078
        %v4084 = vadd.f32 %v4056, %v4080
        %v4085 = vadd.f32 %v4057, %v4081
        %v4086 = vadd.f32 %v4058, %v4082
        %v4087 = vadd.f32 %v4059, %v4083
        %s4088 = scalar_lea.vmem %s5, 72
        %v4089 = vld [vmem:[%s4088] sm:$0xff]
        %s4090 = scalar_lea.vmem %s6, 72
        %v4091 = vld [vmem:[%s4090] sm:$0xff]
        %4093 = vset.pattern.permute.xlu0 0
        %4094 = vperm.xlu0 %4093, %v4091
        %v4095 = vpop.permute.xlu0 %4094
        %v4098 = vsel %vm938, %v4089, 0
        %4100 = vmatprep.subr.mxu0 0.0
        %4101 = vmatpush1.msra.mxu0 0.0
        %4102 = vmatprep.subr.mxu0 0.0
        %4103 = vmatpush1.msra.mxu0 0.0
        %4104 = vmatprep.subr.mxu0 0.0
        %4105 = vmatpush1.msra.mxu0 0.0
        %4106 = vmatprep.subr.mxu0 0.0
        %4107 = vmatpush1.msra.mxu0 0.0
        %4108 = vmatprep.subr.mxu0 0.0
        %4109 = vmatpush1.msra.mxu0 0.0
        %4110 = vmatprep.subr.mxu0 0.0
        %4111 = vmatpush1.msra.mxu0 0.0
        %4112 = vmatprep.subr.mxu0 0.0
        %4113 = vmatpush1.msra.mxu0 0.0
        %4114 = vmatprep.subr.mxu0 0.0
        %4115 = vmatpush1.msra.mxu0 0.0
        %4116 = vmatprep.subr.mxu0 0.0
        %4117 = vmatpush1.msra.mxu0 0.0
        %4118 = vmatprep.subr.mxu0 0.0
        %4119 = vmatpush1.msra.mxu0 0.0
        %4120 = vmatprep.subr.mxu0 0.0
        %4121 = vmatpush1.msra.mxu0 0.0
        %4122 = vmatprep.subr.mxu0 0.0
        %4123 = vmatpush1.msra.mxu0 0.0
        %4124 = vmatprep.subr.mxu0 0.0
        %4125 = vmatpush1.msra.mxu0 0.0
        %4126 = vmatprep.subr.mxu0 0.0
        %4127 = vmatpush1.msra.mxu0 0.0
        %4128 = vmatprep.subr.mxu0 0.0
        %4129 = vmatpush1.msra.mxu0 0.0
        %4130 = vmatprep.subr.mxu0 %v4085
        %4131 = vmatpush1.msra.mxu0 %v4084
        %4132 = vmatprep.subr.mxu0 0.0
        %4133 = vmatpush2.msra.mxu0 0.0
        %4134 = vmatprep.subr.mxu0 0.0
        %4135 = vmatpush2.msra.mxu0 0.0
        %4136 = vmatprep.subr.mxu0 0.0
        %4137 = vmatpush2.msra.mxu0 0.0
        %4138 = vmatprep.subr.mxu0 0.0
        %4139 = vmatpush2.msra.mxu0 0.0
        %4140 = vmatprep.subr.mxu0 0.0
        %4141 = vmatpush2.msra.mxu0 0.0
        %4142 = vmatprep.subr.mxu0 0.0
        %4143 = vmatpush2.msra.mxu0 0.0
        %4144 = vmatprep.subr.mxu0 0.0
        %4145 = vmatpush2.msra.mxu0 0.0
        %4146 = vmatprep.subr.mxu0 0.0
        %4147 = vmatpush2.msra.mxu0 0.0
        %4148 = vmatprep.subr.mxu0 0.0
        %4149 = vmatpush2.msra.mxu0 0.0
        %4150 = vmatprep.subr.mxu0 0.0
        %4151 = vmatpush2.msra.mxu0 0.0
        %4152 = vmatprep.subr.mxu0 0.0
        %4153 = vmatpush2.msra.mxu0 0.0
        %4154 = vmatprep.subr.mxu0 0.0
        %4155 = vmatpush2.msra.mxu0 0.0
        %4156 = vmatprep.subr.mxu0 0.0
        %4157 = vmatpush2.msra.mxu0 0.0
        %4158 = vmatprep.subr.mxu0 0.0
        %4159 = vmatpush2.msra.mxu0 0.0
        %4160 = vmatprep.subr.mxu0 0.0
        %4161 = vmatpush2.msra.mxu0 0.0
        %4162 = vmatprep.subr.mxu0 0.0
        %4163 = vmatpush2.msra.mxu0 0.0
        %4164 = vmatprep.mubr.f32.mxu0 0.0
        %4165 = vmatmul.mubr.f32.gmra.mxu0 %v4098
        %v4166 = vpop.f32.mrf.mxu0
        %v4167 = vadd.f32 %v4095, %v4166
        %v4168 = vpop.f32.mrf.mxu0
        %v4169 = vadd.f32 %v4095, %v4168
        %4170 = vdwg.mxu0
        %4171 = vmatprep.subr.mxu0 0.0
        %4172 = vmatpush1.msra.mxu0 0.0
        %4173 = vmatprep.subr.mxu0 0.0
        %4174 = vmatpush1.msra.mxu0 0.0
        %4175 = vmatprep.subr.mxu0 0.0
        %4176 = vmatpush1.msra.mxu0 0.0
        %4177 = vmatprep.subr.mxu0 0.0
        %4178 = vmatpush1.msra.mxu0 0.0
        %4179 = vmatprep.subr.mxu0 0.0
        %4180 = vmatpush1.msra.mxu0 0.0
        %4181 = vmatprep.subr.mxu0 0.0
        %4182 = vmatpush1.msra.mxu0 0.0
        %4183 = vmatprep.subr.mxu0 0.0
        %4184 = vmatpush1.msra.mxu0 0.0
        %4185 = vmatprep.subr.mxu0 0.0
        %4186 = vmatpush1.msra.mxu0 0.0
        %4187 = vmatprep.subr.mxu0 0.0
        %4188 = vmatpush1.msra.mxu0 0.0
        %4189 = vmatprep.subr.mxu0 0.0
        %4190 = vmatpush1.msra.mxu0 0.0
        %4191 = vmatprep.subr.mxu0 0.0
        %4192 = vmatpush1.msra.mxu0 0.0
        %4193 = vmatprep.subr.mxu0 0.0
        %4194 = vmatpush1.msra.mxu0 0.0
        %4195 = vmatprep.subr.mxu0 0.0
        %4196 = vmatpush1.msra.mxu0 0.0
        %4197 = vmatprep.subr.mxu0 0.0
        %4198 = vmatpush1.msra.mxu0 0.0
        %4199 = vmatprep.subr.mxu0 0.0
        %4200 = vmatpush1.msra.mxu0 0.0
        %4201 = vmatprep.subr.mxu0 %v4087
        %4202 = vmatpush1.msra.mxu0 %v4086
        %4203 = vmatprep.subr.mxu0 0.0
        %4204 = vmatpush2.msra.mxu0 0.0
        %4205 = vmatprep.subr.mxu0 0.0
        %4206 = vmatpush2.msra.mxu0 0.0
        %4207 = vmatprep.subr.mxu0 0.0
        %4208 = vmatpush2.msra.mxu0 0.0
        %4209 = vmatprep.subr.mxu0 0.0
        %4210 = vmatpush2.msra.mxu0 0.0
        %4211 = vmatprep.subr.mxu0 0.0
        %4212 = vmatpush2.msra.mxu0 0.0
        %4213 = vmatprep.subr.mxu0 0.0
        %4214 = vmatpush2.msra.mxu0 0.0
        %4215 = vmatprep.subr.mxu0 0.0
        %4216 = vmatpush2.msra.mxu0 0.0
        %4217 = vmatprep.subr.mxu0 0.0
        %4218 = vmatpush2.msra.mxu0 0.0
        %4219 = vmatprep.subr.mxu0 0.0
        %4220 = vmatpush2.msra.mxu0 0.0
        %4221 = vmatprep.subr.mxu0 0.0
        %4222 = vmatpush2.msra.mxu0 0.0
        %4223 = vmatprep.subr.mxu0 0.0
        %4224 = vmatpush2.msra.mxu0 0.0
        %4225 = vmatprep.subr.mxu0 0.0
        %4226 = vmatpush2.msra.mxu0 0.0
        %4227 = vmatprep.subr.mxu0 0.0
        %4228 = vmatpush2.msra.mxu0 0.0
        %4229 = vmatprep.subr.mxu0 0.0
        %4230 = vmatpush2.msra.mxu0 0.0
        %4231 = vmatprep.subr.mxu0 0.0
        %4232 = vmatpush2.msra.mxu0 0.0
        %4233 = vmatprep.subr.mxu0 0.0
        %4234 = vmatpush2.msra.mxu0 0.0
        %4235 = vmatprep.mubr.f32.mxu0 0.0
        %4236 = vmatmul.mubr.f32.gmra.mxu0 %v4098
        %v4237 = vpop.f32.mrf.mxu0
        %v4238 = vadd.f32 %v4095, %v4237
        %v4239 = vpop.f32.mrf.mxu0
        %v4240 = vadd.f32 %v4095, %v4239
        %4241 = vdwg.mxu0
        %v4242 = vadd.f32 %v4167, %v424
        %v4243 = vadd.f32 %v4169, %v426
        %v4244 = vadd.f32 %v4238, %v501
        %v4245 = vadd.f32 %v4240, %v503
        %v4246 = vmax.f32 %v2266, 0.0
        %v4247 = vmax.f32 %v2267, 0.0
        %v4248 = vmax.f32 %v2268, 0.0
        %v4249 = vmax.f32 %v2269, 0.0
        %4250 = vrot.lane.b32.xlu0 %v4246, 34
        %v4251 = vpop.permute.xlu0 %4250
        %4252 = vrot.lane.b32.xlu0 %v4247, 34
        %v4253 = vpop.permute.xlu0 %4252
        %4254 = vrot.lane.b32.xlu0 %v4248, 34
        %v4255 = vpop.permute.xlu0 %4254
        %4256 = vrot.lane.b32.xlu0 %v4249, 34
        %v4257 = vpop.permute.xlu0 %4256
        %vm4258 = vcmp.lt.s32.totalorder %v524, 34
        %v4259 = vsel %vm4258, %v4255, %v4257
        %v4260 = vsel %vm4258, %v4253, %v4255
        %v4261 = vsel %vm4258, %v4251, %v4253
        %v4262 = vsel %vm4258, %v4257, %v4251
        %v4263 = vsel %vm308, 1, 0
        %v4264 = vlaneseq
        %v4265 = vshrl.u32 %v4264, 7
        %v4266 = vsub.s32 0, %v4265
        %v4267 = vrot.slane %v4263, %v4266
        %v4268 = vlaneseq
        %v4269 = vshrl.u32 %v4268, 7
        %v4270 = vsub.s32 1, %v4269
        %v4271 = vrot.slane %v4263, %v4270
        %v4272 = vlaneseq
        %v4273 = vshrl.u32 %v4272, 7
        %v4274 = vsub.s32 2, %v4273
        %v4275 = vrot.slane %v4263, %v4274
        %v4276 = vlaneseq
        %v4277 = vshrl.u32 %v4276, 7
        %v4278 = vsub.s32 3, %v4277
        %v4279 = vrot.slane %v4263, %v4278
        %vm4280 = vcmp.eq.s32.totalorder %v4267, 1
        %vm4281 = vcmp.eq.s32.totalorder %v4271, 1
        %vm4282 = vcmp.eq.s32.totalorder %v4275, 1
        %vm4283 = vcmp.eq.s32.totalorder %v4279, 1
        %v4284 = vsel %vm4280, %v4262, 0.0
        %v4285 = vsel %vm4281, %v4261, 0.0
        %v4286 = vsel %vm4282, %v4260, 0.0
        %v4287 = vsel %vm4283, %v4259, 0.0
        %4288 = vset.pattern.permute.xlu0 90
        %4289 = vperm.xlu0 %4288, %v555
        %v4290 = vpop.permute.xlu0 %4289
        %v4292 = vmul.f32 %v4284, %v4290
        %v4293 = vmul.f32 %v4285, %v4290
        %v4294 = vmul.f32 %v4286, %v4290
        %v4295 = vmul.f32 %v4287, %v4290
        %v4296 = vadd.f32 %v4292, 0.0
        %v4297 = vadd.f32 %v4293, 0.0
        %v4298 = vadd.f32 %v4294, 0.0
        %v4299 = vadd.f32 %v4295, 0.0
        %4300 = vrot.lane.b32.xlu0 %v4246, 32
        %v4301 = vpop.permute.xlu0 %4300
        %4302 = vrot.lane.b32.xlu0 %v4247, 32
        %v4303 = vpop.permute.xlu0 %4302
        %4304 = vrot.lane.b32.xlu0 %v4248, 32
        %v4305 = vpop.permute.xlu0 %4304
        %4306 = vrot.lane.b32.xlu0 %v4249, 32
        %v4307 = vpop.permute.xlu0 %4306
        %vm4308 = vcmp.lt.s32.totalorder %v524, 32
        %v4309 = vsel %vm4308, %v4305, %v4307
        %v4310 = vsel %vm4308, %v4303, %v4305
        %v4311 = vsel %vm4308, %v4301, %v4303
        %v4312 = vsel %vm4308, %v4307, %v4301
        %v4313 = vsel %vm303, 1, 0
        %v4314 = vlaneseq
        %v4315 = vshrl.u32 %v4314, 7
        %v4316 = vsub.s32 0, %v4315
        %v4317 = vrot.slane %v4313, %v4316
        %v4318 = vlaneseq
        %v4319 = vshrl.u32 %v4318, 7
        %v4320 = vsub.s32 1, %v4319
        %v4321 = vrot.slane %v4313, %v4320
        %v4322 = vlaneseq
        %v4323 = vshrl.u32 %v4322, 7
        %v4324 = vsub.s32 2, %v4323
        %v4325 = vrot.slane %v4313, %v4324
        %v4326 = vlaneseq
        %v4327 = vshrl.u32 %v4326, 7
        %v4328 = vsub.s32 3, %v4327
        %v4329 = vrot.slane %v4313, %v4328
        %vm4330 = vcmp.eq.s32.totalorder %v4317, 1
        %vm4331 = vcmp.eq.s32.totalorder %v4321, 1
        %vm4332 = vcmp.eq.s32.totalorder %v4325, 1
        %vm4333 = vcmp.eq.s32.totalorder %v4329, 1
        %v4334 = vsel %vm4330, %v4312, 0.0
        %v4335 = vsel %vm4331, %v4311, 0.0
        %v4336 = vsel %vm4332, %v4310, 0.0
        %v4337 = vsel %vm4333, %v4309, 0.0
        %4338 = vset.pattern.permute.xlu0 91
        %4339 = vperm.xlu0 %4338, %v555
        %v4340 = vpop.permute.xlu0 %4339
        %v4342 = vmul.f32 %v4334, %v4340
        %v4343 = vmul.f32 %v4335, %v4340
        %v4344 = vmul.f32 %v4336, %v4340
        %v4345 = vmul.f32 %v4337, %v4340
        %v4346 = vadd.f32 %v4296, %v4342
        %v4347 = vadd.f32 %v4297, %v4343
        %v4348 = vadd.f32 %v4298, %v4344
        %v4349 = vadd.f32 %v4299, %v4345
        %4350 = vrot.lane.b32.xlu0 %v4246, 30
        %v4351 = vpop.permute.xlu0 %4350
        %4352 = vrot.lane.b32.xlu0 %v4247, 30
        %v4353 = vpop.permute.xlu0 %4352
        %4354 = vrot.lane.b32.xlu0 %v4248, 30
        %v4355 = vpop.permute.xlu0 %4354
        %4356 = vrot.lane.b32.xlu0 %v4249, 30
        %v4357 = vpop.permute.xlu0 %4356
        %vm4358 = vcmp.lt.s32.totalorder %v524, 30
        %v4359 = vsel %vm4358, %v4355, %v4357
        %v4360 = vsel %vm4358, %v4353, %v4355
        %v4361 = vsel %vm4358, %v4351, %v4353
        %v4362 = vsel %vm4358, %v4357, %v4351
        %v4363 = vsel %vm313, 1, 0
        %v4364 = vlaneseq
        %v4365 = vshrl.u32 %v4364, 7
        %v4366 = vsub.s32 0, %v4365
        %v4367 = vrot.slane %v4363, %v4366
        %v4368 = vlaneseq
        %v4369 = vshrl.u32 %v4368, 7
        %v4370 = vsub.s32 1, %v4369
        %v4371 = vrot.slane %v4363, %v4370
        %v4372 = vlaneseq
        %v4373 = vshrl.u32 %v4372, 7
        %v4374 = vsub.s32 2, %v4373
        %v4375 = vrot.slane %v4363, %v4374
        %v4376 = vlaneseq
        %v4377 = vshrl.u32 %v4376, 7
        %v4378 = vsub.s32 3, %v4377
        %v4379 = vrot.slane %v4363, %v4378
        %vm4380 = vcmp.eq.s32.totalorder %v4367, 1
        %vm4381 = vcmp.eq.s32.totalorder %v4371, 1
        %vm4382 = vcmp.eq.s32.totalorder %v4375, 1
        %vm4383 = vcmp.eq.s32.totalorder %v4379, 1
        %v4384 = vsel %vm4380, %v4362, 0.0
        %v4385 = vsel %vm4381, %v4361, 0.0
        %v4386 = vsel %vm4382, %v4360, 0.0
        %v4387 = vsel %vm4383, %v4359, 0.0
        %4388 = vset.pattern.permute.xlu0 92
        %4389 = vperm.xlu0 %4388, %v555
        %v4390 = vpop.permute.xlu0 %4389
        %v4392 = vmul.f32 %v4384, %v4390
        %v4393 = vmul.f32 %v4385, %v4390
        %v4394 = vmul.f32 %v4386, %v4390
        %v4395 = vmul.f32 %v4387, %v4390
        %v4396 = vadd.f32 %v4346, %v4392
        %v4397 = vadd.f32 %v4347, %v4393
        %v4398 = vadd.f32 %v4348, %v4394
        %v4399 = vadd.f32 %v4349, %v4395
        %4400 = vrot.lane.b32.xlu0 %v4246, 2
        %v4401 = vpop.permute.xlu0 %4400
        %4402 = vrot.lane.b32.xlu0 %v4247, 2
        %v4403 = vpop.permute.xlu0 %4402
        %4404 = vrot.lane.b32.xlu0 %v4248, 2
        %v4405 = vpop.permute.xlu0 %4404
        %4406 = vrot.lane.b32.xlu0 %v4249, 2
        %v4407 = vpop.permute.xlu0 %4406
        %vm4408 = vcmp.lt.s32.totalorder %v524, 2
        %v4409 = vsel %vm4408, %v4405, %v4407
        %v4410 = vsel %vm4408, %v4403, %v4405
        %v4411 = vsel %vm4408, %v4401, %v4403
        %v4412 = vsel %vm4408, %v4407, %v4401
        %v4413 = vsel %vm307, 1, 0
        %v4414 = vlaneseq
        %v4415 = vshrl.u32 %v4414, 7
        %v4416 = vsub.s32 0, %v4415
        %v4417 = vrot.slane %v4413, %v4416
        %v4418 = vlaneseq
        %v4419 = vshrl.u32 %v4418, 7
        %v4420 = vsub.s32 1, %v4419
        %v4421 = vrot.slane %v4413, %v4420
        %v4422 = vlaneseq
        %v4423 = vshrl.u32 %v4422, 7
        %v4424 = vsub.s32 2, %v4423
        %v4425 = vrot.slane %v4413, %v4424
        %v4426 = vlaneseq
        %v4427 = vshrl.u32 %v4426, 7
        %v4428 = vsub.s32 3, %v4427
        %v4429 = vrot.slane %v4413, %v4428
        %vm4430 = vcmp.eq.s32.totalorder %v4417, 1
        %vm4431 = vcmp.eq.s32.totalorder %v4421, 1
        %vm4432 = vcmp.eq.s32.totalorder %v4425, 1
        %vm4433 = vcmp.eq.s32.totalorder %v4429, 1
        %v4434 = vsel %vm4430, %v4412, 0.0
        %v4435 = vsel %vm4431, %v4411, 0.0
        %v4436 = vsel %vm4432, %v4410, 0.0
        %v4437 = vsel %vm4433, %v4409, 0.0
        %4438 = vset.pattern.permute.xlu0 93
        %4439 = vperm.xlu0 %4438, %v555
        %v4440 = vpop.permute.xlu0 %4439
        %v4442 = vmul.f32 %v4434, %v4440
        %v4443 = vmul.f32 %v4435, %v4440
        %v4444 = vmul.f32 %v4436, %v4440
        %v4445 = vmul.f32 %v4437, %v4440
        %v4446 = vadd.f32 %v4396, %v4442
        %v4447 = vadd.f32 %v4397, %v4443
        %v4448 = vadd.f32 %v4398, %v4444
        %v4449 = vadd.f32 %v4399, %v4445
        %4450 = vset.pattern.permute.xlu0 94
        %4451 = vperm.xlu0 %4450, %v555
        %v4452 = vpop.permute.xlu0 %4451
        %v4454 = vmul.f32 %v4246, %v4452
        %v4455 = vmul.f32 %v4247, %v4452
        %v4456 = vmul.f32 %v4248, %v4452
        %v4457 = vmul.f32 %v4249, %v4452
        %v4458 = vadd.f32 %v4446, %v4454
        %v4459 = vadd.f32 %v4447, %v4455
        %v4460 = vadd.f32 %v4448, %v4456
        %v4461 = vadd.f32 %v4449, %v4457
        %4462 = vrot.lane.b32.xlu0 %v4246, 126
        %v4463 = vpop.permute.xlu0 %4462
        %4464 = vrot.lane.b32.xlu0 %v4247, 126
        %v4465 = vpop.permute.xlu0 %4464
        %4466 = vrot.lane.b32.xlu0 %v4248, 126
        %v4467 = vpop.permute.xlu0 %4466
        %4468 = vrot.lane.b32.xlu0 %v4249, 126
        %v4469 = vpop.permute.xlu0 %4468
        %vm4470 = vcmp.lt.s32.totalorder %v524, 126
        %v4471 = vsel %vm4470, %v4467, %v4469
        %v4472 = vsel %vm4470, %v4465, %v4467
        %v4473 = vsel %vm4470, %v4463, %v4465
        %v4474 = vsel %vm4470, %v4469, %v4463
        %v4475 = vsel %vm312, 1, 0
        %v4476 = vlaneseq
        %v4477 = vshrl.u32 %v4476, 7
        %v4478 = vsub.s32 0, %v4477
        %v4479 = vrot.slane %v4475, %v4478
        %v4480 = vlaneseq
        %v4481 = vshrl.u32 %v4480, 7
        %v4482 = vsub.s32 1, %v4481
        %v4483 = vrot.slane %v4475, %v4482
        %v4484 = vlaneseq
        %v4485 = vshrl.u32 %v4484, 7
        %v4486 = vsub.s32 2, %v4485
        %v4487 = vrot.slane %v4475, %v4486
        %v4488 = vlaneseq
        %v4489 = vshrl.u32 %v4488, 7
        %v4490 = vsub.s32 3, %v4489
        %v4491 = vrot.slane %v4475, %v4490
        %vm4492 = vcmp.eq.s32.totalorder %v4479, 1
        %vm4493 = vcmp.eq.s32.totalorder %v4483, 1
        %vm4494 = vcmp.eq.s32.totalorder %v4487, 1
        %vm4495 = vcmp.eq.s32.totalorder %v4491, 1
        %v4496 = vsel %vm4492, %v4473, 0.0
        %v4497 = vsel %vm4493, %v4472, 0.0
        %v4498 = vsel %vm4494, %v4471, 0.0
        %v4499 = vsel %vm4495, %v4474, 0.0
        %4500 = vset.pattern.permute.xlu0 95
        %4501 = vperm.xlu0 %4500, %v555
        %v4502 = vpop.permute.xlu0 %4501
        %v4504 = vmul.f32 %v4496, %v4502
        %v4505 = vmul.f32 %v4497, %v4502
        %v4506 = vmul.f32 %v4498, %v4502
        %v4507 = vmul.f32 %v4499, %v4502
        %v4508 = vadd.f32 %v4458, %v4504
        %v4509 = vadd.f32 %v4459, %v4505
        %v4510 = vadd.f32 %v4460, %v4506
        %v4511 = vadd.f32 %v4461, %v4507
        %4512 = vrot.lane.b32.xlu0 %v4246, 98
        %v4513 = vpop.permute.xlu0 %4512
        %4514 = vrot.lane.b32.xlu0 %v4247, 98
        %v4515 = vpop.permute.xlu0 %4514
        %4516 = vrot.lane.b32.xlu0 %v4248, 98
        %v4517 = vpop.permute.xlu0 %4516
        %4518 = vrot.lane.b32.xlu0 %v4249, 98
        %v4519 = vpop.permute.xlu0 %4518
        %vm4520 = vcmp.lt.s32.totalorder %v524, 98
        %v4521 = vsel %vm4520, %v4517, %v4519
        %v4522 = vsel %vm4520, %v4515, %v4517
        %v4523 = vsel %vm4520, %v4513, %v4515
        %v4524 = vsel %vm4520, %v4519, %v4513
        %v4525 = vsel %vm318, 1, 0
        %v4526 = vlaneseq
        %v4527 = vshrl.u32 %v4526, 7
        %v4528 = vsub.s32 0, %v4527
        %v4529 = vrot.slane %v4525, %v4528
        %v4530 = vlaneseq
        %v4531 = vshrl.u32 %v4530, 7
        %v4532 = vsub.s32 1, %v4531
        %v4533 = vrot.slane %v4525, %v4532
        %v4534 = vlaneseq
        %v4535 = vshrl.u32 %v4534, 7
        %v4536 = vsub.s32 2, %v4535
        %v4537 = vrot.slane %v4525, %v4536
        %v4538 = vlaneseq
        %v4539 = vshrl.u32 %v4538, 7
        %v4540 = vsub.s32 3, %v4539
        %v4541 = vrot.slane %v4525, %v4540
        %vm4542 = vcmp.eq.s32.totalorder %v4529, 1
        %vm4543 = vcmp.eq.s32.totalorder %v4533, 1
        %vm4544 = vcmp.eq.s32.totalorder %v4537, 1
        %vm4545 = vcmp.eq.s32.totalorder %v4541, 1
        %v4546 = vsel %vm4542, %v4523, 0.0
        %v4547 = vsel %vm4543, %v4522, 0.0
        %v4548 = vsel %vm4544, %v4521, 0.0
        %v4549 = vsel %vm4545, %v4524, 0.0
        %4550 = vset.pattern.permute.xlu0 96
        %4551 = vperm.xlu0 %4550, %v555
        %v4552 = vpop.permute.xlu0 %4551
        %v4554 = vmul.f32 %v4546, %v4552
        %v4555 = vmul.f32 %v4547, %v4552
        %v4556 = vmul.f32 %v4548, %v4552
        %v4557 = vmul.f32 %v4549, %v4552
        %v4558 = vadd.f32 %v4508, %v4554
        %v4559 = vadd.f32 %v4509, %v4555
        %v4560 = vadd.f32 %v4510, %v4556
        %v4561 = vadd.f32 %v4511, %v4557
        %4562 = vrot.lane.b32.xlu0 %v4246, 96
        %v4563 = vpop.permute.xlu0 %4562
        %4564 = vrot.lane.b32.xlu0 %v4247, 96
        %v4565 = vpop.permute.xlu0 %4564
        %4566 = vrot.lane.b32.xlu0 %v4248, 96
        %v4567 = vpop.permute.xlu0 %4566
        %4568 = vrot.lane.b32.xlu0 %v4249, 96
        %v4569 = vpop.permute.xlu0 %4568
        %vm4570 = vcmp.lt.s32.totalorder %v524, 96
        %v4571 = vsel %vm4570, %v4567, %v4569
        %v4572 = vsel %vm4570, %v4565, %v4567
        %v4573 = vsel %vm4570, %v4563, %v4565
        %v4574 = vsel %vm4570, %v4569, %v4563
        %v4575 = vsel %vm317, 1, 0
        %v4576 = vlaneseq
        %v4577 = vshrl.u32 %v4576, 7
        %v4578 = vsub.s32 0, %v4577
        %v4579 = vrot.slane %v4575, %v4578
        %v4580 = vlaneseq
        %v4581 = vshrl.u32 %v4580, 7
        %v4582 = vsub.s32 1, %v4581
        %v4583 = vrot.slane %v4575, %v4582
        %v4584 = vlaneseq
        %v4585 = vshrl.u32 %v4584, 7
        %v4586 = vsub.s32 2, %v4585
        %v4587 = vrot.slane %v4575, %v4586
        %v4588 = vlaneseq
        %v4589 = vshrl.u32 %v4588, 7
        %v4590 = vsub.s32 3, %v4589
        %v4591 = vrot.slane %v4575, %v4590
        %vm4592 = vcmp.eq.s32.totalorder %v4579, 1
        %vm4593 = vcmp.eq.s32.totalorder %v4583, 1
        %vm4594 = vcmp.eq.s32.totalorder %v4587, 1
        %vm4595 = vcmp.eq.s32.totalorder %v4591, 1
        %v4596 = vsel %vm4592, %v4573, 0.0
        %v4597 = vsel %vm4593, %v4572, 0.0
        %v4598 = vsel %vm4594, %v4571, 0.0
        %v4599 = vsel %vm4595, %v4574, 0.0
        %4600 = vset.pattern.permute.xlu0 97
        %4601 = vperm.xlu0 %4600, %v555
        %v4602 = vpop.permute.xlu0 %4601
        %v4604 = vmul.f32 %v4596, %v4602
        %v4605 = vmul.f32 %v4597, %v4602
        %v4606 = vmul.f32 %v4598, %v4602
        %v4607 = vmul.f32 %v4599, %v4602
        %v4608 = vadd.f32 %v4558, %v4604
        %v4609 = vadd.f32 %v4559, %v4605
        %v4610 = vadd.f32 %v4560, %v4606
        %v4611 = vadd.f32 %v4561, %v4607
        %4612 = vrot.lane.b32.xlu0 %v4246, 94
        %v4613 = vpop.permute.xlu0 %4612
        %4614 = vrot.lane.b32.xlu0 %v4247, 94
        %v4615 = vpop.permute.xlu0 %4614
        %4616 = vrot.lane.b32.xlu0 %v4248, 94
        %v4617 = vpop.permute.xlu0 %4616
        %4618 = vrot.lane.b32.xlu0 %v4249, 94
        %v4619 = vpop.permute.xlu0 %4618
        %vm4620 = vcmp.lt.s32.totalorder %v524, 94
        %v4621 = vsel %vm4620, %v4617, %v4619
        %v4622 = vsel %vm4620, %v4615, %v4617
        %v4623 = vsel %vm4620, %v4613, %v4615
        %v4624 = vsel %vm4620, %v4619, %v4613
        %v4625 = vsel %vm319, 1, 0
        %v4626 = vlaneseq
        %v4627 = vshrl.u32 %v4626, 7
        %v4628 = vsub.s32 0, %v4627
        %v4629 = vrot.slane %v4625, %v4628
        %v4630 = vlaneseq
        %v4631 = vshrl.u32 %v4630, 7
        %v4632 = vsub.s32 1, %v4631
        %v4633 = vrot.slane %v4625, %v4632
        %v4634 = vlaneseq
        %v4635 = vshrl.u32 %v4634, 7
        %v4636 = vsub.s32 2, %v4635
        %v4637 = vrot.slane %v4625, %v4636
        %v4638 = vlaneseq
        %v4639 = vshrl.u32 %v4638, 7
        %v4640 = vsub.s32 3, %v4639
        %v4641 = vrot.slane %v4625, %v4640
        %vm4642 = vcmp.eq.s32.totalorder %v4629, 1
        %vm4643 = vcmp.eq.s32.totalorder %v4633, 1
        %vm4644 = vcmp.eq.s32.totalorder %v4637, 1
        %vm4645 = vcmp.eq.s32.totalorder %v4641, 1
        %v4646 = vsel %vm4642, %v4623, 0.0
        %v4647 = vsel %vm4643, %v4622, 0.0
        %v4648 = vsel %vm4644, %v4621, 0.0
        %v4649 = vsel %vm4645, %v4624, 0.0
        %4650 = vset.pattern.permute.xlu0 98
        %4651 = vperm.xlu0 %4650, %v555
        %v4652 = vpop.permute.xlu0 %4651
        %v4654 = vmul.f32 %v4646, %v4652
        %v4655 = vmul.f32 %v4647, %v4652
        %v4656 = vmul.f32 %v4648, %v4652
        %v4657 = vmul.f32 %v4649, %v4652
        %v4658 = vadd.f32 %v4608, %v4654
        %v4659 = vadd.f32 %v4609, %v4655
        %v4660 = vadd.f32 %v4610, %v4656
        %v4661 = vadd.f32 %v4611, %v4657
        %s4662 = scalar_lea.vmem %s5, 80
        %v4663 = vld [vmem:[%s4662] sm:$0xff]
        %s4664 = scalar_lea.vmem %s6, 80
        %v4665 = vld [vmem:[%s4664] sm:$0xff]
        %4667 = vset.pattern.permute.xlu0 0
        %4668 = vperm.xlu0 %4667, %v4665
        %v4669 = vpop.permute.xlu0 %4668
        %v4672 = vsel %vm938, %v4663, 0
        %4674 = vmatprep.subr.mxu0 0.0
        %4675 = vmatpush1.msra.mxu0 0.0
        %4676 = vmatprep.subr.mxu0 0.0
        %4677 = vmatpush1.msra.mxu0 0.0
        %4678 = vmatprep.subr.mxu0 0.0
        %4679 = vmatpush1.msra.mxu0 0.0
        %4680 = vmatprep.subr.mxu0 0.0
        %4681 = vmatpush1.msra.mxu0 0.0
        %4682 = vmatprep.subr.mxu0 0.0
        %4683 = vmatpush1.msra.mxu0 0.0
        %4684 = vmatprep.subr.mxu0 0.0
        %4685 = vmatpush1.msra.mxu0 0.0
        %4686 = vmatprep.subr.mxu0 0.0
        %4687 = vmatpush1.msra.mxu0 0.0
        %4688 = vmatprep.subr.mxu0 0.0
        %4689 = vmatpush1.msra.mxu0 0.0
        %4690 = vmatprep.subr.mxu0 0.0
        %4691 = vmatpush1.msra.mxu0 0.0
        %4692 = vmatprep.subr.mxu0 0.0
        %4693 = vmatpush1.msra.mxu0 0.0
        %4694 = vmatprep.subr.mxu0 0.0
        %4695 = vmatpush1.msra.mxu0 0.0
        %4696 = vmatprep.subr.mxu0 0.0
        %4697 = vmatpush1.msra.mxu0 0.0
        %4698 = vmatprep.subr.mxu0 0.0
        %4699 = vmatpush1.msra.mxu0 0.0
        %4700 = vmatprep.subr.mxu0 0.0
        %4701 = vmatpush1.msra.mxu0 0.0
        %4702 = vmatprep.subr.mxu0 0.0
        %4703 = vmatpush1.msra.mxu0 0.0
        %4704 = vmatprep.subr.mxu0 %v4659
        %4705 = vmatpush1.msra.mxu0 %v4658
        %4706 = vmatprep.subr.mxu0 0.0
        %4707 = vmatpush2.msra.mxu0 0.0
        %4708 = vmatprep.subr.mxu0 0.0
        %4709 = vmatpush2.msra.mxu0 0.0
        %4710 = vmatprep.subr.mxu0 0.0
        %4711 = vmatpush2.msra.mxu0 0.0
        %4712 = vmatprep.subr.mxu0 0.0
        %4713 = vmatpush2.msra.mxu0 0.0
        %4714 = vmatprep.subr.mxu0 0.0
        %4715 = vmatpush2.msra.mxu0 0.0
        %4716 = vmatprep.subr.mxu0 0.0
        %4717 = vmatpush2.msra.mxu0 0.0
        %4718 = vmatprep.subr.mxu0 0.0
        %4719 = vmatpush2.msra.mxu0 0.0
        %4720 = vmatprep.subr.mxu0 0.0
        %4721 = vmatpush2.msra.mxu0 0.0
        %4722 = vmatprep.subr.mxu0 0.0
        %4723 = vmatpush2.msra.mxu0 0.0
        %4724 = vmatprep.subr.mxu0 0.0
        %4725 = vmatpush2.msra.mxu0 0.0
        %4726 = vmatprep.subr.mxu0 0.0
        %4727 = vmatpush2.msra.mxu0 0.0
        %4728 = vmatprep.subr.mxu0 0.0
        %4729 = vmatpush2.msra.mxu0 0.0
        %4730 = vmatprep.subr.mxu0 0.0
        %4731 = vmatpush2.msra.mxu0 0.0
        %4732 = vmatprep.subr.mxu0 0.0
        %4733 = vmatpush2.msra.mxu0 0.0
        %4734 = vmatprep.subr.mxu0 0.0
        %4735 = vmatpush2.msra.mxu0 0.0
        %4736 = vmatprep.subr.mxu0 0.0
        %4737 = vmatpush2.msra.mxu0 0.0
        %4738 = vmatprep.mubr.f32.mxu0 0.0
        %4739 = vmatmul.mubr.f32.gmra.mxu0 %v4672
        %v4740 = vpop.f32.mrf.mxu0
        %v4741 = vadd.f32 %v4669, %v4740
        %v4742 = vpop.f32.mrf.mxu0
        %v4743 = vadd.f32 %v4669, %v4742
        %4744 = vdwg.mxu0
        %4745 = vmatprep.subr.mxu0 0.0
        %4746 = vmatpush1.msra.mxu0 0.0
        %4747 = vmatprep.subr.mxu0 0.0
        %4748 = vmatpush1.msra.mxu0 0.0
        %4749 = vmatprep.subr.mxu0 0.0
        %4750 = vmatpush1.msra.mxu0 0.0
        %4751 = vmatprep.subr.mxu0 0.0
        %4752 = vmatpush1.msra.mxu0 0.0
        %4753 = vmatprep.subr.mxu0 0.0
        %4754 = vmatpush1.msra.mxu0 0.0
        %4755 = vmatprep.subr.mxu0 0.0
        %4756 = vmatpush1.msra.mxu0 0.0
        %4757 = vmatprep.subr.mxu0 0.0
        %4758 = vmatpush1.msra.mxu0 0.0
        %4759 = vmatprep.subr.mxu0 0.0
        %4760 = vmatpush1.msra.mxu0 0.0
        %4761 = vmatprep.subr.mxu0 0.0
        %4762 = vmatpush1.msra.mxu0 0.0
        %4763 = vmatprep.subr.mxu0 0.0
        %4764 = vmatpush1.msra.mxu0 0.0
        %4765 = vmatprep.subr.mxu0 0.0
        %4766 = vmatpush1.msra.mxu0 0.0
        %4767 = vmatprep.subr.mxu0 0.0
        %4768 = vmatpush1.msra.mxu0 0.0
        %4769 = vmatprep.subr.mxu0 0.0
        %4770 = vmatpush1.msra.mxu0 0.0
        %4771 = vmatprep.subr.mxu0 0.0
        %4772 = vmatpush1.msra.mxu0 0.0
        %4773 = vmatprep.subr.mxu0 0.0
        %4774 = vmatpush1.msra.mxu0 0.0
        %4775 = vmatprep.subr.mxu0 %v4661
        %4776 = vmatpush1.msra.mxu0 %v4660
        %4777 = vmatprep.subr.mxu0 0.0
        %4778 = vmatpush2.msra.mxu0 0.0
        %4779 = vmatprep.subr.mxu0 0.0
        %4780 = vmatpush2.msra.mxu0 0.0
        %4781 = vmatprep.subr.mxu0 0.0
        %4782 = vmatpush2.msra.mxu0 0.0
        %4783 = vmatprep.subr.mxu0 0.0
        %4784 = vmatpush2.msra.mxu0 0.0
        %4785 = vmatprep.subr.mxu0 0.0
        %4786 = vmatpush2.msra.mxu0 0.0
        %4787 = vmatprep.subr.mxu0 0.0
        %4788 = vmatpush2.msra.mxu0 0.0
        %4789 = vmatprep.subr.mxu0 0.0
        %4790 = vmatpush2.msra.mxu0 0.0
        %4791 = vmatprep.subr.mxu0 0.0
        %4792 = vmatpush2.msra.mxu0 0.0
        %4793 = vmatprep.subr.mxu0 0.0
        %4794 = vmatpush2.msra.mxu0 0.0
        %4795 = vmatprep.subr.mxu0 0.0
        %4796 = vmatpush2.msra.mxu0 0.0
        %4797 = vmatprep.subr.mxu0 0.0
        %4798 = vmatpush2.msra.mxu0 0.0
        %4799 = vmatprep.subr.mxu0 0.0
        %4800 = vmatpush2.msra.mxu0 0.0
        %4801 = vmatprep.subr.mxu0 0.0
        %4802 = vmatpush2.msra.mxu0 0.0
        %4803 = vmatprep.subr.mxu0 0.0
        %4804 = vmatpush2.msra.mxu0 0.0
        %4805 = vmatprep.subr.mxu0 0.0
        %4806 = vmatpush2.msra.mxu0 0.0
        %4807 = vmatprep.subr.mxu0 0.0
        %4808 = vmatpush2.msra.mxu0 0.0
        %4809 = vmatprep.mubr.f32.mxu0 0.0
        %4810 = vmatmul.mubr.f32.gmra.mxu0 %v4672
        %v4811 = vpop.f32.mrf.mxu0
        %v4812 = vadd.f32 %v4669, %v4811
        %v4813 = vpop.f32.mrf.mxu0
        %v4814 = vadd.f32 %v4669, %v4813
        %4815 = vdwg.mxu0
        %v4816 = vadd.f32 %v424, %v4741
        %v4817 = vadd.f32 %v426, %v4743
        %v4818 = vadd.f32 %v501, %v4812
        %v4819 = vadd.f32 %v503, %v4814
        %4820 = vst [vmem:[%s271] sm:$0xff] %v2266
        %4821 = vst [vmem:[%s271 + $0x8] sm:$0xff] %v2267
        %4822 = vst [vmem:[%s271 + $0x10] sm:$0xff] %v2268
        %4823 = vst [vmem:[%s271 + $0x18] sm:$0xff] %v2269
        %4824 = vst [vmem:[%s271 + $0x20] sm:$0xff] %v3582
        %4825 = vst [vmem:[%s271 + $0x28] sm:$0xff] %v3583
        %4826 = vst [vmem:[%s271 + $0x30] sm:$0xff] %v3584
        %4827 = vst [vmem:[%s271 + $0x38] sm:$0xff] %v3585
        %4828 = vst [vmem:[%s271 + $0x40] sm:$0xff] %v4242
        %4829 = vst [vmem:[%s271 + $0x48] sm:$0xff] %v4243
        %4830 = vst [vmem:[%s271 + $0x50] sm:$0xff] %v4244
        %4831 = vst [vmem:[%s271 + $0x58] sm:$0xff] %v4245
        %4832 = vst [vmem:[%s271 + $0x60] sm:$0xff] %v4816
        %4833 = vst [vmem:[%s271 + $0x68] sm:$0xff] %v4817
        %4834 = vst [vmem:[%s271 + $0x70] sm:$0xff] %v4818
        %4835 = vst [vmem:[%s271 + $0x78] sm:$0xff] %v4819
        %s4836 = sand.u32 %s181, 1
        %s4837 = scalar_lea.sflag [#allocation3], %s4836
        %s4838 = sand.u32 %s181, 1
        %s4839 = smul.addr %s4838, 128
        %s4840 = scalar_lea.vmem [#allocation2], %s4839
        // Predicated region
        $region49: #{tpu_custom_call.1} parent=47 // pred_check
          %p4841 = pneg %p191
        $region50: #{tpu_custom_call.1} parent=47 // pred_check_branch
          %4843 = sbr.rel (%p4841) target = $region52
        $region51: #{tpu_custom_call.1} parent=47 // pred_region
          %s4845 = ssub.s32 2048, 2048
          %4846 = vsyncadd %s4837, %s4845
          %s4847 = smul.addr %s21, 16
          %s4848 = smul.addr %s4847, 128
          %s4849 = scalar_lea.hbm %s7, %s4848
          %s4850 = sshll.u32 %s4840, 4
          %s4851 = int_to_ptr.vmem [resolvable:$true] %s4850
          %4856 = dma.vmem_to_hbm [thread:$0]  %s4851, 2048, %s4849, %s4837, 512, 512, 32
        $region52: #{tpu_custom_call.1} parent=47 // pred_fallthru
          _
      $region48: #{tpu_custom_call.1} parent=5 // pred_fallthru
        _
      %p4857 = scmp.le.s32.totalorder 2, %s16
      // Predicated region
      $region53: #{tpu_custom_call.1} parent=5 // pred_check
        %p4858 = pneg %p4857
      $region54: #{tpu_custom_call.1} parent=5 // pred_check_branch
        %4860 = sbr.rel (%p4858) target = $region56
      $region55: #{tpu_custom_call.1} parent=5 // pred_region
        %s4861 = ssub.s32 %s16, 2
        // Predicated region
        $region57: #{tpu_custom_call.1} parent=55 // pred_check
          %p4862 = pneg %p197
        $region58: #{tpu_custom_call.1} parent=55 // pred_check_branch
          %4864 = sbr.rel (%p4862) target = $region60
        $region59: #{tpu_custom_call.1} parent=55 // pred_region
          %s4865 = sand.u32 %s182, 1
          %s4866 = scalar_lea.sflag [#allocation3], %s4865
          %s4867 = sand.u32 %s182, 1
          %s4868 = smul.addr %s4867, 128
          %s4869 = scalar_lea.vmem [#allocation2], %s4868
          %4870 = dma.done %s4866, 2048
        $region60: #{tpu_custom_call.1} parent=55 // pred_fallthru
          _
      $region56: #{tpu_custom_call.1} parent=5 // pred_fallthru
        _
    $region6: #{tpu_custom_call.1} parent=1 // loop_footer
      %s20 = sadd.s32 1, %s16
    $region7: #{tpu_custom_call.1} parent=1 // loop_footer_branch
      %15 = sbr.rel target = $region3
    $region8: #{tpu_custom_call.1} parent=1 // loop_exit
      _
    %4871 = vsyncpa [#allocation3], 1
    %s4872 = scalar_lea.sflag [#allocation3], 1
    %4873 = vsyncpa %s4872, 1

</llo_original>
